<compile_context>
chip_gen: v7x
topology: tpu7x:2x2x1
jax: 0.10.0
libtpu: 0.0.40
codegen_flags: <defaults>
</compile_context>

<pallas_src>
import jax
import jax.numpy as jnp
from jax import lax
from jax.experimental import pallas as pl
from jax.experimental.pallas import tpu as pltpu

EPS = 1e-5


# ---------------------------------------------------------------------------
# Shared in-kernel 3x3 conv on a row strip (rows already include the halo)
# ---------------------------------------------------------------------------
def _conv3x3_on_rows(xr, w_ref):
    """xr: (TH+2, W, Cin) bf16 rows incl. top/bottom halo (zero-masked at the
    image edges).  Zero pad along W is built into the kw-folded slab.
    w_ref: (3, 3*Cin, Cout) bf16 (BN already folded).
    Returns an f32 accumulator of shape (TH*W, Cout)."""
    THp2, W, Cin = xr.shape
    TH = THp2 - 2
    Cout = w_ref.shape[-1]
    zcol = jnp.zeros((THp2, 1, Cin), xr.dtype)
    # NOTE: could use pltpu.roll(xr, +/-1, axis=1) + a one-column mask to move
    # the shift onto the XLU; concat kept here as the known-good lowering.
    s_left = jnp.concatenate([zcol, xr[:, :W - 1, :]], axis=1)    # kw = 0
    s_right = jnp.concatenate([xr[:, 1:, :], zcol], axis=1)       # kw = 2
    # slab[h, w, kw*Cin + c] = x_padded[h, w + kw, c]
    slab = jnp.concatenate([s_left, xr, s_right], axis=-1)        # (TH+2, W, 3*Cin)
    acc = jnp.zeros((TH * W, Cout), jnp.float32)
    for kh in range(3):                                           # leading-axis slices only
        acc = acc + jnp.dot(slab[kh:kh + TH].reshape(TH * W, 3 * Cin),
                            w_ref[kh], preferred_element_type=jnp.float32)
    return acc


# ---------------------------------------------------------------------------
# Kernel 1: conv1 + bn1 + relu, plus row-mean / partial column-sum statistics
# ---------------------------------------------------------------------------
def _conv1_kernel(x_ref, xtop_ref, xbot_ref, w_ref, b_ref,
                  y_ref, rowmean_ref, colsum_ref):
    i = pl.program_id(1)
    n_i = pl.num_programs(1)
    _, TH, W, _ = x_ref.shape
    Cout = w_ref.shape[-1]
    bf = jnp.bfloat16

    # Halo rows: clamped index_map loads a real neighbouring row; mask it to
    # zero at the image edges.  Everything is assembled directly in bf16.
    top = xtop_ref[0] * (i > 0).astype(bf)
    bot = xbot_ref[0] * (i < n_i - 1).astype(bf)
    xr = jnp.concatenate([top, x_ref[0], bot], axis=0)            # (TH+2, W, Cin) bf16

    acc = _conv3x3_on_rows(xr, w_ref) + b_ref[0]
    y = jnp.maximum(acc, 0.0).reshape(TH, W, Cout)                # relu, f32
    y_ref[0] = y.astype(y_ref.dtype)                              # bf16 HBM intermediate

    # Strip statistics of the conv1 output (no second full-activation pass).
    rowmean_ref[0] = (jnp.sum(y, axis=1) * (1.0 / W)).astype(rowmean_ref.dtype)
    # Per-row-tile partial column sums -> both grid axes stay "parallel"
    # (v7x megacore at batch 1); the tiny nH reduction happens in JAX.
    colsum_ref[0, 0] = jnp.sum(y, axis=0).astype(colsum_ref.dtype)


def conv1_bn_relu_stats(x, wfold, bias, TH, vmem_bytes):
    N, H, W, C = x.shape
    Cout = wfold.shape[-1]
    nH = H // TH
    body = lambda n, i: (n, i, 0, 0)
    top = lambda n, i: (n, jnp.maximum(i * TH - 1, 0), 0, 0)
    bot = lambda n, i: (n, jnp.minimum((i + 1) * TH, H - 1), 0, 0)
    return pl.pallas_call(
        _conv1_kernel,
        grid=(N, nH),
        in_specs=[
            pl.BlockSpec((1, TH, W, C), body),       # current row tile (bf16)
            pl.BlockSpec((1, 1, W, C), top),         # top halo row
            pl.BlockSpec((1, 1, W, C), bot),         # bottom halo row
            # Constant-index weights/bias (fetched once).  On v7x these could
            # additionally use pipeline_mode=pl.Buffered(1) to drop a buffer.
            pl.BlockSpec((3, 3 * C, Cout), lambda n, i: (0, 0, 0)),
            pl.BlockSpec((1, Cout), lambda n, i: (0, 0)),
        ],
        out_shape=(
            jax.ShapeDtypeStruct((N, H, W, Cout), jnp.bfloat16),   # y1 (bf16)
            jax.ShapeDtypeStruct((N, H, Cout), jnp.float32),       # row means
            jax.ShapeDtypeStruct((N, nH, W, Cout), jnp.float32),   # partial col sums
        ),
        out_specs=(
            pl.BlockSpec((1, TH, W, Cout), body),
            pl.BlockSpec((1, TH, Cout), lambda n, i: (n, i, 0)),
            pl.BlockSpec((1, 1, W, Cout), lambda n, i: (n, i, 0, 0)),
        ),
        compiler_params=pltpu.CompilerParams(
            dimension_semantics=("parallel", "parallel"),
            vmem_limit_bytes=vmem_bytes),
    )(x, x, x, wfold, bias)


# ---------------------------------------------------------------------------
# Kernel 2: SP attention + modulation + conv2 + bn2 + residual + relu (fused)
# ---------------------------------------------------------------------------
def _conv2_spm_kernel(y_ref, ytop_ref, ybot_ref, rvp_ref, cv_ref, w3_ref,
                      b3_ref, w_ref, b_ref, res_ref, out_ref):
    i = pl.program_id(1)
    n_i = pl.num_programs(1)
    _, TH, W, C = y_ref.shape
    Cout = w_ref.shape[-1]
    bf = jnp.bfloat16

    top = ytop_ref[0] * (i > 0).astype(bf)
    bot = ybot_ref[0] * (i < n_i - 1).astype(bf)
    yr = jnp.concatenate([top, y_ref[0], bot], axis=0)            # (TH+2, W, C) bf16

    # SP attention for these rows (halo rows included; the masked halo rows of
    # yr are zero, so their attention value is irrelevant).  rvp is the row
    # vector padded by one row on each side; the elementwise math stays f32,
    # the cast to bf16 happens only at the MXU boundary / modulation.
    row0 = pl.multiple_of(i * TH, TH)
    rows = rvp_ref[0, pl.ds(row0, TH + 2), :]                     # (TH+2, C) f32
    s = jnp.maximum(rows[:, None, :] + cv_ref[0][None, :, :], 0.0)
    z = jnp.dot(s.reshape((TH + 2) * W, C).astype(bf), w3_ref[...],
                preferred_element_type=jnp.float32) + b3_ref[0]
    att = pl.reciprocal(1.0 + jnp.exp(-z), approx=True)           # sigmoid (EUP)
    mod = (yr.reshape((TH + 2) * W, C) * att.astype(bf)).reshape(TH + 2, W, C)

    acc = _conv3x3_on_rows(mod, w_ref) + b_ref[0]
    out = acc.reshape(TH, W, Cout) + res_ref[0].astype(jnp.float32)
    out_ref[0] = jnp.maximum(out, 0.0).astype(out_ref.dtype)


def conv2_spm_fused(y1, rowvec, colvec, w3, b3, wfold, bias, res, TH, vmem_bytes):
    N, H, W, C = y1.shape
    Cout = wfold.shape[-1]
    nH = H // TH
    # Tiny (N, H+2, C) pad so strip row r of tile i maps to rowvec[i*TH-1+r].
    rvp = jnp.pad(rowvec, ((0, 0), (1, 1), (0, 0)))
    body = lambda n, i: (n, i, 0, 0)
    top = lambda n, i: (n, jnp.maximum(i * TH - 1, 0), 0, 0)
    bot = lambda n, i: (n, jnp.minimum((i + 1) * TH, H - 1), 0, 0)
    return pl.pallas_call(
        _conv2_spm_kernel,
        grid=(N, nH),
        in_specs=[
            pl.BlockSpec((1, TH, W, C), body),          # conv1 output row tile (bf16)
            pl.BlockSpec((1, 1, W, C), top),            # halo rows (bf16)
            pl.BlockSpec((1, 1, W, C), bot),
            pl.BlockSpec((1, H + 2, C), lambda n, i: (n, 0, 0)),   # padded rowvec (f32)
            pl.BlockSpec((1, W, C), lambda n, i: (n, 0, 0)),       # colvec (f32)
            pl.BlockSpec((C, Cout), lambda n, i: (0, 0)),          # w3 bf16
            pl.BlockSpec((1, Cout), lambda n, i: (0, 0)),          # b3 f32
            pl.BlockSpec((3, 3 * C, Cout), lambda n, i: (0, 0, 0)),  # w2 bf16
            pl.BlockSpec((1, Cout), lambda n, i: (0, 0)),            # bias2 f32
            pl.BlockSpec((1, TH, W, Cout), body),                    # residual x (bf16)
        ],
        out_shape=jax.ShapeDtypeStruct((N, H, W, Cout), jnp.float32),
        out_specs=pl.BlockSpec((1, TH, W, Cout), body),
        compiler_params=pltpu.CompilerParams(
            dimension_semantics=("parallel", "parallel"),
            vmem_limit_bytes=vmem_bytes),
    )(y1, y1, y1, rvp, colvec, w3, b3, wfold, bias, res)


# ---------------------------------------------------------------------------
# VMEM / tiling heuristics
# ---------------------------------------------------------------------------
def _vmem_limit_bytes():
    """Explicit scoped-VMEM limit: ~85% of physical VMEM, capped at 100 MiB
    (v5e/v6e: 128 MiB physical -> 100 MiB; v7x: 64 MiB -> ~54 MiB)."""
    phys = 64 << 20                       # conservative fallback (v7x per-core)
    try:
        phys = int(getattr(pltpu.get_tpu_info(), "vmem_capacity_bytes", phys))
    except Exception:
        pass
    return int(min(phys * 0.85, 100 << 20))


def _pick_row_tile(H, W, C, vmem_bytes):
    """Largest row tile (multiple of 8 dividing H, <= 32) whose per-step VMEM
    footprint (double-buffered tiles + in-kernel temporaries) fits the budget."""
    def step_bytes(th):
        # ~10 bf16 + ~4 f32 tile-sized live values per step (rough upper bound)
        return (th + 2) * W * C * 36
    best = None
    for th in (32, 24, 16, 8):
        if th <= H and H % th == 0:
            if best is None:
                best = th                 # largest legal tile, used as last resort
            if step_bytes(th) <= int(0.6 * vmem_bytes):
                return th
    return best if best is not None else H   # tiny / odd H: single tile


# ---------------------------------------------------------------------------
# Tiny SPBlock strip ops (O(H*C) / O(W*C) work) -- plain JAX glue
# ---------------------------------------------------------------------------
def adaptive_pool1d(v, out_size):
    # PyTorch AdaptiveAvgPool semantics along axis 1 of (N, L, C).
    L = v.shape[1]
    outs = []
    for j in range(out_size):
        start = (j * L) // out_size
        end = -((-(j + 1) * L) // out_size)   # ceil((j+1)*L/out)
        outs.append(jnp.mean(v[:, start:end, :], axis=1))
    return jnp.stack(outs, axis=1)


def nearest_gather(v, out_size):
    # F.interpolate(mode='nearest') along axis 1: src = floor(dst * in/out)
    in_size = v.shape[1]
    idx = jnp.array([(j * in_size) // out_size for j in range(out_size)],
                    jnp.int32)
    return v[:, idx, :]


def strip_conv3(v, taps, bias):
    # 1-D cross-correlation along axis 1, zero-pad 1, BN folded into taps/bias.
    L = v.shape[1]
    vp = jnp.pad(v, ((0, 0), (1, 1), (0, 0)))
    acc = jnp.zeros(v.shape[:2] + (taps[0].shape[1],), v.dtype)
    for k in range(3):
        acc = acc + vp[:, k:k + L, :] @ taps[k]
    return acc + bias


def fold_bn(b):
    scale = b['gamma'] / jnp.sqrt(b['var'] + EPS)
    shift = b['beta'] - b['mean'] * scale
    return scale, shift


def _pad_channels(p, x, C, CP):
    """Zero-pad channels to CP.  Padded channels stay exactly zero end-to-end:
    conv weights / BN gamma,beta,mean / biases pad with 0 and BN var with 1."""
    if CP == C:
        return p, x
    pc = CP - C
    pad_w = lambda w: jnp.pad(w, ((0, pc), (0, pc), (0, 0), (0, 0)))   # OIHW
    pad_v = lambda v, cv=0.0: jnp.pad(v, (0, pc), constant_values=cv)
    pad_bn = lambda b: dict(gamma=pad_v(b['gamma']), beta=pad_v(b['beta']),
                            mean=pad_v(b['mean']), var=pad_v(b['var'], 1.0))
    pp = dict(
        w1=pad_w(p['w1']), bn1=pad_bn(p['bn1']),
        w2=pad_w(p['w2']), bn2=pad_bn(p['bn2']),
        sp_w1=pad_w(p['sp_w1']), sp_bn1=pad_bn(p['sp_bn1']),
        sp_w2=pad_w(p['sp_w2']), sp_bn2=pad_bn(p['sp_bn2']),
        sp_w3=pad_w(p['sp_w3']), sp_b3=pad_v(p['sp_b3']),
    )
    xp = jnp.pad(x, ((0, 0), (0, 0), (0, 0), (0, pc)))
    return pp, xp


# ---------------------------------------------------------------------------
# BasicBlock forward (Pallas path)
# ---------------------------------------------------------------------------
def basic_block_forward(x_nchw, p):
    x = jnp.transpose(x_nchw, (0, 2, 3, 1)).astype(jnp.float32)   # NCHW -> NHWC
    N, H, W, C = x.shape

    # Lane-density: pad channels to 128 when C < 128 (otherwise masked stores
    # and an under-filled MXU N dim); padded channels are exact zeros and are
    # sliced off at the end.
    CP = 128 if C < 128 else C
    p, x = _pad_channels(p, x, C, CP)
    x_bf = x.astype(jnp.bfloat16)      # single bf16 copy: conv1 input AND residual

    vmem = _vmem_limit_bytes()
    TH = _pick_row_tile(H, W, CP, vmem)

    # conv1 + bn1 + relu, with fused row/col statistics of the output.
    s1, t1 = fold_bn(p['bn1'])
    w1 = (jnp.transpose(p['w1'], (2, 3, 1, 0)) * s1).reshape(3, 3 * CP, CP)
    y1, rowmean, colsum = conv1_bn_relu_stats(
        x_bf, w1.astype(jnp.bfloat16),
        t1.reshape(1, CP).astype(jnp.float32), TH, vmem)
    colmean = jnp.sum(colsum, axis=1) * (1.0 / H)                 # tiny nH reduction

    # ---- SPBlock strip statistics (tiny, plain JAX) ----
    s_sp1, t_sp1 = fold_bn(p['sp_bn1'])
    s_sp2, t_sp2 = fold_bn(p['sp_bn2'])
    taps1 = [jnp.transpose(p['sp_w1'][:, :, k, 0] * s_sp1[:, None]) for k in range(3)]
    taps2 = [jnp.transpose(p['sp_w2'][:, :, 0, k] * s_sp2[:, None]) for k in range(3)]

    x1 = strip_conv3(rowmean, taps1, t_sp1)                                 # (N,H,CP)
    x2 = strip_conv3(colmean, taps2, t_sp2)                                 # (N,W,CP)
    # pools 3..6 collapse one spatial dim entirely -> only the center tap sees data
    x3 = nearest_gather(adaptive_pool1d(colmean, W - 1) @ taps1[1] + t_sp1, W)
    x4 = nearest_gather(adaptive_pool1d(rowmean, H - 1) @ taps2[1] + t_sp2, H)
    x5 = nearest_gather(adaptive_pool1d(colmean, W - 2) @ taps1[1] + t_sp1, W)
    x6 = nearest_gather(adaptive_pool1d(rowmean, H - 2) @ taps2[1] + t_sp2, H)

    rowvec = x1 + x4 + x6             # varies with H only
    colvec = x2 + x3 + x5             # varies with W only

    # SP attention + modulation + conv2 + bn2 + residual + relu, all fused.
    s2, t2 = fold_bn(p['bn2'])
    w2 = (jnp.transpose(p['w2'], (2, 3, 1, 0)) * s2).reshape(3, 3 * CP, CP)
    w3 = jnp.transpose(p['sp_w3'][:, :, 0, 0])
    y = conv2_spm_fused(
        y1, rowvec.astype(jnp.float32), colvec.astype(jnp.float32),
        w3.astype(jnp.bfloat16),
        p['sp_b3'].reshape(1, CP).astype(jnp.float32),
        w2.astype(jnp.bfloat16), t2.reshape(1, CP).astype(jnp.float32),
        x_bf, TH, vmem)
    return jnp.transpose(y[..., :C], (0, 3, 1, 2))                # back to NCHW


# ---------------------------------------------------------------------------
# Pure-JAX reference (mirrors the PyTorch module, NCHW) for validation
# ---------------------------------------------------------------------------
def _conv_ref(x, w, pad, bias=None):
    out = lax.conv_general_dilated(
        x, w, window_strides=(1, 1),
        padding=((pad[0], pad[0]), (pad[1], pad[1])),
        dimension_numbers=('NCHW', 'OIHW', 'NCHW'),
        precision=lax.Precision.HIGHEST)
    if bias is not None:
        out = out + bias[None, :, None, None]
    return out


def _bn_ref(x, b):
    return ((x - b['mean'][None, :, None, None])
            / jnp.sqrt(b['var'][None, :, None, None] + EPS)
            * b['gamma'][None, :, None, None] + b['beta'][None, :, None, None])


def _adaptive_avg_pool2d_ref(x, oh, ow):
    N, C, H, W = x.shape
    rows = []
    for i in range(oh):
        hs, he = (i * H) // oh, -((-(i + 1) * H) // oh)
        cols = []
        for j in range(ow):
            ws, we = (j * W) // ow, -((-(j + 1) * W) // ow)
            cols.append(jnp.mean(x[:, :, hs:he, ws:we], axis=(2, 3)))
        rows.append(jnp.stack(cols, axis=-1))
    return jnp.stack(rows, axis=2)


def _interp_nearest_ref(x, oh, ow):
    N, C, H, W = x.shape
    ih = jnp.array([(i * H) // oh for i in range(oh)], jnp.int32)
    iw = jnp.array([(j * W) // ow for j in range(ow)], jnp.int32)
    return x[:, :, ih][:, :, :, iw]


def _spblock_ref(x, p):
    N, C, h, w = x.shape
    br1 = lambda v: _bn_ref(_conv_ref(v, p['sp_w1'], (1, 0)), p['sp_bn1'])
    br2 = lambda v: _bn_ref(_conv_ref(v, p['sp_w2'], (0, 1)), p['sp_bn2'])
    x1 = jnp.broadcast_to(br1(_adaptive_avg_pool2d_ref(x, h, 1)), (N, C, h, w))
    x2 = jnp.broadcast_to(br2(_adaptive_avg_pool2d_ref(x, 1, w)), (N, C, h, w))
    x3 = _interp_nearest_ref(jnp.broadcast_to(
        br1(_adaptive_avg_pool2d_ref(x, 1, w - 1)), (N, C, h, w - 1)), h, w)
    x4 = _interp_nearest_ref(jnp.broadcast_to(
        br2(_adaptive_avg_pool2d_ref(x, h - 1, 1)), (N, C, h - 1, w)), h, w)
    x5 = _interp_nearest_ref(jnp.broadcast_to(
        br1(_adaptive_avg_pool2d_ref(x, 1, w - 2)), (N, C, h, w - 2)), h, w)
    x6 = _interp_nearest_ref(jnp.broadcast_to(
        br2(_adaptive_avg_pool2d_ref(x, h - 2, 1)), (N, C, h - 2, w)), h, w)
    s = jax.nn.relu(x1 + x2 + x3 + x4 + x5 + x6)
    return jax.nn.sigmoid(_conv_ref(s, p['sp_w3'], (0, 0), bias=p['sp_b3']))


def basic_block_ref(x, p):
    out = jax.nn.relu(_bn_ref(_conv_ref(x, p['w1'], (1, 1)), p['bn1']))
    out = out * _spblock_ref(out, p)
    out = _bn_ref(_conv_ref(out, p['w2'], (1, 1)), p['bn2'])
    return jax.nn.relu(out + x)


# ---------------------------------------------------------------------------
# Deterministic parameter init (shapes from the module's __init__)
# ---------------------------------------------------------------------------
def init_params(key, C):
    keys = iter(jax.random.split(key, 32))

    def conv(shape, s=0.3):
        return s * jax.random.normal(next(keys), shape, jnp.float32)

    def bn():
        return dict(
            gamma=1.0 + 0.1 * jax.random.normal(next(keys), (C,), jnp.float32),
            beta=0.1 * jax.random.normal(next(keys), (C,), jnp.float32),
            mean=0.1 * jax.random.normal(next(keys), (C,), jnp.float32),
            var=1.0 + 0.5 * jax.random.uniform(next(keys), (C,), jnp.float32),
        )

    return dict(
        w1=conv((C, C, 3, 3)), bn1=bn(),
        w2=conv((C, C, 3, 3)), bn2=bn(),
        sp_w1=conv((C, C, 3, 1)), sp_bn1=bn(),
        sp_w2=conv((C, C, 1, 3)), sp_bn2=bn(),
        sp_w3=conv((C, C, 1, 1)),
        sp_b3=0.1 * jax.random.normal(next(keys), (C,), jnp.float32),
    )


if __name__ == "__main__":
    key = jax.random.PRNGKey(0)
    kx, kp = jax.random.split(key)
    N, C, H, W = 2, 4, 16, 16
    x = jax.random.normal(kx, (N, C, H, W), jnp.float32)
    p = init_params(kp, C)

    fwd = jax.jit(basic_block_forward)
    y = jax.block_until_ready(fwd(x, p))

    y_ref = basic_block_ref(x, p)
    assert y.shape == (N, C, H, W), f"bad shape {y.shape}"
    assert bool(jnp.all(jnp.isfinite(y))), "non-finite output"
    # bf16 MXU inputs / bf16 HBM intermediates / approx sigmoid reciprocal ->
    # compare with a magnitude-normalized tolerance (a real indexing or fusion
    # bug shows up as O(1) relative error, far above this).
    err = float(jnp.max(jnp.abs(y - y_ref) / (1.0 + jnp.abs(y_ref))))
    assert err < 5e-2, f"mismatch vs reference: {err}"
    print("KERNEL_OK")
</pallas_src>

<mosaic_0001>
module attributes {stable_mosaic.version = 11 : i64} {
  func.func @_conv1_kernel(%arg0: i32, %arg1: i32, %arg2: memref<1x16x16x128xbf16, #tpu.memory_space<vmem>>, %arg3: memref<1x1x16x128xbf16, #tpu.memory_space<vmem>>, %arg4: memref<1x1x16x128xbf16, #tpu.memory_space<vmem>>, %arg5: memref<3x384x128xbf16, #tpu.memory_space<vmem>>, %arg6: memref<1x128xf32, #tpu.memory_space<vmem>>, %arg7: memref<1x16x16x128xbf16, #tpu.memory_space<vmem>>, %arg8: memref<1x16x128xf32, #tpu.memory_space<vmem>>, %arg9: memref<1x1x16x128xf32, #tpu.memory_space<vmem>>) attributes {dimension_semantics = [#tpu.dimension_semantics<parallel>, #tpu.dimension_semantics<parallel>], iteration_bounds = array<i64: 2, 1>, scalar_prefetch = 0 : i64, scratch_operands = 0 : i64, tpu.core_type = #tpu.core_type<tc>, window_params = [{transform_indices = @transform_0, window_bounds = array<i64: 1, 16, 16, 128>}, {transform_indices = @transform_1, window_bounds = array<i64: 1, 1, 16, 128>}, {transform_indices = @transform_2, window_bounds = array<i64: 1, 1, 16, 128>}, {pipeline_mode = #tpu.pipeline_mode<synchronous>, transform_indices = @transform_3, window_bounds = array<i64: 3, 384, 128>}, {pipeline_mode = #tpu.pipeline_mode<synchronous>, transform_indices = @transform_4, window_bounds = array<i64: 1, 128>}, {transform_indices = @transform_5, window_bounds = array<i64: 1, 16, 16, 128>}, {transform_indices = @transform_6, window_bounds = array<i64: 1, 16, 128>}, {transform_indices = @transform_7, window_bounds = array<i64: 1, 1, 16, 128>}]} {
    %c0 = arith.constant 0 : index
    %c0_0 = arith.constant 0 : index
    %c0_1 = arith.constant 0 : index
    %c0_2 = arith.constant 0 : index
    %0 = vector.load %arg3[%c0, %c0_0, %c0_1, %c0_2] : memref<1x1x16x128xbf16, #tpu.memory_space<vmem>>, vector<1x1x16x128xbf16>
    %1 = vector.shape_cast %0 : vector<1x1x16x128xbf16> to vector<1x16x128xbf16>
    %c0_i32 = arith.constant 0 : i32
    %2 = arith.cmpi sgt, %arg1, %c0_i32 : i32
    %3 = arith.extui %2 : i1 to i32
    %4 = arith.sitofp %3 : i32 to f32
    %5 = arith.truncf %4 : f32 to bf16
    %6 = vector.broadcast %5 : bf16 to vector<1x16x128xbf16>
    %7 = arith.mulf %1, %6 : vector<1x16x128xbf16>
    %c0_3 = arith.constant 0 : index
    %c0_4 = arith.constant 0 : index
    %c0_5 = arith.constant 0 : index
    %c0_6 = arith.constant 0 : index
    %8 = vector.load %arg4[%c0_3, %c0_4, %c0_5, %c0_6] : memref<1x1x16x128xbf16, #tpu.memory_space<vmem>>, vector<1x1x16x128xbf16>
    %9 = vector.shape_cast %8 : vector<1x1x16x128xbf16> to vector<1x16x128xbf16>
    %c0_i32_7 = arith.constant 0 : i32
    %10 = arith.cmpi slt, %arg1, %c0_i32_7 : i32
    %11 = arith.extui %10 : i1 to i32
    %12 = arith.sitofp %11 : i32 to f32
    %13 = arith.truncf %12 : f32 to bf16
    %14 = vector.broadcast %13 : bf16 to vector<1x16x128xbf16>
    %15 = arith.mulf %9, %14 : vector<1x16x128xbf16>
    %c0_8 = arith.constant 0 : index
    %c0_9 = arith.constant 0 : index
    %c0_10 = arith.constant 0 : index
    %c0_11 = arith.constant 0 : index
    %16 = vector.load %arg2[%c0_8, %c0_9, %c0_10, %c0_11] : memref<1x16x16x128xbf16, #tpu.memory_space<vmem>>, vector<1x16x16x128xbf16>
    %17 = vector.shape_cast %16 : vector<1x16x16x128xbf16> to vector<16x16x128xbf16>
    %18 = tpu.concatenate %7, %17, %15 in 0 : vector<1x16x128xbf16>, vector<16x16x128xbf16>, vector<1x16x128xbf16> -> vector<18x16x128xbf16>
    %cst = arith.constant 0.000000e+00 : bf16
    %19 = vector.broadcast %cst : bf16 to vector<18x1x128xbf16>
    %20 = vector.extract_strided_slice %18 {offsets = [0, 0, 0], sizes = [18, 15, 128], strides = [1, 1, 1]} : vector<18x16x128xbf16> to vector<18x15x128xbf16>
    %21 = tpu.concatenate %19, %20 in 1 : vector<18x1x128xbf16>, vector<18x15x128xbf16> -> vector<18x16x128xbf16>
    %22 = vector.extract_strided_slice %18 {offsets = [0, 1, 0], sizes = [18, 15, 128], strides = [1, 1, 1]} : vector<18x16x128xbf16> to vector<18x15x128xbf16>
    %23 = tpu.concatenate %22, %19 in 1 : vector<18x15x128xbf16>, vector<18x1x128xbf16> -> vector<18x16x128xbf16>
    %24 = tpu.concatenate %21, %18, %23 in 2 : vector<18x16x128xbf16>, vector<18x16x128xbf16>, vector<18x16x128xbf16> -> vector<18x16x384xbf16>
    %cst_12 = arith.constant 0.000000e+00 : f32
    %25 = vector.broadcast %cst_12 : f32 to vector<256x128xf32>
    %26 = vector.extract_strided_slice %24 {offsets = [0, 0, 0], sizes = [16, 16, 384], strides = [1, 1, 1]} : vector<18x16x384xbf16> to vector<16x16x384xbf16>
    %27 = vector.shape_cast %26 : vector<16x16x384xbf16> to vector<256x384xbf16>
    %c0_13 = arith.constant 0 : index
    %c0_14 = arith.constant 0 : index
    %c0_15 = arith.constant 0 : index
    %28 = vector.load %arg5[%c0_13, %c0_14, %c0_15] : memref<3x384x128xbf16, #tpu.memory_space<vmem>>, vector<1x384x128xbf16>
    %29 = vector.shape_cast %28 : vector<1x384x128xbf16> to vector<384x128xbf16>
    %cst_16 = arith.constant dense<0.000000e+00> : vector<256x128xf32>
    %30 = tpu.matmul %27, %29, %cst_16 {dimension_numbers = #tpu.dot_dimension_numbers<[1], [0], [0], [1], [0, 0, 1, 1], [], []>} : vector<256x384xbf16>, vector<384x128xbf16>, vector<256x128xf32> -> vector<256x128xf32>
    %31 = arith.addf %25, %30 : vector<256x128xf32>
    %32 = vector.extract_strided_slice %24 {offsets = [1, 0, 0], sizes = [16, 16, 384], strides = [1, 1, 1]} : vector<18x16x384xbf16> to vector<16x16x384xbf16>
    %33 = vector.shape_cast %32 : vector<16x16x384xbf16> to vector<256x384xbf16>
    %c1 = arith.constant 1 : index
    %c0_17 = arith.constant 0 : index
    %c0_18 = arith.constant 0 : index
    %34 = vector.load %arg5[%c1, %c0_17, %c0_18] : memref<3x384x128xbf16, #tpu.memory_space<vmem>>, vector<1x384x128xbf16>
    %35 = vector.shape_cast %34 : vector<1x384x128xbf16> to vector<384x128xbf16>
    %cst_19 = arith.constant dense<0.000000e+00> : vector<256x128xf32>
    %36 = tpu.matmul %33, %35, %cst_19 {dimension_numbers = #tpu.dot_dimension_numbers<[1], [0], [0], [1], [0, 0, 1, 1], [], []>} : vector<256x384xbf16>, vector<384x128xbf16>, vector<256x128xf32> -> vector<256x128xf32>
    %37 = arith.addf %31, %36 : vector<256x128xf32>
    %38 = vector.extract_strided_slice %24 {offsets = [2, 0, 0], sizes = [16, 16, 384], strides = [1, 1, 1]} : vector<18x16x384xbf16> to vector<16x16x384xbf16>
    %39 = vector.shape_cast %38 : vector<16x16x384xbf16> to vector<256x384xbf16>
    %c2 = arith.constant 2 : index
    %c0_20 = arith.constant 0 : index
    %c0_21 = arith.constant 0 : index
    %40 = vector.load %arg5[%c2, %c0_20, %c0_21] : memref<3x384x128xbf16, #tpu.memory_space<vmem>>, vector<1x384x128xbf16>
    %41 = vector.shape_cast %40 : vector<1x384x128xbf16> to vector<384x128xbf16>
    %cst_22 = arith.constant dense<0.000000e+00> : vector<256x128xf32>
    %42 = tpu.matmul %39, %41, %cst_22 {dimension_numbers = #tpu.dot_dimension_numbers<[1], [0], [0], [1], [0, 0, 1, 1], [], []>} : vector<256x384xbf16>, vector<384x128xbf16>, vector<256x128xf32> -> vector<256x128xf32>
    %43 = arith.addf %37, %42 : vector<256x128xf32>
    %c0_23 = arith.constant 0 : index
    %c0_24 = arith.constant 0 : index
    %44 = vector.load %arg6[%c0_23, %c0_24] : memref<1x128xf32, #tpu.memory_space<vmem>>, vector<1x128xf32>
    %45 = vector.shape_cast %44 : vector<1x128xf32> to vector<128xf32>
    %46 = vector.shape_cast %45 : vector<128xf32> to vector<1x128xf32>
    %47 = vector.broadcast %46 : vector<1x128xf32> to vector<256x128xf32>
    %48 = arith.addf %43, %47 : vector<256x128xf32>
    %cst_25 = arith.constant 0.000000e+00 : f32
    %49 = vector.broadcast %cst_25 : f32 to vector<256x128xf32>
    %50 = arith.maximumf %48, %49 : vector<256x128xf32>
    %51 = vector.shape_cast %50 : vector<256x128xf32> to vector<16x16x128xf32>
    %52 = arith.truncf %51 : vector<16x16x128xf32> to vector<16x16x128xbf16>
    %c0_26 = arith.constant 0 : index
    %c0_27 = arith.constant 0 : index
    %c0_28 = arith.constant 0 : index
    %c0_29 = arith.constant 0 : index
    %53 = vector.load %arg7[%c0_26, %c0_27, %c0_28, %c0_29] : memref<1x16x16x128xbf16, #tpu.memory_space<vmem>>, vector<1x16x16x128xbf16>
    %54 = vector.shape_cast %53 : vector<1x16x16x128xbf16> to vector<16x16x128xbf16>
    %55 = vector.shape_cast %52 : vector<16x16x128xbf16> to vector<1x16x16x128xbf16>
    tpu.vector_store %arg7[%c0_26, %c0_27, %c0_28, %c0_29], %55 {strides = array<i32>} : memref<1x16x16x128xbf16, #tpu.memory_space<vmem>>, vector<1x16x16x128xbf16>,
    %cst_30 = arith.constant dense<0.000000e+00> : vector<16x128xf32>
    %56 = vector.multi_reduction <add>, %51, %cst_30 [1] : vector<16x16x128xf32> to vector<16x128xf32>
    %cst_31 = arith.constant 6.250000e-02 : f32
    %57 = vector.broadcast %cst_31 : f32 to vector<16x128xf32>
    %58 = arith.mulf %56, %57 : vector<16x128xf32>
    %c0_32 = arith.constant 0 : index
    %c0_33 = arith.constant 0 : index
    %c0_34 = arith.constant 0 : index
    %59 = vector.load %arg8[%c0_32, %c0_33, %c0_34] : memref<1x16x128xf32, #tpu.memory_space<vmem>>, vector<1x16x128xf32>
    %60 = vector.shape_cast %59 : vector<1x16x128xf32> to vector<16x128xf32>
    %61 = vector.shape_cast %58 : vector<16x128xf32> to vector<1x16x128xf32>
    tpu.vector_store %arg8[%c0_32, %c0_33, %c0_34], %61 {strides = array<i32>} : memref<1x16x128xf32, #tpu.memory_space<vmem>>, vector<1x16x128xf32>,
    %cst_35 = arith.constant dense<0.000000e+00> : vector<16x128xf32>
    %62 = vector.multi_reduction <add>, %51, %cst_35 [0] : vector<16x16x128xf32> to vector<16x128xf32>
    %c0_36 = arith.constant 0 : index
    %c0_37 = arith.constant 0 : index
    %c0_38 = arith.constant 0 : index
    %c0_39 = arith.constant 0 : index
    %63 = vector.load %arg9[%c0_36, %c0_37, %c0_38, %c0_39] : memref<1x1x16x128xf32, #tpu.memory_space<vmem>>, vector<1x1x16x128xf32>
    %64 = vector.shape_cast %63 : vector<1x1x16x128xf32> to vector<16x128xf32>
    %65 = vector.shape_cast %62 : vector<16x128xf32> to vector<1x1x16x128xf32>
    tpu.vector_store %arg9[%c0_36, %c0_37, %c0_38, %c0_39], %65 {strides = array<i32>} : memref<1x1x16x128xf32, #tpu.memory_space<vmem>>, vector<1x1x16x128xf32>,
    return
  }
  func.func @transform_0(%arg0: i32, %arg1: i32) -> (i32, i32, i32, i32) {
    %c0_i32 = arith.constant 0 : i32
    %c0_i32_0 = arith.constant 0 : i32
    %c0_i32_1 = arith.constant 0 : i32
    return %arg0, %arg1, %c0_i32, %c0_i32_0 : i32, i32, i32, i32
  }
  func.func @transform_1(%arg0: i32, %arg1: i32) -> (i32, i32, i32, i32) {
    %c16_i32 = arith.constant 16 : i32
    %0 = arith.muli %arg1, %c16_i32 : i32
    %c1_i32 = arith.constant 1 : i32
    %1 = arith.subi %0, %c1_i32 : i32
    %c0_i32 = arith.constant 0 : i32
    %2 = arith.maxsi %1, %c0_i32 : i32
    %c0_i32_0 = arith.constant 0 : i32
    %c0_i32_1 = arith.constant 0 : i32
    %c0_i32_2 = arith.constant 0 : i32
    return %arg0, %2, %c0_i32_0, %c0_i32_1 : i32, i32, i32, i32
  }
  func.func @transform_2(%arg0: i32, %arg1: i32) -> (i32, i32, i32, i32) {
    %c1_i32 = arith.constant 1 : i32
    %0 = arith.addi %arg1, %c1_i32 : i32
    %c16_i32 = arith.constant 16 : i32
    %1 = arith.muli %0, %c16_i32 : i32
    %c15_i32 = arith.constant 15 : i32
    %2 = arith.minsi %1, %c15_i32 : i32
    %c0_i32 = arith.constant 0 : i32
    %c0_i32_0 = arith.constant 0 : i32
    %c0_i32_1 = arith.constant 0 : i32
    return %arg0, %2, %c0_i32, %c0_i32_0 : i32, i32, i32, i32
  }
  func.func @transform_3(%arg0: i32, %arg1: i32) -> (i32, i32, i32) {
    %c0_i32 = arith.constant 0 : i32
    %c0_i32_0 = arith.constant 0 : i32
    %c0_i32_1 = arith.constant 0 : i32
    %c0_i32_2 = arith.constant 0 : i32
    return %c0_i32, %c0_i32_0, %c0_i32_1 : i32, i32, i32
  }
  func.func @transform_4(%arg0: i32, %arg1: i32) -> (i32, i32) {
    %c0_i32 = arith.constant 0 : i32
    %c0_i32_0 = arith.constant 0 : i32
    %c0_i32_1 = arith.constant 0 : i32
    return %c0_i32, %c0_i32_0 : i32, i32
  }
  func.func @transform_5(%arg0: i32, %arg1: i32) -> (i32, i32, i32, i32) {
    %c0_i32 = arith.constant 0 : i32
    %c0_i32_0 = arith.constant 0 : i32
    %c0_i32_1 = arith.constant 0 : i32
    return %arg0, %arg1, %c0_i32, %c0_i32_0 : i32, i32, i32, i32
  }
  func.func @transform_6(%arg0: i32, %arg1: i32) -> (i32, i32, i32) {
    %c0_i32 = arith.constant 0 : i32
    %c0_i32_0 = arith.constant 0 : i32
    return %arg0, %arg1, %c0_i32 : i32, i32, i32
  }
  func.func @transform_7(%arg0: i32, %arg1: i32) -> (i32, i32, i32, i32) {
    %c0_i32 = arith.constant 0 : i32
    %c0_i32_0 = arith.constant 0 : i32
    %c0_i32_1 = arith.constant 0 : i32
    return %arg0, %arg1, %c0_i32, %c0_i32_0 : i32, i32, i32, i32
  }
}

module attributes {stable_mosaic.version = 11 : i64} {
  func.func @_conv2_spm_kernel(%arg0: i32, %arg1: i32, %arg2: memref<1x16x16x128xbf16, #tpu.memory_space<vmem>>, %arg3: memref<1x1x16x128xbf16, #tpu.memory_space<vmem>>, %arg4: memref<1x1x16x128xbf16, #tpu.memory_space<vmem>>, %arg5: memref<1x18x128xf32, #tpu.memory_space<vmem>>, %arg6: memref<1x16x128xf32, #tpu.memory_space<vmem>>, %arg7: memref<128x128xbf16, #tpu.memory_space<vmem>>, %arg8: memref<1x128xf32, #tpu.memory_space<vmem>>, %arg9: memref<3x384x128xbf16, #tpu.memory_space<vmem>>, %arg10: memref<1x128xf32, #tpu.memory_space<vmem>>, %arg11: memref<1x16x16x128xbf16, #tpu.memory_space<vmem>>, %arg12: memref<1x16x16x128xf32, #tpu.memory_space<vmem>>) attributes {dimension_semantics = [#tpu.dimension_semantics<parallel>, #tpu.dimension_semantics<parallel>], iteration_bounds = array<i64: 2, 1>, scalar_prefetch = 0 : i64, scratch_operands = 0 : i64, tpu.core_type = #tpu.core_type<tc>, window_params = [{transform_indices = @transform_0, window_bounds = array<i64: 1, 16, 16, 128>}, {transform_indices = @transform_1, window_bounds = array<i64: 1, 1, 16, 128>}, {transform_indices = @transform_2, window_bounds = array<i64: 1, 1, 16, 128>}, {transform_indices = @transform_3, window_bounds = array<i64: 1, 18, 128>}, {transform_indices = @transform_4, window_bounds = array<i64: 1, 16, 128>}, {pipeline_mode = #tpu.pipeline_mode<synchronous>, transform_indices = @transform_5, window_bounds = array<i64: 128, 128>}, {pipeline_mode = #tpu.pipeline_mode<synchronous>, transform_indices = @transform_6, window_bounds = array<i64: 1, 128>}, {pipeline_mode = #tpu.pipeline_mode<synchronous>, transform_indices = @transform_7, window_bounds = array<i64: 3, 384, 128>}, {pipeline_mode = #tpu.pipeline_mode<synchronous>, transform_indices = @transform_8, window_bounds = array<i64: 1, 128>}, {transform_indices = @transform_9, window_bounds = array<i64: 1, 16, 16, 128>}, {transform_indices = @transform_10, window_bounds = array<i64: 1, 16, 16, 128>}]} {
    %c0 = arith.constant 0 : index
    %c0_0 = arith.constant 0 : index
    %c0_1 = arith.constant 0 : index
    %c0_2 = arith.constant 0 : index
    %0 = vector.load %arg3[%c0, %c0_0, %c0_1, %c0_2] : memref<1x1x16x128xbf16, #tpu.memory_space<vmem>>, vector<1x1x16x128xbf16>
    %1 = vector.shape_cast %0 : vector<1x1x16x128xbf16> to vector<1x16x128xbf16>
    %c0_i32 = arith.constant 0 : i32
    %2 = arith.cmpi sgt, %arg1, %c0_i32 : i32
    %3 = arith.extui %2 : i1 to i32
    %4 = arith.sitofp %3 : i32 to f32
    %5 = arith.truncf %4 : f32 to bf16
    %6 = vector.broadcast %5 : bf16 to vector<1x16x128xbf16>
    %7 = arith.mulf %1, %6 : vector<1x16x128xbf16>
    %c0_3 = arith.constant 0 : index
    %c0_4 = arith.constant 0 : index
    %c0_5 = arith.constant 0 : index
    %c0_6 = arith.constant 0 : index
    %8 = vector.load %arg4[%c0_3, %c0_4, %c0_5, %c0_6] : memref<1x1x16x128xbf16, #tpu.memory_space<vmem>>, vector<1x1x16x128xbf16>
    %9 = vector.shape_cast %8 : vector<1x1x16x128xbf16> to vector<1x16x128xbf16>
    %c0_i32_7 = arith.constant 0 : i32
    %10 = arith.cmpi slt, %arg1, %c0_i32_7 : i32
    %11 = arith.extui %10 : i1 to i32
    %12 = arith.sitofp %11 : i32 to f32
    %13 = arith.truncf %12 : f32 to bf16
    %14 = vector.broadcast %13 : bf16 to vector<1x16x128xbf16>
    %15 = arith.mulf %9, %14 : vector<1x16x128xbf16>
    %c0_8 = arith.constant 0 : index
    %c0_9 = arith.constant 0 : index
    %c0_10 = arith.constant 0 : index
    %c0_11 = arith.constant 0 : index
    %16 = vector.load %arg2[%c0_8, %c0_9, %c0_10, %c0_11] : memref<1x16x16x128xbf16, #tpu.memory_space<vmem>>, vector<1x16x16x128xbf16>
    %17 = vector.shape_cast %16 : vector<1x16x16x128xbf16> to vector<16x16x128xbf16>
    %18 = tpu.concatenate %7, %17, %15 in 0 : vector<1x16x128xbf16>, vector<16x16x128xbf16>, vector<1x16x128xbf16> -> vector<18x16x128xbf16>
    %c16_i32 = arith.constant 16 : i32
    %19 = arith.muli %arg1, %c16_i32 : i32
    %20 = tpu.assume_multiple %19, 16 : i32
    %c0_12 = arith.constant 0 : index
    %21 = arith.index_cast %20 : i32 to index
    %c0_13 = arith.constant 0 : index
    %22 = vector.load %arg5[%c0_12, %21, %c0_13] : memref<1x18x128xf32, #tpu.memory_space<vmem>>, vector<1x18x128xf32>
    %23 = vector.shape_cast %22 : vector<1x18x128xf32> to vector<18x128xf32>
    %24 = vector.shape_cast %23 : vector<18x128xf32> to vector<18x1x128xf32>
    %c0_14 = arith.constant 0 : index
    %c0_15 = arith.constant 0 : index
    %c0_16 = arith.constant 0 : index
    %25 = vector.load %arg6[%c0_14, %c0_15, %c0_16] : memref<1x16x128xf32, #tpu.memory_space<vmem>>, vector<1x16x128xf32>
    %26 = vector.shape_cast %25 : vector<1x16x128xf32> to vector<16x128xf32>
    %27 = vector.shape_cast %26 : vector<16x128xf32> to vector<1x16x128xf32>
    %28 = vector.broadcast %24 : vector<18x1x128xf32> to vector<18x16x128xf32>
    %29 = vector.broadcast %27 : vector<1x16x128xf32> to vector<18x16x128xf32>
    %30 = arith.addf %28, %29 : vector<18x16x128xf32>
    %cst = arith.constant 0.000000e+00 : f32
    %31 = vector.broadcast %cst : f32 to vector<18x16x128xf32>
    %32 = arith.maximumf %30, %31 : vector<18x16x128xf32>
    %33 = vector.shape_cast %32 : vector<18x16x128xf32> to vector<288x128xf32>
    %34 = arith.truncf %33 : vector<288x128xf32> to vector<288x128xbf16>
    %c0_17 = arith.constant 0 : index
    %c0_18 = arith.constant 0 : index
    %35 = vector.load %arg7[%c0_17, %c0_18] : memref<128x128xbf16, #tpu.memory_space<vmem>>, vector<128x128xbf16>
    %cst_19 = arith.constant dense<0.000000e+00> : vector<288x128xf32>
    %36 = tpu.matmul %34, %35, %cst_19 {dimension_numbers = #tpu.dot_dimension_numbers<[1], [0], [0], [1], [0, 0, 1, 1], [], []>} : vector<288x128xbf16>, vector<128x128xbf16>, vector<288x128xf32> -> vector<288x128xf32>
    %c0_20 = arith.constant 0 : index
    %c0_21 = arith.constant 0 : index
    %37 = vector.load %arg8[%c0_20, %c0_21] : memref<1x128xf32, #tpu.memory_space<vmem>>, vector<1x128xf32>
    %38 = vector.shape_cast %37 : vector<1x128xf32> to vector<128xf32>
    %39 = vector.shape_cast %38 : vector<128xf32> to vector<1x128xf32>
    %40 = vector.broadcast %39 : vector<1x128xf32> to vector<288x128xf32>
    %41 = arith.addf %36, %40 : vector<288x128xf32>
    %cst_22 = arith.constant 0.000000e+00 : f32
    %42 = vector.broadcast %cst_22 : f32 to vector<288x128xf32>
    %43 = arith.subf %42, %41 : vector<288x128xf32>
    %44 = math.exp %43 : vector<288x128xf32>
    %cst_23 = arith.constant 1.000000e+00 : f32
    %45 = vector.broadcast %cst_23 : f32 to vector<288x128xf32>
    %46 = arith.addf %45, %44 : vector<288x128xf32>
    %47 = tpu.reciprocal %46 {approx = true} : vector<288x128xf32> -> vector<288x128xf32>
    %48 = vector.shape_cast %18 : vector<18x16x128xbf16> to vector<288x128xbf16>
    %49 = arith.truncf %47 : vector<288x128xf32> to vector<288x128xbf16>
    %50 = arith.mulf %48, %49 : vector<288x128xbf16>
    %51 = vector.shape_cast %50 : vector<288x128xbf16> to vector<18x16x128xbf16>
    %cst_24 = arith.constant 0.000000e+00 : bf16
    %52 = vector.broadcast %cst_24 : bf16 to vector<18x1x128xbf16>
    %53 = vector.extract_strided_slice %51 {offsets = [0, 0, 0], sizes = [18, 15, 128], strides = [1, 1, 1]} : vector<18x16x128xbf16> to vector<18x15x128xbf16>
    %54 = tpu.concatenate %52, %53 in 1 : vector<18x1x128xbf16>, vector<18x15x128xbf16> -> vector<18x16x128xbf16>
    %55 = vector.extract_strided_slice %51 {offsets = [0, 1, 0], sizes = [18, 15, 128], strides = [1, 1, 1]} : vector<18x16x128xbf16> to vector<18x15x128xbf16>
    %56 = tpu.concatenate %55, %52 in 1 : vector<18x15x128xbf16>, vector<18x1x128xbf16> -> vector<18x16x128xbf16>
    %57 = tpu.concatenate %54, %51, %56 in 2 : vector<18x16x128xbf16>, vector<18x16x128xbf16>, vector<18x16x128xbf16> -> vector<18x16x384xbf16>
    %cst_25 = arith.constant 0.000000e+00 : f32
    %58 = vector.broadcast %cst_25 : f32 to vector<256x128xf32>
    %59 = vector.extract_strided_slice %57 {offsets = [0, 0, 0], sizes = [16, 16, 384], strides = [1, 1, 1]} : vector<18x16x384xbf16> to vector<16x16x384xbf16>
    %60 = vector.shape_cast %59 : vector<16x16x384xbf16> to vector<256x384xbf16>
    %c0_26 = arith.constant 0 : index
    %c0_27 = arith.constant 0 : index
    %c0_28 = arith.constant 0 : index
    %61 = vector.load %arg9[%c0_26, %c0_27, %c0_28] : memref<3x384x128xbf16, #tpu.memory_space<vmem>>, vector<1x384x128xbf16>
    %62 = vector.shape_cast %61 : vector<1x384x128xbf16> to vector<384x128xbf16>
    %cst_29 = arith.constant dense<0.000000e+00> : vector<256x128xf32>
    %63 = tpu.matmul %60, %62, %cst_29 {dimension_numbers = #tpu.dot_dimension_numbers<[1], [0], [0], [1], [0, 0, 1, 1], [], []>} : vector<256x384xbf16>, vector<384x128xbf16>, vector<256x128xf32> -> vector<256x128xf32>
    %64 = arith.addf %58, %63 : vector<256x128xf32>
    %65 = vector.extract_strided_slice %57 {offsets = [1, 0, 0], sizes = [16, 16, 384], strides = [1, 1, 1]} : vector<18x16x384xbf16> to vector<16x16x384xbf16>
    %66 = vector.shape_cast %65 : vector<16x16x384xbf16> to vector<256x384xbf16>
    %c1 = arith.constant 1 : index
    %c0_30 = arith.constant 0 : index
    %c0_31 = arith.constant 0 : index
    %67 = vector.load %arg9[%c1, %c0_30, %c0_31] : memref<3x384x128xbf16, #tpu.memory_space<vmem>>, vector<1x384x128xbf16>
    %68 = vector.shape_cast %67 : vector<1x384x128xbf16> to vector<384x128xbf16>
    %cst_32 = arith.constant dense<0.000000e+00> : vector<256x128xf32>
    %69 = tpu.matmul %66, %68, %cst_32 {dimension_numbers = #tpu.dot_dimension_numbers<[1], [0], [0], [1], [0, 0, 1, 1], [], []>} : vector<256x384xbf16>, vector<384x128xbf16>, vector<256x128xf32> -> vector<256x128xf32>
    %70 = arith.addf %64, %69 : vector<256x128xf32>
    %71 = vector.extract_strided_slice %57 {offsets = [2, 0, 0], sizes = [16, 16, 384], strides = [1, 1, 1]} : vector<18x16x384xbf16> to vector<16x16x384xbf16>
    %72 = vector.shape_cast %71 : vector<16x16x384xbf16> to vector<256x384xbf16>
    %c2 = arith.constant 2 : index
    %c0_33 = arith.constant 0 : index
    %c0_34 = arith.constant 0 : index
    %73 = vector.load %arg9[%c2, %c0_33, %c0_34] : memref<3x384x128xbf16, #tpu.memory_space<vmem>>, vector<1x384x128xbf16>
    %74 = vector.shape_cast %73 : vector<1x384x128xbf16> to vector<384x128xbf16>
    %cst_35 = arith.constant dense<0.000000e+00> : vector<256x128xf32>
    %75 = tpu.matmul %72, %74, %cst_35 {dimension_numbers = #tpu.dot_dimension_numbers<[1], [0], [0], [1], [0, 0, 1, 1], [], []>} : vector<256x384xbf16>, vector<384x128xbf16>, vector<256x128xf32> -> vector<256x128xf32>
    %76 = arith.addf %70, %75 : vector<256x128xf32>
    %c0_36 = arith.constant 0 : index
    %c0_37 = arith.constant 0 : index
    %77 = vector.load %arg10[%c0_36, %c0_37] : memref<1x128xf32, #tpu.memory_space<vmem>>, vector<1x128xf32>
    %78 = vector.shape_cast %77 : vector<1x128xf32> to vector<128xf32>
    %79 = vector.shape_cast %78 : vector<128xf32> to vector<1x128xf32>
    %80 = vector.broadcast %79 : vector<1x128xf32> to vector<256x128xf32>
    %81 = arith.addf %76, %80 : vector<256x128xf32>
    %82 = vector.shape_cast %81 : vector<256x128xf32> to vector<16x16x128xf32>
    %c0_38 = arith.constant 0 : index
    %c0_39 = arith.constant 0 : index
    %c0_40 = arith.constant 0 : index
    %c0_41 = arith.constant 0 : index
    %83 = vector.load %arg11[%c0_38, %c0_39, %c0_40, %c0_41] : memref<1x16x16x128xbf16, #tpu.memory_space<vmem>>, vector<1x16x16x128xbf16>
    %84 = vector.shape_cast %83 : vector<1x16x16x128xbf16> to vector<16x16x128xbf16>
    %85 = arith.extf %84 : vector<16x16x128xbf16> to vector<16x16x128xf32>
    %86 = arith.addf %82, %85 : vector<16x16x128xf32>
    %cst_42 = arith.constant 0.000000e+00 : f32
    %87 = vector.broadcast %cst_42 : f32 to vector<16x16x128xf32>
    %88 = arith.maximumf %86, %87 : vector<16x16x128xf32>
    %c0_43 = arith.constant 0 : index
    %c0_44 = arith.constant 0 : index
    %c0_45 = arith.constant 0 : index
    %c0_46 = arith.constant 0 : index
    %89 = vector.load %arg12[%c0_43, %c0_44, %c0_45, %c0_46] : memref<1x16x16x128xf32, #tpu.memory_space<vmem>>, vector<1x16x16x128xf32>
    %90 = vector.shape_cast %89 : vector<1x16x16x128xf32> to vector<16x16x128xf32>
    %91 = vector.shape_cast %88 : vector<16x16x128xf32> to vector<1x16x16x128xf32>
    tpu.vector_store %arg12[%c0_43, %c0_44, %c0_45, %c0_46], %91 {strides = array<i32>} : memref<1x16x16x128xf32, #tpu.memory_space<vmem>>, vector<1x16x16x128xf32>,
    return
  }
  func.func @transform_0(%arg0: i32, %arg1: i32) -> (i32, i32, i32, i32) {
    %c0_i32 = arith.constant 0 : i32
    %c0_i32_0 = arith.constant 0 : i32
    %c0_i32_1 = arith.constant 0 : i32
    return %arg0, %arg1, %c0_i32, %c0_i32_0 : i32, i32, i32, i32
  }
  func.func @transform_1(%arg0: i32, %arg1: i32) -> (i32, i32, i32, i32) {
    %c16_i32 = arith.constant 16 : i32
    %0 = arith.muli %arg1, %c16_i32 : i32
    %c1_i32 = arith.constant 1 : i32
    %1 = arith.subi %0, %c1_i32 : i32
    %c0_i32 = arith.constant 0 : i32
    %2 = arith.maxsi %1, %c0_i32 : i32
    %c0_i32_0 = arith.constant 0 : i32
    %c0_i32_1 = arith.constant 0 : i32
    %c0_i32_2 = arith.constant 0 : i32
    return %arg0, %2, %c0_i32_0, %c0_i32_1 : i32, i32, i32, i32
  }
  func.func @transform_2(%arg0: i32, %arg1: i32) -> (i32, i32, i32, i32) {
    %c1_i32 = arith.constant 1 : i32
    %0 = arith.addi %arg1, %c1_i32 : i32
    %c16_i32 = arith.constant 16 : i32
    %1 = arith.muli %0, %c16_i32 : i32
    %c15_i32 = arith.constant 15 : i32
    %2 = arith.minsi %1, %c15_i32 : i32
    %c0_i32 = arith.constant 0 : i32
    %c0_i32_0 = arith.constant 0 : i32
    %c0_i32_1 = arith.constant 0 : i32
    return %arg0, %2, %c0_i32, %c0_i32_0 : i32, i32, i32, i32
  }
  func.func @transform_3(%arg0: i32, %arg1: i32) -> (i32, i32, i32) {
    %c0_i32 = arith.constant 0 : i32
    %c0_i32_0 = arith.constant 0 : i32
    %c0_i32_1 = arith.constant 0 : i32
    return %arg0, %c0_i32, %c0_i32_0 : i32, i32, i32
  }
  func.func @transform_4(%arg0: i32, %arg1: i32) -> (i32, i32, i32) {
    %c0_i32 = arith.constant 0 : i32
    %c0_i32_0 = arith.constant 0 : i32
    %c0_i32_1 = arith.constant 0 : i32
    return %arg0, %c0_i32, %c0_i32_0 : i32, i32, i32
  }
  func.func @transform_5(%arg0: i32, %arg1: i32) -> (i32, i32) {
    %c0_i32 = arith.constant 0 : i32
    %c0_i32_0 = arith.constant 0 : i32
    %c0_i32_1 = arith.constant 0 : i32
    return %c0_i32, %c0_i32_0 : i32, i32
  }
  func.func @transform_6(%arg0: i32, %arg1: i32) -> (i32, i32) {
    %c0_i32 = arith.constant 0 : i32
    %c0_i32_0 = arith.constant 0 : i32
    %c0_i32_1 = arith.constant 0 : i32
    return %c0_i32, %c0_i32_0 : i32, i32
  }
  func.func @transform_7(%arg0: i32, %arg1: i32) -> (i32, i32, i32) {
    %c0_i32 = arith.constant 0 : i32
    %c0_i32_0 = arith.constant 0 : i32
    %c0_i32_1 = arith.constant 0 : i32
    %c0_i32_2 = arith.constant 0 : i32
    return %c0_i32, %c0_i32_0, %c0_i32_1 : i32, i32, i32
  }
  func.func @transform_8(%arg0: i32, %arg1: i32) -> (i32, i32) {
    %c0_i32 = arith.constant 0 : i32
    %c0_i32_0 = arith.constant 0 : i32
    %c0_i32_1 = arith.constant 0 : i32
    return %c0_i32, %c0_i32_0 : i32, i32
  }
  func.func @transform_9(%arg0: i32, %arg1: i32) -> (i32, i32, i32, i32) {
    %c0_i32 = arith.constant 0 : i32
    %c0_i32_0 = arith.constant 0 : i32
    %c0_i32_1 = arith.constant 0 : i32
    return %arg0, %arg1, %c0_i32, %c0_i32_0 : i32, i32, i32, i32
  }
  func.func @transform_10(%arg0: i32, %arg1: i32) -> (i32, i32, i32, i32) {
    %c0_i32 = arith.constant 0 : i32
    %c0_i32_0 = arith.constant 0 : i32
    %c0_i32_1 = arith.constant 0 : i32
    return %arg0, %arg1, %c0_i32, %c0_i32_0 : i32, i32, i32, i32
  }
}

</mosaic_0001>

<llo_original>
// kernel: basic_block_forward.2
$region0: #{basic_block_forward.2}
  #allocation0 [shape = 'u32[]', space=smem, size = 0x4, offset = 0x4, fixed_abs, tag = 'smem constant byte address 0x4 - core index']
  #allocation1 [shape = 'u32[144,128]{1,0:T(1,128)}', space=vmem, size = 0x12000, scoped, tag = 'internal scratch']
  %s0 = inlined_call_operand.vmem [shape: bf16[2,16,16,128], index: 0, kind: input, shape index: {}, may-alias: {0,1,2}]
  %s1 = inlined_call_operand.vmem [shape: bf16[2,16,16,128], index: 1, kind: input, shape index: {}, may-alias: {0,1,2}]
  %s2 = inlined_call_operand.vmem [shape: bf16[2,16,16,128], index: 2, kind: input, shape index: {}, may-alias: {0,1,2}]
  %s3 = inlined_call_operand.vmem [shape: bf16[3,384,128], index: 3, kind: input, shape index: {}]
  %s4 = inlined_call_operand.vmem [shape: f32[1,128], index: 4, kind: input, shape index: {}]
  %s5 = inlined_call_operand.vmem [shape: bf16[2,16,16,128], index: 5, kind: output, shape index: {0}]
  %s6 = inlined_call_operand.vmem [shape: f32[2,16,128], index: 6, kind: output, shape index: {1}]
  %s7 = inlined_call_operand.vmem [shape: f32[2,1,16,128], index: 7, kind: output, shape index: {2}]
  %8 = xla_tuple %s5, %s6, %s7
  %s9 = sld [smem:[#allocation0]]
  $region69: #{basic_block_forward.2} parent=0
    _
  %s11 = ssub.s32 1, %s9
  %s12 = scalar_select 0, %s11, %s9
  loop: start=0, step=1, limit=4
  $region2: #{basic_block_forward.2} parent=0 // loop_pre_header
    _
  $region3: #{basic_block_forward.2} parent=0 // loop_header
    %s14 = sphi 0, %s18
    %p15 = scmp.ge.s32.totalorder %s14, 4
    %s21 = sphi 0, %s33
    %s22 = sphi 0, %s29
    %s23 = sphi 0, %s21
    %s24 = sphi 0, %s22
    %s25 = sphi 0, %s23
    %s26 = sphi 0, %s24
    %s38 = sphi 0, %s40
    %s41 = sphi 0, %s38
    %s42 = sphi 0, %s41
    %s58 = sphi 0, %s42
    %s74 = sphi 0, %s76
    %s77 = sphi 0, %s74
    %s78 = sphi 0, %s77
    %s94 = sphi 0, %s78
    %s110 = sphi 0, %s112
    %s113 = sphi 0, %s110
    %s114 = sphi 0, %s113
    %s130 = sphi 0, %s114
    %s134 = sphi 0, %s134
    %s136 = sphi 0, %s134
    %s137 = sphi 0, %s136
    %s151 = sphi 0, %s137
    %s155 = sphi 0, %s155
    %s157 = sphi 0, %s155
    %s158 = sphi 0, %s157
    %s172 = sphi 0, %s158
    %s180 = sphi 0, %s182
    %s183 = sphi 0, %s180
    %s184 = sphi 0, %s183
    %s200 = sphi 0, %s184
    %s208 = sphi 0, %s210
    %s211 = sphi 0, %s208
    %s212 = sphi 0, %s211
    %s228 = sphi 0, %s212
    %s236 = sphi 0, %s238
    %s239 = sphi 0, %s236
    %s240 = sphi 0, %s239
    %s256 = sphi 0, %s240
  $region4: #{basic_block_forward.2} parent=0 // loop_header_branch
    %17 = sbr.rel (%p15) target = $region8
  $region5: #{basic_block_forward.2} parent=0 // loop_body
    %s19 = ssub.s32 %s14, 1
    %s20 = ssub.s32 %s14, 2
    %s27 = sadd.s32 1, %s22
    %p28 = scmp.ge.s32.totalorder %s27, 1
    %s29 = scalar_select %p28, 0, %s27
    %s30 = sadd.s32 1, %s21
    %s31 = scalar_select %p28, %s30, %s21
    %p32 = scmp.ge.s32.totalorder %s31, 2
    %s33 = scalar_select %p32, 0, %s31
    %s34 = ssub.s32 %s21, %s33
    %s35 = ssub.s32 %s22, %s29
    %s36 = sor.u32 %s34, %s35
    %p37 = scmp.eq.s32.totalorder %s36, 0
    %s39 = sadd.s32 %s38, 1
    %s40 = scalar_select %p37, %s38, %s39
    %p43 = pneg %p37
    %p44 = scmp.eq.s32.totalorder %s14, 1
    %p45 = por %p43, %p44
    %p46 = scmp.ne.s32.totalorder %s38, %s41
    %p47 = scmp.eq.s32.totalorder %s14, 0
    %p48 = por %p46, %p47
    %p49 = scmp.ne.s32.totalorder %s38, %s41
    %p50 = scmp.eq.s32.totalorder %s19, 1
    %p51 = por %p49, %p50
    %p52 = scmp.ne.s32.totalorder %s41, %s42
    %p53 = scmp.eq.s32.totalorder %s19, 0
    %p54 = por %p52, %p53
    %p55 = scmp.ne.s32.totalorder %s41, %s42
    %p56 = scmp.eq.s32.totalorder %s20, 1
    %p57 = por %p55, %p56
    %p59 = scmp.ne.s32.totalorder %s42, %s58
    %p60 = scmp.eq.s32.totalorder %s20, 0
    %p61 = por %p59, %p60
    %s62 = smul.u32 %s22, 16
    %s63 = ssub.s32 %s62, 1
    %p64 = scmp.gt.s32.totalorder %s63, 0
    %s65 = scalar_select %p64, %s63, 0
    %s66 = smul.u32 %s29, 16
    %s67 = ssub.s32 %s66, 1
    %p68 = scmp.gt.s32.totalorder %s67, 0
    %s69 = scalar_select %p68, %s67, 0
    %s70 = ssub.s32 %s21, %s33
    %s71 = ssub.s32 %s65, %s69
    %s72 = sor.u32 %s70, %s71
    %p73 = scmp.eq.s32.totalorder %s72, 0
    %s75 = sadd.s32 %s74, 1
    %s76 = scalar_select %p73, %s74, %s75
    %p79 = pneg %p73
    %p80 = scmp.eq.s32.totalorder %s14, 1
    %p81 = por %p79, %p80
    %p82 = scmp.ne.s32.totalorder %s74, %s77
    %p83 = scmp.eq.s32.totalorder %s14, 0
    %p84 = por %p82, %p83
    %p85 = scmp.ne.s32.totalorder %s74, %s77
    %p86 = scmp.eq.s32.totalorder %s19, 1
    %p87 = por %p85, %p86
    %p88 = scmp.ne.s32.totalorder %s77, %s78
    %p89 = scmp.eq.s32.totalorder %s19, 0
    %p90 = por %p88, %p89
    %p91 = scmp.ne.s32.totalorder %s77, %s78
    %p92 = scmp.eq.s32.totalorder %s20, 1
    %p93 = por %p91, %p92
    %p95 = scmp.ne.s32.totalorder %s78, %s94
    %p96 = scmp.eq.s32.totalorder %s20, 0
    %p97 = por %p95, %p96
    %s98 = sadd.s32 %s22, 1
    %s99 = smul.u32 %s98, 16
    %p100 = scmp.lt.s32.totalorder %s99, 15
    %s101 = scalar_select %p100, %s99, 15
    %s102 = sadd.s32 %s29, 1
    %s103 = smul.u32 %s102, 16
    %p104 = scmp.lt.s32.totalorder %s103, 15
    %s105 = scalar_select %p104, %s103, 15
    %s106 = ssub.s32 %s21, %s33
    %s107 = ssub.s32 %s101, %s105
    %s108 = sor.u32 %s106, %s107
    %p109 = scmp.eq.s32.totalorder %s108, 0
    %s111 = sadd.s32 %s110, 1
    %s112 = scalar_select %p109, %s110, %s111
    %p115 = pneg %p109
    %p116 = scmp.eq.s32.totalorder %s14, 1
    %p117 = por %p115, %p116
    %p118 = scmp.ne.s32.totalorder %s110, %s113
    %p119 = scmp.eq.s32.totalorder %s14, 0
    %p120 = por %p118, %p119
    %p121 = scmp.ne.s32.totalorder %s110, %s113
    %p122 = scmp.eq.s32.totalorder %s19, 1
    %p123 = por %p121, %p122
    %p124 = scmp.ne.s32.totalorder %s113, %s114
    %p125 = scmp.eq.s32.totalorder %s19, 0
    %p126 = por %p124, %p125
    %p127 = scmp.ne.s32.totalorder %s113, %s114
    %p128 = scmp.eq.s32.totalorder %s20, 1
    %p129 = por %p127, %p128
    %p131 = scmp.ne.s32.totalorder %s114, %s130
    %p132 = scmp.eq.s32.totalorder %s20, 0
    %p133 = por %p131, %p132
    %s135 = sadd.s32 %s134, 1
    %p138 = scmp.eq.s32.totalorder %s14, 1
    %p139 = scmp.ne.s32.totalorder %s134, %s136
    %p140 = scmp.eq.s32.totalorder %s14, 0
    %p141 = por %p139, %p140
    %p142 = scmp.ne.s32.totalorder %s134, %s136
    %p143 = scmp.eq.s32.totalorder %s19, 1
    %p144 = por %p142, %p143
    %p145 = scmp.ne.s32.totalorder %s136, %s137
    %p146 = scmp.eq.s32.totalorder %s19, 0
    %p147 = por %p145, %p146
    %p148 = scmp.ne.s32.totalorder %s136, %s137
    %p149 = scmp.eq.s32.totalorder %s20, 1
    %p150 = por %p148, %p149
    %p152 = scmp.ne.s32.totalorder %s137, %s151
    %p153 = scmp.eq.s32.totalorder %s20, 0
    %p154 = por %p152, %p153
    %s156 = sadd.s32 %s155, 1
    %p159 = scmp.eq.s32.totalorder %s14, 1
    %p160 = scmp.ne.s32.totalorder %s155, %s157
    %p161 = scmp.eq.s32.totalorder %s14, 0
    %p162 = por %p160, %p161
    %p163 = scmp.ne.s32.totalorder %s155, %s157
    %p164 = scmp.eq.s32.totalorder %s19, 1
    %p165 = por %p163, %p164
    %p166 = scmp.ne.s32.totalorder %s157, %s158
    %p167 = scmp.eq.s32.totalorder %s19, 0
    %p168 = por %p166, %p167
    %p169 = scmp.ne.s32.totalorder %s157, %s158
    %p170 = scmp.eq.s32.totalorder %s20, 1
    %p171 = por %p169, %p170
    %p173 = scmp.ne.s32.totalorder %s158, %s172
    %p174 = scmp.eq.s32.totalorder %s20, 0
    %p175 = por %p173, %p174
    %s176 = ssub.s32 %s21, %s33
    %s177 = ssub.s32 %s22, %s29
    %s178 = sor.u32 %s176, %s177
    %p179 = scmp.eq.s32.totalorder %s178, 0
    %s181 = sadd.s32 %s180, 1
    %s182 = scalar_select %p179, %s180, %s181
    %p185 = pneg %p179
    %p186 = scmp.eq.s32.totalorder %s14, 1
    %p187 = por %p185, %p186
    %p188 = scmp.ne.s32.totalorder %s180, %s183
    %p189 = scmp.eq.s32.totalorder %s14, 0
    %p190 = por %p188, %p189
    %p191 = scmp.ne.s32.totalorder %s180, %s183
    %p192 = scmp.eq.s32.totalorder %s19, 1
    %p193 = por %p191, %p192
    %p194 = scmp.ne.s32.totalorder %s183, %s184
    %p195 = scmp.eq.s32.totalorder %s19, 0
    %p196 = por %p194, %p195
    %p197 = scmp.ne.s32.totalorder %s183, %s184
    %p198 = scmp.eq.s32.totalorder %s20, 1
    %p199 = por %p197, %p198
    %p201 = scmp.ne.s32.totalorder %s184, %s200
    %p202 = scmp.eq.s32.totalorder %s20, 0
    %p203 = por %p201, %p202
    %s204 = ssub.s32 %s21, %s33
    %s205 = ssub.s32 %s22, %s29
    %s206 = sor.u32 %s204, %s205
    %p207 = scmp.eq.s32.totalorder %s206, 0
    %s209 = sadd.s32 %s208, 1
    %s210 = scalar_select %p207, %s208, %s209
    %p213 = pneg %p207
    %p214 = scmp.eq.s32.totalorder %s14, 1
    %p215 = por %p213, %p214
    %p216 = scmp.ne.s32.totalorder %s208, %s211
    %p217 = scmp.eq.s32.totalorder %s14, 0
    %p218 = por %p216, %p217
    %p219 = scmp.ne.s32.totalorder %s208, %s211
    %p220 = scmp.eq.s32.totalorder %s19, 1
    %p221 = por %p219, %p220
    %p222 = scmp.ne.s32.totalorder %s211, %s212
    %p223 = scmp.eq.s32.totalorder %s19, 0
    %p224 = por %p222, %p223
    %p225 = scmp.ne.s32.totalorder %s211, %s212
    %p226 = scmp.eq.s32.totalorder %s20, 1
    %p227 = por %p225, %p226
    %p229 = scmp.ne.s32.totalorder %s212, %s228
    %p230 = scmp.eq.s32.totalorder %s20, 0
    %p231 = por %p229, %p230
    %s232 = ssub.s32 %s21, %s33
    %s233 = ssub.s32 %s22, %s29
    %s234 = sor.u32 %s232, %s233
    %p235 = scmp.eq.s32.totalorder %s234, 0
    %s237 = sadd.s32 %s236, 1
    %s238 = scalar_select %p235, %s236, %s237
    %p241 = pneg %p235
    %p242 = scmp.eq.s32.totalorder %s14, 1
    %p243 = por %p241, %p242
    %p244 = scmp.ne.s32.totalorder %s236, %s239
    %p245 = scmp.eq.s32.totalorder %s14, 0
    %p246 = por %p244, %p245
    %p247 = scmp.ne.s32.totalorder %s236, %s239
    %p248 = scmp.eq.s32.totalorder %s19, 1
    %p249 = por %p247, %p248
    %p250 = scmp.ne.s32.totalorder %s239, %s240
    %p251 = scmp.eq.s32.totalorder %s19, 0
    %p252 = por %p250, %p251
    %p253 = scmp.ne.s32.totalorder %s239, %s240
    %p254 = scmp.eq.s32.totalorder %s20, 1
    %p255 = por %p253, %p254
    %p257 = scmp.ne.s32.totalorder %s240, %s256
    %p258 = scmp.eq.s32.totalorder %s20, 0
    %p259 = por %p257, %p258
    %p260 = scmp.le.s32.totalorder 1, %s14
    %p261 = scmp.lt.s32.totalorder %s14, 3
    %p262 = pnand %p260, %p261
    %p263 = pneg %p262
    // Predicated region
    $region9: #{basic_block_forward.2} parent=5 // pred_check
      _
    $region10: #{basic_block_forward.2} parent=5 // pred_check_branch
      %265 = sbr.rel (%p262) target = $region12
    $region11: #{basic_block_forward.2} parent=5 // pred_region
      %s266 = ssub.s32 %s14, 1
      // Predicated region
      $region13: #{basic_block_forward.2} parent=11 // pred_check
        %p267 = pneg %p147
      $region14: #{basic_block_forward.2} parent=11 // pred_check_branch
        %269 = sbr.rel (%p267) target = $region16
      $region15: #{basic_block_forward.2} parent=11 // pred_region
        _
      $region16: #{basic_block_forward.2} parent=11 // pred_fallthru
        _
      // Predicated region
      $region17: #{basic_block_forward.2} parent=11 // pred_check
        %p270 = pneg %p168
      $region18: #{basic_block_forward.2} parent=11 // pred_check_branch
        %272 = sbr.rel (%p270) target = $region20
      $region19: #{basic_block_forward.2} parent=11 // pred_region
        _
      $region20: #{basic_block_forward.2} parent=11 // pred_fallthru
        _
    $region12: #{basic_block_forward.2} parent=5 // pred_fallthru
      _
    %p273 = scmp.lt.s32.totalorder %s14, 2
    // Predicated region
    $region21: #{basic_block_forward.2} parent=5 // pred_check
      %p274 = pneg %p273
    $region22: #{basic_block_forward.2} parent=5 // pred_check_branch
      %276 = sbr.rel (%p274) target = $region24
    $region23: #{basic_block_forward.2} parent=5 // pred_region
      // Predicated region
      $region25: #{basic_block_forward.2} parent=23 // pred_check
        %p277 = pneg %p48
      $region26: #{basic_block_forward.2} parent=23 // pred_check_branch
        %279 = sbr.rel (%p277) target = $region28
      $region27: #{basic_block_forward.2} parent=23 // pred_region
        %s280 = smul.u32 16, %s22
        %p281 = scmp.lt.s32.totalorder %s21, 1
        %s282 = scalar_select %p281, %s21, 1
        %p283 = scmp.lt.s32.totalorder %s280, 15
        %s284 = scalar_select %p283, %s280, 15
        %s285 = smul.addr %s284, 2
        %s286 = smul.addr %s282, 32
        %s287 = sadd.s32 %s285, %s286
        %s288 = smul.addr %s287, 4
        %s289 = scalar_lea.vmem %s0, %s288
        %s290 = smul.u32 16, %s22
      $region28: #{basic_block_forward.2} parent=23 // pred_fallthru
        _
      // Predicated region
      $region29: #{basic_block_forward.2} parent=23 // pred_check
        %p291 = pneg %p84
      $region30: #{basic_block_forward.2} parent=23 // pred_check_branch
        %293 = sbr.rel (%p291) target = $region32
      $region31: #{basic_block_forward.2} parent=23 // pred_region
        %s294 = smul.u32 %s22, 16
        %s295 = ssub.s32 %s294, 1
        %p296 = scmp.gt.s32.totalorder %s295, 0
        %s297 = scalar_select %p296, %s295, 0
        %p298 = scmp.lt.s32.totalorder %s21, 1
        %s299 = scalar_select %p298, %s21, 1
        %p300 = scmp.lt.s32.totalorder %s297, 15
        %s301 = scalar_select %p300, %s297, 15
        %s302 = smul.addr %s301, 2
        %s303 = smul.addr %s299, 32
        %s304 = sadd.s32 %s302, %s303
        %s305 = smul.addr %s304, 4
        %s306 = scalar_lea.vmem %s1, %s305
        %s307 = smul.u32 %s22, 16
        %s308 = ssub.s32 %s307, 1
        %p309 = scmp.gt.s32.totalorder %s308, 0
        %s310 = scalar_select %p309, %s308, 0
      $region32: #{basic_block_forward.2} parent=23 // pred_fallthru
        _
      // Predicated region
      $region33: #{basic_block_forward.2} parent=23 // pred_check
        %p311 = pneg %p120
      $region34: #{basic_block_forward.2} parent=23 // pred_check_branch
        %313 = sbr.rel (%p311) target = $region36
      $region35: #{basic_block_forward.2} parent=23 // pred_region
        %s314 = sadd.s32 %s22, 1
        %s315 = smul.u32 %s314, 16
        %p316 = scmp.lt.s32.totalorder %s315, 15
        %s317 = scalar_select %p316, %s315, 15
        %p318 = scmp.lt.s32.totalorder %s21, 1
        %s319 = scalar_select %p318, %s21, 1
        %p320 = scmp.lt.s32.totalorder %s317, 15
        %s321 = scalar_select %p320, %s317, 15
        %s322 = smul.addr %s321, 2
        %s323 = smul.addr %s319, 32
        %s324 = sadd.s32 %s322, %s323
        %s325 = smul.addr %s324, 4
        %s326 = scalar_lea.vmem %s2, %s325
        %s327 = sadd.s32 %s22, 1
        %s328 = smul.u32 %s327, 16
        %p329 = scmp.lt.s32.totalorder %s328, 15
        %s330 = scalar_select %p329, %s328, 15
      $region36: #{basic_block_forward.2} parent=23 // pred_fallthru
        _
    $region24: #{basic_block_forward.2} parent=5 // pred_fallthru
      _
    %p331 = scmp.le.s32.totalorder 1, %s14
    %p332 = scmp.lt.s32.totalorder %s14, 3
    %p333 = pnand %p331, %p332
    %p334 = pneg %p333
    // Predicated region
    $region37: #{basic_block_forward.2} parent=5 // pred_check
      _
    $region38: #{basic_block_forward.2} parent=5 // pred_check_branch
      %336 = sbr.rel (%p333) target = $region40
    $region39: #{basic_block_forward.2} parent=5 // pred_region
      %s337 = ssub.s32 %s14, 1
      %s338 = smul.u32 16, %s24
      %p339 = scmp.lt.s32.totalorder %s23, 1
      %s340 = scalar_select %p339, %s23, 1
      %p341 = scmp.lt.s32.totalorder %s338, 15
      %s342 = scalar_select %p341, %s338, 15
      %s343 = smul.addr %s342, 2
      %s344 = smul.addr %s340, 32
      %s345 = sadd.s32 %s343, %s344
      %s346 = smul.addr %s345, 4
      %s347 = scalar_lea.vmem %s0, %s346
      %p348 = pneg %p54
      %p349 = pneg %p51
      %s350 = smul.u32 %s24, 16
      %s351 = ssub.s32 %s350, 1
      %p352 = scmp.gt.s32.totalorder %s351, 0
      %s353 = scalar_select %p352, %s351, 0
      %p354 = scmp.lt.s32.totalorder %s23, 1
      %s355 = scalar_select %p354, %s23, 1
      %p356 = scmp.lt.s32.totalorder %s353, 15
      %s357 = scalar_select %p356, %s353, 15
      %s358 = smul.addr %s357, 2
      %s359 = smul.addr %s355, 32
      %s360 = sadd.s32 %s358, %s359
      %s361 = smul.addr %s360, 4
      %s362 = scalar_lea.vmem %s1, %s361
      %p363 = pneg %p90
      %p364 = pneg %p87
      %s365 = sadd.s32 %s24, 1
      %s366 = smul.u32 %s365, 16
      %p367 = scmp.lt.s32.totalorder %s366, 15
      %s368 = scalar_select %p367, %s366, 15
      %p369 = scmp.lt.s32.totalorder %s23, 1
      %s370 = scalar_select %p369, %s23, 1
      %p371 = scmp.lt.s32.totalorder %s368, 15
      %s372 = scalar_select %p371, %s368, 15
      %s373 = smul.addr %s372, 2
      %s374 = smul.addr %s370, 32
      %s375 = sadd.s32 %s373, %s374
      %s376 = smul.addr %s375, 4
      %s377 = scalar_lea.vmem %s2, %s376
      %p378 = pneg %p126
      %p379 = pneg %p123
      %p380 = pneg %p147
      %p381 = pneg %p144
      %p382 = pneg %p168
      %p383 = pneg %p165
      %p384 = pneg %p196
      %p385 = pneg %p193
      %s386 = smul.u32 16, %s24
      %p387 = scmp.lt.s32.totalorder %s23, 1
      %s388 = scalar_select %p387, %s23, 1
      %p389 = scmp.lt.s32.totalorder %s386, 15
      %s390 = scalar_select %p389, %s386, 15
      %s391 = smul.addr %s390, 2
      %s392 = smul.addr %s388, 32
      %s393 = sadd.s32 %s391, %s392
      %s394 = smul.addr %s393, 4
      %s395 = scalar_lea.vmem %s5, %s394
      %p396 = pneg %p224
      %p397 = pneg %p221
      %s398 = smul.u32 2, %s24
      %p399 = scmp.lt.s32.totalorder %s23, 1
      %s400 = scalar_select %p399, %s23, 1
      %p401 = scmp.lt.s32.totalorder %s398, 1
      %s402 = scalar_select %p401, %s398, 1
      %s403 = smul.addr %s400, 2
      %s404 = sadd.s32 %s402, %s403
      %s405 = smul.addr %s404, 8
      %s406 = scalar_lea.vmem %s6, %s405
      %p407 = pneg %p252
      %p408 = pneg %p249
      %p409 = scmp.lt.s32.totalorder %s23, 1
      %s410 = scalar_select %p409, %s23, 1
      %p411 = scmp.lt.s32.totalorder %s24, 0
      %s412 = scalar_select %p411, %s24, 0
      %s413 = smul.addr %s412, 2
      %s414 = smul.addr %s410, 2
      %s415 = sadd.s32 %s413, %s414
      %s416 = smul.addr %s415, 8
      %s417 = scalar_lea.vmem %s7, %s416
      %s418 = smul.u32 16, %s24
      %p419 = scmp.lt.s32.totalorder %s23, 1
      %s420 = scalar_select %p419, %s23, 1
      %p421 = scmp.lt.s32.totalorder %s418, 15
      %s422 = scalar_select %p421, %s418, 15
      %s423 = smul.addr %s422, 2
      %s424 = smul.addr %s420, 32
      %s425 = sadd.s32 %s423, %s424
      %s426 = smul.addr %s425, 4
      %s427 = scalar_lea.vmem %s0, %s426
      %s428 = smul.u32 16, %s24
      %s429 = smul.u32 %s24, 16
      %s430 = ssub.s32 %s429, 1
      %p431 = scmp.gt.s32.totalorder %s430, 0
      %s432 = scalar_select %p431, %s430, 0
      %p433 = scmp.lt.s32.totalorder %s23, 1
      %s434 = scalar_select %p433, %s23, 1
      %p435 = scmp.lt.s32.totalorder %s432, 15
      %s436 = scalar_select %p435, %s432, 15
      %s437 = smul.addr %s436, 2
      %s438 = smul.addr %s434, 32
      %s439 = sadd.s32 %s437, %s438
      %s440 = smul.addr %s439, 4
      %s441 = scalar_lea.vmem %s1, %s440
      %s442 = smul.u32 %s24, 16
      %s443 = ssub.s32 %s442, 1
      %p444 = scmp.gt.s32.totalorder %s443, 0
      %s445 = scalar_select %p444, %s443, 0
      %s446 = sadd.s32 %s24, 1
      %s447 = smul.u32 %s446, 16
      %p448 = scmp.lt.s32.totalorder %s447, 15
      %s449 = scalar_select %p448, %s447, 15
      %p450 = scmp.lt.s32.totalorder %s23, 1
      %s451 = scalar_select %p450, %s23, 1
      %p452 = scmp.lt.s32.totalorder %s449, 15
      %s453 = scalar_select %p452, %s449, 15
      %s454 = smul.addr %s453, 2
      %s455 = smul.addr %s451, 32
      %s456 = sadd.s32 %s454, %s455
      %s457 = smul.addr %s456, 4
      %s458 = scalar_lea.vmem %s2, %s457
      %s459 = sadd.s32 %s24, 1
      %s460 = smul.u32 %s459, 16
      %p461 = scmp.lt.s32.totalorder %s460, 15
      %s462 = scalar_select %p461, %s460, 15
      %s463 = smul.u32 16, %s24
      %p464 = scmp.lt.s32.totalorder %s23, 1
      %s465 = scalar_select %p464, %s23, 1
      %p466 = scmp.lt.s32.totalorder %s463, 15
      %s467 = scalar_select %p466, %s463, 15
      %s468 = smul.addr %s467, 2
      %s469 = smul.addr %s465, 32
      %s470 = sadd.s32 %s468, %s469
      %s471 = smul.addr %s470, 4
      %s472 = scalar_lea.vmem %s5, %s471
      %s473 = smul.u32 16, %s24
      %s474 = smul.u32 2, %s24
      %p475 = scmp.lt.s32.totalorder %s23, 1
      %s476 = scalar_select %p475, %s23, 1
      %p477 = scmp.lt.s32.totalorder %s474, 1
      %s478 = scalar_select %p477, %s474, 1
      %s479 = smul.addr %s476, 2
      %s480 = sadd.s32 %s478, %s479
      %s481 = smul.addr %s480, 8
      %s482 = scalar_lea.vmem %s6, %s481
      %s483 = smul.u32 2, %s24
      %p484 = scmp.lt.s32.totalorder %s23, 1
      %s485 = scalar_select %p484, %s23, 1
      %p486 = scmp.lt.s32.totalorder %s24, 0
      %s487 = scalar_select %p486, %s24, 0
      %s488 = smul.addr %s487, 2
      %s489 = smul.addr %s485, 2
      %s490 = sadd.s32 %s488, %s489
      %s491 = smul.addr %s490, 8
      %s492 = scalar_lea.vmem %s7, %s491
      %v494 = vld [vmem:[%s441] sm:$0xf]
      %v495 = vld [vmem:[%s441 + $0x4] sm:$0xf]
      %p496 = scmp.gt.s32.totalorder %s24, 0
      %s497 = scalar_select %p496, 1, 0
      %s498 = scvt.s32.f32 %s497
      %p500 = scmp.ne.f32.partialorder %s498, %s498
      %s501 = sshrl.u32 %s498, 16
      %s502 = sand.u32 %s501, 1
      %s503 = sadd.s32 32767, %s502
      %s504 = sadd.s32 %s498, %s503
      %s505 = sand.u32 %s504, 4294901760
      %s506 = scalar_select %p500, 2143289344, %s505
      %s508 = sshrl.u32 %s506, 16
      %s509 = sshll.u32 %s508, 16
      %s510 = sor.u32 %s508, %s509
      %v511 = vstv %s510
      %v513 = vmul.bf16 %v494, %v511
      %v514 = vmul.bf16 %v495, %v511
      %v515 = vld [vmem:[%s458] sm:$0xf]
      %v516 = vld [vmem:[%s458 + $0x4] sm:$0xf]
      %p517 = scmp.lt.s32.totalorder %s24, 0
      %s518 = scalar_select %p517, 1, 0
      %s519 = scvt.s32.f32 %s518
      %p521 = scmp.ne.f32.partialorder %s519, %s519
      %s522 = sshrl.u32 %s519, 16
      %s523 = sand.u32 %s522, 1
      %s524 = sadd.s32 32767, %s523
      %s525 = sadd.s32 %s519, %s524
      %s526 = sand.u32 %s525, 4294901760
      %s527 = scalar_select %p521, 2143289344, %s526
      %s529 = sshrl.u32 %s527, 16
      %s530 = sshll.u32 %s529, 16
      %s531 = sor.u32 %s529, %s530
      %v532 = vstv %s531
      %v534 = vmul.bf16 %v515, %v532
      %v535 = vmul.bf16 %v516, %v532
      %v536 = vld [vmem:[%s427] sm:$0xf]
      %v537 = vld [vmem:[%s427 + $0x4] sm:$0xf]
      %v538 = vld [vmem:[%s427 + $0x8] sm:$0xf]
      %v539 = vld [vmem:[%s427 + $0xc] sm:$0xf]
      %v540 = vld [vmem:[%s427 + $0x10] sm:$0xf]
      %v541 = vld [vmem:[%s427 + $0x14] sm:$0xf]
      %v542 = vld [vmem:[%s427 + $0x18] sm:$0xf]
      %v543 = vld [vmem:[%s427 + $0x1c] sm:$0xf]
      %v544 = vld [vmem:[%s427 + $0x20] sm:$0xf]
      %v545 = vld [vmem:[%s427 + $0x24] sm:$0xf]
      %v546 = vld [vmem:[%s427 + $0x28] sm:$0xf]
      %v547 = vld [vmem:[%s427 + $0x2c] sm:$0xf]
      %v548 = vld [vmem:[%s427 + $0x30] sm:$0xf]
      %v549 = vld [vmem:[%s427 + $0x34] sm:$0xf]
      %v550 = vld [vmem:[%s427 + $0x38] sm:$0xf]
      %v551 = vld [vmem:[%s427 + $0x3c] sm:$0xf]
      %v552 = vld [vmem:[%s427 + $0x40] sm:$0xf]
      %v553 = vld [vmem:[%s427 + $0x44] sm:$0xf]
      %v554 = vld [vmem:[%s427 + $0x48] sm:$0xf]
      %v555 = vld [vmem:[%s427 + $0x4c] sm:$0xf]
      %v556 = vld [vmem:[%s427 + $0x50] sm:$0xf]
      %v557 = vld [vmem:[%s427 + $0x54] sm:$0xf]
      %v558 = vld [vmem:[%s427 + $0x58] sm:$0xf]
      %v559 = vld [vmem:[%s427 + $0x5c] sm:$0xf]
      %v560 = vld [vmem:[%s427 + $0x60] sm:$0xf]
      %v561 = vld [vmem:[%s427 + $0x64] sm:$0xf]
      %v562 = vld [vmem:[%s427 + $0x68] sm:$0xf]
      %v563 = vld [vmem:[%s427 + $0x6c] sm:$0xf]
      %v564 = vld [vmem:[%s427 + $0x70] sm:$0xf]
      %v565 = vld [vmem:[%s427 + $0x74] sm:$0xf]
      %v566 = vld [vmem:[%s427 + $0x78] sm:$0xf]
      %v567 = vld [vmem:[%s427 + $0x7c] sm:$0xf]
      %v604 = vunpack.c.l.b16 %v513
      %v605 = vunpack.c.l.b16 %v514
      %v606 = vunpack.c.l.b16 %v536
      %v607 = vunpack.c.l.b16 %v537
      %v608 = vunpack.c.l.b16 %v538
      %v609 = vunpack.c.l.b16 %v539
      %v610 = vunpack.c.l.b16 %v540
      %v611 = vunpack.c.l.b16 %v541
      %v612 = vunpack.c.l.b16 %v542
      %v613 = vunpack.c.l.b16 %v543
      %v614 = vunpack.c.l.b16 %v544
      %v615 = vunpack.c.l.b16 %v545
      %v616 = vunpack.c.l.b16 %v546
      %v617 = vunpack.c.l.b16 %v547
      %v618 = vunpack.c.l.b16 %v548
      %v619 = vunpack.c.l.b16 %v549
      %v620 = vunpack.c.l.b16 %v550
      %v621 = vunpack.c.l.b16 %v551
      %v622 = vunpack.c.l.b16 %v552
      %v623 = vunpack.c.l.b16 %v553
      %v624 = vunpack.c.l.b16 %v554
      %v625 = vunpack.c.l.b16 %v555
      %v626 = vunpack.c.l.b16 %v556
      %v627 = vunpack.c.l.b16 %v557
      %v628 = vunpack.c.l.b16 %v558
      %v629 = vunpack.c.l.b16 %v559
      %v630 = vunpack.c.l.b16 %v560
      %v631 = vunpack.c.l.b16 %v561
      %v632 = vunpack.c.l.b16 %v562
      %v633 = vunpack.c.l.b16 %v563
      %v634 = vunpack.c.l.b16 %v564
      %v635 = vunpack.c.l.b16 %v565
      %v636 = vunpack.c.l.b16 %v566
      %v637 = vunpack.c.l.b16 %v567
      %v638 = vunpack.c.l.b16 %v534
      %v639 = vunpack.c.l.b16 %v535
      %v640 = vpack.c.b16 %v605, %v604
      %v641 = vpack.c.b16 %v607, %v606
      %v642 = vpack.c.b16 %v609, %v608
      %v643 = vpack.c.b16 %v611, %v610
      %v644 = vpack.c.b16 %v613, %v612
      %v645 = vpack.c.b16 %v615, %v614
      %v646 = vpack.c.b16 %v617, %v616
      %v647 = vpack.c.b16 %v619, %v618
      %v648 = vpack.c.b16 %v621, %v620
      %v649 = vpack.c.b16 %v623, %v622
      %v650 = vpack.c.b16 %v625, %v624
      %v651 = vpack.c.b16 %v627, %v626
      %v652 = vpack.c.b16 %v629, %v628
      %v653 = vpack.c.b16 %v631, %v630
      %v654 = vpack.c.b16 %v633, %v632
      %v655 = vpack.c.b16 %v635, %v634
      %v656 = vpack.c.b16 %v637, %v636
      %v657 = vpack.c.b16 %v639, %v638
      %v659 = vshrl.u32 %v640, 16
      %v661 = vrot.slane %v659, 7
      %v662 = vshll.u32 %v640, 16
      %v664 = vor.u32 %v661, %v662
      %v666 = vshrl.u32 %v641, 16
      %v668 = vrot.slane %v666, 7
      %v669 = vshll.u32 %v641, 16
      %v671 = vor.u32 %v668, %v669
      %v673 = vshrl.u32 %v642, 16
      %v675 = vrot.slane %v673, 7
      %v676 = vshll.u32 %v642, 16
      %v678 = vor.u32 %v675, %v676
      %v680 = vshrl.u32 %v643, 16
      %v682 = vrot.slane %v680, 7
      %v683 = vshll.u32 %v643, 16
      %v685 = vor.u32 %v682, %v683
      %v687 = vshrl.u32 %v644, 16
      %v689 = vrot.slane %v687, 7
      %v690 = vshll.u32 %v644, 16
      %v692 = vor.u32 %v689, %v690
      %v694 = vshrl.u32 %v645, 16
      %v696 = vrot.slane %v694, 7
      %v697 = vshll.u32 %v645, 16
      %v699 = vor.u32 %v696, %v697
      %v701 = vshrl.u32 %v646, 16
      %v703 = vrot.slane %v701, 7
      %v704 = vshll.u32 %v646, 16
      %v706 = vor.u32 %v703, %v704
      %v708 = vshrl.u32 %v647, 16
      %v710 = vrot.slane %v708, 7
      %v711 = vshll.u32 %v647, 16
      %v713 = vor.u32 %v710, %v711
      %v715 = vshrl.u32 %v648, 16
      %v717 = vrot.slane %v715, 7
      %v718 = vshll.u32 %v648, 16
      %v720 = vor.u32 %v717, %v718
      %v722 = vshrl.u32 %v649, 16
      %v724 = vrot.slane %v722, 7
      %v725 = vshll.u32 %v649, 16
      %v727 = vor.u32 %v724, %v725
      %v729 = vshrl.u32 %v650, 16
      %v731 = vrot.slane %v729, 7
      %v732 = vshll.u32 %v650, 16
      %v734 = vor.u32 %v731, %v732
      %v736 = vshrl.u32 %v651, 16
      %v738 = vrot.slane %v736, 7
      %v739 = vshll.u32 %v651, 16
      %v741 = vor.u32 %v738, %v739
      %v743 = vshrl.u32 %v652, 16
      %v745 = vrot.slane %v743, 7
      %v746 = vshll.u32 %v652, 16
      %v748 = vor.u32 %v745, %v746
      %v750 = vshrl.u32 %v653, 16
      %v752 = vrot.slane %v750, 7
      %v753 = vshll.u32 %v653, 16
      %v755 = vor.u32 %v752, %v753
      %v757 = vshrl.u32 %v654, 16
      %v759 = vrot.slane %v757, 7
      %v760 = vshll.u32 %v654, 16
      %v762 = vor.u32 %v759, %v760
      %v764 = vshrl.u32 %v655, 16
      %v766 = vrot.slane %v764, 7
      %v767 = vshll.u32 %v655, 16
      %v769 = vor.u32 %v766, %v767
      %v771 = vshrl.u32 %v656, 16
      %v773 = vrot.slane %v771, 7
      %v774 = vshll.u32 %v656, 16
      %v776 = vor.u32 %v773, %v774
      %v778 = vshrl.u32 %v657, 16
      %v780 = vrot.slane %v778, 7
      %v781 = vshll.u32 %v657, 16
      %v783 = vor.u32 %v780, %v781
      %vm802 = vcmask 1040384
      %vm803 = vsmask.f32 256
      %vm804 = vmand %vm802, %vm803
      %v805 = vsel %vm804, 0, %v664
      %v806 = vsel %vm804, 0, %v671
      %v807 = vsel %vm804, 0, %v678
      %v808 = vsel %vm804, 0, %v685
      %v809 = vsel %vm804, 0, %v692
      %v810 = vsel %vm804, 0, %v699
      %v811 = vsel %vm804, 0, %v706
      %v812 = vsel %vm804, 0, %v713
      %v813 = vsel %vm804, 0, %v720
      %v814 = vsel %vm804, 0, %v727
      %v815 = vsel %vm804, 0, %v734
      %v816 = vsel %vm804, 0, %v741
      %v817 = vsel %vm804, 0, %v748
      %v818 = vsel %vm804, 0, %v755
      %v819 = vsel %vm804, 0, %v762
      %v820 = vsel %vm804, 0, %v769
      %v821 = vsel %vm804, 0, %v776
      %v822 = vsel %vm804, 0, %v783
      %v823 = vrot.slane %v662, 1
      %v824 = vor.u32 %v659, %v823
      %v825 = vrot.slane %v669, 1
      %v826 = vor.u32 %v666, %v825
      %v827 = vrot.slane %v676, 1
      %v828 = vor.u32 %v673, %v827
      %v829 = vrot.slane %v683, 1
      %v830 = vor.u32 %v680, %v829
      %v831 = vrot.slane %v690, 1
      %v832 = vor.u32 %v687, %v831
      %v833 = vrot.slane %v697, 1
      %v834 = vor.u32 %v694, %v833
      %v835 = vrot.slane %v704, 1
      %v836 = vor.u32 %v701, %v835
      %v837 = vrot.slane %v711, 1
      %v838 = vor.u32 %v708, %v837
      %v839 = vrot.slane %v718, 1
      %v840 = vor.u32 %v715, %v839
      %v841 = vrot.slane %v725, 1
      %v842 = vor.u32 %v722, %v841
      %v843 = vrot.slane %v732, 1
      %v844 = vor.u32 %v729, %v843
      %v845 = vrot.slane %v739, 1
      %v846 = vor.u32 %v736, %v845
      %v847 = vrot.slane %v746, 1
      %v848 = vor.u32 %v743, %v847
      %v849 = vrot.slane %v753, 1
      %v850 = vor.u32 %v750, %v849
      %v851 = vrot.slane %v760, 1
      %v852 = vor.u32 %v757, %v851
      %v853 = vrot.slane %v767, 1
      %v854 = vor.u32 %v764, %v853
      %v855 = vrot.slane %v774, 1
      %v856 = vor.u32 %v771, %v855
      %v857 = vrot.slane %v781, 1
      %v858 = vor.u32 %v778, %v857
      %vm877 = vcmask 1047552
      %vm878 = vsmask.f32 7424
      %vm879 = vmand %vm877, %vm878
      %v880 = vsel %vm879, %v824, 0
      %v881 = vsel %vm879, %v826, 0
      %v882 = vsel %vm879, %v828, 0
      %v883 = vsel %vm879, %v830, 0
      %v884 = vsel %vm879, %v832, 0
      %v885 = vsel %vm879, %v834, 0
      %v886 = vsel %vm879, %v836, 0
      %v887 = vsel %vm879, %v838, 0
      %v888 = vsel %vm879, %v840, 0
      %v889 = vsel %vm879, %v842, 0
      %v890 = vsel %vm879, %v844, 0
      %v891 = vsel %vm879, %v846, 0
      %v892 = vsel %vm879, %v848, 0
      %v893 = vsel %vm879, %v850, 0
      %v894 = vsel %vm879, %v852, 0
      %v895 = vsel %vm879, %v854, 0
      %v896 = vsel %vm879, %v856, 0
      %v897 = vsel %vm879, %v858, 0
      %v916 = vld [vmem:[%s3] sm:$0xf]
      %v917 = vld [vmem:[%s3 + $0x4] sm:$0xf]
      %v918 = vld [vmem:[%s3 + $0x8] sm:$0xf]
      %v919 = vld [vmem:[%s3 + $0xc] sm:$0xf]
      %v920 = vld [vmem:[%s3 + $0x10] sm:$0xf]
      %v921 = vld [vmem:[%s3 + $0x14] sm:$0xf]
      %v922 = vld [vmem:[%s3 + $0x18] sm:$0xf]
      %v923 = vld [vmem:[%s3 + $0x1c] sm:$0xf]
      %v924 = vld [vmem:[%s3 + $0x20] sm:$0xf]
      %v925 = vld [vmem:[%s3 + $0x24] sm:$0xf]
      %v926 = vld [vmem:[%s3 + $0x28] sm:$0xf]
      %v927 = vld [vmem:[%s3 + $0x2c] sm:$0xf]
      %v928 = vld [vmem:[%s3 + $0x30] sm:$0xf]
      %v929 = vld [vmem:[%s3 + $0x34] sm:$0xf]
      %v930 = vld [vmem:[%s3 + $0x38] sm:$0xf]
      %v931 = vld [vmem:[%s3 + $0x3c] sm:$0xf]
      %v932 = vld [vmem:[%s3 + $0x40] sm:$0xf]
      %v933 = vld [vmem:[%s3 + $0x44] sm:$0xf]
      %v934 = vld [vmem:[%s3 + $0x48] sm:$0xf]
      %v935 = vld [vmem:[%s3 + $0x4c] sm:$0xf]
      %v936 = vld [vmem:[%s3 + $0x50] sm:$0xf]
      %v937 = vld [vmem:[%s3 + $0x54] sm:$0xf]
      %v938 = vld [vmem:[%s3 + $0x58] sm:$0xf]
      %v939 = vld [vmem:[%s3 + $0x5c] sm:$0xf]
      %v940 = vld [vmem:[%s3 + $0x60] sm:$0xf]
      %v941 = vld [vmem:[%s3 + $0x64] sm:$0xf]
      %v942 = vld [vmem:[%s3 + $0x68] sm:$0xf]
      %v943 = vld [vmem:[%s3 + $0x6c] sm:$0xf]
      %v944 = vld [vmem:[%s3 + $0x70] sm:$0xf]
      %v945 = vld [vmem:[%s3 + $0x74] sm:$0xf]
      %v946 = vld [vmem:[%s3 + $0x78] sm:$0xf]
      %v947 = vld [vmem:[%s3 + $0x7c] sm:$0xf]
      %v948 = vld [vmem:[%s3 + $0x80] sm:$0xf]
      %v949 = vld [vmem:[%s3 + $0x84] sm:$0xf]
      %v950 = vld [vmem:[%s3 + $0x88] sm:$0xf]
      %v951 = vld [vmem:[%s3 + $0x8c] sm:$0xf]
      %v952 = vld [vmem:[%s3 + $0x90] sm:$0xf]
      %v953 = vld [vmem:[%s3 + $0x94] sm:$0xf]
      %v954 = vld [vmem:[%s3 + $0x98] sm:$0xf]
      %v955 = vld [vmem:[%s3 + $0x9c] sm:$0xf]
      %v956 = vld [vmem:[%s3 + $0xa0] sm:$0xf]
      %v957 = vld [vmem:[%s3 + $0xa4] sm:$0xf]
      %v958 = vld [vmem:[%s3 + $0xa8] sm:$0xf]
      %v959 = vld [vmem:[%s3 + $0xac] sm:$0xf]
      %v960 = vld [vmem:[%s3 + $0xb0] sm:$0xf]
      %v961 = vld [vmem:[%s3 + $0xb4] sm:$0xf]
      %v962 = vld [vmem:[%s3 + $0xb8] sm:$0xf]
      %v963 = vld [vmem:[%s3 + $0xbc] sm:$0xf]
      %s964 = scalar_lea.vmem %s3, 192
      %v965 = vld [vmem:[%s964] sm:$0xf]
      %v966 = vld [vmem:[%s964 + $0x4] sm:$0xf]
      %v967 = vld [vmem:[%s964 + $0x8] sm:$0xf]
      %v968 = vld [vmem:[%s964 + $0xc] sm:$0xf]
      %v969 = vld [vmem:[%s964 + $0x10] sm:$0xf]
      %v970 = vld [vmem:[%s964 + $0x14] sm:$0xf]
      %v971 = vld [vmem:[%s964 + $0x18] sm:$0xf]
      %v972 = vld [vmem:[%s964 + $0x1c] sm:$0xf]
      %v973 = vld [vmem:[%s964 + $0x20] sm:$0xf]
      %v974 = vld [vmem:[%s964 + $0x24] sm:$0xf]
      %v975 = vld [vmem:[%s964 + $0x28] sm:$0xf]
      %v976 = vld [vmem:[%s964 + $0x2c] sm:$0xf]
      %v977 = vld [vmem:[%s964 + $0x30] sm:$0xf]
      %v978 = vld [vmem:[%s964 + $0x34] sm:$0xf]
      %v979 = vld [vmem:[%s964 + $0x38] sm:$0xf]
      %v980 = vld [vmem:[%s964 + $0x3c] sm:$0xf]
      %v981 = vld [vmem:[%s964 + $0x40] sm:$0xf]
      %v982 = vld [vmem:[%s964 + $0x44] sm:$0xf]
      %v983 = vld [vmem:[%s964 + $0x48] sm:$0xf]
      %v984 = vld [vmem:[%s964 + $0x4c] sm:$0xf]
      %v985 = vld [vmem:[%s964 + $0x50] sm:$0xf]
      %v986 = vld [vmem:[%s964 + $0x54] sm:$0xf]
      %v987 = vld [vmem:[%s964 + $0x58] sm:$0xf]
      %v988 = vld [vmem:[%s964 + $0x5c] sm:$0xf]
      %v989 = vld [vmem:[%s964 + $0x60] sm:$0xf]
      %v990 = vld [vmem:[%s964 + $0x64] sm:$0xf]
      %v991 = vld [vmem:[%s964 + $0x68] sm:$0xf]
      %v992 = vld [vmem:[%s964 + $0x6c] sm:$0xf]
      %v993 = vld [vmem:[%s964 + $0x70] sm:$0xf]
      %v994 = vld [vmem:[%s964 + $0x74] sm:$0xf]
      %v995 = vld [vmem:[%s964 + $0x78] sm:$0xf]
      %v996 = vld [vmem:[%s964 + $0x7c] sm:$0xf]
      %v997 = vld [vmem:[%s964 + $0x80] sm:$0xf]
      %v998 = vld [vmem:[%s964 + $0x84] sm:$0xf]
      %v999 = vld [vmem:[%s964 + $0x88] sm:$0xf]
      %v1000 = vld [vmem:[%s964 + $0x8c] sm:$0xf]
      %v1001 = vld [vmem:[%s964 + $0x90] sm:$0xf]
      %v1002 = vld [vmem:[%s964 + $0x94] sm:$0xf]
      %v1003 = vld [vmem:[%s964 + $0x98] sm:$0xf]
      %v1004 = vld [vmem:[%s964 + $0x9c] sm:$0xf]
      %v1005 = vld [vmem:[%s964 + $0xa0] sm:$0xf]
      %v1006 = vld [vmem:[%s964 + $0xa4] sm:$0xf]
      %v1007 = vld [vmem:[%s964 + $0xa8] sm:$0xf]
      %v1008 = vld [vmem:[%s964 + $0xac] sm:$0xf]
      %v1009 = vld [vmem:[%s964 + $0xb0] sm:$0xf]
      %v1010 = vld [vmem:[%s964 + $0xb4] sm:$0xf]
      %v1011 = vld [vmem:[%s964 + $0xb8] sm:$0xf]
      %v1012 = vld [vmem:[%s964 + $0xbc] sm:$0xf]
      %v1061 = vunpack.c.l.b16 %v965
      %v1062 = vunpack.c.l.b16 %v966
      %v1063 = vunpack.c.l.b16 %v967
      %v1064 = vunpack.c.l.b16 %v968
      %v1065 = vunpack.c.l.b16 %v969
      %v1066 = vunpack.c.l.b16 %v970
      %v1067 = vunpack.c.l.b16 %v971
      %v1068 = vunpack.c.l.b16 %v972
      %v1069 = vunpack.c.l.b16 %v973
      %v1070 = vunpack.c.l.b16 %v974
      %v1071 = vunpack.c.l.b16 %v975
      %v1072 = vunpack.c.l.b16 %v976
      %v1073 = vunpack.c.l.b16 %v977
      %v1074 = vunpack.c.l.b16 %v978
      %v1075 = vunpack.c.l.b16 %v979
      %v1076 = vunpack.c.l.b16 %v980
      %v1077 = vunpack.c.l.b16 %v981
      %v1078 = vunpack.c.l.b16 %v982
      %v1079 = vunpack.c.l.b16 %v983
      %v1080 = vunpack.c.l.b16 %v984
      %v1081 = vunpack.c.l.b16 %v985
      %v1082 = vunpack.c.l.b16 %v986
      %v1083 = vunpack.c.l.b16 %v987
      %v1084 = vunpack.c.l.b16 %v988
      %v1085 = vunpack.c.l.b16 %v989
      %v1086 = vunpack.c.l.b16 %v990
      %v1087 = vunpack.c.l.b16 %v991
      %v1088 = vunpack.c.l.b16 %v992
      %v1089 = vunpack.c.l.b16 %v993
      %v1090 = vunpack.c.l.b16 %v994
      %v1091 = vunpack.c.l.b16 %v995
      %v1092 = vunpack.c.l.b16 %v996
      %v1093 = vunpack.c.l.b16 %v997
      %v1094 = vunpack.c.l.b16 %v998
      %v1095 = vunpack.c.l.b16 %v999
      %v1096 = vunpack.c.l.b16 %v1000
      %v1097 = vunpack.c.l.b16 %v1001
      %v1098 = vunpack.c.l.b16 %v1002
      %v1099 = vunpack.c.l.b16 %v1003
      %v1100 = vunpack.c.l.b16 %v1004
      %v1101 = vunpack.c.l.b16 %v1005
      %v1102 = vunpack.c.l.b16 %v1006
      %v1103 = vunpack.c.l.b16 %v1007
      %v1104 = vunpack.c.l.b16 %v1008
      %v1105 = vunpack.c.l.b16 %v1009
      %v1106 = vunpack.c.l.b16 %v1010
      %v1107 = vunpack.c.l.b16 %v1011
      %v1108 = vunpack.c.l.b16 %v1012
      %v1109 = vpack.c.b16 %v1062, %v1061
      %v1110 = vpack.c.b16 %v1064, %v1063
      %v1111 = vpack.c.b16 %v1066, %v1065
      %v1112 = vpack.c.b16 %v1068, %v1067
      %v1113 = vpack.c.b16 %v1070, %v1069
      %v1114 = vpack.c.b16 %v1072, %v1071
      %v1115 = vpack.c.b16 %v1074, %v1073
      %v1116 = vpack.c.b16 %v1076, %v1075
      %v1117 = vpack.c.b16 %v1078, %v1077
      %v1118 = vpack.c.b16 %v1080, %v1079
      %v1119 = vpack.c.b16 %v1082, %v1081
      %v1120 = vpack.c.b16 %v1084, %v1083
      %v1121 = vpack.c.b16 %v1086, %v1085
      %v1122 = vpack.c.b16 %v1088, %v1087
      %v1123 = vpack.c.b16 %v1090, %v1089
      %v1124 = vpack.c.b16 %v1092, %v1091
      %v1125 = vpack.c.b16 %v1094, %v1093
      %v1126 = vpack.c.b16 %v1096, %v1095
      %v1127 = vpack.c.b16 %v1098, %v1097
      %v1128 = vpack.c.b16 %v1100, %v1099
      %v1129 = vpack.c.b16 %v1102, %v1101
      %v1130 = vpack.c.b16 %v1104, %v1103
      %v1131 = vpack.c.b16 %v1106, %v1105
      %v1132 = vpack.c.b16 %v1108, %v1107
      %1157 = vmatprep.subr.bf16.mxu0 0
      %1158 = vmatpush1.bf16.msra.mxu0 %v1109
      %1159 = vmatprep.subr.bf16.mxu0 0
      %1160 = vmatpush1.bf16.msra.mxu0 %v1110
      %1161 = vmatprep.subr.bf16.mxu0 0
      %1162 = vmatpush1.bf16.msra.mxu0 %v1111
      %1163 = vmatprep.subr.bf16.mxu0 0
      %1164 = vmatpush1.bf16.msra.mxu0 %v1112
      %1165 = vmatprep.subr.bf16.mxu0 0
      %1166 = vmatpush1.bf16.msra.mxu0 %v1113
      %1167 = vmatprep.subr.bf16.mxu0 0
      %1168 = vmatpush1.bf16.msra.mxu0 %v1114
      %1169 = vmatprep.subr.bf16.mxu0 0
      %1170 = vmatpush1.bf16.msra.mxu0 %v1115
      %1171 = vmatprep.subr.bf16.mxu0 0
      %1172 = vmatpush1.bf16.msra.mxu0 %v1116
      %1173 = vmatprep.subr.bf16.mxu0 0
      %1174 = vmatpush1.bf16.msra.mxu0 %v1117
      %1175 = vmatprep.subr.bf16.mxu0 0
      %1176 = vmatpush1.bf16.msra.mxu0 %v1118
      %1177 = vmatprep.subr.bf16.mxu0 0
      %1178 = vmatpush1.bf16.msra.mxu0 %v1119
      %1179 = vmatprep.subr.bf16.mxu0 0
      %1180 = vmatpush1.bf16.msra.mxu0 %v1120
      %1181 = vmatprep.subr.bf16.mxu0 0
      %1182 = vmatpush1.bf16.msra.mxu0 %v1121
      %1183 = vmatprep.subr.bf16.mxu0 0
      %1184 = vmatpush1.bf16.msra.mxu0 %v1122
      %1185 = vmatprep.subr.bf16.mxu0 0
      %1186 = vmatpush1.bf16.msra.mxu0 %v1123
      %1187 = vmatprep.subr.bf16.mxu0 0
      %1188 = vmatpush1.bf16.msra.mxu0 %v1124
      %1189 = vmatprep.mubr.bf16.mxu0 %v641
      %1190 = vmatmul.mubr.bf16.gmra.mrb[0].mxu0 %v806
      %v1191 = vpop.f32.mrb[0].mxu0
      %v1192 = vadd.f32 0.0, %v1191
      %v1193 = vpop.f32.mrb[0].mxu0
      %v1194 = vpop.f32.mrb[0].mxu0
      %v1195 = vadd.f32 0.0, %v1194
      %v1196 = vpop.f32.mrb[0].mxu0
      %1197 = vmatprep.mubr.bf16.mxu0 %v642
      %1198 = vmatmul.mubr.bf16.gmra.mrb[0].mxu0 %v807
      %v1199 = vpop.f32.mrb[0].mxu0
      %v1200 = vadd.f32 0.0, %v1199
      %v1201 = vpop.f32.mrb[0].mxu0
      %v1202 = vpop.f32.mrb[0].mxu0
      %v1203 = vadd.f32 0.0, %v1202
      %v1204 = vpop.f32.mrb[0].mxu0
      %1205 = vmatprep.mubr.bf16.mxu0 %v643
      %1206 = vmatmul.mubr.bf16.gmra.mrb[0].mxu0 %v808
      %v1207 = vpop.f32.mrb[0].mxu0
      %v1208 = vadd.f32 0.0, %v1207
      %v1209 = vpop.f32.mrb[0].mxu0
      %v1210 = vpop.f32.mrb[0].mxu0
      %v1211 = vadd.f32 0.0, %v1210
      %v1212 = vpop.f32.mrb[0].mxu0
      %1213 = vmatprep.mubr.bf16.mxu0 %v644
      %1214 = vmatmul.mubr.bf16.gmra.mrb[0].mxu0 %v809
      %v1215 = vpop.f32.mrb[0].mxu0
      %v1216 = vadd.f32 0.0, %v1215
      %v1217 = vpop.f32.mrb[0].mxu0
      %v1218 = vpop.f32.mrb[0].mxu0
      %v1219 = vadd.f32 0.0, %v1218
      %v1220 = vpop.f32.mrb[0].mxu0
      %1221 = vmatprep.mubr.bf16.mxu0 %v645
      %1222 = vmatmul.mubr.bf16.gmra.mrb[0].mxu0 %v810
      %v1223 = vpop.f32.mrb[0].mxu0
      %v1224 = vadd.f32 0.0, %v1223
      %v1225 = vpop.f32.mrb[0].mxu0
      %v1226 = vpop.f32.mrb[0].mxu0
      %v1227 = vadd.f32 0.0, %v1226
      %v1228 = vpop.f32.mrb[0].mxu0
      %1229 = vmatprep.mubr.bf16.mxu0 %v646
      %1230 = vmatmul.mubr.bf16.gmra.mrb[0].mxu0 %v811
      %v1231 = vpop.f32.mrb[0].mxu0
      %v1232 = vadd.f32 0.0, %v1231
      %v1233 = vpop.f32.mrb[0].mxu0
      %v1234 = vpop.f32.mrb[0].mxu0
      %v1235 = vadd.f32 0.0, %v1234
      %v1236 = vpop.f32.mrb[0].mxu0
      %1237 = vmatprep.mubr.bf16.mxu0 %v647
      %1238 = vmatmul.mubr.bf16.gmra.mrb[0].mxu0 %v812
      %v1239 = vpop.f32.mrb[0].mxu0
      %v1240 = vadd.f32 0.0, %v1239
      %v1241 = vpop.f32.mrb[0].mxu0
      %v1242 = vpop.f32.mrb[0].mxu0
      %v1243 = vadd.f32 0.0, %v1242
      %v1244 = vpop.f32.mrb[0].mxu0
      %1245 = vmatprep.mubr.bf16.mxu0 %v648
      %1246 = vmatmul.mubr.bf16.gmra.mrb[0].mxu0 %v813
      %v1247 = vpop.f32.mrb[0].mxu0
      %v1248 = vadd.f32 0.0, %v1247
      %v1249 = vpop.f32.mrb[0].mxu0
      %v1250 = vpop.f32.mrb[0].mxu0
      %v1251 = vadd.f32 0.0, %v1250
      %v1252 = vpop.f32.mrb[0].mxu0
      %1253 = vmatprep.mubr.bf16.mxu0 %v649
      %1254 = vmatmul.mubr.bf16.gmra.mrb[0].mxu0 %v814
      %v1255 = vpop.f32.mrb[0].mxu0
      %v1256 = vadd.f32 0.0, %v1255
      %v1257 = vpop.f32.mrb[0].mxu0
      %v1258 = vpop.f32.mrb[0].mxu0
      %v1259 = vadd.f32 0.0, %v1258
      %v1260 = vpop.f32.mrb[0].mxu0
      %1261 = vmatprep.mubr.bf16.mxu0 %v650
      %1262 = vmatmul.mubr.bf16.gmra.mrb[0].mxu0 %v815
      %v1263 = vpop.f32.mrb[0].mxu0
      %v1264 = vadd.f32 0.0, %v1263
      %v1265 = vpop.f32.mrb[0].mxu0
      %v1266 = vpop.f32.mrb[0].mxu0
      %v1267 = vadd.f32 0.0, %v1266
      %v1268 = vpop.f32.mrb[0].mxu0
      %1269 = vmatprep.mubr.bf16.mxu0 %v651
      %1270 = vmatmul.mubr.bf16.gmra.mrb[0].mxu0 %v816
      %v1271 = vpop.f32.mrb[0].mxu0
      %v1272 = vadd.f32 0.0, %v1271
      %v1273 = vpop.f32.mrb[0].mxu0
      %v1274 = vpop.f32.mrb[0].mxu0
      %v1275 = vadd.f32 0.0, %v1274
      %v1276 = vpop.f32.mrb[0].mxu0
      %1277 = vmatprep.mubr.bf16.mxu0 %v652
      %1278 = vmatmul.mubr.bf16.gmra.mrb[0].mxu0 %v817
      %v1279 = vpop.f32.mrb[0].mxu0
      %v1280 = vadd.f32 0.0, %v1279
      %v1281 = vpop.f32.mrb[0].mxu0
      %v1282 = vpop.f32.mrb[0].mxu0
      %v1283 = vadd.f32 0.0, %v1282
      %v1284 = vpop.f32.mrb[0].mxu0
      %1285 = vmatprep.mubr.bf16.mxu0 %v653
      %1286 = vmatmul.mubr.bf16.gmra.mrb[0].mxu0 %v818
      %v1287 = vpop.f32.mrb[0].mxu0
      %v1288 = vadd.f32 0.0, %v1287
      %v1289 = vpop.f32.mrb[0].mxu0
      %v1290 = vpop.f32.mrb[0].mxu0
      %v1291 = vadd.f32 0.0, %v1290
      %v1292 = vpop.f32.mrb[0].mxu0
      %1293 = vmatprep.mubr.bf16.mxu0 %v654
      %1294 = vmatmul.mubr.bf16.gmra.mrb[0].mxu0 %v819
      %v1295 = vpop.f32.mrb[0].mxu0
      %v1296 = vadd.f32 0.0, %v1295
      %v1297 = vpop.f32.mrb[0].mxu0
      %v1298 = vpop.f32.mrb[0].mxu0
      %v1299 = vadd.f32 0.0, %v1298
      %v1300 = vpop.f32.mrb[0].mxu0
      %1301 = vmatprep.mubr.bf16.mxu0 %v655
      %1302 = vmatmul.mubr.bf16.gmra.mrb[0].mxu0 %v820
      %v1303 = vpop.f32.mrb[0].mxu0
      %v1304 = vadd.f32 0.0, %v1303
      %v1305 = vpop.f32.mrb[0].mxu0
      %v1306 = vpop.f32.mrb[0].mxu0
      %v1307 = vadd.f32 0.0, %v1306
      %v1308 = vpop.f32.mrb[0].mxu0
      %1309 = vmatprep.mubr.bf16.mxu0 %v656
      %1310 = vmatmul.mubr.bf16.gmra.mrb[0].mxu0 %v821
      %v1311 = vpop.f32.mrb[0].mxu0
      %v1312 = vadd.f32 0.0, %v1311
      %v1313 = vpop.f32.mrb[0].mxu0
      %v1314 = vpop.f32.mrb[0].mxu0
      %v1315 = vadd.f32 0.0, %v1314
      %v1316 = vpop.f32.mrb[0].mxu0
      %1317 = vdwg.mxu0
      %1318 = vmatprep.subr.bf16.mxu0 0
      %1319 = vmatpush1.bf16.msra.mxu0 %v1125
      %1320 = vmatprep.subr.bf16.mxu0 0
      %1321 = vmatpush1.bf16.msra.mxu0 %v1126
      %1322 = vmatprep.subr.bf16.mxu0 0
      %1323 = vmatpush1.bf16.msra.mxu0 %v1127
      %1324 = vmatprep.subr.bf16.mxu0 0
      %1325 = vmatpush1.bf16.msra.mxu0 %v1128
      %1326 = vmatprep.subr.bf16.mxu0 0
      %1327 = vmatpush1.bf16.msra.mxu0 %v1129
      %1328 = vmatprep.subr.bf16.mxu0 0
      %1329 = vmatpush1.bf16.msra.mxu0 %v1130
      %1330 = vmatprep.subr.bf16.mxu0 0
      %1331 = vmatpush1.bf16.msra.mxu0 %v1131
      %1332 = vmatprep.subr.bf16.mxu0 0
      %1333 = vmatpush1.bf16.msra.mxu0 %v1132
      %1334 = vmatprep.subr.bf16.mxu0 0
      %1335 = vmatpush1.bf16.msra.mxu0 0
      %1336 = vmatprep.subr.bf16.mxu0 0
      %1337 = vmatpush1.bf16.msra.mxu0 0
      %1338 = vmatprep.subr.bf16.mxu0 0
      %1339 = vmatpush1.bf16.msra.mxu0 0
      %1340 = vmatprep.subr.bf16.mxu0 0
      %1341 = vmatpush1.bf16.msra.mxu0 0
      %1342 = vmatprep.subr.bf16.mxu0 0
      %1343 = vmatpush1.bf16.msra.mxu0 0
      %1344 = vmatprep.subr.bf16.mxu0 0
      %1345 = vmatpush1.bf16.msra.mxu0 0
      %1346 = vmatprep.subr.bf16.mxu0 0
      %1347 = vmatpush1.bf16.msra.mxu0 0
      %1348 = vmatprep.subr.bf16.mxu0 0
      %1349 = vmatpush1.bf16.msra.mxu0 0
      %1350 = vmatprep.mubr.bf16.mxu0 0
      %1351 = vmatmul.mubr.bf16.gmra.mrb[0].mxu0 %v881
      %v1352 = vpop.f32.mrb[0].mxu0
      %v1353 = vadd.f32 %v1192, %v1352
      %v1354 = vpop.f32.mrb[0].mxu0
      %v1355 = vpop.f32.mrb[0].mxu0
      %v1356 = vadd.f32 %v1195, %v1355
      %v1357 = vpop.f32.mrb[0].mxu0
      %1358 = vmatprep.mubr.bf16.mxu0 0
      %1359 = vmatmul.mubr.bf16.gmra.mrb[0].mxu0 %v882
      %v1360 = vpop.f32.mrb[0].mxu0
      %v1361 = vadd.f32 %v1200, %v1360
      %v1362 = vpop.f32.mrb[0].mxu0
      %v1363 = vpop.f32.mrb[0].mxu0
      %v1364 = vadd.f32 %v1203, %v1363
      %v1365 = vpop.f32.mrb[0].mxu0
      %1366 = vmatprep.mubr.bf16.mxu0 0
      %1367 = vmatmul.mubr.bf16.gmra.mrb[0].mxu0 %v883
      %v1368 = vpop.f32.mrb[0].mxu0
      %v1369 = vadd.f32 %v1208, %v1368
      %v1370 = vpop.f32.mrb[0].mxu0
      %v1371 = vpop.f32.mrb[0].mxu0
      %v1372 = vadd.f32 %v1211, %v1371
      %v1373 = vpop.f32.mrb[0].mxu0
      %1374 = vmatprep.mubr.bf16.mxu0 0
      %1375 = vmatmul.mubr.bf16.gmra.mrb[0].mxu0 %v884
      %v1376 = vpop.f32.mrb[0].mxu0
      %v1377 = vadd.f32 %v1216, %v1376
      %v1378 = vpop.f32.mrb[0].mxu0
      %v1379 = vpop.f32.mrb[0].mxu0
      %v1380 = vadd.f32 %v1219, %v1379
      %v1381 = vpop.f32.mrb[0].mxu0
      %1382 = vmatprep.mubr.bf16.mxu0 0
      %1383 = vmatmul.mubr.bf16.gmra.mrb[0].mxu0 %v885
      %v1384 = vpop.f32.mrb[0].mxu0
      %v1385 = vadd.f32 %v1224, %v1384
      %v1386 = vpop.f32.mrb[0].mxu0
      %v1387 = vpop.f32.mrb[0].mxu0
      %v1388 = vadd.f32 %v1227, %v1387
      %v1389 = vpop.f32.mrb[0].mxu0
      %1390 = vmatprep.mubr.bf16.mxu0 0
      %1391 = vmatmul.mubr.bf16.gmra.mrb[0].mxu0 %v886
      %v1392 = vpop.f32.mrb[0].mxu0
      %v1393 = vadd.f32 %v1232, %v1392
      %v1394 = vpop.f32.mrb[0].mxu0
      %v1395 = vpop.f32.mrb[0].mxu0
      %v1396 = vadd.f32 %v1235, %v1395
      %v1397 = vpop.f32.mrb[0].mxu0
      %1398 = vmatprep.mubr.bf16.mxu0 0
      %1399 = vmatmul.mubr.bf16.gmra.mrb[0].mxu0 %v887
      %v1400 = vpop.f32.mrb[0].mxu0
      %v1401 = vadd.f32 %v1240, %v1400
      %v1402 = vpop.f32.mrb[0].mxu0
      %v1403 = vpop.f32.mrb[0].mxu0
      %v1404 = vadd.f32 %v1243, %v1403
      %v1405 = vpop.f32.mrb[0].mxu0
      %1406 = vmatprep.mubr.bf16.mxu0 0
      %1407 = vmatmul.mubr.bf16.gmra.mrb[0].mxu0 %v888
      %v1408 = vpop.f32.mrb[0].mxu0
      %v1409 = vadd.f32 %v1248, %v1408
      %v1410 = vpop.f32.mrb[0].mxu0
      %v1411 = vpop.f32.mrb[0].mxu0
      %v1412 = vadd.f32 %v1251, %v1411
      %v1413 = vpop.f32.mrb[0].mxu0
      %1414 = vmatprep.mubr.bf16.mxu0 0
      %1415 = vmatmul.mubr.bf16.gmra.mrb[0].mxu0 %v889
      %v1416 = vpop.f32.mrb[0].mxu0
      %v1417 = vadd.f32 %v1256, %v1416
      %v1418 = vpop.f32.mrb[0].mxu0
      %v1419 = vpop.f32.mrb[0].mxu0
      %v1420 = vadd.f32 %v1259, %v1419
      %v1421 = vpop.f32.mrb[0].mxu0
      %1422 = vmatprep.mubr.bf16.mxu0 0
      %1423 = vmatmul.mubr.bf16.gmra.mrb[0].mxu0 %v890
      %v1424 = vpop.f32.mrb[0].mxu0
      %v1425 = vadd.f32 %v1264, %v1424
      %v1426 = vpop.f32.mrb[0].mxu0
      %v1427 = vpop.f32.mrb[0].mxu0
      %v1428 = vadd.f32 %v1267, %v1427
      %v1429 = vpop.f32.mrb[0].mxu0
      %1430 = vmatprep.mubr.bf16.mxu0 0
      %1431 = vmatmul.mubr.bf16.gmra.mrb[0].mxu0 %v891
      %v1432 = vpop.f32.mrb[0].mxu0
      %v1433 = vadd.f32 %v1272, %v1432
      %v1434 = vpop.f32.mrb[0].mxu0
      %v1435 = vpop.f32.mrb[0].mxu0
      %v1436 = vadd.f32 %v1275, %v1435
      %v1437 = vpop.f32.mrb[0].mxu0
      %1438 = vmatprep.mubr.bf16.mxu0 0
      %1439 = vmatmul.mubr.bf16.gmra.mrb[0].mxu0 %v892
      %v1440 = vpop.f32.mrb[0].mxu0
      %v1441 = vadd.f32 %v1280, %v1440
      %v1442 = vpop.f32.mrb[0].mxu0
      %v1443 = vpop.f32.mrb[0].mxu0
      %v1444 = vadd.f32 %v1283, %v1443
      %v1445 = vpop.f32.mrb[0].mxu0
      %1446 = vmatprep.mubr.bf16.mxu0 0
      %1447 = vmatmul.mubr.bf16.gmra.mrb[0].mxu0 %v893
      %v1448 = vpop.f32.mrb[0].mxu0
      %v1449 = vadd.f32 %v1288, %v1448
      %v1450 = vpop.f32.mrb[0].mxu0
      %v1451 = vpop.f32.mrb[0].mxu0
      %v1452 = vadd.f32 %v1291, %v1451
      %v1453 = vpop.f32.mrb[0].mxu0
      %1454 = vmatprep.mubr.bf16.mxu0 0
      %1455 = vmatmul.mubr.bf16.gmra.mrb[0].mxu0 %v894
      %v1456 = vpop.f32.mrb[0].mxu0
      %v1457 = vadd.f32 %v1296, %v1456
      %v1458 = vpop.f32.mrb[0].mxu0
      %v1459 = vpop.f32.mrb[0].mxu0
      %v1460 = vadd.f32 %v1299, %v1459
      %v1461 = vpop.f32.mrb[0].mxu0
      %1462 = vmatprep.mubr.bf16.mxu0 0
      %1463 = vmatmul.mubr.bf16.gmra.mrb[0].mxu0 %v895
      %v1464 = vpop.f32.mrb[0].mxu0
      %v1465 = vadd.f32 %v1304, %v1464
      %v1466 = vpop.f32.mrb[0].mxu0
      %v1467 = vpop.f32.mrb[0].mxu0
      %v1468 = vadd.f32 %v1307, %v1467
      %v1469 = vpop.f32.mrb[0].mxu0
      %1470 = vmatprep.mubr.bf16.mxu0 0
      %1471 = vmatmul.mubr.bf16.gmra.mrb[0].mxu0 %v896
      %v1472 = vpop.f32.mrb[0].mxu0
      %v1473 = vadd.f32 %v1312, %v1472
      %v1474 = vpop.f32.mrb[0].mxu0
      %v1475 = vpop.f32.mrb[0].mxu0
      %v1476 = vadd.f32 %v1315, %v1475
      %v1477 = vpop.f32.mrb[0].mxu0
      %1478 = vdwg.mxu0
      %v1527 = vunpack.c.l.b16 %v916
      %v1528 = vunpack.c.l.b16 %v917
      %v1529 = vunpack.c.l.b16 %v918
      %v1530 = vunpack.c.l.b16 %v919
      %v1531 = vunpack.c.l.b16 %v920
      %v1532 = vunpack.c.l.b16 %v921
      %v1533 = vunpack.c.l.b16 %v922
      %v1534 = vunpack.c.l.b16 %v923
      %v1535 = vunpack.c.l.b16 %v924
      %v1536 = vunpack.c.l.b16 %v925
      %v1537 = vunpack.c.l.b16 %v926
      %v1538 = vunpack.c.l.b16 %v927
      %v1539 = vunpack.c.l.b16 %v928
      %v1540 = vunpack.c.l.b16 %v929
      %v1541 = vunpack.c.l.b16 %v930
      %v1542 = vunpack.c.l.b16 %v931
      %v1543 = vunpack.c.l.b16 %v932
      %v1544 = vunpack.c.l.b16 %v933
      %v1545 = vunpack.c.l.b16 %v934
      %v1546 = vunpack.c.l.b16 %v935
      %v1547 = vunpack.c.l.b16 %v936
      %v1548 = vunpack.c.l.b16 %v937
      %v1549 = vunpack.c.l.b16 %v938
      %v1550 = vunpack.c.l.b16 %v939
      %v1551 = vunpack.c.l.b16 %v940
      %v1552 = vunpack.c.l.b16 %v941
      %v1553 = vunpack.c.l.b16 %v942
      %v1554 = vunpack.c.l.b16 %v943
      %v1555 = vunpack.c.l.b16 %v944
      %v1556 = vunpack.c.l.b16 %v945
      %v1557 = vunpack.c.l.b16 %v946
      %v1558 = vunpack.c.l.b16 %v947
      %v1559 = vunpack.c.l.b16 %v948
      %v1560 = vunpack.c.l.b16 %v949
      %v1561 = vunpack.c.l.b16 %v950
      %v1562 = vunpack.c.l.b16 %v951
      %v1563 = vunpack.c.l.b16 %v952
      %v1564 = vunpack.c.l.b16 %v953
      %v1565 = vunpack.c.l.b16 %v954
      %v1566 = vunpack.c.l.b16 %v955
      %v1567 = vunpack.c.l.b16 %v956
      %v1568 = vunpack.c.l.b16 %v957
      %v1569 = vunpack.c.l.b16 %v958
      %v1570 = vunpack.c.l.b16 %v959
      %v1571 = vunpack.c.l.b16 %v960
      %v1572 = vunpack.c.l.b16 %v961
      %v1573 = vunpack.c.l.b16 %v962
      %v1574 = vunpack.c.l.b16 %v963
      %v1575 = vpack.c.b16 %v1528, %v1527
      %v1576 = vpack.c.b16 %v1530, %v1529
      %v1577 = vpack.c.b16 %v1532, %v1531
      %v1578 = vpack.c.b16 %v1534, %v1533
      %v1579 = vpack.c.b16 %v1536, %v1535
      %v1580 = vpack.c.b16 %v1538, %v1537
      %v1581 = vpack.c.b16 %v1540, %v1539
      %v1582 = vpack.c.b16 %v1542, %v1541
      %v1583 = vpack.c.b16 %v1544, %v1543
      %v1584 = vpack.c.b16 %v1546, %v1545
      %v1585 = vpack.c.b16 %v1548, %v1547
      %v1586 = vpack.c.b16 %v1550, %v1549
      %v1587 = vpack.c.b16 %v1552, %v1551
      %v1588 = vpack.c.b16 %v1554, %v1553
      %v1589 = vpack.c.b16 %v1556, %v1555
      %v1590 = vpack.c.b16 %v1558, %v1557
      %v1591 = vpack.c.b16 %v1560, %v1559
      %v1592 = vpack.c.b16 %v1562, %v1561
      %v1593 = vpack.c.b16 %v1564, %v1563
      %v1594 = vpack.c.b16 %v1566, %v1565
      %v1595 = vpack.c.b16 %v1568, %v1567
      %v1596 = vpack.c.b16 %v1570, %v1569
      %v1597 = vpack.c.b16 %v1572, %v1571
      %v1598 = vpack.c.b16 %v1574, %v1573
      %1623 = vmatprep.subr.bf16.mxu0 0
      %1624 = vmatpush1.bf16.msra.mxu0 %v1575
      %1625 = vmatprep.subr.bf16.mxu0 0
      %1626 = vmatpush1.bf16.msra.mxu0 %v1576
      %1627 = vmatprep.subr.bf16.mxu0 0
      %1628 = vmatpush1.bf16.msra.mxu0 %v1577
      %1629 = vmatprep.subr.bf16.mxu0 0
      %1630 = vmatpush1.bf16.msra.mxu0 %v1578
      %1631 = vmatprep.subr.bf16.mxu0 0
      %1632 = vmatpush1.bf16.msra.mxu0 %v1579
      %1633 = vmatprep.subr.bf16.mxu0 0
      %1634 = vmatpush1.bf16.msra.mxu0 %v1580
      %1635 = vmatprep.subr.bf16.mxu0 0
      %1636 = vmatpush1.bf16.msra.mxu0 %v1581
      %1637 = vmatprep.subr.bf16.mxu0 0
      %1638 = vmatpush1.bf16.msra.mxu0 %v1582
      %1639 = vmatprep.subr.bf16.mxu0 0
      %1640 = vmatpush1.bf16.msra.mxu0 %v1583
      %1641 = vmatprep.subr.bf16.mxu0 0
      %1642 = vmatpush1.bf16.msra.mxu0 %v1584
      %1643 = vmatprep.subr.bf16.mxu0 0
      %1644 = vmatpush1.bf16.msra.mxu0 %v1585
      %1645 = vmatprep.subr.bf16.mxu0 0
      %1646 = vmatpush1.bf16.msra.mxu0 %v1586
      %1647 = vmatprep.subr.bf16.mxu0 0
      %1648 = vmatpush1.bf16.msra.mxu0 %v1587
      %1649 = vmatprep.subr.bf16.mxu0 0
      %1650 = vmatpush1.bf16.msra.mxu0 %v1588
      %1651 = vmatprep.subr.bf16.mxu0 0
      %1652 = vmatpush1.bf16.msra.mxu0 %v1589
      %1653 = vmatprep.subr.bf16.mxu0 0
      %1654 = vmatpush1.bf16.msra.mxu0 %v1590
      %1655 = vmatprep.mubr.bf16.mxu0 %v640
      %1656 = vmatmul.mubr.bf16.gmra.mrb[0].mxu0 %v805
      %v1657 = vpop.f32.mrb[0].mxu0
      %v1658 = vadd.f32 %v1353, %v1657
      %v1659 = vpop.f32.mrb[0].mxu0
      %v1660 = vpop.f32.mrb[0].mxu0
      %v1661 = vadd.f32 %v1356, %v1660
      %v1662 = vpop.f32.mrb[0].mxu0
      %1663 = vmatprep.mubr.bf16.mxu0 %v641
      %1664 = vmatmul.mubr.bf16.gmra.mrb[0].mxu0 %v806
      %v1665 = vpop.f32.mrb[0].mxu0
      %v1666 = vadd.f32 %v1361, %v1665
      %v1667 = vpop.f32.mrb[0].mxu0
      %v1668 = vpop.f32.mrb[0].mxu0
      %v1669 = vadd.f32 %v1364, %v1668
      %v1670 = vpop.f32.mrb[0].mxu0
      %1671 = vmatprep.mubr.bf16.mxu0 %v642
      %1672 = vmatmul.mubr.bf16.gmra.mrb[0].mxu0 %v807
      %v1673 = vpop.f32.mrb[0].mxu0
      %v1674 = vadd.f32 %v1369, %v1673
      %v1675 = vpop.f32.mrb[0].mxu0
      %v1676 = vpop.f32.mrb[0].mxu0
      %v1677 = vadd.f32 %v1372, %v1676
      %v1678 = vpop.f32.mrb[0].mxu0
      %1679 = vmatprep.mubr.bf16.mxu0 %v643
      %1680 = vmatmul.mubr.bf16.gmra.mrb[0].mxu0 %v808
      %v1681 = vpop.f32.mrb[0].mxu0
      %v1682 = vadd.f32 %v1377, %v1681
      %v1683 = vpop.f32.mrb[0].mxu0
      %v1684 = vpop.f32.mrb[0].mxu0
      %v1685 = vadd.f32 %v1380, %v1684
      %v1686 = vpop.f32.mrb[0].mxu0
      %1687 = vmatprep.mubr.bf16.mxu0 %v644
      %1688 = vmatmul.mubr.bf16.gmra.mrb[0].mxu0 %v809
      %v1689 = vpop.f32.mrb[0].mxu0
      %v1690 = vadd.f32 %v1385, %v1689
      %v1691 = vpop.f32.mrb[0].mxu0
      %v1692 = vpop.f32.mrb[0].mxu0
      %v1693 = vadd.f32 %v1388, %v1692
      %v1694 = vpop.f32.mrb[0].mxu0
      %1695 = vmatprep.mubr.bf16.mxu0 %v645
      %1696 = vmatmul.mubr.bf16.gmra.mrb[0].mxu0 %v810
      %v1697 = vpop.f32.mrb[0].mxu0
      %v1698 = vadd.f32 %v1393, %v1697
      %v1699 = vpop.f32.mrb[0].mxu0
      %v1700 = vpop.f32.mrb[0].mxu0
      %v1701 = vadd.f32 %v1396, %v1700
      %v1702 = vpop.f32.mrb[0].mxu0
      %1703 = vmatprep.mubr.bf16.mxu0 %v646
      %1704 = vmatmul.mubr.bf16.gmra.mrb[0].mxu0 %v811
      %v1705 = vpop.f32.mrb[0].mxu0
      %v1706 = vadd.f32 %v1401, %v1705
      %v1707 = vpop.f32.mrb[0].mxu0
      %v1708 = vpop.f32.mrb[0].mxu0
      %v1709 = vadd.f32 %v1404, %v1708
      %v1710 = vpop.f32.mrb[0].mxu0
      %1711 = vmatprep.mubr.bf16.mxu0 %v647
      %1712 = vmatmul.mubr.bf16.gmra.mrb[0].mxu0 %v812
      %v1713 = vpop.f32.mrb[0].mxu0
      %v1714 = vadd.f32 %v1409, %v1713
      %v1715 = vpop.f32.mrb[0].mxu0
      %v1716 = vpop.f32.mrb[0].mxu0
      %v1717 = vadd.f32 %v1412, %v1716
      %v1718 = vpop.f32.mrb[0].mxu0
      %1719 = vmatprep.mubr.bf16.mxu0 %v648
      %1720 = vmatmul.mubr.bf16.gmra.mrb[0].mxu0 %v813
      %v1721 = vpop.f32.mrb[0].mxu0
      %v1722 = vadd.f32 %v1417, %v1721
      %v1723 = vpop.f32.mrb[0].mxu0
      %v1724 = vpop.f32.mrb[0].mxu0
      %v1725 = vadd.f32 %v1420, %v1724
      %v1726 = vpop.f32.mrb[0].mxu0
      %1727 = vmatprep.mubr.bf16.mxu0 %v649
      %1728 = vmatmul.mubr.bf16.gmra.mrb[0].mxu0 %v814
      %v1729 = vpop.f32.mrb[0].mxu0
      %v1730 = vadd.f32 %v1425, %v1729
      %v1731 = vpop.f32.mrb[0].mxu0
      %v1732 = vpop.f32.mrb[0].mxu0
      %v1733 = vadd.f32 %v1428, %v1732
      %v1734 = vpop.f32.mrb[0].mxu0
      %1735 = vmatprep.mubr.bf16.mxu0 %v650
      %1736 = vmatmul.mubr.bf16.gmra.mrb[0].mxu0 %v815
      %v1737 = vpop.f32.mrb[0].mxu0
      %v1738 = vadd.f32 %v1433, %v1737
      %v1739 = vpop.f32.mrb[0].mxu0
      %v1740 = vpop.f32.mrb[0].mxu0
      %v1741 = vadd.f32 %v1436, %v1740
      %v1742 = vpop.f32.mrb[0].mxu0
      %1743 = vmatprep.mubr.bf16.mxu0 %v651
      %1744 = vmatmul.mubr.bf16.gmra.mrb[0].mxu0 %v816
      %v1745 = vpop.f32.mrb[0].mxu0
      %v1746 = vadd.f32 %v1441, %v1745
      %v1747 = vpop.f32.mrb[0].mxu0
      %v1748 = vpop.f32.mrb[0].mxu0
      %v1749 = vadd.f32 %v1444, %v1748
      %v1750 = vpop.f32.mrb[0].mxu0
      %1751 = vmatprep.mubr.bf16.mxu0 %v652
      %1752 = vmatmul.mubr.bf16.gmra.mrb[0].mxu0 %v817
      %v1753 = vpop.f32.mrb[0].mxu0
      %v1754 = vadd.f32 %v1449, %v1753
      %v1755 = vpop.f32.mrb[0].mxu0
      %v1756 = vpop.f32.mrb[0].mxu0
      %v1757 = vadd.f32 %v1452, %v1756
      %v1758 = vpop.f32.mrb[0].mxu0
      %1759 = vmatprep.mubr.bf16.mxu0 %v653
      %1760 = vmatmul.mubr.bf16.gmra.mrb[0].mxu0 %v818
      %v1761 = vpop.f32.mrb[0].mxu0
      %v1762 = vadd.f32 %v1457, %v1761
      %v1763 = vpop.f32.mrb[0].mxu0
      %v1764 = vpop.f32.mrb[0].mxu0
      %v1765 = vadd.f32 %v1460, %v1764
      %v1766 = vpop.f32.mrb[0].mxu0
      %1767 = vmatprep.mubr.bf16.mxu0 %v654
      %1768 = vmatmul.mubr.bf16.gmra.mrb[0].mxu0 %v819
      %v1769 = vpop.f32.mrb[0].mxu0
      %v1770 = vadd.f32 %v1465, %v1769
      %v1771 = vpop.f32.mrb[0].mxu0
      %v1772 = vpop.f32.mrb[0].mxu0
      %v1773 = vadd.f32 %v1468, %v1772
      %v1774 = vpop.f32.mrb[0].mxu0
      %1775 = vmatprep.mubr.bf16.mxu0 %v655
      %1776 = vmatmul.mubr.bf16.gmra.mrb[0].mxu0 %v820
      %v1777 = vpop.f32.mrb[0].mxu0
      %v1778 = vadd.f32 %v1473, %v1777
      %v1779 = vpop.f32.mrb[0].mxu0
      %v1780 = vpop.f32.mrb[0].mxu0
      %v1781 = vadd.f32 %v1476, %v1780
      %v1782 = vpop.f32.mrb[0].mxu0
      %1783 = vdwg.mxu0
      %1784 = vmatprep.subr.bf16.mxu0 0
      %1785 = vmatpush1.bf16.msra.mxu0 %v1591
      %1786 = vmatprep.subr.bf16.mxu0 0
      %1787 = vmatpush1.bf16.msra.mxu0 %v1592
      %1788 = vmatprep.subr.bf16.mxu0 0
      %1789 = vmatpush1.bf16.msra.mxu0 %v1593
      %1790 = vmatprep.subr.bf16.mxu0 0
      %1791 = vmatpush1.bf16.msra.mxu0 %v1594
      %1792 = vmatprep.subr.bf16.mxu0 0
      %1793 = vmatpush1.bf16.msra.mxu0 %v1595
      %1794 = vmatprep.subr.bf16.mxu0 0
      %1795 = vmatpush1.bf16.msra.mxu0 %v1596
      %1796 = vmatprep.subr.bf16.mxu0 0
      %1797 = vmatpush1.bf16.msra.mxu0 %v1597
      %1798 = vmatprep.subr.bf16.mxu0 0
      %1799 = vmatpush1.bf16.msra.mxu0 %v1598
      %1800 = vmatprep.subr.bf16.mxu0 0
      %1801 = vmatpush1.bf16.msra.mxu0 0
      %1802 = vmatprep.subr.bf16.mxu0 0
      %1803 = vmatpush1.bf16.msra.mxu0 0
      %1804 = vmatprep.subr.bf16.mxu0 0
      %1805 = vmatpush1.bf16.msra.mxu0 0
      %1806 = vmatprep.subr.bf16.mxu0 0
      %1807 = vmatpush1.bf16.msra.mxu0 0
      %1808 = vmatprep.subr.bf16.mxu0 0
      %1809 = vmatpush1.bf16.msra.mxu0 0
      %1810 = vmatprep.subr.bf16.mxu0 0
      %1811 = vmatpush1.bf16.msra.mxu0 0
      %1812 = vmatprep.subr.bf16.mxu0 0
      %1813 = vmatpush1.bf16.msra.mxu0 0
      %1814 = vmatprep.subr.bf16.mxu0 0
      %1815 = vmatpush1.bf16.msra.mxu0 0
      %1816 = vmatprep.mubr.bf16.mxu0 0
      %1817 = vmatmul.mubr.bf16.gmra.mrb[0].mxu0 %v880
      %v1818 = vpop.f32.mrb[0].mxu0
      %v1819 = vadd.f32 %v1658, %v1818
      %v1820 = vpop.f32.mrb[0].mxu0
      %v1821 = vpop.f32.mrb[0].mxu0
      %v1822 = vadd.f32 %v1661, %v1821
      %v1823 = vpop.f32.mrb[0].mxu0
      %1824 = vmatprep.mubr.bf16.mxu0 0
      %1825 = vmatmul.mubr.bf16.gmra.mrb[0].mxu0 %v881
      %v1826 = vpop.f32.mrb[0].mxu0
      %v1827 = vadd.f32 %v1666, %v1826
      %v1828 = vpop.f32.mrb[0].mxu0
      %v1829 = vpop.f32.mrb[0].mxu0
      %v1830 = vadd.f32 %v1669, %v1829
      %v1831 = vpop.f32.mrb[0].mxu0
      %1832 = vmatprep.mubr.bf16.mxu0 0
      %1833 = vmatmul.mubr.bf16.gmra.mrb[0].mxu0 %v882
      %v1834 = vpop.f32.mrb[0].mxu0
      %v1835 = vadd.f32 %v1674, %v1834
      %v1836 = vpop.f32.mrb[0].mxu0
      %v1837 = vpop.f32.mrb[0].mxu0
      %v1838 = vadd.f32 %v1677, %v1837
      %v1839 = vpop.f32.mrb[0].mxu0
      %1840 = vmatprep.mubr.bf16.mxu0 0
      %1841 = vmatmul.mubr.bf16.gmra.mrb[0].mxu0 %v883
      %v1842 = vpop.f32.mrb[0].mxu0
      %v1843 = vadd.f32 %v1682, %v1842
      %v1844 = vpop.f32.mrb[0].mxu0
      %v1845 = vpop.f32.mrb[0].mxu0
      %v1846 = vadd.f32 %v1685, %v1845
      %v1847 = vpop.f32.mrb[0].mxu0
      %1848 = vmatprep.mubr.bf16.mxu0 0
      %1849 = vmatmul.mubr.bf16.gmra.mrb[0].mxu0 %v884
      %v1850 = vpop.f32.mrb[0].mxu0
      %v1851 = vadd.f32 %v1690, %v1850
      %v1852 = vpop.f32.mrb[0].mxu0
      %v1853 = vpop.f32.mrb[0].mxu0
      %v1854 = vadd.f32 %v1693, %v1853
      %v1855 = vpop.f32.mrb[0].mxu0
      %1856 = vmatprep.mubr.bf16.mxu0 0
      %1857 = vmatmul.mubr.bf16.gmra.mrb[0].mxu0 %v885
      %v1858 = vpop.f32.mrb[0].mxu0
      %v1859 = vadd.f32 %v1698, %v1858
      %v1860 = vpop.f32.mrb[0].mxu0
      %v1861 = vpop.f32.mrb[0].mxu0
      %v1862 = vadd.f32 %v1701, %v1861
      %v1863 = vpop.f32.mrb[0].mxu0
      %1864 = vmatprep.mubr.bf16.mxu0 0
      %1865 = vmatmul.mubr.bf16.gmra.mrb[0].mxu0 %v886
      %v1866 = vpop.f32.mrb[0].mxu0
      %v1867 = vadd.f32 %v1706, %v1866
      %v1868 = vpop.f32.mrb[0].mxu0
      %v1869 = vpop.f32.mrb[0].mxu0
      %v1870 = vadd.f32 %v1709, %v1869
      %v1871 = vpop.f32.mrb[0].mxu0
      %1872 = vmatprep.mubr.bf16.mxu0 0
      %1873 = vmatmul.mubr.bf16.gmra.mrb[0].mxu0 %v887
      %v1874 = vpop.f32.mrb[0].mxu0
      %v1875 = vadd.f32 %v1714, %v1874
      %v1876 = vpop.f32.mrb[0].mxu0
      %v1877 = vpop.f32.mrb[0].mxu0
      %v1878 = vadd.f32 %v1717, %v1877
      %v1879 = vpop.f32.mrb[0].mxu0
      %1880 = vmatprep.mubr.bf16.mxu0 0
      %1881 = vmatmul.mubr.bf16.gmra.mrb[0].mxu0 %v888
      %v1882 = vpop.f32.mrb[0].mxu0
      %v1883 = vadd.f32 %v1722, %v1882
      %v1884 = vpop.f32.mrb[0].mxu0
      %v1885 = vpop.f32.mrb[0].mxu0
      %v1886 = vadd.f32 %v1725, %v1885
      %v1887 = vpop.f32.mrb[0].mxu0
      %1888 = vmatprep.mubr.bf16.mxu0 0
      %1889 = vmatmul.mubr.bf16.gmra.mrb[0].mxu0 %v889
      %v1890 = vpop.f32.mrb[0].mxu0
      %v1891 = vadd.f32 %v1730, %v1890
      %v1892 = vpop.f32.mrb[0].mxu0
      %v1893 = vpop.f32.mrb[0].mxu0
      %v1894 = vadd.f32 %v1733, %v1893
      %v1895 = vpop.f32.mrb[0].mxu0
      %1896 = vmatprep.mubr.bf16.mxu0 0
      %1897 = vmatmul.mubr.bf16.gmra.mrb[0].mxu0 %v890
      %v1898 = vpop.f32.mrb[0].mxu0
      %v1899 = vadd.f32 %v1738, %v1898
      %v1900 = vpop.f32.mrb[0].mxu0
      %v1901 = vpop.f32.mrb[0].mxu0
      %v1902 = vadd.f32 %v1741, %v1901
      %v1903 = vpop.f32.mrb[0].mxu0
      %1904 = vmatprep.mubr.bf16.mxu0 0
      %1905 = vmatmul.mubr.bf16.gmra.mrb[0].mxu0 %v891
      %v1906 = vpop.f32.mrb[0].mxu0
      %v1907 = vadd.f32 %v1746, %v1906
      %v1908 = vpop.f32.mrb[0].mxu0
      %v1909 = vpop.f32.mrb[0].mxu0
      %v1910 = vadd.f32 %v1749, %v1909
      %v1911 = vpop.f32.mrb[0].mxu0
      %1912 = vmatprep.mubr.bf16.mxu0 0
      %1913 = vmatmul.mubr.bf16.gmra.mrb[0].mxu0 %v892
      %v1914 = vpop.f32.mrb[0].mxu0
      %v1915 = vadd.f32 %v1754, %v1914
      %v1916 = vpop.f32.mrb[0].mxu0
      %v1917 = vpop.f32.mrb[0].mxu0
      %v1918 = vadd.f32 %v1757, %v1917
      %v1919 = vpop.f32.mrb[0].mxu0
      %1920 = vmatprep.mubr.bf16.mxu0 0
      %1921 = vmatmul.mubr.bf16.gmra.mrb[0].mxu0 %v893
      %v1922 = vpop.f32.mrb[0].mxu0
      %v1923 = vadd.f32 %v1762, %v1922
      %v1924 = vpop.f32.mrb[0].mxu0
      %v1925 = vpop.f32.mrb[0].mxu0
      %v1926 = vadd.f32 %v1765, %v1925
      %v1927 = vpop.f32.mrb[0].mxu0
      %1928 = vmatprep.mubr.bf16.mxu0 0
      %1929 = vmatmul.mubr.bf16.gmra.mrb[0].mxu0 %v894
      %v1930 = vpop.f32.mrb[0].mxu0
      %v1931 = vadd.f32 %v1770, %v1930
      %v1932 = vpop.f32.mrb[0].mxu0
      %v1933 = vpop.f32.mrb[0].mxu0
      %v1934 = vadd.f32 %v1773, %v1933
      %v1935 = vpop.f32.mrb[0].mxu0
      %1936 = vmatprep.mubr.bf16.mxu0 0
      %1937 = vmatmul.mubr.bf16.gmra.mrb[0].mxu0 %v895
      %v1938 = vpop.f32.mrb[0].mxu0
      %v1939 = vadd.f32 %v1778, %v1938
      %v1940 = vpop.f32.mrb[0].mxu0
      %v1941 = vpop.f32.mrb[0].mxu0
      %v1942 = vadd.f32 %v1781, %v1941
      %v1943 = vpop.f32.mrb[0].mxu0
      %1944 = vdwg.mxu0
      %s1945 = scalar_lea.vmem %s3, 384
      %v1946 = vld [vmem:[%s1945] sm:$0xf]
      %v1947 = vld [vmem:[%s1945 + $0x4] sm:$0xf]
      %v1948 = vld [vmem:[%s1945 + $0x8] sm:$0xf]
      %v1949 = vld [vmem:[%s1945 + $0xc] sm:$0xf]
      %v1950 = vld [vmem:[%s1945 + $0x10] sm:$0xf]
      %v1951 = vld [vmem:[%s1945 + $0x14] sm:$0xf]
      %v1952 = vld [vmem:[%s1945 + $0x18] sm:$0xf]
      %v1953 = vld [vmem:[%s1945 + $0x1c] sm:$0xf]
      %v1954 = vld [vmem:[%s1945 + $0x20] sm:$0xf]
      %v1955 = vld [vmem:[%s1945 + $0x24] sm:$0xf]
      %v1956 = vld [vmem:[%s1945 + $0x28] sm:$0xf]
      %v1957 = vld [vmem:[%s1945 + $0x2c] sm:$0xf]
      %v1958 = vld [vmem:[%s1945 + $0x30] sm:$0xf]
      %v1959 = vld [vmem:[%s1945 + $0x34] sm:$0xf]
      %v1960 = vld [vmem:[%s1945 + $0x38] sm:$0xf]
      %v1961 = vld [vmem:[%s1945 + $0x3c] sm:$0xf]
      %v1962 = vld [vmem:[%s1945 + $0x40] sm:$0xf]
      %v1963 = vld [vmem:[%s1945 + $0x44] sm:$0xf]
      %v1964 = vld [vmem:[%s1945 + $0x48] sm:$0xf]
      %v1965 = vld [vmem:[%s1945 + $0x4c] sm:$0xf]
      %v1966 = vld [vmem:[%s1945 + $0x50] sm:$0xf]
      %v1967 = vld [vmem:[%s1945 + $0x54] sm:$0xf]
      %v1968 = vld [vmem:[%s1945 + $0x58] sm:$0xf]
      %v1969 = vld [vmem:[%s1945 + $0x5c] sm:$0xf]
      %v1970 = vld [vmem:[%s1945 + $0x60] sm:$0xf]
      %v1971 = vld [vmem:[%s1945 + $0x64] sm:$0xf]
      %v1972 = vld [vmem:[%s1945 + $0x68] sm:$0xf]
      %v1973 = vld [vmem:[%s1945 + $0x6c] sm:$0xf]
      %v1974 = vld [vmem:[%s1945 + $0x70] sm:$0xf]
      %v1975 = vld [vmem:[%s1945 + $0x74] sm:$0xf]
      %v1976 = vld [vmem:[%s1945 + $0x78] sm:$0xf]
      %v1977 = vld [vmem:[%s1945 + $0x7c] sm:$0xf]
      %v1978 = vld [vmem:[%s1945 + $0x80] sm:$0xf]
      %v1979 = vld [vmem:[%s1945 + $0x84] sm:$0xf]
      %v1980 = vld [vmem:[%s1945 + $0x88] sm:$0xf]
      %v1981 = vld [vmem:[%s1945 + $0x8c] sm:$0xf]
      %v1982 = vld [vmem:[%s1945 + $0x90] sm:$0xf]
      %v1983 = vld [vmem:[%s1945 + $0x94] sm:$0xf]
      %v1984 = vld [vmem:[%s1945 + $0x98] sm:$0xf]
      %v1985 = vld [vmem:[%s1945 + $0x9c] sm:$0xf]
      %v1986 = vld [vmem:[%s1945 + $0xa0] sm:$0xf]
      %v1987 = vld [vmem:[%s1945 + $0xa4] sm:$0xf]
      %v1988 = vld [vmem:[%s1945 + $0xa8] sm:$0xf]
      %v1989 = vld [vmem:[%s1945 + $0xac] sm:$0xf]
      %v1990 = vld [vmem:[%s1945 + $0xb0] sm:$0xf]
      %v1991 = vld [vmem:[%s1945 + $0xb4] sm:$0xf]
      %v1992 = vld [vmem:[%s1945 + $0xb8] sm:$0xf]
      %v1993 = vld [vmem:[%s1945 + $0xbc] sm:$0xf]
      %v2042 = vunpack.c.l.b16 %v1946
      %v2043 = vunpack.c.l.b16 %v1947
      %v2044 = vunpack.c.l.b16 %v1948
      %v2045 = vunpack.c.l.b16 %v1949
      %v2046 = vunpack.c.l.b16 %v1950
      %v2047 = vunpack.c.l.b16 %v1951
      %v2048 = vunpack.c.l.b16 %v1952
      %v2049 = vunpack.c.l.b16 %v1953
      %v2050 = vunpack.c.l.b16 %v1954
      %v2051 = vunpack.c.l.b16 %v1955
      %v2052 = vunpack.c.l.b16 %v1956
      %v2053 = vunpack.c.l.b16 %v1957
      %v2054 = vunpack.c.l.b16 %v1958
      %v2055 = vunpack.c.l.b16 %v1959
      %v2056 = vunpack.c.l.b16 %v1960
      %v2057 = vunpack.c.l.b16 %v1961
      %v2058 = vunpack.c.l.b16 %v1962
      %v2059 = vunpack.c.l.b16 %v1963
      %v2060 = vunpack.c.l.b16 %v1964
      %v2061 = vunpack.c.l.b16 %v1965
      %v2062 = vunpack.c.l.b16 %v1966
      %v2063 = vunpack.c.l.b16 %v1967
      %v2064 = vunpack.c.l.b16 %v1968
      %v2065 = vunpack.c.l.b16 %v1969
      %v2066 = vunpack.c.l.b16 %v1970
      %v2067 = vunpack.c.l.b16 %v1971
      %v2068 = vunpack.c.l.b16 %v1972
      %v2069 = vunpack.c.l.b16 %v1973
      %v2070 = vunpack.c.l.b16 %v1974
      %v2071 = vunpack.c.l.b16 %v1975
      %v2072 = vunpack.c.l.b16 %v1976
      %v2073 = vunpack.c.l.b16 %v1977
      %v2074 = vunpack.c.l.b16 %v1978
      %v2075 = vunpack.c.l.b16 %v1979
      %v2076 = vunpack.c.l.b16 %v1980
      %v2077 = vunpack.c.l.b16 %v1981
      %v2078 = vunpack.c.l.b16 %v1982
      %v2079 = vunpack.c.l.b16 %v1983
      %v2080 = vunpack.c.l.b16 %v1984
      %v2081 = vunpack.c.l.b16 %v1985
      %v2082 = vunpack.c.l.b16 %v1986
      %v2083 = vunpack.c.l.b16 %v1987
      %v2084 = vunpack.c.l.b16 %v1988
      %v2085 = vunpack.c.l.b16 %v1989
      %v2086 = vunpack.c.l.b16 %v1990
      %v2087 = vunpack.c.l.b16 %v1991
      %v2088 = vunpack.c.l.b16 %v1992
      %v2089 = vunpack.c.l.b16 %v1993
      %v2090 = vpack.c.b16 %v2043, %v2042
      %v2091 = vpack.c.b16 %v2045, %v2044
      %v2092 = vpack.c.b16 %v2047, %v2046
      %v2093 = vpack.c.b16 %v2049, %v2048
      %v2094 = vpack.c.b16 %v2051, %v2050
      %v2095 = vpack.c.b16 %v2053, %v2052
      %v2096 = vpack.c.b16 %v2055, %v2054
      %v2097 = vpack.c.b16 %v2057, %v2056
      %v2098 = vpack.c.b16 %v2059, %v2058
      %v2099 = vpack.c.b16 %v2061, %v2060
      %v2100 = vpack.c.b16 %v2063, %v2062
      %v2101 = vpack.c.b16 %v2065, %v2064
      %v2102 = vpack.c.b16 %v2067, %v2066
      %v2103 = vpack.c.b16 %v2069, %v2068
      %v2104 = vpack.c.b16 %v2071, %v2070
      %v2105 = vpack.c.b16 %v2073, %v2072
      %v2106 = vpack.c.b16 %v2075, %v2074
      %v2107 = vpack.c.b16 %v2077, %v2076
      %v2108 = vpack.c.b16 %v2079, %v2078
      %v2109 = vpack.c.b16 %v2081, %v2080
      %v2110 = vpack.c.b16 %v2083, %v2082
      %v2111 = vpack.c.b16 %v2085, %v2084
      %v2112 = vpack.c.b16 %v2087, %v2086
      %v2113 = vpack.c.b16 %v2089, %v2088
      %2138 = vmatprep.subr.bf16.mxu0 0
      %2139 = vmatpush1.bf16.msra.mxu0 %v2090
      %2140 = vmatprep.subr.bf16.mxu0 0
      %2141 = vmatpush1.bf16.msra.mxu0 %v2091
      %2142 = vmatprep.subr.bf16.mxu0 0
      %2143 = vmatpush1.bf16.msra.mxu0 %v2092
      %2144 = vmatprep.subr.bf16.mxu0 0
      %2145 = vmatpush1.bf16.msra.mxu0 %v2093
      %2146 = vmatprep.subr.bf16.mxu0 0
      %2147 = vmatpush1.bf16.msra.mxu0 %v2094
      %2148 = vmatprep.subr.bf16.mxu0 0
      %2149 = vmatpush1.bf16.msra.mxu0 %v2095
      %2150 = vmatprep.subr.bf16.mxu0 0
      %2151 = vmatpush1.bf16.msra.mxu0 %v2096
      %2152 = vmatprep.subr.bf16.mxu0 0
      %2153 = vmatpush1.bf16.msra.mxu0 %v2097
      %2154 = vmatprep.subr.bf16.mxu0 0
      %2155 = vmatpush1.bf16.msra.mxu0 %v2098
      %2156 = vmatprep.subr.bf16.mxu0 0
      %2157 = vmatpush1.bf16.msra.mxu0 %v2099
      %2158 = vmatprep.subr.bf16.mxu0 0
      %2159 = vmatpush1.bf16.msra.mxu0 %v2100
      %2160 = vmatprep.subr.bf16.mxu0 0
      %2161 = vmatpush1.bf16.msra.mxu0 %v2101
      %2162 = vmatprep.subr.bf16.mxu0 0
      %2163 = vmatpush1.bf16.msra.mxu0 %v2102
      %2164 = vmatprep.subr.bf16.mxu0 0
      %2165 = vmatpush1.bf16.msra.mxu0 %v2103
      %2166 = vmatprep.subr.bf16.mxu0 0
      %2167 = vmatpush1.bf16.msra.mxu0 %v2104
      %2168 = vmatprep.subr.bf16.mxu0 0
      %2169 = vmatpush1.bf16.msra.mxu0 %v2105
      %2170 = vmatprep.mubr.bf16.mxu0 %v642
      %2171 = vmatmul.mubr.bf16.gmra.mrb[0].mxu0 %v807
      %v2172 = vpop.f32.mrb[0].mxu0
      %v2173 = vadd.f32 0.0, %v2172
      %v2174 = vpop.f32.mrb[0].mxu0
      %v2175 = vpop.f32.mrb[0].mxu0
      %v2176 = vadd.f32 0.0, %v2175
      %v2177 = vpop.f32.mrb[0].mxu0
      %2178 = vmatprep.mubr.bf16.mxu0 %v643
      %2179 = vmatmul.mubr.bf16.gmra.mrb[0].mxu0 %v808
      %v2180 = vpop.f32.mrb[0].mxu0
      %v2181 = vadd.f32 0.0, %v2180
      %v2182 = vpop.f32.mrb[0].mxu0
      %v2183 = vpop.f32.mrb[0].mxu0
      %v2184 = vadd.f32 0.0, %v2183
      %v2185 = vpop.f32.mrb[0].mxu0
      %2186 = vmatprep.mubr.bf16.mxu0 %v644
      %2187 = vmatmul.mubr.bf16.gmra.mrb[0].mxu0 %v809
      %v2188 = vpop.f32.mrb[0].mxu0
      %v2189 = vadd.f32 0.0, %v2188
      %v2190 = vpop.f32.mrb[0].mxu0
      %v2191 = vpop.f32.mrb[0].mxu0
      %v2192 = vadd.f32 0.0, %v2191
      %v2193 = vpop.f32.mrb[0].mxu0
      %2194 = vmatprep.mubr.bf16.mxu0 %v645
      %2195 = vmatmul.mubr.bf16.gmra.mrb[0].mxu0 %v810
      %v2196 = vpop.f32.mrb[0].mxu0
      %v2197 = vadd.f32 0.0, %v2196
      %v2198 = vpop.f32.mrb[0].mxu0
      %v2199 = vpop.f32.mrb[0].mxu0
      %v2200 = vadd.f32 0.0, %v2199
      %v2201 = vpop.f32.mrb[0].mxu0
      %2202 = vmatprep.mubr.bf16.mxu0 %v646
      %2203 = vmatmul.mubr.bf16.gmra.mrb[0].mxu0 %v811
      %v2204 = vpop.f32.mrb[0].mxu0
      %v2205 = vadd.f32 0.0, %v2204
      %v2206 = vpop.f32.mrb[0].mxu0
      %v2207 = vpop.f32.mrb[0].mxu0
      %v2208 = vadd.f32 0.0, %v2207
      %v2209 = vpop.f32.mrb[0].mxu0
      %2210 = vmatprep.mubr.bf16.mxu0 %v647
      %2211 = vmatmul.mubr.bf16.gmra.mrb[0].mxu0 %v812
      %v2212 = vpop.f32.mrb[0].mxu0
      %v2213 = vadd.f32 0.0, %v2212
      %v2214 = vpop.f32.mrb[0].mxu0
      %v2215 = vpop.f32.mrb[0].mxu0
      %v2216 = vadd.f32 0.0, %v2215
      %v2217 = vpop.f32.mrb[0].mxu0
      %2218 = vmatprep.mubr.bf16.mxu0 %v648
      %2219 = vmatmul.mubr.bf16.gmra.mrb[0].mxu0 %v813
      %v2220 = vpop.f32.mrb[0].mxu0
      %v2221 = vadd.f32 0.0, %v2220
      %v2222 = vpop.f32.mrb[0].mxu0
      %v2223 = vpop.f32.mrb[0].mxu0
      %v2224 = vadd.f32 0.0, %v2223
      %v2225 = vpop.f32.mrb[0].mxu0
      %2226 = vmatprep.mubr.bf16.mxu0 %v649
      %2227 = vmatmul.mubr.bf16.gmra.mrb[0].mxu0 %v814
      %v2228 = vpop.f32.mrb[0].mxu0
      %v2229 = vadd.f32 0.0, %v2228
      %v2230 = vpop.f32.mrb[0].mxu0
      %v2231 = vpop.f32.mrb[0].mxu0
      %v2232 = vadd.f32 0.0, %v2231
      %v2233 = vpop.f32.mrb[0].mxu0
      %2234 = vmatprep.mubr.bf16.mxu0 %v650
      %2235 = vmatmul.mubr.bf16.gmra.mrb[0].mxu0 %v815
      %v2236 = vpop.f32.mrb[0].mxu0
      %v2237 = vadd.f32 0.0, %v2236
      %v2238 = vpop.f32.mrb[0].mxu0
      %v2239 = vpop.f32.mrb[0].mxu0
      %v2240 = vadd.f32 0.0, %v2239
      %v2241 = vpop.f32.mrb[0].mxu0
      %2242 = vmatprep.mubr.bf16.mxu0 %v651
      %2243 = vmatmul.mubr.bf16.gmra.mrb[0].mxu0 %v816
      %v2244 = vpop.f32.mrb[0].mxu0
      %v2245 = vadd.f32 0.0, %v2244
      %v2246 = vpop.f32.mrb[0].mxu0
      %v2247 = vpop.f32.mrb[0].mxu0
      %v2248 = vadd.f32 0.0, %v2247
      %v2249 = vpop.f32.mrb[0].mxu0
      %2250 = vmatprep.mubr.bf16.mxu0 %v652
      %2251 = vmatmul.mubr.bf16.gmra.mrb[0].mxu0 %v817
      %v2252 = vpop.f32.mrb[0].mxu0
      %v2253 = vadd.f32 0.0, %v2252
      %v2254 = vpop.f32.mrb[0].mxu0
      %v2255 = vpop.f32.mrb[0].mxu0
      %v2256 = vadd.f32 0.0, %v2255
      %v2257 = vpop.f32.mrb[0].mxu0
      %2258 = vmatprep.mubr.bf16.mxu0 %v653
      %2259 = vmatmul.mubr.bf16.gmra.mrb[0].mxu0 %v818
      %v2260 = vpop.f32.mrb[0].mxu0
      %v2261 = vadd.f32 0.0, %v2260
      %v2262 = vpop.f32.mrb[0].mxu0
      %v2263 = vpop.f32.mrb[0].mxu0
      %v2264 = vadd.f32 0.0, %v2263
      %v2265 = vpop.f32.mrb[0].mxu0
      %2266 = vmatprep.mubr.bf16.mxu0 %v654
      %2267 = vmatmul.mubr.bf16.gmra.mrb[0].mxu0 %v819
      %v2268 = vpop.f32.mrb[0].mxu0
      %v2269 = vadd.f32 0.0, %v2268
      %v2270 = vpop.f32.mrb[0].mxu0
      %v2271 = vpop.f32.mrb[0].mxu0
      %v2272 = vadd.f32 0.0, %v2271
      %v2273 = vpop.f32.mrb[0].mxu0
      %2274 = vmatprep.mubr.bf16.mxu0 %v655
      %2275 = vmatmul.mubr.bf16.gmra.mrb[0].mxu0 %v820
      %v2276 = vpop.f32.mrb[0].mxu0
      %v2277 = vadd.f32 0.0, %v2276
      %v2278 = vpop.f32.mrb[0].mxu0
      %v2279 = vpop.f32.mrb[0].mxu0
      %v2280 = vadd.f32 0.0, %v2279
      %v2281 = vpop.f32.mrb[0].mxu0
      %2282 = vmatprep.mubr.bf16.mxu0 %v656
      %2283 = vmatmul.mubr.bf16.gmra.mrb[0].mxu0 %v821
      %v2284 = vpop.f32.mrb[0].mxu0
      %v2285 = vadd.f32 0.0, %v2284
      %v2286 = vpop.f32.mrb[0].mxu0
      %v2287 = vpop.f32.mrb[0].mxu0
      %v2288 = vadd.f32 0.0, %v2287
      %v2289 = vpop.f32.mrb[0].mxu0
      %2290 = vmatprep.mubr.bf16.mxu0 %v657
      %2291 = vmatmul.mubr.bf16.gmra.mrb[0].mxu0 %v822
      %v2292 = vpop.f32.mrb[0].mxu0
      %v2293 = vadd.f32 0.0, %v2292
      %v2294 = vpop.f32.mrb[0].mxu0
      %v2295 = vpop.f32.mrb[0].mxu0
      %v2296 = vadd.f32 0.0, %v2295
      %v2297 = vpop.f32.mrb[0].mxu0
      %2298 = vdwg.mxu0
      %2299 = vmatprep.subr.bf16.mxu0 0
      %2300 = vmatpush1.bf16.msra.mxu0 %v2106
      %2301 = vmatprep.subr.bf16.mxu0 0
      %2302 = vmatpush1.bf16.msra.mxu0 %v2107
      %2303 = vmatprep.subr.bf16.mxu0 0
      %2304 = vmatpush1.bf16.msra.mxu0 %v2108
      %2305 = vmatprep.subr.bf16.mxu0 0
      %2306 = vmatpush1.bf16.msra.mxu0 %v2109
      %2307 = vmatprep.subr.bf16.mxu0 0
      %2308 = vmatpush1.bf16.msra.mxu0 %v2110
      %2309 = vmatprep.subr.bf16.mxu0 0
      %2310 = vmatpush1.bf16.msra.mxu0 %v2111
      %2311 = vmatprep.subr.bf16.mxu0 0
      %2312 = vmatpush1.bf16.msra.mxu0 %v2112
      %2313 = vmatprep.subr.bf16.mxu0 0
      %2314 = vmatpush1.bf16.msra.mxu0 %v2113
      %2315 = vmatprep.subr.bf16.mxu0 0
      %2316 = vmatpush1.bf16.msra.mxu0 0
      %2317 = vmatprep.subr.bf16.mxu0 0
      %2318 = vmatpush1.bf16.msra.mxu0 0
      %2319 = vmatprep.subr.bf16.mxu0 0
      %2320 = vmatpush1.bf16.msra.mxu0 0
      %2321 = vmatprep.subr.bf16.mxu0 0
      %2322 = vmatpush1.bf16.msra.mxu0 0
      %2323 = vmatprep.subr.bf16.mxu0 0
      %2324 = vmatpush1.bf16.msra.mxu0 0
      %2325 = vmatprep.subr.bf16.mxu0 0
      %2326 = vmatpush1.bf16.msra.mxu0 0
      %2327 = vmatprep.subr.bf16.mxu0 0
      %2328 = vmatpush1.bf16.msra.mxu0 0
      %2329 = vmatprep.subr.bf16.mxu0 0
      %2330 = vmatpush1.bf16.msra.mxu0 0
      %2331 = vmatprep.mubr.bf16.mxu0 0
      %2332 = vmatmul.mubr.bf16.gmra.mrb[0].mxu0 %v882
      %v2333 = vpop.f32.mrb[0].mxu0
      %v2334 = vadd.f32 %v2173, %v2333
      %v2335 = vpop.f32.mrb[0].mxu0
      %v2336 = vpop.f32.mrb[0].mxu0
      %v2337 = vadd.f32 %v2176, %v2336
      %v2338 = vpop.f32.mrb[0].mxu0
      %2339 = vmatprep.mubr.bf16.mxu0 0
      %2340 = vmatmul.mubr.bf16.gmra.mrb[0].mxu0 %v883
      %v2341 = vpop.f32.mrb[0].mxu0
      %v2342 = vadd.f32 %v2181, %v2341
      %v2343 = vpop.f32.mrb[0].mxu0
      %v2344 = vpop.f32.mrb[0].mxu0
      %v2345 = vadd.f32 %v2184, %v2344
      %v2346 = vpop.f32.mrb[0].mxu0
      %2347 = vmatprep.mubr.bf16.mxu0 0
      %2348 = vmatmul.mubr.bf16.gmra.mrb[0].mxu0 %v884
      %v2349 = vpop.f32.mrb[0].mxu0
      %v2350 = vadd.f32 %v2189, %v2349
      %v2351 = vpop.f32.mrb[0].mxu0
      %v2352 = vpop.f32.mrb[0].mxu0
      %v2353 = vadd.f32 %v2192, %v2352
      %v2354 = vpop.f32.mrb[0].mxu0
      %2355 = vmatprep.mubr.bf16.mxu0 0
      %2356 = vmatmul.mubr.bf16.gmra.mrb[0].mxu0 %v885
      %v2357 = vpop.f32.mrb[0].mxu0
      %v2358 = vadd.f32 %v2197, %v2357
      %v2359 = vpop.f32.mrb[0].mxu0
      %v2360 = vpop.f32.mrb[0].mxu0
      %v2361 = vadd.f32 %v2200, %v2360
      %v2362 = vpop.f32.mrb[0].mxu0
      %2363 = vmatprep.mubr.bf16.mxu0 0
      %2364 = vmatmul.mubr.bf16.gmra.mrb[0].mxu0 %v886
      %v2365 = vpop.f32.mrb[0].mxu0
      %v2366 = vadd.f32 %v2205, %v2365
      %v2367 = vpop.f32.mrb[0].mxu0
      %v2368 = vpop.f32.mrb[0].mxu0
      %v2369 = vadd.f32 %v2208, %v2368
      %v2370 = vpop.f32.mrb[0].mxu0
      %2371 = vmatprep.mubr.bf16.mxu0 0
      %2372 = vmatmul.mubr.bf16.gmra.mrb[0].mxu0 %v887
      %v2373 = vpop.f32.mrb[0].mxu0
      %v2374 = vadd.f32 %v2213, %v2373
      %v2375 = vpop.f32.mrb[0].mxu0
      %v2376 = vpop.f32.mrb[0].mxu0
      %v2377 = vadd.f32 %v2216, %v2376
      %v2378 = vpop.f32.mrb[0].mxu0
      %2379 = vmatprep.mubr.bf16.mxu0 0
      %2380 = vmatmul.mubr.bf16.gmra.mrb[0].mxu0 %v888
      %v2381 = vpop.f32.mrb[0].mxu0
      %v2382 = vadd.f32 %v2221, %v2381
      %v2383 = vpop.f32.mrb[0].mxu0
      %v2384 = vpop.f32.mrb[0].mxu0
      %v2385 = vadd.f32 %v2224, %v2384
      %v2386 = vpop.f32.mrb[0].mxu0
      %2387 = vmatprep.mubr.bf16.mxu0 0
      %2388 = vmatmul.mubr.bf16.gmra.mrb[0].mxu0 %v889
      %v2389 = vpop.f32.mrb[0].mxu0
      %v2390 = vadd.f32 %v2229, %v2389
      %v2391 = vpop.f32.mrb[0].mxu0
      %v2392 = vpop.f32.mrb[0].mxu0
      %v2393 = vadd.f32 %v2232, %v2392
      %v2394 = vpop.f32.mrb[0].mxu0
      %2395 = vmatprep.mubr.bf16.mxu0 0
      %2396 = vmatmul.mubr.bf16.gmra.mrb[0].mxu0 %v890
      %v2397 = vpop.f32.mrb[0].mxu0
      %v2398 = vadd.f32 %v2237, %v2397
      %v2399 = vpop.f32.mrb[0].mxu0
      %v2400 = vpop.f32.mrb[0].mxu0
      %v2401 = vadd.f32 %v2240, %v2400
      %v2402 = vpop.f32.mrb[0].mxu0
      %2403 = vmatprep.mubr.bf16.mxu0 0
      %2404 = vmatmul.mubr.bf16.gmra.mrb[0].mxu0 %v891
      %v2405 = vpop.f32.mrb[0].mxu0
      %v2406 = vadd.f32 %v2245, %v2405
      %v2407 = vpop.f32.mrb[0].mxu0
      %v2408 = vpop.f32.mrb[0].mxu0
      %v2409 = vadd.f32 %v2248, %v2408
      %v2410 = vpop.f32.mrb[0].mxu0
      %2411 = vmatprep.mubr.bf16.mxu0 0
      %2412 = vmatmul.mubr.bf16.gmra.mrb[0].mxu0 %v892
      %v2413 = vpop.f32.mrb[0].mxu0
      %v2414 = vadd.f32 %v2253, %v2413
      %v2415 = vpop.f32.mrb[0].mxu0
      %v2416 = vpop.f32.mrb[0].mxu0
      %v2417 = vadd.f32 %v2256, %v2416
      %v2418 = vpop.f32.mrb[0].mxu0
      %2419 = vmatprep.mubr.bf16.mxu0 0
      %2420 = vmatmul.mubr.bf16.gmra.mrb[0].mxu0 %v893
      %v2421 = vpop.f32.mrb[0].mxu0
      %v2422 = vadd.f32 %v2261, %v2421
      %v2423 = vpop.f32.mrb[0].mxu0
      %v2424 = vpop.f32.mrb[0].mxu0
      %v2425 = vadd.f32 %v2264, %v2424
      %v2426 = vpop.f32.mrb[0].mxu0
      %2427 = vmatprep.mubr.bf16.mxu0 0
      %2428 = vmatmul.mubr.bf16.gmra.mrb[0].mxu0 %v894
      %v2429 = vpop.f32.mrb[0].mxu0
      %v2430 = vadd.f32 %v2269, %v2429
      %v2431 = vpop.f32.mrb[0].mxu0
      %v2432 = vpop.f32.mrb[0].mxu0
      %v2433 = vadd.f32 %v2272, %v2432
      %v2434 = vpop.f32.mrb[0].mxu0
      %2435 = vmatprep.mubr.bf16.mxu0 0
      %2436 = vmatmul.mubr.bf16.gmra.mrb[0].mxu0 %v895
      %v2437 = vpop.f32.mrb[0].mxu0
      %v2438 = vadd.f32 %v2277, %v2437
      %v2439 = vpop.f32.mrb[0].mxu0
      %v2440 = vpop.f32.mrb[0].mxu0
      %v2441 = vadd.f32 %v2280, %v2440
      %v2442 = vpop.f32.mrb[0].mxu0
      %2443 = vmatprep.mubr.bf16.mxu0 0
      %2444 = vmatmul.mubr.bf16.gmra.mrb[0].mxu0 %v896
      %v2445 = vpop.f32.mrb[0].mxu0
      %v2446 = vadd.f32 %v2285, %v2445
      %v2447 = vpop.f32.mrb[0].mxu0
      %v2448 = vpop.f32.mrb[0].mxu0
      %v2449 = vadd.f32 %v2288, %v2448
      %v2450 = vpop.f32.mrb[0].mxu0
      %2451 = vmatprep.mubr.bf16.mxu0 0
      %2452 = vmatmul.mubr.bf16.gmra.mrb[0].mxu0 %v897
      %v2453 = vpop.f32.mrb[0].mxu0
      %v2454 = vadd.f32 %v2293, %v2453
      %v2455 = vpop.f32.mrb[0].mxu0
      %v2456 = vpop.f32.mrb[0].mxu0
      %v2457 = vadd.f32 %v2296, %v2456
      %v2458 = vpop.f32.mrb[0].mxu0
      %2459 = vdwg.mxu0
      %v2460 = vadd.f32 %v1819, %v2334
      %v2461 = vadd.f32 %v1822, %v2337
      %v2462 = vadd.f32 %v1827, %v2342
      %v2463 = vadd.f32 %v1830, %v2345
      %v2464 = vadd.f32 %v1835, %v2350
      %v2465 = vadd.f32 %v1838, %v2353
      %v2466 = vadd.f32 %v1843, %v2358
      %v2467 = vadd.f32 %v1846, %v2361
      %v2468 = vadd.f32 %v1851, %v2366
      %v2469 = vadd.f32 %v1854, %v2369
      %v2470 = vadd.f32 %v1859, %v2374
      %v2471 = vadd.f32 %v1862, %v2377
      %v2472 = vadd.f32 %v1867, %v2382
      %v2473 = vadd.f32 %v1870, %v2385
      %v2474 = vadd.f32 %v1875, %v2390
      %v2475 = vadd.f32 %v1878, %v2393
      %v2476 = vadd.f32 %v1883, %v2398
      %v2477 = vadd.f32 %v1886, %v2401
      %v2478 = vadd.f32 %v1891, %v2406
      %v2479 = vadd.f32 %v1894, %v2409
      %v2480 = vadd.f32 %v1899, %v2414
      %v2481 = vadd.f32 %v1902, %v2417
      %v2482 = vadd.f32 %v1907, %v2422
      %v2483 = vadd.f32 %v1910, %v2425
      %v2484 = vadd.f32 %v1915, %v2430
      %v2485 = vadd.f32 %v1918, %v2433
      %v2486 = vadd.f32 %v1923, %v2438
      %v2487 = vadd.f32 %v1926, %v2441
      %v2488 = vadd.f32 %v1931, %v2446
      %v2489 = vadd.f32 %v1934, %v2449
      %v2490 = vadd.f32 %v1939, %v2454
      %v2491 = vadd.f32 %v1942, %v2457
      %v2492 = vld [vmem:[%s4] sm:$0x1]
      %v2494 = vlaneseq
      %v2495 = vshrl.u32 %v2494, 7
      %v2496 = vsub.s32 0, %v2495
      %v2497 = vrot.slane %v2492, %v2496
      %v2499 = vadd.f32 %v2460, %v2497
      %v2500 = vadd.f32 %v2461, %v2497
      %v2501 = vadd.f32 %v2462, %v2497
      %v2502 = vadd.f32 %v2463, %v2497
      %v2503 = vadd.f32 %v2464, %v2497
      %v2504 = vadd.f32 %v2465, %v2497
      %v2505 = vadd.f32 %v2466, %v2497
      %v2506 = vadd.f32 %v2467, %v2497
      %v2507 = vadd.f32 %v2468, %v2497
      %v2508 = vadd.f32 %v2469, %v2497
      %v2509 = vadd.f32 %v2470, %v2497
      %v2510 = vadd.f32 %v2471, %v2497
      %v2511 = vadd.f32 %v2472, %v2497
      %v2512 = vadd.f32 %v2473, %v2497
      %v2513 = vadd.f32 %v2474, %v2497
      %v2514 = vadd.f32 %v2475, %v2497
      %v2515 = vadd.f32 %v2476, %v2497
      %v2516 = vadd.f32 %v2477, %v2497
      %v2517 = vadd.f32 %v2478, %v2497
      %v2518 = vadd.f32 %v2479, %v2497
      %v2519 = vadd.f32 %v2480, %v2497
      %v2520 = vadd.f32 %v2481, %v2497
      %v2521 = vadd.f32 %v2482, %v2497
      %v2522 = vadd.f32 %v2483, %v2497
      %v2523 = vadd.f32 %v2484, %v2497
      %v2524 = vadd.f32 %v2485, %v2497
      %v2525 = vadd.f32 %v2486, %v2497
      %v2526 = vadd.f32 %v2487, %v2497
      %v2527 = vadd.f32 %v2488, %v2497
      %v2528 = vadd.f32 %v2489, %v2497
      %v2529 = vadd.f32 %v2490, %v2497
      %v2530 = vadd.f32 %v2491, %v2497
      %v2531 = vmax.f32 %v2499, 0.0
      %v2532 = vmax.f32 %v2500, 0.0
      %v2533 = vmax.f32 %v2501, 0.0
      %v2534 = vmax.f32 %v2502, 0.0
      %v2535 = vmax.f32 %v2503, 0.0
      %v2536 = vmax.f32 %v2504, 0.0
      %v2537 = vmax.f32 %v2505, 0.0
      %v2538 = vmax.f32 %v2506, 0.0
      %v2539 = vmax.f32 %v2507, 0.0
      %v2540 = vmax.f32 %v2508, 0.0
      %v2541 = vmax.f32 %v2509, 0.0
      %v2542 = vmax.f32 %v2510, 0.0
      %v2543 = vmax.f32 %v2511, 0.0
      %v2544 = vmax.f32 %v2512, 0.0
      %v2545 = vmax.f32 %v2513, 0.0
      %v2546 = vmax.f32 %v2514, 0.0
      %v2547 = vmax.f32 %v2515, 0.0
      %v2548 = vmax.f32 %v2516, 0.0
      %v2549 = vmax.f32 %v2517, 0.0
      %v2550 = vmax.f32 %v2518, 0.0
      %v2551 = vmax.f32 %v2519, 0.0
      %v2552 = vmax.f32 %v2520, 0.0
      %v2553 = vmax.f32 %v2521, 0.0
      %v2554 = vmax.f32 %v2522, 0.0
      %v2555 = vmax.f32 %v2523, 0.0
      %v2556 = vmax.f32 %v2524, 0.0
      %v2557 = vmax.f32 %v2525, 0.0
      %v2558 = vmax.f32 %v2526, 0.0
      %v2559 = vmax.f32 %v2527, 0.0
      %v2560 = vmax.f32 %v2528, 0.0
      %v2561 = vmax.f32 %v2529, 0.0
      %v2562 = vmax.f32 %v2530, 0.0
      %v2563 = vpack.c.bf16 %v2532, %v2531
      %v2564 = vpack.c.bf16 %v2534, %v2533
      %v2565 = vpack.c.bf16 %v2536, %v2535
      %v2566 = vpack.c.bf16 %v2538, %v2537
      %v2567 = vpack.c.bf16 %v2540, %v2539
      %v2568 = vpack.c.bf16 %v2542, %v2541
      %v2569 = vpack.c.bf16 %v2544, %v2543
      %v2570 = vpack.c.bf16 %v2546, %v2545
      %v2571 = vpack.c.bf16 %v2548, %v2547
      %v2572 = vpack.c.bf16 %v2550, %v2549
      %v2573 = vpack.c.bf16 %v2552, %v2551
      %v2574 = vpack.c.bf16 %v2554, %v2553
      %v2575 = vpack.c.bf16 %v2556, %v2555
      %v2576 = vpack.c.bf16 %v2558, %v2557
      %v2577 = vpack.c.bf16 %v2560, %v2559
      %v2578 = vpack.c.bf16 %v2562, %v2561
      %v2595 = vunpack.c.l.b16 %v2563
      %v2596 = vunpack.c.h.b16 %v2563
      %v2597 = vunpack.c.l.b16 %v2564
      %v2598 = vunpack.c.h.b16 %v2564
      %v2599 = vunpack.c.l.b16 %v2565
      %v2600 = vunpack.c.h.b16 %v2565
      %v2601 = vunpack.c.l.b16 %v2566
      %v2602 = vunpack.c.h.b16 %v2566
      %v2603 = vunpack.c.l.b16 %v2567
      %v2604 = vunpack.c.h.b16 %v2567
      %v2605 = vunpack.c.l.b16 %v2568
      %v2606 = vunpack.c.h.b16 %v2568
      %v2607 = vunpack.c.l.b16 %v2569
      %v2608 = vunpack.c.h.b16 %v2569
      %v2609 = vunpack.c.l.b16 %v2570
      %v2610 = vunpack.c.h.b16 %v2570
      %v2611 = vunpack.c.l.b16 %v2571
      %v2612 = vunpack.c.h.b16 %v2571
      %v2613 = vunpack.c.l.b16 %v2572
      %v2614 = vunpack.c.h.b16 %v2572
      %v2615 = vunpack.c.l.b16 %v2573
      %v2616 = vunpack.c.h.b16 %v2573
      %v2617 = vunpack.c.l.b16 %v2574
      %v2618 = vunpack.c.h.b16 %v2574
      %v2619 = vunpack.c.l.b16 %v2575
      %v2620 = vunpack.c.h.b16 %v2575
      %v2621 = vunpack.c.l.b16 %v2576
      %v2622 = vunpack.c.h.b16 %v2576
      %v2623 = vunpack.c.l.b16 %v2577
      %v2624 = vunpack.c.h.b16 %v2577
      %v2625 = vunpack.c.l.b16 %v2578
      %v2626 = vunpack.c.h.b16 %v2578
      %v2627 = vpack.c.b16 %v2595, %v2595
      %v2628 = vpack.c.b16 %v2596, %v2596
      %v2629 = vpack.c.b16 %v2597, %v2597
      %v2630 = vpack.c.b16 %v2598, %v2598
      %v2631 = vpack.c.b16 %v2599, %v2599
      %v2632 = vpack.c.b16 %v2600, %v2600
      %v2633 = vpack.c.b16 %v2601, %v2601
      %v2634 = vpack.c.b16 %v2602, %v2602
      %v2635 = vpack.c.b16 %v2603, %v2603
      %v2636 = vpack.c.b16 %v2604, %v2604
      %v2637 = vpack.c.b16 %v2605, %v2605
      %v2638 = vpack.c.b16 %v2606, %v2606
      %v2639 = vpack.c.b16 %v2607, %v2607
      %v2640 = vpack.c.b16 %v2608, %v2608
      %v2641 = vpack.c.b16 %v2609, %v2609
      %v2642 = vpack.c.b16 %v2610, %v2610
      %v2643 = vpack.c.b16 %v2611, %v2611
      %v2644 = vpack.c.b16 %v2612, %v2612
      %v2645 = vpack.c.b16 %v2613, %v2613
      %v2646 = vpack.c.b16 %v2614, %v2614
      %v2647 = vpack.c.b16 %v2615, %v2615
      %v2648 = vpack.c.b16 %v2616, %v2616
      %v2649 = vpack.c.b16 %v2617, %v2617
      %v2650 = vpack.c.b16 %v2618, %v2618
      %v2651 = vpack.c.b16 %v2619, %v2619
      %v2652 = vpack.c.b16 %v2620, %v2620
      %v2653 = vpack.c.b16 %v2621, %v2621
      %v2654 = vpack.c.b16 %v2622, %v2622
      %v2655 = vpack.c.b16 %v2623, %v2623
      %v2656 = vpack.c.b16 %v2624, %v2624
      %v2657 = vpack.c.b16 %v2625, %v2625
      %v2658 = vpack.c.b16 %v2626, %v2626
      %2691 = vst [vmem:[%s472] sm:$0xf] %v2627
      %2692 = vst [vmem:[%s472 + $0x4] sm:$0xf] %v2628
      %2693 = vst [vmem:[%s472 + $0x8] sm:$0xf] %v2629
      %2694 = vst [vmem:[%s472 + $0xc] sm:$0xf] %v2630
      %2695 = vst [vmem:[%s472 + $0x10] sm:$0xf] %v2631
      %2696 = vst [vmem:[%s472 + $0x14] sm:$0xf] %v2632
      %2697 = vst [vmem:[%s472 + $0x18] sm:$0xf] %v2633
      %2698 = vst [vmem:[%s472 + $0x1c] sm:$0xf] %v2634
      %2699 = vst [vmem:[%s472 + $0x20] sm:$0xf] %v2635
      %2700 = vst [vmem:[%s472 + $0x24] sm:$0xf] %v2636
      %2701 = vst [vmem:[%s472 + $0x28] sm:$0xf] %v2637
      %2702 = vst [vmem:[%s472 + $0x2c] sm:$0xf] %v2638
      %2703 = vst [vmem:[%s472 + $0x30] sm:$0xf] %v2639
      %2704 = vst [vmem:[%s472 + $0x34] sm:$0xf] %v2640
      %2705 = vst [vmem:[%s472 + $0x38] sm:$0xf] %v2641
      %2706 = vst [vmem:[%s472 + $0x3c] sm:$0xf] %v2642
      %2707 = vst [vmem:[%s472 + $0x40] sm:$0xf] %v2643
      %2708 = vst [vmem:[%s472 + $0x44] sm:$0xf] %v2644
      %2709 = vst [vmem:[%s472 + $0x48] sm:$0xf] %v2645
      %2710 = vst [vmem:[%s472 + $0x4c] sm:$0xf] %v2646
      %2711 = vst [vmem:[%s472 + $0x50] sm:$0xf] %v2647
      %2712 = vst [vmem:[%s472 + $0x54] sm:$0xf] %v2648
      %2713 = vst [vmem:[%s472 + $0x58] sm:$0xf] %v2649
      %2714 = vst [vmem:[%s472 + $0x5c] sm:$0xf] %v2650
      %2715 = vst [vmem:[%s472 + $0x60] sm:$0xf] %v2651
      %2716 = vst [vmem:[%s472 + $0x64] sm:$0xf] %v2652
      %2717 = vst [vmem:[%s472 + $0x68] sm:$0xf] %v2653
      %2718 = vst [vmem:[%s472 + $0x6c] sm:$0xf] %v2654
      %2719 = vst [vmem:[%s472 + $0x70] sm:$0xf] %v2655
      %2720 = vst [vmem:[%s472 + $0x74] sm:$0xf] %v2656
      %2721 = vst [vmem:[%s472 + $0x78] sm:$0xf] %v2657
      %2722 = vst [vmem:[%s472 + $0x7c] sm:$0xf] %v2658
      %v2723 = vadd.f32 %v2531, %v2532
      %v2724 = vrot.slane %v2723, 4
      %v2725 = vadd.f32 %v2723, %v2724
      %v2726 = vrot.slane %v2725, 2
      %v2727 = vadd.f32 %v2725, %v2726
      %v2728 = vrot.slane %v2727, 1
      %v2729 = vadd.f32 %v2727, %v2728
      %v2730 = vadd.f32 %v2533, %v2534
      %v2731 = vrot.slane %v2730, 4
      %v2732 = vadd.f32 %v2730, %v2731
      %v2733 = vrot.slane %v2732, 2
      %v2734 = vadd.f32 %v2732, %v2733
      %v2735 = vrot.slane %v2734, 1
      %v2736 = vadd.f32 %v2734, %v2735
      %v2737 = vadd.f32 %v2535, %v2536
      %v2738 = vrot.slane %v2737, 4
      %v2739 = vadd.f32 %v2737, %v2738
      %v2740 = vrot.slane %v2739, 2
      %v2741 = vadd.f32 %v2739, %v2740
      %v2742 = vrot.slane %v2741, 1
      %v2743 = vadd.f32 %v2741, %v2742
      %v2744 = vadd.f32 %v2537, %v2538
      %v2745 = vrot.slane %v2744, 4
      %v2746 = vadd.f32 %v2744, %v2745
      %v2747 = vrot.slane %v2746, 2
      %v2748 = vadd.f32 %v2746, %v2747
      %v2749 = vrot.slane %v2748, 1
      %v2750 = vadd.f32 %v2748, %v2749
      %v2751 = vadd.f32 %v2539, %v2540
      %v2752 = vrot.slane %v2751, 4
      %v2753 = vadd.f32 %v2751, %v2752
      %v2754 = vrot.slane %v2753, 2
      %v2755 = vadd.f32 %v2753, %v2754
      %v2756 = vrot.slane %v2755, 1
      %v2757 = vadd.f32 %v2755, %v2756
      %v2758 = vadd.f32 %v2541, %v2542
      %v2759 = vrot.slane %v2758, 4
      %v2760 = vadd.f32 %v2758, %v2759
      %v2761 = vrot.slane %v2760, 2
      %v2762 = vadd.f32 %v2760, %v2761
      %v2763 = vrot.slane %v2762, 1
      %v2764 = vadd.f32 %v2762, %v2763
      %v2765 = vadd.f32 %v2543, %v2544
      %v2766 = vrot.slane %v2765, 4
      %v2767 = vadd.f32 %v2765, %v2766
      %v2768 = vrot.slane %v2767, 2
      %v2769 = vadd.f32 %v2767, %v2768
      %v2770 = vrot.slane %v2769, 1
      %v2771 = vadd.f32 %v2769, %v2770
      %v2772 = vadd.f32 %v2545, %v2546
      %v2773 = vrot.slane %v2772, 4
      %v2774 = vadd.f32 %v2772, %v2773
      %v2775 = vrot.slane %v2774, 2
      %v2776 = vadd.f32 %v2774, %v2775
      %v2777 = vrot.slane %v2776, 1
      %v2778 = vadd.f32 %v2776, %v2777
      %v2779 = vadd.f32 %v2547, %v2548
      %v2780 = vrot.slane %v2779, 4
      %v2781 = vadd.f32 %v2779, %v2780
      %v2782 = vrot.slane %v2781, 2
      %v2783 = vadd.f32 %v2781, %v2782
      %v2784 = vrot.slane %v2783, 1
      %v2785 = vadd.f32 %v2783, %v2784
      %v2786 = vadd.f32 %v2549, %v2550
      %v2787 = vrot.slane %v2786, 4
      %v2788 = vadd.f32 %v2786, %v2787
      %v2789 = vrot.slane %v2788, 2
      %v2790 = vadd.f32 %v2788, %v2789
      %v2791 = vrot.slane %v2790, 1
      %v2792 = vadd.f32 %v2790, %v2791
      %v2793 = vadd.f32 %v2551, %v2552
      %v2794 = vrot.slane %v2793, 4
      %v2795 = vadd.f32 %v2793, %v2794
      %v2796 = vrot.slane %v2795, 2
      %v2797 = vadd.f32 %v2795, %v2796
      %v2798 = vrot.slane %v2797, 1
      %v2799 = vadd.f32 %v2797, %v2798
      %v2800 = vadd.f32 %v2553, %v2554
      %v2801 = vrot.slane %v2800, 4
      %v2802 = vadd.f32 %v2800, %v2801
      %v2803 = vrot.slane %v2802, 2
      %v2804 = vadd.f32 %v2802, %v2803
      %v2805 = vrot.slane %v2804, 1
      %v2806 = vadd.f32 %v2804, %v2805
      %v2807 = vadd.f32 %v2555, %v2556
      %v2808 = vrot.slane %v2807, 4
      %v2809 = vadd.f32 %v2807, %v2808
      %v2810 = vrot.slane %v2809, 2
      %v2811 = vadd.f32 %v2809, %v2810
      %v2812 = vrot.slane %v2811, 1
      %v2813 = vadd.f32 %v2811, %v2812
      %v2814 = vadd.f32 %v2557, %v2558
      %v2815 = vrot.slane %v2814, 4
      %v2816 = vadd.f32 %v2814, %v2815
      %v2817 = vrot.slane %v2816, 2
      %v2818 = vadd.f32 %v2816, %v2817
      %v2819 = vrot.slane %v2818, 1
      %v2820 = vadd.f32 %v2818, %v2819
      %v2821 = vadd.f32 %v2559, %v2560
      %v2822 = vrot.slane %v2821, 4
      %v2823 = vadd.f32 %v2821, %v2822
      %v2824 = vrot.slane %v2823, 2
      %v2825 = vadd.f32 %v2823, %v2824
      %v2826 = vrot.slane %v2825, 1
      %v2827 = vadd.f32 %v2825, %v2826
      %v2828 = vadd.f32 %v2561, %v2562
      %v2829 = vrot.slane %v2828, 4
      %v2830 = vadd.f32 %v2828, %v2829
      %v2831 = vrot.slane %v2830, 2
      %v2832 = vadd.f32 %v2830, %v2831
      %v2833 = vrot.slane %v2832, 1
      %v2834 = vadd.f32 %v2832, %v2833
      %v2835 = vmul.f32 %v2729, 0.0625
      %v2836 = vmul.f32 %v2736, 0.0625
      %v2837 = vmul.f32 %v2743, 0.0625
      %v2838 = vmul.f32 %v2750, 0.0625
      %v2839 = vmul.f32 %v2757, 0.0625
      %v2840 = vmul.f32 %v2764, 0.0625
      %v2841 = vmul.f32 %v2771, 0.0625
      %v2842 = vmul.f32 %v2778, 0.0625
      %v2843 = vmul.f32 %v2785, 0.0625
      %v2844 = vmul.f32 %v2792, 0.0625
      %v2845 = vmul.f32 %v2799, 0.0625
      %v2846 = vmul.f32 %v2806, 0.0625
      %v2847 = vmul.f32 %v2813, 0.0625
      %v2848 = vmul.f32 %v2820, 0.0625
      %v2849 = vmul.f32 %v2827, 0.0625
      %v2850 = vmul.f32 %v2834, 0.0625
      %vm2867 = vcmask 1041409
      %v2868 = vsel %vm2867, %v2836, %v2835
      %vm2869 = vcmask 1042434
      %v2870 = vsel %vm2869, %v2837, %v2868
      %vm2871 = vcmask 1043459
      %v2872 = vsel %vm2871, %v2838, %v2870
      %vm2873 = vcmask 1044484
      %v2874 = vsel %vm2873, %v2839, %v2872
      %vm2875 = vcmask 1045509
      %v2876 = vsel %vm2875, %v2840, %v2874
      %vm2877 = vcmask 1046534
      %v2878 = vsel %vm2877, %v2841, %v2876
      %vm2879 = vcmask 1047559
      %v2880 = vsel %vm2879, %v2842, %v2878
      %v2881 = vsel %vm2867, %v2844, %v2843
      %v2882 = vsel %vm2869, %v2845, %v2881
      %v2883 = vsel %vm2871, %v2846, %v2882
      %v2884 = vsel %vm2873, %v2847, %v2883
      %v2885 = vsel %vm2875, %v2848, %v2884
      %v2886 = vsel %vm2877, %v2849, %v2885
      %v2887 = vsel %vm2879, %v2850, %v2886
      %2890 = vst [vmem:[%s482] sm:$0xff] %v2880
      %2891 = vst [vmem:[%s482 + $0x8] sm:$0xff] %v2887
      %v2892 = vadd.f32 %v2531, %v2533
      %v2893 = vadd.f32 %v2892, %v2535
      %v2894 = vadd.f32 %v2893, %v2537
      %v2895 = vadd.f32 %v2894, %v2539
      %v2896 = vadd.f32 %v2895, %v2541
      %v2897 = vadd.f32 %v2896, %v2543
      %v2898 = vadd.f32 %v2897, %v2545
      %v2899 = vadd.f32 %v2898, %v2547
      %v2900 = vadd.f32 %v2899, %v2549
      %v2901 = vadd.f32 %v2900, %v2551
      %v2902 = vadd.f32 %v2901, %v2553
      %v2903 = vadd.f32 %v2902, %v2555
      %v2904 = vadd.f32 %v2903, %v2557
      %v2905 = vadd.f32 %v2904, %v2559
      %v2906 = vadd.f32 %v2905, %v2561
      %v2907 = vadd.f32 %v2532, %v2534
      %v2908 = vadd.f32 %v2907, %v2536
      %v2909 = vadd.f32 %v2908, %v2538
      %v2910 = vadd.f32 %v2909, %v2540
      %v2911 = vadd.f32 %v2910, %v2542
      %v2912 = vadd.f32 %v2911, %v2544
      %v2913 = vadd.f32 %v2912, %v2546
      %v2914 = vadd.f32 %v2913, %v2548
      %v2915 = vadd.f32 %v2914, %v2550
      %v2916 = vadd.f32 %v2915, %v2552
      %v2917 = vadd.f32 %v2916, %v2554
      %v2918 = vadd.f32 %v2917, %v2556
      %v2919 = vadd.f32 %v2918, %v2558
      %v2920 = vadd.f32 %v2919, %v2560
      %v2921 = vadd.f32 %v2920, %v2562
      %2922 = vst [vmem:[%s492] sm:$0xff] %v2906
      %2923 = vst [vmem:[%s492 + $0x8] sm:$0xff] %v2921
      %s2924 = smul.u32 16, %s24
      %p2925 = scmp.lt.s32.totalorder %s23, 1
      %s2926 = scalar_select %p2925, %s23, 1
      %p2927 = scmp.lt.s32.totalorder %s2924, 15
      %s2928 = scalar_select %p2927, %s2924, 15
      %s2929 = smul.addr %s2928, 2
      %s2930 = smul.addr %s2926, 32
      %s2931 = sadd.s32 %s2929, %s2930
      %s2932 = smul.addr %s2931, 4
      %s2933 = scalar_lea.vmem %s5, %s2932
      %s2934 = smul.u32 2, %s24
      %p2935 = scmp.lt.s32.totalorder %s23, 1
      %s2936 = scalar_select %p2935, %s23, 1
      %p2937 = scmp.lt.s32.totalorder %s2934, 1
      %s2938 = scalar_select %p2937, %s2934, 1
      %s2939 = smul.addr %s2936, 2
      %s2940 = sadd.s32 %s2938, %s2939
      %s2941 = smul.addr %s2940, 8
      %s2942 = scalar_lea.vmem %s6, %s2941
      %p2943 = scmp.lt.s32.totalorder %s23, 1
      %s2944 = scalar_select %p2943, %s23, 1
      %p2945 = scmp.lt.s32.totalorder %s24, 0
      %s2946 = scalar_select %p2945, %s24, 0
      %s2947 = smul.addr %s2946, 2
      %s2948 = smul.addr %s2944, 2
      %s2949 = sadd.s32 %s2947, %s2948
      %s2950 = smul.addr %s2949, 8
      %s2951 = scalar_lea.vmem %s7, %s2950
      // Predicated region
      $region41: #{basic_block_forward.2} parent=39 // pred_check
        %p2952 = pneg %p193
      $region42: #{basic_block_forward.2} parent=39 // pred_check_branch
        %2954 = sbr.rel (%p2952) target = $region44
      $region43: #{basic_block_forward.2} parent=39 // pred_region
        %s2955 = smul.u32 16, %s24
      $region44: #{basic_block_forward.2} parent=39 // pred_fallthru
        _
      // Predicated region
      $region45: #{basic_block_forward.2} parent=39 // pred_check
        %p2956 = pneg %p221
      $region46: #{basic_block_forward.2} parent=39 // pred_check_branch
        %2958 = sbr.rel (%p2956) target = $region48
      $region47: #{basic_block_forward.2} parent=39 // pred_region
        %s2959 = smul.u32 2, %s24
      $region48: #{basic_block_forward.2} parent=39 // pred_fallthru
        _
      // Predicated region
      $region49: #{basic_block_forward.2} parent=39 // pred_check
        %p2960 = pneg %p249
      $region50: #{basic_block_forward.2} parent=39 // pred_check_branch
        %2962 = sbr.rel (%p2960) target = $region52
      $region51: #{basic_block_forward.2} parent=39 // pred_region
        _
      $region52: #{basic_block_forward.2} parent=39 // pred_fallthru
        _
    $region40: #{basic_block_forward.2} parent=5 // pred_fallthru
      _
    %p2963 = scmp.le.s32.totalorder 2, %s14
    // Predicated region
    $region53: #{basic_block_forward.2} parent=5 // pred_check
      %p2964 = pneg %p2963
    $region54: #{basic_block_forward.2} parent=5 // pred_check_branch
      %2966 = sbr.rel (%p2964) target = $region56
    $region55: #{basic_block_forward.2} parent=5 // pred_region
      %s2967 = ssub.s32 %s14, 2
      // Predicated region
      $region57: #{basic_block_forward.2} parent=55 // pred_check
        %p2968 = pneg %p199
      $region58: #{basic_block_forward.2} parent=55 // pred_check_branch
        %2970 = sbr.rel (%p2968) target = $region60
      $region59: #{basic_block_forward.2} parent=55 // pred_region
        %s2971 = smul.u32 16, %s26
        %p2972 = scmp.lt.s32.totalorder %s25, 1
        %s2973 = scalar_select %p2972, %s25, 1
        %p2974 = scmp.lt.s32.totalorder %s2971, 15
        %s2975 = scalar_select %p2974, %s2971, 15
        %s2976 = smul.addr %s2975, 2
        %s2977 = smul.addr %s2973, 32
        %s2978 = sadd.s32 %s2976, %s2977
        %s2979 = smul.addr %s2978, 4
        %s2980 = scalar_lea.vmem %s5, %s2979
      $region60: #{basic_block_forward.2} parent=55 // pred_fallthru
        _
      // Predicated region
      $region61: #{basic_block_forward.2} parent=55 // pred_check
        %p2981 = pneg %p227
      $region62: #{basic_block_forward.2} parent=55 // pred_check_branch
        %2983 = sbr.rel (%p2981) target = $region64
      $region63: #{basic_block_forward.2} parent=55 // pred_region
        %s2984 = smul.u32 2, %s26
        %p2985 = scmp.lt.s32.totalorder %s25, 1
        %s2986 = scalar_select %p2985, %s25, 1
        %p2987 = scmp.lt.s32.totalorder %s2984, 1
        %s2988 = scalar_select %p2987, %s2984, 1
        %s2989 = smul.addr %s2986, 2
        %s2990 = sadd.s32 %s2988, %s2989
        %s2991 = smul.addr %s2990, 8
        %s2992 = scalar_lea.vmem %s6, %s2991
      $region64: #{basic_block_forward.2} parent=55 // pred_fallthru
        _
      // Predicated region
      $region65: #{basic_block_forward.2} parent=55 // pred_check
        %p2993 = pneg %p255
      $region66: #{basic_block_forward.2} parent=55 // pred_check_branch
        %2995 = sbr.rel (%p2993) target = $region68
      $region67: #{basic_block_forward.2} parent=55 // pred_region
        %p2996 = scmp.lt.s32.totalorder %s25, 1
        %s2997 = scalar_select %p2996, %s25, 1
        %p2998 = scmp.lt.s32.totalorder %s26, 0
        %s2999 = scalar_select %p2998, %s26, 0
        %s3000 = smul.addr %s2999, 2
        %s3001 = smul.addr %s2997, 2
        %s3002 = sadd.s32 %s3000, %s3001
        %s3003 = smul.addr %s3002, 8
        %s3004 = scalar_lea.vmem %s7, %s3003
      $region68: #{basic_block_forward.2} parent=55 // pred_fallthru
        _
    $region56: #{basic_block_forward.2} parent=5 // pred_fallthru
      _
  $region6: #{basic_block_forward.2} parent=0 // loop_footer
    %s18 = sadd.s32 1, %s14
  $region7: #{basic_block_forward.2} parent=0 // loop_footer_branch
    %13 = sbr.rel target = $region3
  $region8: #{basic_block_forward.2} parent=0 // loop_exit
    _

// kernel: basic_block_forward.3
$region0: #{basic_block_forward.3}
  #allocation0 [shape = 'u32[]', space=smem, size = 0x4, offset = 0x4, fixed_abs, tag = 'smem constant byte address 0x4 - core index']
  #allocation1 [shape = 'u32[144,128]{1,0:T(1,128)}', space=vmem, size = 0x12000, scoped, tag = 'internal scratch']
  %s0 = inlined_call_operand.vmem [shape: bf16[2,16,16,128], index: 0, kind: input, shape index: {}, may-alias: {0,1,2}]
  %s1 = inlined_call_operand.vmem [shape: bf16[2,16,16,128], index: 1, kind: input, shape index: {}, may-alias: {0,1,2}]
  %s2 = inlined_call_operand.vmem [shape: bf16[2,16,16,128], index: 2, kind: input, shape index: {}, may-alias: {0,1,2}]
  %s3 = inlined_call_operand.vmem [shape: f32[2,18,128], index: 3, kind: input, shape index: {}]
  %s4 = inlined_call_operand.vmem [shape: f32[2,16,128], index: 4, kind: input, shape index: {}]
  %s5 = inlined_call_operand.vmem [shape: bf16[128,128], index: 5, kind: input, shape index: {}]
  %s6 = inlined_call_operand.vmem [shape: f32[1,128], index: 6, kind: input, shape index: {}]
  %s7 = inlined_call_operand.vmem [shape: bf16[3,384,128], index: 7, kind: input, shape index: {}]
  %s8 = inlined_call_operand.vmem [shape: f32[1,128], index: 8, kind: input, shape index: {}]
  %s9 = inlined_call_operand.vmem [shape: bf16[2,16,16,128], index: 9, kind: input, shape index: {}]
  %s10 = inlined_call_operand.vmem [shape: f32[2,16,16,128], index: 10, kind: output, shape index: {}]
  %s11 = sld [smem:[#allocation0]]
  $region73: #{basic_block_forward.3} parent=0
    _
  %s13 = ssub.s32 1, %s11
  %s14 = scalar_select 0, %s13, %s11
  loop: start=0, step=1, limit=4
  $region2: #{basic_block_forward.3} parent=0 // loop_pre_header
    _
  $region3: #{basic_block_forward.3} parent=0 // loop_header
    %s16 = sphi 0, %s20
    %p17 = scmp.ge.s32.totalorder %s16, 4
    %s23 = sphi 0, %s35
    %s24 = sphi 0, %s31
    %s25 = sphi 0, %s23
    %s26 = sphi 0, %s24
    %s27 = sphi 0, %s25
    %s28 = sphi 0, %s26
    %s40 = sphi 0, %s42
    %s43 = sphi 0, %s40
    %s44 = sphi 0, %s43
    %s60 = sphi 0, %s44
    %s76 = sphi 0, %s78
    %s79 = sphi 0, %s76
    %s80 = sphi 0, %s79
    %s96 = sphi 0, %s80
    %s112 = sphi 0, %s114
    %s115 = sphi 0, %s112
    %s116 = sphi 0, %s115
    %s132 = sphi 0, %s116
    %s138 = sphi 0, %s140
    %s141 = sphi 0, %s138
    %s142 = sphi 0, %s141
    %s158 = sphi 0, %s142
    %s164 = sphi 0, %s166
    %s167 = sphi 0, %s164
    %s168 = sphi 0, %s167
    %s184 = sphi 0, %s168
    %s188 = sphi 0, %s188
    %s190 = sphi 0, %s188
    %s191 = sphi 0, %s190
    %s205 = sphi 0, %s191
    %s209 = sphi 0, %s209
    %s211 = sphi 0, %s209
    %s212 = sphi 0, %s211
    %s226 = sphi 0, %s212
    %s230 = sphi 0, %s230
    %s232 = sphi 0, %s230
    %s233 = sphi 0, %s232
    %s247 = sphi 0, %s233
    %s251 = sphi 0, %s251
    %s253 = sphi 0, %s251
    %s254 = sphi 0, %s253
    %s268 = sphi 0, %s254
    %s276 = sphi 0, %s278
    %s279 = sphi 0, %s276
    %s280 = sphi 0, %s279
    %s296 = sphi 0, %s280
    %s304 = sphi 0, %s306
    %s307 = sphi 0, %s304
    %s308 = sphi 0, %s307
    %s324 = sphi 0, %s308
  $region4: #{basic_block_forward.3} parent=0 // loop_header_branch
    %19 = sbr.rel (%p17) target = $region8
  $region5: #{basic_block_forward.3} parent=0 // loop_body
    %s21 = ssub.s32 %s16, 1
    %s22 = ssub.s32 %s16, 2
    %s29 = sadd.s32 1, %s24
    %p30 = scmp.ge.s32.totalorder %s29, 1
    %s31 = scalar_select %p30, 0, %s29
    %s32 = sadd.s32 1, %s23
    %s33 = scalar_select %p30, %s32, %s23
    %p34 = scmp.ge.s32.totalorder %s33, 2
    %s35 = scalar_select %p34, 0, %s33
    %s36 = ssub.s32 %s23, %s35
    %s37 = ssub.s32 %s24, %s31
    %s38 = sor.u32 %s36, %s37
    %p39 = scmp.eq.s32.totalorder %s38, 0
    %s41 = sadd.s32 %s40, 1
    %s42 = scalar_select %p39, %s40, %s41
    %p45 = pneg %p39
    %p46 = scmp.eq.s32.totalorder %s16, 1
    %p47 = por %p45, %p46
    %p48 = scmp.ne.s32.totalorder %s40, %s43
    %p49 = scmp.eq.s32.totalorder %s16, 0
    %p50 = por %p48, %p49
    %p51 = scmp.ne.s32.totalorder %s40, %s43
    %p52 = scmp.eq.s32.totalorder %s21, 1
    %p53 = por %p51, %p52
    %p54 = scmp.ne.s32.totalorder %s43, %s44
    %p55 = scmp.eq.s32.totalorder %s21, 0
    %p56 = por %p54, %p55
    %p57 = scmp.ne.s32.totalorder %s43, %s44
    %p58 = scmp.eq.s32.totalorder %s22, 1
    %p59 = por %p57, %p58
    %p61 = scmp.ne.s32.totalorder %s44, %s60
    %p62 = scmp.eq.s32.totalorder %s22, 0
    %p63 = por %p61, %p62
    %s64 = smul.u32 %s24, 16
    %s65 = ssub.s32 %s64, 1
    %p66 = scmp.gt.s32.totalorder %s65, 0
    %s67 = scalar_select %p66, %s65, 0
    %s68 = smul.u32 %s31, 16
    %s69 = ssub.s32 %s68, 1
    %p70 = scmp.gt.s32.totalorder %s69, 0
    %s71 = scalar_select %p70, %s69, 0
    %s72 = ssub.s32 %s23, %s35
    %s73 = ssub.s32 %s67, %s71
    %s74 = sor.u32 %s72, %s73
    %p75 = scmp.eq.s32.totalorder %s74, 0
    %s77 = sadd.s32 %s76, 1
    %s78 = scalar_select %p75, %s76, %s77
    %p81 = pneg %p75
    %p82 = scmp.eq.s32.totalorder %s16, 1
    %p83 = por %p81, %p82
    %p84 = scmp.ne.s32.totalorder %s76, %s79
    %p85 = scmp.eq.s32.totalorder %s16, 0
    %p86 = por %p84, %p85
    %p87 = scmp.ne.s32.totalorder %s76, %s79
    %p88 = scmp.eq.s32.totalorder %s21, 1
    %p89 = por %p87, %p88
    %p90 = scmp.ne.s32.totalorder %s79, %s80
    %p91 = scmp.eq.s32.totalorder %s21, 0
    %p92 = por %p90, %p91
    %p93 = scmp.ne.s32.totalorder %s79, %s80
    %p94 = scmp.eq.s32.totalorder %s22, 1
    %p95 = por %p93, %p94
    %p97 = scmp.ne.s32.totalorder %s80, %s96
    %p98 = scmp.eq.s32.totalorder %s22, 0
    %p99 = por %p97, %p98
    %s100 = sadd.s32 %s24, 1
    %s101 = smul.u32 %s100, 16
    %p102 = scmp.lt.s32.totalorder %s101, 15
    %s103 = scalar_select %p102, %s101, 15
    %s104 = sadd.s32 %s31, 1
    %s105 = smul.u32 %s104, 16
    %p106 = scmp.lt.s32.totalorder %s105, 15
    %s107 = scalar_select %p106, %s105, 15
    %s108 = ssub.s32 %s23, %s35
    %s109 = ssub.s32 %s103, %s107
    %s110 = sor.u32 %s108, %s109
    %p111 = scmp.eq.s32.totalorder %s110, 0
    %s113 = sadd.s32 %s112, 1
    %s114 = scalar_select %p111, %s112, %s113
    %p117 = pneg %p111
    %p118 = scmp.eq.s32.totalorder %s16, 1
    %p119 = por %p117, %p118
    %p120 = scmp.ne.s32.totalorder %s112, %s115
    %p121 = scmp.eq.s32.totalorder %s16, 0
    %p122 = por %p120, %p121
    %p123 = scmp.ne.s32.totalorder %s112, %s115
    %p124 = scmp.eq.s32.totalorder %s21, 1
    %p125 = por %p123, %p124
    %p126 = scmp.ne.s32.totalorder %s115, %s116
    %p127 = scmp.eq.s32.totalorder %s21, 0
    %p128 = por %p126, %p127
    %p129 = scmp.ne.s32.totalorder %s115, %s116
    %p130 = scmp.eq.s32.totalorder %s22, 1
    %p131 = por %p129, %p130
    %p133 = scmp.ne.s32.totalorder %s116, %s132
    %p134 = scmp.eq.s32.totalorder %s22, 0
    %p135 = por %p133, %p134
    %s136 = ssub.s32 %s23, %s35
    %p137 = scmp.eq.s32.totalorder %s136, 0
    %s139 = sadd.s32 %s138, 1
    %s140 = scalar_select %p137, %s138, %s139
    %p143 = pneg %p137
    %p144 = scmp.eq.s32.totalorder %s16, 1
    %p145 = por %p143, %p144
    %p146 = scmp.ne.s32.totalorder %s138, %s141
    %p147 = scmp.eq.s32.totalorder %s16, 0
    %p148 = por %p146, %p147
    %p149 = scmp.ne.s32.totalorder %s138, %s141
    %p150 = scmp.eq.s32.totalorder %s21, 1
    %p151 = por %p149, %p150
    %p152 = scmp.ne.s32.totalorder %s141, %s142
    %p153 = scmp.eq.s32.totalorder %s21, 0
    %p154 = por %p152, %p153
    %p155 = scmp.ne.s32.totalorder %s141, %s142
    %p156 = scmp.eq.s32.totalorder %s22, 1
    %p157 = por %p155, %p156
    %p159 = scmp.ne.s32.totalorder %s142, %s158
    %p160 = scmp.eq.s32.totalorder %s22, 0
    %p161 = por %p159, %p160
    %s162 = ssub.s32 %s23, %s35
    %p163 = scmp.eq.s32.totalorder %s162, 0
    %s165 = sadd.s32 %s164, 1
    %s166 = scalar_select %p163, %s164, %s165
    %p169 = pneg %p163
    %p170 = scmp.eq.s32.totalorder %s16, 1
    %p171 = por %p169, %p170
    %p172 = scmp.ne.s32.totalorder %s164, %s167
    %p173 = scmp.eq.s32.totalorder %s16, 0
    %p174 = por %p172, %p173
    %p175 = scmp.ne.s32.totalorder %s164, %s167
    %p176 = scmp.eq.s32.totalorder %s21, 1
    %p177 = por %p175, %p176
    %p178 = scmp.ne.s32.totalorder %s167, %s168
    %p179 = scmp.eq.s32.totalorder %s21, 0
    %p180 = por %p178, %p179
    %p181 = scmp.ne.s32.totalorder %s167, %s168
    %p182 = scmp.eq.s32.totalorder %s22, 1
    %p183 = por %p181, %p182
    %p185 = scmp.ne.s32.totalorder %s168, %s184
    %p186 = scmp.eq.s32.totalorder %s22, 0
    %p187 = por %p185, %p186
    %s189 = sadd.s32 %s188, 1
    %p192 = scmp.eq.s32.totalorder %s16, 1
    %p193 = scmp.ne.s32.totalorder %s188, %s190
    %p194 = scmp.eq.s32.totalorder %s16, 0
    %p195 = por %p193, %p194
    %p196 = scmp.ne.s32.totalorder %s188, %s190
    %p197 = scmp.eq.s32.totalorder %s21, 1
    %p198 = por %p196, %p197
    %p199 = scmp.ne.s32.totalorder %s190, %s191
    %p200 = scmp.eq.s32.totalorder %s21, 0
    %p201 = por %p199, %p200
    %p202 = scmp.ne.s32.totalorder %s190, %s191
    %p203 = scmp.eq.s32.totalorder %s22, 1
    %p204 = por %p202, %p203
    %p206 = scmp.ne.s32.totalorder %s191, %s205
    %p207 = scmp.eq.s32.totalorder %s22, 0
    %p208 = por %p206, %p207
    %s210 = sadd.s32 %s209, 1
    %p213 = scmp.eq.s32.totalorder %s16, 1
    %p214 = scmp.ne.s32.totalorder %s209, %s211
    %p215 = scmp.eq.s32.totalorder %s16, 0
    %p216 = por %p214, %p215
    %p217 = scmp.ne.s32.totalorder %s209, %s211
    %p218 = scmp.eq.s32.totalorder %s21, 1
    %p219 = por %p217, %p218
    %p220 = scmp.ne.s32.totalorder %s211, %s212
    %p221 = scmp.eq.s32.totalorder %s21, 0
    %p222 = por %p220, %p221
    %p223 = scmp.ne.s32.totalorder %s211, %s212
    %p224 = scmp.eq.s32.totalorder %s22, 1
    %p225 = por %p223, %p224
    %p227 = scmp.ne.s32.totalorder %s212, %s226
    %p228 = scmp.eq.s32.totalorder %s22, 0
    %p229 = por %p227, %p228
    %s231 = sadd.s32 %s230, 1
    %p234 = scmp.eq.s32.totalorder %s16, 1
    %p235 = scmp.ne.s32.totalorder %s230, %s232
    %p236 = scmp.eq.s32.totalorder %s16, 0
    %p237 = por %p235, %p236
    %p238 = scmp.ne.s32.totalorder %s230, %s232
    %p239 = scmp.eq.s32.totalorder %s21, 1
    %p240 = por %p238, %p239
    %p241 = scmp.ne.s32.totalorder %s232, %s233
    %p242 = scmp.eq.s32.totalorder %s21, 0
    %p243 = por %p241, %p242
    %p244 = scmp.ne.s32.totalorder %s232, %s233
    %p245 = scmp.eq.s32.totalorder %s22, 1
    %p246 = por %p244, %p245
    %p248 = scmp.ne.s32.totalorder %s233, %s247
    %p249 = scmp.eq.s32.totalorder %s22, 0
    %p250 = por %p248, %p249
    %s252 = sadd.s32 %s251, 1
    %p255 = scmp.eq.s32.totalorder %s16, 1
    %p256 = scmp.ne.s32.totalorder %s251, %s253
    %p257 = scmp.eq.s32.totalorder %s16, 0
    %p258 = por %p256, %p257
    %p259 = scmp.ne.s32.totalorder %s251, %s253
    %p260 = scmp.eq.s32.totalorder %s21, 1
    %p261 = por %p259, %p260
    %p262 = scmp.ne.s32.totalorder %s253, %s254
    %p263 = scmp.eq.s32.totalorder %s21, 0
    %p264 = por %p262, %p263
    %p265 = scmp.ne.s32.totalorder %s253, %s254
    %p266 = scmp.eq.s32.totalorder %s22, 1
    %p267 = por %p265, %p266
    %p269 = scmp.ne.s32.totalorder %s254, %s268
    %p270 = scmp.eq.s32.totalorder %s22, 0
    %p271 = por %p269, %p270
    %s272 = ssub.s32 %s23, %s35
    %s273 = ssub.s32 %s24, %s31
    %s274 = sor.u32 %s272, %s273
    %p275 = scmp.eq.s32.totalorder %s274, 0
    %s277 = sadd.s32 %s276, 1
    %s278 = scalar_select %p275, %s276, %s277
    %p281 = pneg %p275
    %p282 = scmp.eq.s32.totalorder %s16, 1
    %p283 = por %p281, %p282
    %p284 = scmp.ne.s32.totalorder %s276, %s279
    %p285 = scmp.eq.s32.totalorder %s16, 0
    %p286 = por %p284, %p285
    %p287 = scmp.ne.s32.totalorder %s276, %s279
    %p288 = scmp.eq.s32.totalorder %s21, 1
    %p289 = por %p287, %p288
    %p290 = scmp.ne.s32.totalorder %s279, %s280
    %p291 = scmp.eq.s32.totalorder %s21, 0
    %p292 = por %p290, %p291
    %p293 = scmp.ne.s32.totalorder %s279, %s280
    %p294 = scmp.eq.s32.totalorder %s22, 1
    %p295 = por %p293, %p294
    %p297 = scmp.ne.s32.totalorder %s280, %s296
    %p298 = scmp.eq.s32.totalorder %s22, 0
    %p299 = por %p297, %p298
    %s300 = ssub.s32 %s23, %s35
    %s301 = ssub.s32 %s24, %s31
    %s302 = sor.u32 %s300, %s301
    %p303 = scmp.eq.s32.totalorder %s302, 0
    %s305 = sadd.s32 %s304, 1
    %s306 = scalar_select %p303, %s304, %s305
    %p309 = pneg %p303
    %p310 = scmp.eq.s32.totalorder %s16, 1
    %p311 = por %p309, %p310
    %p312 = scmp.ne.s32.totalorder %s304, %s307
    %p313 = scmp.eq.s32.totalorder %s16, 0
    %p314 = por %p312, %p313
    %p315 = scmp.ne.s32.totalorder %s304, %s307
    %p316 = scmp.eq.s32.totalorder %s21, 1
    %p317 = por %p315, %p316
    %p318 = scmp.ne.s32.totalorder %s307, %s308
    %p319 = scmp.eq.s32.totalorder %s21, 0
    %p320 = por %p318, %p319
    %p321 = scmp.ne.s32.totalorder %s307, %s308
    %p322 = scmp.eq.s32.totalorder %s22, 1
    %p323 = por %p321, %p322
    %p325 = scmp.ne.s32.totalorder %s308, %s324
    %p326 = scmp.eq.s32.totalorder %s22, 0
    %p327 = por %p325, %p326
    %p328 = scmp.le.s32.totalorder 1, %s16
    %p329 = scmp.lt.s32.totalorder %s16, 3
    %p330 = pnand %p328, %p329
    %p331 = pneg %p330
    // Predicated region
    $region9: #{basic_block_forward.3} parent=5 // pred_check
      _
    $region10: #{basic_block_forward.3} parent=5 // pred_check_branch
      %333 = sbr.rel (%p330) target = $region12
    $region11: #{basic_block_forward.3} parent=5 // pred_region
      %s334 = ssub.s32 %s16, 1
      // Predicated region
      $region13: #{basic_block_forward.3} parent=11 // pred_check
        %p335 = pneg %p201
      $region14: #{basic_block_forward.3} parent=11 // pred_check_branch
        %337 = sbr.rel (%p335) target = $region16
      $region15: #{basic_block_forward.3} parent=11 // pred_region
        _
      $region16: #{basic_block_forward.3} parent=11 // pred_fallthru
        _
      // Predicated region
      $region17: #{basic_block_forward.3} parent=11 // pred_check
        %p338 = pneg %p222
      $region18: #{basic_block_forward.3} parent=11 // pred_check_branch
        %340 = sbr.rel (%p338) target = $region20
      $region19: #{basic_block_forward.3} parent=11 // pred_region
        _
      $region20: #{basic_block_forward.3} parent=11 // pred_fallthru
        _
      // Predicated region
      $region21: #{basic_block_forward.3} parent=11 // pred_check
        %p341 = pneg %p243
      $region22: #{basic_block_forward.3} parent=11 // pred_check_branch
        %343 = sbr.rel (%p341) target = $region24
      $region23: #{basic_block_forward.3} parent=11 // pred_region
        _
      $region24: #{basic_block_forward.3} parent=11 // pred_fallthru
        _
      // Predicated region
      $region25: #{basic_block_forward.3} parent=11 // pred_check
        %p344 = pneg %p264
      $region26: #{basic_block_forward.3} parent=11 // pred_check_branch
        %346 = sbr.rel (%p344) target = $region28
      $region27: #{basic_block_forward.3} parent=11 // pred_region
        _
      $region28: #{basic_block_forward.3} parent=11 // pred_fallthru
        _
    $region12: #{basic_block_forward.3} parent=5 // pred_fallthru
      _
    %p347 = scmp.lt.s32.totalorder %s16, 2
    // Predicated region
    $region29: #{basic_block_forward.3} parent=5 // pred_check
      %p348 = pneg %p347
    $region30: #{basic_block_forward.3} parent=5 // pred_check_branch
      %350 = sbr.rel (%p348) target = $region32
    $region31: #{basic_block_forward.3} parent=5 // pred_region
      // Predicated region
      $region33: #{basic_block_forward.3} parent=31 // pred_check
        %p351 = pneg %p50
      $region34: #{basic_block_forward.3} parent=31 // pred_check_branch
        %353 = sbr.rel (%p351) target = $region36
      $region35: #{basic_block_forward.3} parent=31 // pred_region
        %s354 = smul.u32 16, %s24
        %p355 = scmp.lt.s32.totalorder %s23, 1
        %s356 = scalar_select %p355, %s23, 1
        %p357 = scmp.lt.s32.totalorder %s354, 15
        %s358 = scalar_select %p357, %s354, 15
        %s359 = smul.addr %s358, 2
        %s360 = smul.addr %s356, 32
        %s361 = sadd.s32 %s359, %s360
        %s362 = smul.addr %s361, 4
        %s363 = scalar_lea.vmem %s0, %s362
        %s364 = smul.u32 16, %s24
      $region36: #{basic_block_forward.3} parent=31 // pred_fallthru
        _
      // Predicated region
      $region37: #{basic_block_forward.3} parent=31 // pred_check
        %p365 = pneg %p86
      $region38: #{basic_block_forward.3} parent=31 // pred_check_branch
        %367 = sbr.rel (%p365) target = $region40
      $region39: #{basic_block_forward.3} parent=31 // pred_region
        %s368 = smul.u32 %s24, 16
        %s369 = ssub.s32 %s368, 1
        %p370 = scmp.gt.s32.totalorder %s369, 0
        %s371 = scalar_select %p370, %s369, 0
        %p372 = scmp.lt.s32.totalorder %s23, 1
        %s373 = scalar_select %p372, %s23, 1
        %p374 = scmp.lt.s32.totalorder %s371, 15
        %s375 = scalar_select %p374, %s371, 15
        %s376 = smul.addr %s375, 2
        %s377 = smul.addr %s373, 32
        %s378 = sadd.s32 %s376, %s377
        %s379 = smul.addr %s378, 4
        %s380 = scalar_lea.vmem %s1, %s379
        %s381 = smul.u32 %s24, 16
        %s382 = ssub.s32 %s381, 1
        %p383 = scmp.gt.s32.totalorder %s382, 0
        %s384 = scalar_select %p383, %s382, 0
      $region40: #{basic_block_forward.3} parent=31 // pred_fallthru
        _
      // Predicated region
      $region41: #{basic_block_forward.3} parent=31 // pred_check
        %p385 = pneg %p122
      $region42: #{basic_block_forward.3} parent=31 // pred_check_branch
        %387 = sbr.rel (%p385) target = $region44
      $region43: #{basic_block_forward.3} parent=31 // pred_region
        %s388 = sadd.s32 %s24, 1
        %s389 = smul.u32 %s388, 16
        %p390 = scmp.lt.s32.totalorder %s389, 15
        %s391 = scalar_select %p390, %s389, 15
        %p392 = scmp.lt.s32.totalorder %s23, 1
        %s393 = scalar_select %p392, %s23, 1
        %p394 = scmp.lt.s32.totalorder %s391, 15
        %s395 = scalar_select %p394, %s391, 15
        %s396 = smul.addr %s395, 2
        %s397 = smul.addr %s393, 32
        %s398 = sadd.s32 %s396, %s397
        %s399 = smul.addr %s398, 4
        %s400 = scalar_lea.vmem %s2, %s399
        %s401 = sadd.s32 %s24, 1
        %s402 = smul.u32 %s401, 16
        %p403 = scmp.lt.s32.totalorder %s402, 15
        %s404 = scalar_select %p403, %s402, 15
      $region44: #{basic_block_forward.3} parent=31 // pred_fallthru
        _
      // Predicated region
      $region45: #{basic_block_forward.3} parent=31 // pred_check
        %p405 = pneg %p148
      $region46: #{basic_block_forward.3} parent=31 // pred_check_branch
        %407 = sbr.rel (%p405) target = $region48
      $region47: #{basic_block_forward.3} parent=31 // pred_region
        %p408 = scmp.lt.s32.totalorder %s23, 1
        %s409 = scalar_select %p408, %s23, 1
        %s410 = smul.addr %s409, 3
        %s411 = smul.addr %s410, 8
        %s412 = scalar_lea.vmem %s3, %s411
      $region48: #{basic_block_forward.3} parent=31 // pred_fallthru
        _
      // Predicated region
      $region49: #{basic_block_forward.3} parent=31 // pred_check
        %p413 = pneg %p174
      $region50: #{basic_block_forward.3} parent=31 // pred_check_branch
        %415 = sbr.rel (%p413) target = $region52
      $region51: #{basic_block_forward.3} parent=31 // pred_region
        %p416 = scmp.lt.s32.totalorder %s23, 1
        %s417 = scalar_select %p416, %s23, 1
        %s418 = smul.addr %s417, 2
        %s419 = smul.addr %s418, 8
        %s420 = scalar_lea.vmem %s4, %s419
      $region52: #{basic_block_forward.3} parent=31 // pred_fallthru
        _
      // Predicated region
      $region53: #{basic_block_forward.3} parent=31 // pred_check
        %p421 = pneg %p286
      $region54: #{basic_block_forward.3} parent=31 // pred_check_branch
        %423 = sbr.rel (%p421) target = $region56
      $region55: #{basic_block_forward.3} parent=31 // pred_region
        %s424 = smul.u32 16, %s24
        %p425 = scmp.lt.s32.totalorder %s23, 1
        %s426 = scalar_select %p425, %s23, 1
        %p427 = scmp.lt.s32.totalorder %s424, 15
        %s428 = scalar_select %p427, %s424, 15
        %s429 = smul.addr %s428, 2
        %s430 = smul.addr %s426, 32
        %s431 = sadd.s32 %s429, %s430
        %s432 = smul.addr %s431, 4
        %s433 = scalar_lea.vmem %s9, %s432
        %s434 = smul.u32 16, %s24
      $region56: #{basic_block_forward.3} parent=31 // pred_fallthru
        _
    $region32: #{basic_block_forward.3} parent=5 // pred_fallthru
      _
    %p435 = scmp.le.s32.totalorder 1, %s16
    %p436 = scmp.lt.s32.totalorder %s16, 3
    %p437 = pnand %p435, %p436
    %p438 = pneg %p437
    // Predicated region
    $region57: #{basic_block_forward.3} parent=5 // pred_check
      _
    $region58: #{basic_block_forward.3} parent=5 // pred_check_branch
      %440 = sbr.rel (%p437) target = $region60
    $region59: #{basic_block_forward.3} parent=5 // pred_region
      %s441 = ssub.s32 %s16, 1
      %s442 = smul.u32 16, %s26
      %p443 = scmp.lt.s32.totalorder %s25, 1
      %s444 = scalar_select %p443, %s25, 1
      %p445 = scmp.lt.s32.totalorder %s442, 15
      %s446 = scalar_select %p445, %s442, 15
      %s447 = smul.addr %s446, 2
      %s448 = smul.addr %s444, 32
      %s449 = sadd.s32 %s447, %s448
      %s450 = smul.addr %s449, 4
      %s451 = scalar_lea.vmem %s0, %s450
      %p452 = pneg %p56
      %p453 = pneg %p53
      %s454 = smul.u32 %s26, 16
      %s455 = ssub.s32 %s454, 1
      %p456 = scmp.gt.s32.totalorder %s455, 0
      %s457 = scalar_select %p456, %s455, 0
      %p458 = scmp.lt.s32.totalorder %s25, 1
      %s459 = scalar_select %p458, %s25, 1
      %p460 = scmp.lt.s32.totalorder %s457, 15
      %s461 = scalar_select %p460, %s457, 15
      %s462 = smul.addr %s461, 2
      %s463 = smul.addr %s459, 32
      %s464 = sadd.s32 %s462, %s463
      %s465 = smul.addr %s464, 4
      %s466 = scalar_lea.vmem %s1, %s465
      %p467 = pneg %p92
      %p468 = pneg %p89
      %s469 = sadd.s32 %s26, 1
      %s470 = smul.u32 %s469, 16
      %p471 = scmp.lt.s32.totalorder %s470, 15
      %s472 = scalar_select %p471, %s470, 15
      %p473 = scmp.lt.s32.totalorder %s25, 1
      %s474 = scalar_select %p473, %s25, 1
      %p475 = scmp.lt.s32.totalorder %s472, 15
      %s476 = scalar_select %p475, %s472, 15
      %s477 = smul.addr %s476, 2
      %s478 = smul.addr %s474, 32
      %s479 = sadd.s32 %s477, %s478
      %s480 = smul.addr %s479, 4
      %s481 = scalar_lea.vmem %s2, %s480
      %p482 = pneg %p128
      %p483 = pneg %p125
      %p484 = scmp.lt.s32.totalorder %s25, 1
      %s485 = scalar_select %p484, %s25, 1
      %s486 = smul.addr %s485, 3
      %s487 = smul.addr %s486, 8
      %s488 = scalar_lea.vmem %s3, %s487
      %p489 = pneg %p154
      %p490 = pneg %p151
      %p491 = scmp.lt.s32.totalorder %s25, 1
      %s492 = scalar_select %p491, %s25, 1
      %s493 = smul.addr %s492, 2
      %s494 = smul.addr %s493, 8
      %s495 = scalar_lea.vmem %s4, %s494
      %p496 = pneg %p180
      %p497 = pneg %p177
      %p498 = pneg %p201
      %p499 = pneg %p198
      %p500 = pneg %p222
      %p501 = pneg %p219
      %p502 = pneg %p243
      %p503 = pneg %p240
      %p504 = pneg %p264
      %p505 = pneg %p261
      %s506 = smul.u32 16, %s26
      %p507 = scmp.lt.s32.totalorder %s25, 1
      %s508 = scalar_select %p507, %s25, 1
      %p509 = scmp.lt.s32.totalorder %s506, 15
      %s510 = scalar_select %p509, %s506, 15
      %s511 = smul.addr %s510, 2
      %s512 = smul.addr %s508, 32
      %s513 = sadd.s32 %s511, %s512
      %s514 = smul.addr %s513, 4
      %s515 = scalar_lea.vmem %s9, %s514
      %p516 = pneg %p292
      %p517 = pneg %p289
      %p518 = pneg %p320
      %p519 = pneg %p317
      %s520 = smul.u32 16, %s26
      %p521 = scmp.lt.s32.totalorder %s25, 1
      %s522 = scalar_select %p521, %s25, 1
      %p523 = scmp.lt.s32.totalorder %s520, 15
      %s524 = scalar_select %p523, %s520, 15
      %s525 = smul.addr %s524, 2
      %s526 = smul.addr %s522, 32
      %s527 = sadd.s32 %s525, %s526
      %s528 = smul.addr %s527, 8
      %s529 = scalar_lea.vmem %s10, %s528
      %s530 = smul.u32 16, %s26
      %p531 = scmp.lt.s32.totalorder %s25, 1
      %s532 = scalar_select %p531, %s25, 1
      %p533 = scmp.lt.s32.totalorder %s530, 15
      %s534 = scalar_select %p533, %s530, 15
      %s535 = smul.addr %s534, 2
      %s536 = smul.addr %s532, 32
      %s537 = sadd.s32 %s535, %s536
      %s538 = smul.addr %s537, 4
      %s539 = scalar_lea.vmem %s0, %s538
      %s540 = smul.u32 16, %s26
      %s541 = smul.u32 %s26, 16
      %s542 = ssub.s32 %s541, 1
      %p543 = scmp.gt.s32.totalorder %s542, 0
      %s544 = scalar_select %p543, %s542, 0
      %p545 = scmp.lt.s32.totalorder %s25, 1
      %s546 = scalar_select %p545, %s25, 1
      %p547 = scmp.lt.s32.totalorder %s544, 15
      %s548 = scalar_select %p547, %s544, 15
      %s549 = smul.addr %s548, 2
      %s550 = smul.addr %s546, 32
      %s551 = sadd.s32 %s549, %s550
      %s552 = smul.addr %s551, 4
      %s553 = scalar_lea.vmem %s1, %s552
      %s554 = smul.u32 %s26, 16
      %s555 = ssub.s32 %s554, 1
      %p556 = scmp.gt.s32.totalorder %s555, 0
      %s557 = scalar_select %p556, %s555, 0
      %s558 = sadd.s32 %s26, 1
      %s559 = smul.u32 %s558, 16
      %p560 = scmp.lt.s32.totalorder %s559, 15
      %s561 = scalar_select %p560, %s559, 15
      %p562 = scmp.lt.s32.totalorder %s25, 1
      %s563 = scalar_select %p562, %s25, 1
      %p564 = scmp.lt.s32.totalorder %s561, 15
      %s565 = scalar_select %p564, %s561, 15
      %s566 = smul.addr %s565, 2
      %s567 = smul.addr %s563, 32
      %s568 = sadd.s32 %s566, %s567
      %s569 = smul.addr %s568, 4
      %s570 = scalar_lea.vmem %s2, %s569
      %s571 = sadd.s32 %s26, 1
      %s572 = smul.u32 %s571, 16
      %p573 = scmp.lt.s32.totalorder %s572, 15
      %s574 = scalar_select %p573, %s572, 15
      %p575 = scmp.lt.s32.totalorder %s25, 1
      %s576 = scalar_select %p575, %s25, 1
      %s577 = smul.addr %s576, 3
      %s578 = smul.addr %s577, 8
      %s579 = scalar_lea.vmem %s3, %s578
      %p580 = scmp.lt.s32.totalorder %s25, 1
      %s581 = scalar_select %p580, %s25, 1
      %s582 = smul.addr %s581, 2
      %s583 = smul.addr %s582, 8
      %s584 = scalar_lea.vmem %s4, %s583
      %s585 = smul.u32 16, %s26
      %p586 = scmp.lt.s32.totalorder %s25, 1
      %s587 = scalar_select %p586, %s25, 1
      %p588 = scmp.lt.s32.totalorder %s585, 15
      %s589 = scalar_select %p588, %s585, 15
      %s590 = smul.addr %s589, 2
      %s591 = smul.addr %s587, 32
      %s592 = sadd.s32 %s590, %s591
      %s593 = smul.addr %s592, 4
      %s594 = scalar_lea.vmem %s9, %s593
      %s595 = smul.u32 16, %s26
      %s596 = smul.u32 16, %s26
      %p597 = scmp.lt.s32.totalorder %s25, 1
      %s598 = scalar_select %p597, %s25, 1
      %p599 = scmp.lt.s32.totalorder %s596, 15
      %s600 = scalar_select %p599, %s596, 15
      %s601 = smul.addr %s600, 2
      %s602 = smul.addr %s598, 32
      %s603 = sadd.s32 %s601, %s602
      %s604 = smul.addr %s603, 8
      %s605 = scalar_lea.vmem %s10, %s604
      %s606 = smul.u32 16, %s26
      %v608 = vld [vmem:[%s553] sm:$0xf]
      %v609 = vld [vmem:[%s553 + $0x4] sm:$0xf]
      %p610 = scmp.gt.s32.totalorder %s26, 0
      %s611 = scalar_select %p610, 1, 0
      %s612 = scvt.s32.f32 %s611
      %p614 = scmp.ne.f32.partialorder %s612, %s612
      %s615 = sshrl.u32 %s612, 16
      %s616 = sand.u32 %s615, 1
      %s617 = sadd.s32 32767, %s616
      %s618 = sadd.s32 %s612, %s617
      %s619 = sand.u32 %s618, 4294901760
      %s620 = scalar_select %p614, 2143289344, %s619
      %s622 = sshrl.u32 %s620, 16
      %s623 = sshll.u32 %s622, 16
      %s624 = sor.u32 %s622, %s623
      %v625 = vstv %s624
      %v627 = vmul.bf16 %v608, %v625
      %v628 = vmul.bf16 %v609, %v625
      %v629 = vld [vmem:[%s570] sm:$0xf]
      %v630 = vld [vmem:[%s570 + $0x4] sm:$0xf]
      %p631 = scmp.lt.s32.totalorder %s26, 0
      %s632 = scalar_select %p631, 1, 0
      %s633 = scvt.s32.f32 %s632
      %p635 = scmp.ne.f32.partialorder %s633, %s633
      %s636 = sshrl.u32 %s633, 16
      %s637 = sand.u32 %s636, 1
      %s638 = sadd.s32 32767, %s637
      %s639 = sadd.s32 %s633, %s638
      %s640 = sand.u32 %s639, 4294901760
      %s641 = scalar_select %p635, 2143289344, %s640
      %s643 = sshrl.u32 %s641, 16
      %s644 = sshll.u32 %s643, 16
      %s645 = sor.u32 %s643, %s644
      %v646 = vstv %s645
      %v648 = vmul.bf16 %v629, %v646
      %v649 = vmul.bf16 %v630, %v646
      %v650 = vld [vmem:[%s539] sm:$0xf]
      %v651 = vld [vmem:[%s539 + $0x4] sm:$0xf]
      %v652 = vld [vmem:[%s539 + $0x8] sm:$0xf]
      %v653 = vld [vmem:[%s539 + $0xc] sm:$0xf]
      %v654 = vld [vmem:[%s539 + $0x10] sm:$0xf]
      %v655 = vld [vmem:[%s539 + $0x14] sm:$0xf]
      %v656 = vld [vmem:[%s539 + $0x18] sm:$0xf]
      %v657 = vld [vmem:[%s539 + $0x1c] sm:$0xf]
      %v658 = vld [vmem:[%s539 + $0x20] sm:$0xf]
      %v659 = vld [vmem:[%s539 + $0x24] sm:$0xf]
      %v660 = vld [vmem:[%s539 + $0x28] sm:$0xf]
      %v661 = vld [vmem:[%s539 + $0x2c] sm:$0xf]
      %v662 = vld [vmem:[%s539 + $0x30] sm:$0xf]
      %v663 = vld [vmem:[%s539 + $0x34] sm:$0xf]
      %v664 = vld [vmem:[%s539 + $0x38] sm:$0xf]
      %v665 = vld [vmem:[%s539 + $0x3c] sm:$0xf]
      %v666 = vld [vmem:[%s539 + $0x40] sm:$0xf]
      %v667 = vld [vmem:[%s539 + $0x44] sm:$0xf]
      %v668 = vld [vmem:[%s539 + $0x48] sm:$0xf]
      %v669 = vld [vmem:[%s539 + $0x4c] sm:$0xf]
      %v670 = vld [vmem:[%s539 + $0x50] sm:$0xf]
      %v671 = vld [vmem:[%s539 + $0x54] sm:$0xf]
      %v672 = vld [vmem:[%s539 + $0x58] sm:$0xf]
      %v673 = vld [vmem:[%s539 + $0x5c] sm:$0xf]
      %v674 = vld [vmem:[%s539 + $0x60] sm:$0xf]
      %v675 = vld [vmem:[%s539 + $0x64] sm:$0xf]
      %v676 = vld [vmem:[%s539 + $0x68] sm:$0xf]
      %v677 = vld [vmem:[%s539 + $0x6c] sm:$0xf]
      %v678 = vld [vmem:[%s539 + $0x70] sm:$0xf]
      %v679 = vld [vmem:[%s539 + $0x74] sm:$0xf]
      %v680 = vld [vmem:[%s539 + $0x78] sm:$0xf]
      %v681 = vld [vmem:[%s539 + $0x7c] sm:$0xf]
      %s682 = smul.u32 %s26, 16
      %s683 = scalar_lea.vmem %s579, %s682
      %v684 = vld [vmem:[%s683] sm:$0xff]
      %v685 = vld [vmem:[%s683 + $0x8] sm:$0xff]
      %v686 = vld [vmem:[%s683 + $0x10] sm:$0x3]
      %v690 = vcombine.high %v684, %v684
      %v692 = vunpack.c.l.s4 1966171168
      %v693 = vunpack.c.0.s8 %v692
      %v694 = vlaneseq
      %v695 = vshrl.u32 %v694, 7
      %v696 = vsub.s32 %v693, %v695
      %v697 = vrot.slane %v684, %v696
      %v699 = vunpack.c.l.s4 1966171168
      %v700 = vunpack.c.0.s8 %v699
      %v701 = vlaneseq
      %v702 = vshrl.u32 %v701, 7
      %v703 = vsub.s32 %v700, %v702
      %v704 = vrot.slane %v690, %v703
      %v705 = vcombine.high %v697, %v697
      %v706 = vcombine.high %v704, %v704
      %v708 = vunpack.c.l.s4 1966171168
      %v709 = vunpack.c.0.s8 %v708
      %v710 = vlaneseq
      %v711 = vshrl.u32 %v710, 7
      %v712 = vsub.s32 %v709, %v711
      %v713 = vrot.slane %v697, %v712
      %v715 = vunpack.c.l.s4 1966171168
      %v716 = vunpack.c.0.s8 %v715
      %v717 = vlaneseq
      %v718 = vshrl.u32 %v717, 7
      %v719 = vsub.s32 %v716, %v718
      %v720 = vrot.slane %v704, %v719
      %v722 = vunpack.c.l.s4 1966171168
      %v723 = vunpack.c.0.s8 %v722
      %v724 = vlaneseq
      %v725 = vshrl.u32 %v724, 7
      %v726 = vsub.s32 %v723, %v725
      %v727 = vrot.slane %v705, %v726
      %v729 = vunpack.c.l.s4 1966171168
      %v730 = vunpack.c.0.s8 %v729
      %v731 = vlaneseq
      %v732 = vshrl.u32 %v731, 7
      %v733 = vsub.s32 %v730, %v732
      %v734 = vrot.slane %v706, %v733
      %v735 = vcombine.high %v713, %v713
      %v736 = vcombine.high %v720, %v720
      %v737 = vcombine.high %v727, %v727
      %v738 = vcombine.high %v734, %v734
      %v739 = vcombine.high %v685, %v685
      %v741 = vunpack.c.l.s4 1966171168
      %v742 = vunpack.c.0.s8 %v741
      %v743 = vlaneseq
      %v744 = vshrl.u32 %v743, 7
      %v745 = vsub.s32 %v742, %v744
      %v746 = vrot.slane %v685, %v745
      %v748 = vunpack.c.l.s4 1966171168
      %v749 = vunpack.c.0.s8 %v748
      %v750 = vlaneseq
      %v751 = vshrl.u32 %v750, 7
      %v752 = vsub.s32 %v749, %v751
      %v753 = vrot.slane %v739, %v752
      %v754 = vcombine.high %v746, %v746
      %v755 = vcombine.high %v753, %v753
      %v757 = vunpack.c.l.s4 1966171168
      %v758 = vunpack.c.0.s8 %v757
      %v759 = vlaneseq
      %v760 = vshrl.u32 %v759, 7
      %v761 = vsub.s32 %v758, %v760
      %v762 = vrot.slane %v746, %v761
      %v764 = vunpack.c.l.s4 1966171168
      %v765 = vunpack.c.0.s8 %v764
      %v766 = vlaneseq
      %v767 = vshrl.u32 %v766, 7
      %v768 = vsub.s32 %v765, %v767
      %v769 = vrot.slane %v753, %v768
      %v771 = vunpack.c.l.s4 1966171168
      %v772 = vunpack.c.0.s8 %v771
      %v773 = vlaneseq
      %v774 = vshrl.u32 %v773, 7
      %v775 = vsub.s32 %v772, %v774
      %v776 = vrot.slane %v754, %v775
      %v778 = vunpack.c.l.s4 1966171168
      %v779 = vunpack.c.0.s8 %v778
      %v780 = vlaneseq
      %v781 = vshrl.u32 %v780, 7
      %v782 = vsub.s32 %v779, %v781
      %v783 = vrot.slane %v755, %v782
      %v784 = vcombine.high %v762, %v762
      %v785 = vcombine.high %v769, %v769
      %v786 = vcombine.high %v776, %v776
      %v787 = vcombine.high %v783, %v783
      %v789 = vunpack.c.l.s4 1966171168
      %v790 = vunpack.c.0.s8 %v789
      %v791 = vlaneseq
      %v792 = vshrl.u32 %v791, 7
      %v793 = vsub.s32 %v790, %v792
      %v794 = vrot.slane %v686, %v793
      %v795 = vcombine.high %v794, %v794
      %v797 = vunpack.c.l.s4 1966171168
      %v798 = vunpack.c.0.s8 %v797
      %v799 = vlaneseq
      %v800 = vshrl.u32 %v799, 7
      %v801 = vsub.s32 %v798, %v800
      %v802 = vrot.slane %v794, %v801
      %v804 = vunpack.c.l.s4 1966171168
      %v805 = vunpack.c.0.s8 %v804
      %v806 = vlaneseq
      %v807 = vshrl.u32 %v806, 7
      %v808 = vsub.s32 %v805, %v807
      %v809 = vrot.slane %v795, %v808
      %v810 = vld [vmem:[%s584] sm:$0xff]
      %v811 = vld [vmem:[%s584 + $0x8] sm:$0xff]
      %v812 = vlaneseq
      %v813 = vshrl.u32 %v812, 7
      %v814 = vsub.s32 0, %v813
      %v815 = vrot.slane %v713, %v814
      %v816 = vlaneseq
      %v817 = vshrl.u32 %v816, 7
      %v818 = vsub.s32 0, %v817
      %v819 = vrot.slane %v727, %v818
      %v820 = vlaneseq
      %v821 = vshrl.u32 %v820, 7
      %v822 = vsub.s32 0, %v821
      %v823 = vrot.slane %v735, %v822
      %v824 = vlaneseq
      %v825 = vshrl.u32 %v824, 7
      %v826 = vsub.s32 0, %v825
      %v827 = vrot.slane %v737, %v826
      %v828 = vlaneseq
      %v829 = vshrl.u32 %v828, 7
      %v830 = vsub.s32 0, %v829
      %v831 = vrot.slane %v720, %v830
      %v832 = vlaneseq
      %v833 = vshrl.u32 %v832, 7
      %v834 = vsub.s32 0, %v833
      %v835 = vrot.slane %v734, %v834
      %v836 = vlaneseq
      %v837 = vshrl.u32 %v836, 7
      %v838 = vsub.s32 0, %v837
      %v839 = vrot.slane %v736, %v838
      %v840 = vlaneseq
      %v841 = vshrl.u32 %v840, 7
      %v842 = vsub.s32 0, %v841
      %v843 = vrot.slane %v738, %v842
      %v844 = vlaneseq
      %v845 = vshrl.u32 %v844, 7
      %v846 = vsub.s32 0, %v845
      %v847 = vrot.slane %v762, %v846
      %v848 = vlaneseq
      %v849 = vshrl.u32 %v848, 7
      %v850 = vsub.s32 0, %v849
      %v851 = vrot.slane %v776, %v850
      %v852 = vlaneseq
      %v853 = vshrl.u32 %v852, 7
      %v854 = vsub.s32 0, %v853
      %v855 = vrot.slane %v784, %v854
      %v856 = vlaneseq
      %v857 = vshrl.u32 %v856, 7
      %v858 = vsub.s32 0, %v857
      %v859 = vrot.slane %v786, %v858
      %v860 = vlaneseq
      %v861 = vshrl.u32 %v860, 7
      %v862 = vsub.s32 0, %v861
      %v863 = vrot.slane %v769, %v862
      %v864 = vlaneseq
      %v865 = vshrl.u32 %v864, 7
      %v866 = vsub.s32 0, %v865
      %v867 = vrot.slane %v783, %v866
      %v868 = vlaneseq
      %v869 = vshrl.u32 %v868, 7
      %v870 = vsub.s32 0, %v869
      %v871 = vrot.slane %v785, %v870
      %v872 = vlaneseq
      %v873 = vshrl.u32 %v872, 7
      %v874 = vsub.s32 0, %v873
      %v875 = vrot.slane %v787, %v874
      %v876 = vlaneseq
      %v877 = vshrl.u32 %v876, 7
      %v878 = vsub.s32 0, %v877
      %v879 = vrot.slane %v802, %v878
      %v880 = vlaneseq
      %v881 = vshrl.u32 %v880, 7
      %v882 = vsub.s32 0, %v881
      %v883 = vrot.slane %v809, %v882
      %v902 = vadd.f32 %v815, %v810
      %v903 = vadd.f32 %v815, %v811
      %v904 = vadd.f32 %v819, %v810
      %v905 = vadd.f32 %v819, %v811
      %v906 = vadd.f32 %v823, %v810
      %v907 = vadd.f32 %v823, %v811
      %v908 = vadd.f32 %v827, %v810
      %v909 = vadd.f32 %v827, %v811
      %v910 = vadd.f32 %v831, %v810
      %v911 = vadd.f32 %v831, %v811
      %v912 = vadd.f32 %v835, %v810
      %v913 = vadd.f32 %v835, %v811
      %v914 = vadd.f32 %v839, %v810
      %v915 = vadd.f32 %v839, %v811
      %v916 = vadd.f32 %v843, %v810
      %v917 = vadd.f32 %v843, %v811
      %v918 = vadd.f32 %v847, %v810
      %v919 = vadd.f32 %v847, %v811
      %v920 = vadd.f32 %v851, %v810
      %v921 = vadd.f32 %v851, %v811
      %v922 = vadd.f32 %v855, %v810
      %v923 = vadd.f32 %v855, %v811
      %v924 = vadd.f32 %v859, %v810
      %v925 = vadd.f32 %v859, %v811
      %v926 = vadd.f32 %v863, %v810
      %v927 = vadd.f32 %v863, %v811
      %v928 = vadd.f32 %v867, %v810
      %v929 = vadd.f32 %v867, %v811
      %v930 = vadd.f32 %v871, %v810
      %v931 = vadd.f32 %v871, %v811
      %v932 = vadd.f32 %v875, %v810
      %v933 = vadd.f32 %v875, %v811
      %v934 = vadd.f32 %v879, %v810
      %v935 = vadd.f32 %v879, %v811
      %v936 = vadd.f32 %v883, %v810
      %v937 = vadd.f32 %v883, %v811
      %v938 = vmax.f32 %v902, 0.0
      %v939 = vmax.f32 %v903, 0.0
      %v940 = vmax.f32 %v904, 0.0
      %v941 = vmax.f32 %v905, 0.0
      %v942 = vmax.f32 %v906, 0.0
      %v943 = vmax.f32 %v907, 0.0
      %v944 = vmax.f32 %v908, 0.0
      %v945 = vmax.f32 %v909, 0.0
      %v946 = vmax.f32 %v910, 0.0
      %v947 = vmax.f32 %v911, 0.0
      %v948 = vmax.f32 %v912, 0.0
      %v949 = vmax.f32 %v913, 0.0
      %v950 = vmax.f32 %v914, 0.0
      %v951 = vmax.f32 %v915, 0.0
      %v952 = vmax.f32 %v916, 0.0
      %v953 = vmax.f32 %v917, 0.0
      %v954 = vmax.f32 %v918, 0.0
      %v955 = vmax.f32 %v919, 0.0
      %v956 = vmax.f32 %v920, 0.0
      %v957 = vmax.f32 %v921, 0.0
      %v958 = vmax.f32 %v922, 0.0
      %v959 = vmax.f32 %v923, 0.0
      %v960 = vmax.f32 %v924, 0.0
      %v961 = vmax.f32 %v925, 0.0
      %v962 = vmax.f32 %v926, 0.0
      %v963 = vmax.f32 %v927, 0.0
      %v964 = vmax.f32 %v928, 0.0
      %v965 = vmax.f32 %v929, 0.0
      %v966 = vmax.f32 %v930, 0.0
      %v967 = vmax.f32 %v931, 0.0
      %v968 = vmax.f32 %v932, 0.0
      %v969 = vmax.f32 %v933, 0.0
      %v970 = vmax.f32 %v934, 0.0
      %v971 = vmax.f32 %v935, 0.0
      %v972 = vmax.f32 %v936, 0.0
      %v973 = vmax.f32 %v937, 0.0
      %v974 = vpack.c.bf16 %v939, %v938
      %v975 = vpack.c.bf16 %v941, %v940
      %v976 = vpack.c.bf16 %v943, %v942
      %v977 = vpack.c.bf16 %v945, %v944
      %v978 = vpack.c.bf16 %v947, %v946
      %v979 = vpack.c.bf16 %v949, %v948
      %v980 = vpack.c.bf16 %v951, %v950
      %v981 = vpack.c.bf16 %v953, %v952
      %v982 = vpack.c.bf16 %v955, %v954
      %v983 = vpack.c.bf16 %v957, %v956
      %v984 = vpack.c.bf16 %v959, %v958
      %v985 = vpack.c.bf16 %v961, %v960
      %v986 = vpack.c.bf16 %v963, %v962
      %v987 = vpack.c.bf16 %v965, %v964
      %v988 = vpack.c.bf16 %v967, %v966
      %v989 = vpack.c.bf16 %v969, %v968
      %v990 = vpack.c.bf16 %v971, %v970
      %v991 = vpack.c.bf16 %v973, %v972
      %v992 = vld [vmem:[%s5] sm:$0xf]
      %v993 = vld [vmem:[%s5 + $0x4] sm:$0xf]
      %v994 = vld [vmem:[%s5 + $0x8] sm:$0xf]
      %v995 = vld [vmem:[%s5 + $0xc] sm:$0xf]
      %v996 = vld [vmem:[%s5 + $0x10] sm:$0xf]
      %v997 = vld [vmem:[%s5 + $0x14] sm:$0xf]
      %v998 = vld [vmem:[%s5 + $0x18] sm:$0xf]
      %v999 = vld [vmem:[%s5 + $0x1c] sm:$0xf]
      %v1000 = vld [vmem:[%s5 + $0x20] sm:$0xf]
      %v1001 = vld [vmem:[%s5 + $0x24] sm:$0xf]
      %v1002 = vld [vmem:[%s5 + $0x28] sm:$0xf]
      %v1003 = vld [vmem:[%s5 + $0x2c] sm:$0xf]
      %v1004 = vld [vmem:[%s5 + $0x30] sm:$0xf]
      %v1005 = vld [vmem:[%s5 + $0x34] sm:$0xf]
      %v1006 = vld [vmem:[%s5 + $0x38] sm:$0xf]
      %v1007 = vld [vmem:[%s5 + $0x3c] sm:$0xf]
      %v1008 = vld [vmem:[%s6] sm:$0x1]
      %v1010 = vlaneseq
      %v1011 = vshrl.u32 %v1010, 7
      %v1012 = vsub.s32 0, %v1011
      %v1013 = vrot.slane %v1008, %v1012
      %v1031 = vunpack.c.l.b16 %v992
      %v1032 = vunpack.c.l.b16 %v993
      %v1033 = vunpack.c.l.b16 %v994
      %v1034 = vunpack.c.l.b16 %v995
      %v1035 = vunpack.c.l.b16 %v996
      %v1036 = vunpack.c.l.b16 %v997
      %v1037 = vunpack.c.l.b16 %v998
      %v1038 = vunpack.c.l.b16 %v999
      %v1039 = vunpack.c.l.b16 %v1000
      %v1040 = vunpack.c.l.b16 %v1001
      %v1041 = vunpack.c.l.b16 %v1002
      %v1042 = vunpack.c.l.b16 %v1003
      %v1043 = vunpack.c.l.b16 %v1004
      %v1044 = vunpack.c.l.b16 %v1005
      %v1045 = vunpack.c.l.b16 %v1006
      %v1046 = vunpack.c.l.b16 %v1007
      %v1047 = vpack.c.b16 %v1032, %v1031
      %v1048 = vpack.c.b16 %v1034, %v1033
      %v1049 = vpack.c.b16 %v1036, %v1035
      %v1050 = vpack.c.b16 %v1038, %v1037
      %v1051 = vpack.c.b16 %v1040, %v1039
      %v1052 = vpack.c.b16 %v1042, %v1041
      %v1053 = vpack.c.b16 %v1044, %v1043
      %v1054 = vpack.c.b16 %v1046, %v1045
      %1063 = vmatprep.subr.bf16.mxu0 0
      %1064 = vmatpush1.bf16.msra.mxu0 %v1047
      %1065 = vmatprep.subr.bf16.mxu0 0
      %1066 = vmatpush1.bf16.msra.mxu0 %v1048
      %1067 = vmatprep.subr.bf16.mxu0 0
      %1068 = vmatpush1.bf16.msra.mxu0 %v1049
      %1069 = vmatprep.subr.bf16.mxu0 0
      %1070 = vmatpush1.bf16.msra.mxu0 %v1050
      %1071 = vmatprep.subr.bf16.mxu0 0
      %1072 = vmatpush1.bf16.msra.mxu0 %v1051
      %1073 = vmatprep.subr.bf16.mxu0 0
      %1074 = vmatpush1.bf16.msra.mxu0 %v1052
      %1075 = vmatprep.subr.bf16.mxu0 0
      %1076 = vmatpush1.bf16.msra.mxu0 %v1053
      %1077 = vmatprep.subr.bf16.mxu0 0
      %1078 = vmatpush1.bf16.msra.mxu0 %v1054
      %1079 = vmatprep.subr.bf16.mxu0 0
      %1080 = vmatpush1.bf16.msra.mxu0 0
      %1081 = vmatprep.subr.bf16.mxu0 0
      %1082 = vmatpush1.bf16.msra.mxu0 0
      %1083 = vmatprep.subr.bf16.mxu0 0
      %1084 = vmatpush1.bf16.msra.mxu0 0
      %1085 = vmatprep.subr.bf16.mxu0 0
      %1086 = vmatpush1.bf16.msra.mxu0 0
      %1087 = vmatprep.subr.bf16.mxu0 0
      %1088 = vmatpush1.bf16.msra.mxu0 0
      %1089 = vmatprep.subr.bf16.mxu0 0
      %1090 = vmatpush1.bf16.msra.mxu0 0
      %1091 = vmatprep.subr.bf16.mxu0 0
      %1092 = vmatpush1.bf16.msra.mxu0 0
      %1093 = vmatprep.subr.bf16.mxu0 0
      %1094 = vmatpush1.bf16.msra.mxu0 0
      %1095 = vmatprep.mubr.bf16.mxu0 0
      %1096 = vmatmul.mubr.bf16.gmra.mrb[0].mxu0 %v974
      %v1097 = vpop.f32.mrb[0].mxu0
      %v1098 = vadd.f32 %v1013, %v1097
      %v1099 = vpop.f32.mrb[0].mxu0
      %v1100 = vpop.f32.mrb[0].mxu0
      %v1101 = vadd.f32 %v1013, %v1100
      %v1102 = vpop.f32.mrb[0].mxu0
      %1103 = vmatprep.mubr.bf16.mxu0 0
      %1104 = vmatmul.mubr.bf16.gmra.mrb[0].mxu0 %v975
      %v1105 = vpop.f32.mrb[0].mxu0
      %v1106 = vadd.f32 %v1013, %v1105
      %v1107 = vpop.f32.mrb[0].mxu0
      %v1108 = vpop.f32.mrb[0].mxu0
      %v1109 = vadd.f32 %v1013, %v1108
      %v1110 = vpop.f32.mrb[0].mxu0
      %1111 = vmatprep.mubr.bf16.mxu0 0
      %1112 = vmatmul.mubr.bf16.gmra.mrb[0].mxu0 %v976
      %v1113 = vpop.f32.mrb[0].mxu0
      %v1114 = vadd.f32 %v1013, %v1113
      %v1115 = vpop.f32.mrb[0].mxu0
      %v1116 = vpop.f32.mrb[0].mxu0
      %v1117 = vadd.f32 %v1013, %v1116
      %v1118 = vpop.f32.mrb[0].mxu0
      %1119 = vmatprep.mubr.bf16.mxu0 0
      %1120 = vmatmul.mubr.bf16.gmra.mrb[0].mxu0 %v977
      %v1121 = vpop.f32.mrb[0].mxu0
      %v1122 = vadd.f32 %v1013, %v1121
      %v1123 = vpop.f32.mrb[0].mxu0
      %v1124 = vpop.f32.mrb[0].mxu0
      %v1125 = vadd.f32 %v1013, %v1124
      %v1126 = vpop.f32.mrb[0].mxu0
      %1127 = vmatprep.mubr.bf16.mxu0 0
      %1128 = vmatmul.mubr.bf16.gmra.mrb[0].mxu0 %v978
      %v1129 = vpop.f32.mrb[0].mxu0
      %v1130 = vadd.f32 %v1013, %v1129
      %v1131 = vpop.f32.mrb[0].mxu0
      %v1132 = vpop.f32.mrb[0].mxu0
      %v1133 = vadd.f32 %v1013, %v1132
      %v1134 = vpop.f32.mrb[0].mxu0
      %1135 = vmatprep.mubr.bf16.mxu0 0
      %1136 = vmatmul.mubr.bf16.gmra.mrb[0].mxu0 %v979
      %v1137 = vpop.f32.mrb[0].mxu0
      %v1138 = vadd.f32 %v1013, %v1137
      %v1139 = vpop.f32.mrb[0].mxu0
      %v1140 = vpop.f32.mrb[0].mxu0
      %v1141 = vadd.f32 %v1013, %v1140
      %v1142 = vpop.f32.mrb[0].mxu0
      %1143 = vmatprep.mubr.bf16.mxu0 0
      %1144 = vmatmul.mubr.bf16.gmra.mrb[0].mxu0 %v980
      %v1145 = vpop.f32.mrb[0].mxu0
      %v1146 = vadd.f32 %v1013, %v1145
      %v1147 = vpop.f32.mrb[0].mxu0
      %v1148 = vpop.f32.mrb[0].mxu0
      %v1149 = vadd.f32 %v1013, %v1148
      %v1150 = vpop.f32.mrb[0].mxu0
      %1151 = vmatprep.mubr.bf16.mxu0 0
      %1152 = vmatmul.mubr.bf16.gmra.mrb[0].mxu0 %v981
      %v1153 = vpop.f32.mrb[0].mxu0
      %v1154 = vadd.f32 %v1013, %v1153
      %v1155 = vpop.f32.mrb[0].mxu0
      %v1156 = vpop.f32.mrb[0].mxu0
      %v1157 = vadd.f32 %v1013, %v1156
      %v1158 = vpop.f32.mrb[0].mxu0
      %1159 = vmatprep.mubr.bf16.mxu0 0
      %1160 = vmatmul.mubr.bf16.gmra.mrb[0].mxu0 %v982
      %v1161 = vpop.f32.mrb[0].mxu0
      %v1162 = vadd.f32 %v1013, %v1161
      %v1163 = vpop.f32.mrb[0].mxu0
      %v1164 = vpop.f32.mrb[0].mxu0
      %v1165 = vadd.f32 %v1013, %v1164
      %v1166 = vpop.f32.mrb[0].mxu0
      %1167 = vmatprep.mubr.bf16.mxu0 0
      %1168 = vmatmul.mubr.bf16.gmra.mrb[0].mxu0 %v983
      %v1169 = vpop.f32.mrb[0].mxu0
      %v1170 = vadd.f32 %v1013, %v1169
      %v1171 = vpop.f32.mrb[0].mxu0
      %v1172 = vpop.f32.mrb[0].mxu0
      %v1173 = vadd.f32 %v1013, %v1172
      %v1174 = vpop.f32.mrb[0].mxu0
      %1175 = vmatprep.mubr.bf16.mxu0 0
      %1176 = vmatmul.mubr.bf16.gmra.mrb[0].mxu0 %v984
      %v1177 = vpop.f32.mrb[0].mxu0
      %v1178 = vadd.f32 %v1013, %v1177
      %v1179 = vpop.f32.mrb[0].mxu0
      %v1180 = vpop.f32.mrb[0].mxu0
      %v1181 = vadd.f32 %v1013, %v1180
      %v1182 = vpop.f32.mrb[0].mxu0
      %1183 = vmatprep.mubr.bf16.mxu0 0
      %1184 = vmatmul.mubr.bf16.gmra.mrb[0].mxu0 %v985
      %v1185 = vpop.f32.mrb[0].mxu0
      %v1186 = vadd.f32 %v1013, %v1185
      %v1187 = vpop.f32.mrb[0].mxu0
      %v1188 = vpop.f32.mrb[0].mxu0
      %v1189 = vadd.f32 %v1013, %v1188
      %v1190 = vpop.f32.mrb[0].mxu0
      %1191 = vmatprep.mubr.bf16.mxu0 0
      %1192 = vmatmul.mubr.bf16.gmra.mrb[0].mxu0 %v986
      %v1193 = vpop.f32.mrb[0].mxu0
      %v1194 = vadd.f32 %v1013, %v1193
      %v1195 = vpop.f32.mrb[0].mxu0
      %v1196 = vpop.f32.mrb[0].mxu0
      %v1197 = vadd.f32 %v1013, %v1196
      %v1198 = vpop.f32.mrb[0].mxu0
      %1199 = vmatprep.mubr.bf16.mxu0 0
      %1200 = vmatmul.mubr.bf16.gmra.mrb[0].mxu0 %v987
      %v1201 = vpop.f32.mrb[0].mxu0
      %v1202 = vadd.f32 %v1013, %v1201
      %v1203 = vpop.f32.mrb[0].mxu0
      %v1204 = vpop.f32.mrb[0].mxu0
      %v1205 = vadd.f32 %v1013, %v1204
      %v1206 = vpop.f32.mrb[0].mxu0
      %1207 = vmatprep.mubr.bf16.mxu0 0
      %1208 = vmatmul.mubr.bf16.gmra.mrb[0].mxu0 %v988
      %v1209 = vpop.f32.mrb[0].mxu0
      %v1210 = vadd.f32 %v1013, %v1209
      %v1211 = vpop.f32.mrb[0].mxu0
      %v1212 = vpop.f32.mrb[0].mxu0
      %v1213 = vadd.f32 %v1013, %v1212
      %v1214 = vpop.f32.mrb[0].mxu0
      %1215 = vmatprep.mubr.bf16.mxu0 0
      %1216 = vmatmul.mubr.bf16.gmra.mrb[0].mxu0 %v989
      %v1217 = vpop.f32.mrb[0].mxu0
      %v1218 = vadd.f32 %v1013, %v1217
      %v1219 = vpop.f32.mrb[0].mxu0
      %v1220 = vpop.f32.mrb[0].mxu0
      %v1221 = vadd.f32 %v1013, %v1220
      %v1222 = vpop.f32.mrb[0].mxu0
      %1223 = vmatprep.mubr.bf16.mxu0 0
      %1224 = vmatmul.mubr.bf16.gmra.mrb[0].mxu0 %v990
      %v1225 = vpop.f32.mrb[0].mxu0
      %v1226 = vadd.f32 %v1013, %v1225
      %v1227 = vpop.f32.mrb[0].mxu0
      %v1228 = vpop.f32.mrb[0].mxu0
      %v1229 = vadd.f32 %v1013, %v1228
      %v1230 = vpop.f32.mrb[0].mxu0
      %1231 = vmatprep.mubr.bf16.mxu0 0
      %1232 = vmatmul.mubr.bf16.gmra.mrb[0].mxu0 %v991
      %v1233 = vpop.f32.mrb[0].mxu0
      %v1234 = vadd.f32 %v1013, %v1233
      %v1235 = vpop.f32.mrb[0].mxu0
      %v1236 = vpop.f32.mrb[0].mxu0
      %v1237 = vadd.f32 %v1013, %v1236
      %v1238 = vpop.f32.mrb[0].mxu0
      %1239 = vdwg.mxu0
      %v1240 = vsub.f32 0.0, %v1098
      %v1241 = vsub.f32 0.0, %v1101
      %v1242 = vsub.f32 0.0, %v1106
      %v1243 = vsub.f32 0.0, %v1109
      %v1244 = vsub.f32 0.0, %v1114
      %v1245 = vsub.f32 0.0, %v1117
      %v1246 = vsub.f32 0.0, %v1122
      %v1247 = vsub.f32 0.0, %v1125
      %v1248 = vsub.f32 0.0, %v1130
      %v1249 = vsub.f32 0.0, %v1133
      %v1250 = vsub.f32 0.0, %v1138
      %v1251 = vsub.f32 0.0, %v1141
      %v1252 = vsub.f32 0.0, %v1146
      %v1253 = vsub.f32 0.0, %v1149
      %v1254 = vsub.f32 0.0, %v1154
      %v1255 = vsub.f32 0.0, %v1157
      %v1256 = vsub.f32 0.0, %v1162
      %v1257 = vsub.f32 0.0, %v1165
      %v1258 = vsub.f32 0.0, %v1170
      %v1259 = vsub.f32 0.0, %v1173
      %v1260 = vsub.f32 0.0, %v1178
      %v1261 = vsub.f32 0.0, %v1181
      %v1262 = vsub.f32 0.0, %v1186
      %v1263 = vsub.f32 0.0, %v1189
      %v1264 = vsub.f32 0.0, %v1194
      %v1265 = vsub.f32 0.0, %v1197
      %v1266 = vsub.f32 0.0, %v1202
      %v1267 = vsub.f32 0.0, %v1205
      %v1268 = vsub.f32 0.0, %v1210
      %v1269 = vsub.f32 0.0, %v1213
      %v1270 = vsub.f32 0.0, %v1218
      %v1271 = vsub.f32 0.0, %v1221
      %v1272 = vsub.f32 0.0, %v1226
      %v1273 = vsub.f32 0.0, %v1229
      %v1274 = vsub.f32 0.0, %v1234
      %v1275 = vsub.f32 0.0, %v1237
      %v1276 = vmul.f32 %v1240, 1.442695
      %v1277 = vpow.pop %v1276
      %v1278 = vmul.f32 %v1241, 1.442695
      %v1279 = vpow.pop %v1278
      %v1280 = vmul.f32 %v1242, 1.442695
      %v1281 = vpow.pop %v1280
      %v1282 = vmul.f32 %v1243, 1.442695
      %v1283 = vpow.pop %v1282
      %v1284 = vmul.f32 %v1244, 1.442695
      %v1285 = vpow.pop %v1284
      %v1286 = vmul.f32 %v1245, 1.442695
      %v1287 = vpow.pop %v1286
      %v1288 = vmul.f32 %v1246, 1.442695
      %v1289 = vpow.pop %v1288
      %v1290 = vmul.f32 %v1247, 1.442695
      %v1291 = vpow.pop %v1290
      %v1292 = vmul.f32 %v1248, 1.442695
      %v1293 = vpow.pop %v1292
      %v1294 = vmul.f32 %v1249, 1.442695
      %v1295 = vpow.pop %v1294
      %v1296 = vmul.f32 %v1250, 1.442695
      %v1297 = vpow.pop %v1296
      %v1298 = vmul.f32 %v1251, 1.442695
      %v1299 = vpow.pop %v1298
      %v1300 = vmul.f32 %v1252, 1.442695
      %v1301 = vpow.pop %v1300
      %v1302 = vmul.f32 %v1253, 1.442695
      %v1303 = vpow.pop %v1302
      %v1304 = vmul.f32 %v1254, 1.442695
      %v1305 = vpow.pop %v1304
      %v1306 = vmul.f32 %v1255, 1.442695
      %v1307 = vpow.pop %v1306
      %v1308 = vmul.f32 %v1256, 1.442695
      %v1309 = vpow.pop %v1308
      %v1310 = vmul.f32 %v1257, 1.442695
      %v1311 = vpow.pop %v1310
      %v1312 = vmul.f32 %v1258, 1.442695
      %v1313 = vpow.pop %v1312
      %v1314 = vmul.f32 %v1259, 1.442695
      %v1315 = vpow.pop %v1314
      %v1316 = vmul.f32 %v1260, 1.442695
      %v1317 = vpow.pop %v1316
      %v1318 = vmul.f32 %v1261, 1.442695
      %v1319 = vpow.pop %v1318
      %v1320 = vmul.f32 %v1262, 1.442695
      %v1321 = vpow.pop %v1320
      %v1322 = vmul.f32 %v1263, 1.442695
      %v1323 = vpow.pop %v1322
      %v1324 = vmul.f32 %v1264, 1.442695
      %v1325 = vpow.pop %v1324
      %v1326 = vmul.f32 %v1265, 1.442695
      %v1327 = vpow.pop %v1326
      %v1328 = vmul.f32 %v1266, 1.442695
      %v1329 = vpow.pop %v1328
      %v1330 = vmul.f32 %v1267, 1.442695
      %v1331 = vpow.pop %v1330
      %v1332 = vmul.f32 %v1268, 1.442695
      %v1333 = vpow.pop %v1332
      %v1334 = vmul.f32 %v1269, 1.442695
      %v1335 = vpow.pop %v1334
      %v1336 = vmul.f32 %v1270, 1.442695
      %v1337 = vpow.pop %v1336
      %v1338 = vmul.f32 %v1271, 1.442695
      %v1339 = vpow.pop %v1338
      %v1340 = vmul.f32 %v1272, 1.442695
      %v1341 = vpow.pop %v1340
      %v1342 = vmul.f32 %v1273, 1.442695
      %v1343 = vpow.pop %v1342
      %v1344 = vmul.f32 %v1274, 1.442695
      %v1345 = vpow.pop %v1344
      %v1346 = vmul.f32 %v1275, 1.442695
      %v1347 = vpow.pop %v1346
      %v1348 = vadd.f32 %v1277, 1.0
      %v1349 = vadd.f32 %v1279, 1.0
      %v1350 = vadd.f32 %v1281, 1.0
      %v1351 = vadd.f32 %v1283, 1.0
      %v1352 = vadd.f32 %v1285, 1.0
      %v1353 = vadd.f32 %v1287, 1.0
      %v1354 = vadd.f32 %v1289, 1.0
      %v1355 = vadd.f32 %v1291, 1.0
      %v1356 = vadd.f32 %v1293, 1.0
      %v1357 = vadd.f32 %v1295, 1.0
      %v1358 = vadd.f32 %v1297, 1.0
      %v1359 = vadd.f32 %v1299, 1.0
      %v1360 = vadd.f32 %v1301, 1.0
      %v1361 = vadd.f32 %v1303, 1.0
      %v1362 = vadd.f32 %v1305, 1.0
      %v1363 = vadd.f32 %v1307, 1.0
      %v1364 = vadd.f32 %v1309, 1.0
      %v1365 = vadd.f32 %v1311, 1.0
      %v1366 = vadd.f32 %v1313, 1.0
      %v1367 = vadd.f32 %v1315, 1.0
      %v1368 = vadd.f32 %v1317, 1.0
      %v1369 = vadd.f32 %v1319, 1.0
      %v1370 = vadd.f32 %v1321, 1.0
      %v1371 = vadd.f32 %v1323, 1.0
      %v1372 = vadd.f32 %v1325, 1.0
      %v1373 = vadd.f32 %v1327, 1.0
      %v1374 = vadd.f32 %v1329, 1.0
      %v1375 = vadd.f32 %v1331, 1.0
      %v1376 = vadd.f32 %v1333, 1.0
      %v1377 = vadd.f32 %v1335, 1.0
      %v1378 = vadd.f32 %v1337, 1.0
      %v1379 = vadd.f32 %v1339, 1.0
      %v1380 = vadd.f32 %v1341, 1.0
      %v1381 = vadd.f32 %v1343, 1.0
      %v1382 = vadd.f32 %v1345, 1.0
      %v1383 = vadd.f32 %v1347, 1.0
      %v1384 = vrcp.pop %v1348
      %v1385 = vrcp.pop %v1349
      %v1386 = vrcp.pop %v1350
      %v1387 = vrcp.pop %v1351
      %v1388 = vrcp.pop %v1352
      %v1389 = vrcp.pop %v1353
      %v1390 = vrcp.pop %v1354
      %v1391 = vrcp.pop %v1355
      %v1392 = vrcp.pop %v1356
      %v1393 = vrcp.pop %v1357
      %v1394 = vrcp.pop %v1358
      %v1395 = vrcp.pop %v1359
      %v1396 = vrcp.pop %v1360
      %v1397 = vrcp.pop %v1361
      %v1398 = vrcp.pop %v1362
      %v1399 = vrcp.pop %v1363
      %v1400 = vrcp.pop %v1364
      %v1401 = vrcp.pop %v1365
      %v1402 = vrcp.pop %v1366
      %v1403 = vrcp.pop %v1367
      %v1404 = vrcp.pop %v1368
      %v1405 = vrcp.pop %v1369
      %v1406 = vrcp.pop %v1370
      %v1407 = vrcp.pop %v1371
      %v1408 = vrcp.pop %v1372
      %v1409 = vrcp.pop %v1373
      %v1410 = vrcp.pop %v1374
      %v1411 = vrcp.pop %v1375
      %v1412 = vrcp.pop %v1376
      %v1413 = vrcp.pop %v1377
      %v1414 = vrcp.pop %v1378
      %v1415 = vrcp.pop %v1379
      %v1416 = vrcp.pop %v1380
      %v1417 = vrcp.pop %v1381
      %v1418 = vrcp.pop %v1382
      %v1419 = vrcp.pop %v1383
      %v1420 = vpack.c.bf16 %v1385, %v1384
      %v1421 = vpack.c.bf16 %v1387, %v1386
      %v1422 = vpack.c.bf16 %v1389, %v1388
      %v1423 = vpack.c.bf16 %v1391, %v1390
      %v1424 = vpack.c.bf16 %v1393, %v1392
      %v1425 = vpack.c.bf16 %v1395, %v1394
      %v1426 = vpack.c.bf16 %v1397, %v1396
      %v1427 = vpack.c.bf16 %v1399, %v1398
      %v1428 = vpack.c.bf16 %v1401, %v1400
      %v1429 = vpack.c.bf16 %v1403, %v1402
      %v1430 = vpack.c.bf16 %v1405, %v1404
      %v1431 = vpack.c.bf16 %v1407, %v1406
      %v1432 = vpack.c.bf16 %v1409, %v1408
      %v1433 = vpack.c.bf16 %v1411, %v1410
      %v1434 = vpack.c.bf16 %v1413, %v1412
      %v1435 = vpack.c.bf16 %v1415, %v1414
      %v1436 = vpack.c.bf16 %v1417, %v1416
      %v1437 = vpack.c.bf16 %v1419, %v1418
      %v1456 = vunpack.c.l.b16 %v1420
      %v1457 = vunpack.c.h.b16 %v1420
      %v1458 = vunpack.c.l.b16 %v1421
      %v1459 = vunpack.c.h.b16 %v1421
      %v1460 = vunpack.c.l.b16 %v1422
      %v1461 = vunpack.c.h.b16 %v1422
      %v1462 = vunpack.c.l.b16 %v1423
      %v1463 = vunpack.c.h.b16 %v1423
      %v1464 = vunpack.c.l.b16 %v1424
      %v1465 = vunpack.c.h.b16 %v1424
      %v1466 = vunpack.c.l.b16 %v1425
      %v1467 = vunpack.c.h.b16 %v1425
      %v1468 = vunpack.c.l.b16 %v1426
      %v1469 = vunpack.c.h.b16 %v1426
      %v1470 = vunpack.c.l.b16 %v1427
      %v1471 = vunpack.c.h.b16 %v1427
      %v1472 = vunpack.c.l.b16 %v1428
      %v1473 = vunpack.c.h.b16 %v1428
      %v1474 = vunpack.c.l.b16 %v1429
      %v1475 = vunpack.c.h.b16 %v1429
      %v1476 = vunpack.c.l.b16 %v1430
      %v1477 = vunpack.c.h.b16 %v1430
      %v1478 = vunpack.c.l.b16 %v1431
      %v1479 = vunpack.c.h.b16 %v1431
      %v1480 = vunpack.c.l.b16 %v1432
      %v1481 = vunpack.c.h.b16 %v1432
      %v1482 = vunpack.c.l.b16 %v1433
      %v1483 = vunpack.c.h.b16 %v1433
      %v1484 = vunpack.c.l.b16 %v1434
      %v1485 = vunpack.c.h.b16 %v1434
      %v1486 = vunpack.c.l.b16 %v1435
      %v1487 = vunpack.c.h.b16 %v1435
      %v1488 = vunpack.c.l.b16 %v1436
      %v1489 = vunpack.c.h.b16 %v1436
      %v1490 = vunpack.c.l.b16 %v1437
      %v1491 = vunpack.c.h.b16 %v1437
      %v1492 = vpack.c.b16 %v1456, %v1456
      %v1493 = vpack.c.b16 %v1457, %v1457
      %v1494 = vpack.c.b16 %v1458, %v1458
      %v1495 = vpack.c.b16 %v1459, %v1459
      %v1496 = vpack.c.b16 %v1460, %v1460
      %v1497 = vpack.c.b16 %v1461, %v1461
      %v1498 = vpack.c.b16 %v1462, %v1462
      %v1499 = vpack.c.b16 %v1463, %v1463
      %v1500 = vpack.c.b16 %v1464, %v1464
      %v1501 = vpack.c.b16 %v1465, %v1465
      %v1502 = vpack.c.b16 %v1466, %v1466
      %v1503 = vpack.c.b16 %v1467, %v1467
      %v1504 = vpack.c.b16 %v1468, %v1468
      %v1505 = vpack.c.b16 %v1469, %v1469
      %v1506 = vpack.c.b16 %v1470, %v1470
      %v1507 = vpack.c.b16 %v1471, %v1471
      %v1508 = vpack.c.b16 %v1472, %v1472
      %v1509 = vpack.c.b16 %v1473, %v1473
      %v1510 = vpack.c.b16 %v1474, %v1474
      %v1511 = vpack.c.b16 %v1475, %v1475
      %v1512 = vpack.c.b16 %v1476, %v1476
      %v1513 = vpack.c.b16 %v1477, %v1477
      %v1514 = vpack.c.b16 %v1478, %v1478
      %v1515 = vpack.c.b16 %v1479, %v1479
      %v1516 = vpack.c.b16 %v1480, %v1480
      %v1517 = vpack.c.b16 %v1481, %v1481
      %v1518 = vpack.c.b16 %v1482, %v1482
      %v1519 = vpack.c.b16 %v1483, %v1483
      %v1520 = vpack.c.b16 %v1484, %v1484
      %v1521 = vpack.c.b16 %v1485, %v1485
      %v1522 = vpack.c.b16 %v1486, %v1486
      %v1523 = vpack.c.b16 %v1487, %v1487
      %v1524 = vpack.c.b16 %v1488, %v1488
      %v1525 = vpack.c.b16 %v1489, %v1489
      %v1526 = vpack.c.b16 %v1490, %v1490
      %v1527 = vpack.c.b16 %v1491, %v1491
      %v1564 = vmul.bf16 %v627, %v1492
      %v1565 = vmul.bf16 %v628, %v1493
      %v1566 = vmul.bf16 %v650, %v1494
      %v1567 = vmul.bf16 %v651, %v1495
      %v1568 = vmul.bf16 %v652, %v1496
      %v1569 = vmul.bf16 %v653, %v1497
      %v1570 = vmul.bf16 %v654, %v1498
      %v1571 = vmul.bf16 %v655, %v1499
      %v1572 = vmul.bf16 %v656, %v1500
      %v1573 = vmul.bf16 %v657, %v1501
      %v1574 = vmul.bf16 %v658, %v1502
      %v1575 = vmul.bf16 %v659, %v1503
      %v1576 = vmul.bf16 %v660, %v1504
      %v1577 = vmul.bf16 %v661, %v1505
      %v1578 = vmul.bf16 %v662, %v1506
      %v1579 = vmul.bf16 %v663, %v1507
      %v1580 = vmul.bf16 %v664, %v1508
      %v1581 = vmul.bf16 %v665, %v1509
      %v1582 = vmul.bf16 %v666, %v1510
      %v1583 = vmul.bf16 %v667, %v1511
      %v1584 = vmul.bf16 %v668, %v1512
      %v1585 = vmul.bf16 %v669, %v1513
      %v1586 = vmul.bf16 %v670, %v1514
      %v1587 = vmul.bf16 %v671, %v1515
      %v1588 = vmul.bf16 %v672, %v1516
      %v1589 = vmul.bf16 %v673, %v1517
      %v1590 = vmul.bf16 %v674, %v1518
      %v1591 = vmul.bf16 %v675, %v1519
      %v1592 = vmul.bf16 %v676, %v1520
      %v1593 = vmul.bf16 %v677, %v1521
      %v1594 = vmul.bf16 %v678, %v1522
      %v1595 = vmul.bf16 %v679, %v1523
      %v1596 = vmul.bf16 %v680, %v1524
      %v1597 = vmul.bf16 %v681, %v1525
      %v1598 = vmul.bf16 %v648, %v1526
      %v1599 = vmul.bf16 %v649, %v1527
      %v1636 = vunpack.c.l.b16 %v1564
      %v1637 = vunpack.c.l.b16 %v1565
      %v1638 = vunpack.c.l.b16 %v1566
      %v1639 = vunpack.c.l.b16 %v1567
      %v1640 = vunpack.c.l.b16 %v1568
      %v1641 = vunpack.c.l.b16 %v1569
      %v1642 = vunpack.c.l.b16 %v1570
      %v1643 = vunpack.c.l.b16 %v1571
      %v1644 = vunpack.c.l.b16 %v1572
      %v1645 = vunpack.c.l.b16 %v1573
      %v1646 = vunpack.c.l.b16 %v1574
      %v1647 = vunpack.c.l.b16 %v1575
      %v1648 = vunpack.c.l.b16 %v1576
      %v1649 = vunpack.c.l.b16 %v1577
      %v1650 = vunpack.c.l.b16 %v1578
      %v1651 = vunpack.c.l.b16 %v1579
      %v1652 = vunpack.c.l.b16 %v1580
      %v1653 = vunpack.c.l.b16 %v1581
      %v1654 = vunpack.c.l.b16 %v1582
      %v1655 = vunpack.c.l.b16 %v1583
      %v1656 = vunpack.c.l.b16 %v1584
      %v1657 = vunpack.c.l.b16 %v1585
      %v1658 = vunpack.c.l.b16 %v1586
      %v1659 = vunpack.c.l.b16 %v1587
      %v1660 = vunpack.c.l.b16 %v1588
      %v1661 = vunpack.c.l.b16 %v1589
      %v1662 = vunpack.c.l.b16 %v1590
      %v1663 = vunpack.c.l.b16 %v1591
      %v1664 = vunpack.c.l.b16 %v1592
      %v1665 = vunpack.c.l.b16 %v1593
      %v1666 = vunpack.c.l.b16 %v1594
      %v1667 = vunpack.c.l.b16 %v1595
      %v1668 = vunpack.c.l.b16 %v1596
      %v1669 = vunpack.c.l.b16 %v1597
      %v1670 = vunpack.c.l.b16 %v1598
      %v1671 = vunpack.c.l.b16 %v1599
      %v1672 = vpack.c.b16 %v1637, %v1636
      %v1673 = vpack.c.b16 %v1639, %v1638
      %v1674 = vpack.c.b16 %v1641, %v1640
      %v1675 = vpack.c.b16 %v1643, %v1642
      %v1676 = vpack.c.b16 %v1645, %v1644
      %v1677 = vpack.c.b16 %v1647, %v1646
      %v1678 = vpack.c.b16 %v1649, %v1648
      %v1679 = vpack.c.b16 %v1651, %v1650
      %v1680 = vpack.c.b16 %v1653, %v1652
      %v1681 = vpack.c.b16 %v1655, %v1654
      %v1682 = vpack.c.b16 %v1657, %v1656
      %v1683 = vpack.c.b16 %v1659, %v1658
      %v1684 = vpack.c.b16 %v1661, %v1660
      %v1685 = vpack.c.b16 %v1663, %v1662
      %v1686 = vpack.c.b16 %v1665, %v1664
      %v1687 = vpack.c.b16 %v1667, %v1666
      %v1688 = vpack.c.b16 %v1669, %v1668
      %v1689 = vpack.c.b16 %v1671, %v1670
      %v1691 = vshrl.u32 %v1672, 16
      %v1693 = vrot.slane %v1691, 7
      %v1694 = vshll.u32 %v1672, 16
      %v1696 = vor.u32 %v1693, %v1694
      %v1698 = vshrl.u32 %v1673, 16
      %v1700 = vrot.slane %v1698, 7
      %v1701 = vshll.u32 %v1673, 16
      %v1703 = vor.u32 %v1700, %v1701
      %v1705 = vshrl.u32 %v1674, 16
      %v1707 = vrot.slane %v1705, 7
      %v1708 = vshll.u32 %v1674, 16
      %v1710 = vor.u32 %v1707, %v1708
      %v1712 = vshrl.u32 %v1675, 16
      %v1714 = vrot.slane %v1712, 7
      %v1715 = vshll.u32 %v1675, 16
      %v1717 = vor.u32 %v1714, %v1715
      %v1719 = vshrl.u32 %v1676, 16
      %v1721 = vrot.slane %v1719, 7
      %v1722 = vshll.u32 %v1676, 16
      %v1724 = vor.u32 %v1721, %v1722
      %v1726 = vshrl.u32 %v1677, 16
      %v1728 = vrot.slane %v1726, 7
      %v1729 = vshll.u32 %v1677, 16
      %v1731 = vor.u32 %v1728, %v1729
      %v1733 = vshrl.u32 %v1678, 16
      %v1735 = vrot.slane %v1733, 7
      %v1736 = vshll.u32 %v1678, 16
      %v1738 = vor.u32 %v1735, %v1736
      %v1740 = vshrl.u32 %v1679, 16
      %v1742 = vrot.slane %v1740, 7
      %v1743 = vshll.u32 %v1679, 16
      %v1745 = vor.u32 %v1742, %v1743
      %v1747 = vshrl.u32 %v1680, 16
      %v1749 = vrot.slane %v1747, 7
      %v1750 = vshll.u32 %v1680, 16
      %v1752 = vor.u32 %v1749, %v1750
      %v1754 = vshrl.u32 %v1681, 16
      %v1756 = vrot.slane %v1754, 7
      %v1757 = vshll.u32 %v1681, 16
      %v1759 = vor.u32 %v1756, %v1757
      %v1761 = vshrl.u32 %v1682, 16
      %v1763 = vrot.slane %v1761, 7
      %v1764 = vshll.u32 %v1682, 16
      %v1766 = vor.u32 %v1763, %v1764
      %v1768 = vshrl.u32 %v1683, 16
      %v1770 = vrot.slane %v1768, 7
      %v1771 = vshll.u32 %v1683, 16
      %v1773 = vor.u32 %v1770, %v1771
      %v1775 = vshrl.u32 %v1684, 16
      %v1777 = vrot.slane %v1775, 7
      %v1778 = vshll.u32 %v1684, 16
      %v1780 = vor.u32 %v1777, %v1778
      %v1782 = vshrl.u32 %v1685, 16
      %v1784 = vrot.slane %v1782, 7
      %v1785 = vshll.u32 %v1685, 16
      %v1787 = vor.u32 %v1784, %v1785
      %v1789 = vshrl.u32 %v1686, 16
      %v1791 = vrot.slane %v1789, 7
      %v1792 = vshll.u32 %v1686, 16
      %v1794 = vor.u32 %v1791, %v1792
      %v1796 = vshrl.u32 %v1687, 16
      %v1798 = vrot.slane %v1796, 7
      %v1799 = vshll.u32 %v1687, 16
      %v1801 = vor.u32 %v1798, %v1799
      %v1803 = vshrl.u32 %v1688, 16
      %v1805 = vrot.slane %v1803, 7
      %v1806 = vshll.u32 %v1688, 16
      %v1808 = vor.u32 %v1805, %v1806
      %v1810 = vshrl.u32 %v1689, 16
      %v1812 = vrot.slane %v1810, 7
      %v1813 = vshll.u32 %v1689, 16
      %v1815 = vor.u32 %v1812, %v1813
      %vm1834 = vcmask 1040384
      %vm1835 = vsmask.f32 256
      %vm1836 = vmand %vm1834, %vm1835
      %v1837 = vsel %vm1836, 0, %v1696
      %v1838 = vsel %vm1836, 0, %v1703
      %v1839 = vsel %vm1836, 0, %v1710
      %v1840 = vsel %vm1836, 0, %v1717
      %v1841 = vsel %vm1836, 0, %v1724
      %v1842 = vsel %vm1836, 0, %v1731
      %v1843 = vsel %vm1836, 0, %v1738
      %v1844 = vsel %vm1836, 0, %v1745
      %v1845 = vsel %vm1836, 0, %v1752
      %v1846 = vsel %vm1836, 0, %v1759
      %v1847 = vsel %vm1836, 0, %v1766
      %v1848 = vsel %vm1836, 0, %v1773
      %v1849 = vsel %vm1836, 0, %v1780
      %v1850 = vsel %vm1836, 0, %v1787
      %v1851 = vsel %vm1836, 0, %v1794
      %v1852 = vsel %vm1836, 0, %v1801
      %v1853 = vsel %vm1836, 0, %v1808
      %v1854 = vsel %vm1836, 0, %v1815
      %v1855 = vrot.slane %v1694, 1
      %v1856 = vor.u32 %v1691, %v1855
      %v1857 = vrot.slane %v1701, 1
      %v1858 = vor.u32 %v1698, %v1857
      %v1859 = vrot.slane %v1708, 1
      %v1860 = vor.u32 %v1705, %v1859
      %v1861 = vrot.slane %v1715, 1
      %v1862 = vor.u32 %v1712, %v1861
      %v1863 = vrot.slane %v1722, 1
      %v1864 = vor.u32 %v1719, %v1863
      %v1865 = vrot.slane %v1729, 1
      %v1866 = vor.u32 %v1726, %v1865
      %v1867 = vrot.slane %v1736, 1
      %v1868 = vor.u32 %v1733, %v1867
      %v1869 = vrot.slane %v1743, 1
      %v1870 = vor.u32 %v1740, %v1869
      %v1871 = vrot.slane %v1750, 1
      %v1872 = vor.u32 %v1747, %v1871
      %v1873 = vrot.slane %v1757, 1
      %v1874 = vor.u32 %v1754, %v1873
      %v1875 = vrot.slane %v1764, 1
      %v1876 = vor.u32 %v1761, %v1875
      %v1877 = vrot.slane %v1771, 1
      %v1878 = vor.u32 %v1768, %v1877
      %v1879 = vrot.slane %v1778, 1
      %v1880 = vor.u32 %v1775, %v1879
      %v1881 = vrot.slane %v1785, 1
      %v1882 = vor.u32 %v1782, %v1881
      %v1883 = vrot.slane %v1792, 1
      %v1884 = vor.u32 %v1789, %v1883
      %v1885 = vrot.slane %v1799, 1
      %v1886 = vor.u32 %v1796, %v1885
      %v1887 = vrot.slane %v1806, 1
      %v1888 = vor.u32 %v1803, %v1887
      %v1889 = vrot.slane %v1813, 1
      %v1890 = vor.u32 %v1810, %v1889
      %vm1909 = vcmask 1047552
      %vm1910 = vsmask.f32 7424
      %vm1911 = vmand %vm1909, %vm1910
      %v1912 = vsel %vm1911, %v1856, 0
      %v1913 = vsel %vm1911, %v1858, 0
      %v1914 = vsel %vm1911, %v1860, 0
      %v1915 = vsel %vm1911, %v1862, 0
      %v1916 = vsel %vm1911, %v1864, 0
      %v1917 = vsel %vm1911, %v1866, 0
      %v1918 = vsel %vm1911, %v1868, 0
      %v1919 = vsel %vm1911, %v1870, 0
      %v1920 = vsel %vm1911, %v1872, 0
      %v1921 = vsel %vm1911, %v1874, 0
      %v1922 = vsel %vm1911, %v1876, 0
      %v1923 = vsel %vm1911, %v1878, 0
      %v1924 = vsel %vm1911, %v1880, 0
      %v1925 = vsel %vm1911, %v1882, 0
      %v1926 = vsel %vm1911, %v1884, 0
      %v1927 = vsel %vm1911, %v1886, 0
      %v1928 = vsel %vm1911, %v1888, 0
      %v1929 = vsel %vm1911, %v1890, 0
      %v1948 = vld [vmem:[%s7] sm:$0xf]
      %v1949 = vld [vmem:[%s7 + $0x4] sm:$0xf]
      %v1950 = vld [vmem:[%s7 + $0x8] sm:$0xf]
      %v1951 = vld [vmem:[%s7 + $0xc] sm:$0xf]
      %v1952 = vld [vmem:[%s7 + $0x10] sm:$0xf]
      %v1953 = vld [vmem:[%s7 + $0x14] sm:$0xf]
      %v1954 = vld [vmem:[%s7 + $0x18] sm:$0xf]
      %v1955 = vld [vmem:[%s7 + $0x1c] sm:$0xf]
      %v1956 = vld [vmem:[%s7 + $0x20] sm:$0xf]
      %v1957 = vld [vmem:[%s7 + $0x24] sm:$0xf]
      %v1958 = vld [vmem:[%s7 + $0x28] sm:$0xf]
      %v1959 = vld [vmem:[%s7 + $0x2c] sm:$0xf]
      %v1960 = vld [vmem:[%s7 + $0x30] sm:$0xf]
      %v1961 = vld [vmem:[%s7 + $0x34] sm:$0xf]
      %v1962 = vld [vmem:[%s7 + $0x38] sm:$0xf]
      %v1963 = vld [vmem:[%s7 + $0x3c] sm:$0xf]
      %v1964 = vld [vmem:[%s7 + $0x40] sm:$0xf]
      %v1965 = vld [vmem:[%s7 + $0x44] sm:$0xf]
      %v1966 = vld [vmem:[%s7 + $0x48] sm:$0xf]
      %v1967 = vld [vmem:[%s7 + $0x4c] sm:$0xf]
      %v1968 = vld [vmem:[%s7 + $0x50] sm:$0xf]
      %v1969 = vld [vmem:[%s7 + $0x54] sm:$0xf]
      %v1970 = vld [vmem:[%s7 + $0x58] sm:$0xf]
      %v1971 = vld [vmem:[%s7 + $0x5c] sm:$0xf]
      %v1972 = vld [vmem:[%s7 + $0x60] sm:$0xf]
      %v1973 = vld [vmem:[%s7 + $0x64] sm:$0xf]
      %v1974 = vld [vmem:[%s7 + $0x68] sm:$0xf]
      %v1975 = vld [vmem:[%s7 + $0x6c] sm:$0xf]
      %v1976 = vld [vmem:[%s7 + $0x70] sm:$0xf]
      %v1977 = vld [vmem:[%s7 + $0x74] sm:$0xf]
      %v1978 = vld [vmem:[%s7 + $0x78] sm:$0xf]
      %v1979 = vld [vmem:[%s7 + $0x7c] sm:$0xf]
      %v1980 = vld [vmem:[%s7 + $0x80] sm:$0xf]
      %v1981 = vld [vmem:[%s7 + $0x84] sm:$0xf]
      %v1982 = vld [vmem:[%s7 + $0x88] sm:$0xf]
      %v1983 = vld [vmem:[%s7 + $0x8c] sm:$0xf]
      %v1984 = vld [vmem:[%s7 + $0x90] sm:$0xf]
      %v1985 = vld [vmem:[%s7 + $0x94] sm:$0xf]
      %v1986 = vld [vmem:[%s7 + $0x98] sm:$0xf]
      %v1987 = vld [vmem:[%s7 + $0x9c] sm:$0xf]
      %v1988 = vld [vmem:[%s7 + $0xa0] sm:$0xf]
      %v1989 = vld [vmem:[%s7 + $0xa4] sm:$0xf]
      %v1990 = vld [vmem:[%s7 + $0xa8] sm:$0xf]
      %v1991 = vld [vmem:[%s7 + $0xac] sm:$0xf]
      %v1992 = vld [vmem:[%s7 + $0xb0] sm:$0xf]
      %v1993 = vld [vmem:[%s7 + $0xb4] sm:$0xf]
      %v1994 = vld [vmem:[%s7 + $0xb8] sm:$0xf]
      %v1995 = vld [vmem:[%s7 + $0xbc] sm:$0xf]
      %s1996 = scalar_lea.vmem %s7, 192
      %v1997 = vld [vmem:[%s1996] sm:$0xf]
      %v1998 = vld [vmem:[%s1996 + $0x4] sm:$0xf]
      %v1999 = vld [vmem:[%s1996 + $0x8] sm:$0xf]
      %v2000 = vld [vmem:[%s1996 + $0xc] sm:$0xf]
      %v2001 = vld [vmem:[%s1996 + $0x10] sm:$0xf]
      %v2002 = vld [vmem:[%s1996 + $0x14] sm:$0xf]
      %v2003 = vld [vmem:[%s1996 + $0x18] sm:$0xf]
      %v2004 = vld [vmem:[%s1996 + $0x1c] sm:$0xf]
      %v2005 = vld [vmem:[%s1996 + $0x20] sm:$0xf]
      %v2006 = vld [vmem:[%s1996 + $0x24] sm:$0xf]
      %v2007 = vld [vmem:[%s1996 + $0x28] sm:$0xf]
      %v2008 = vld [vmem:[%s1996 + $0x2c] sm:$0xf]
      %v2009 = vld [vmem:[%s1996 + $0x30] sm:$0xf]
      %v2010 = vld [vmem:[%s1996 + $0x34] sm:$0xf]
      %v2011 = vld [vmem:[%s1996 + $0x38] sm:$0xf]
      %v2012 = vld [vmem:[%s1996 + $0x3c] sm:$0xf]
      %v2013 = vld [vmem:[%s1996 + $0x40] sm:$0xf]
      %v2014 = vld [vmem:[%s1996 + $0x44] sm:$0xf]
      %v2015 = vld [vmem:[%s1996 + $0x48] sm:$0xf]
      %v2016 = vld [vmem:[%s1996 + $0x4c] sm:$0xf]
      %v2017 = vld [vmem:[%s1996 + $0x50] sm:$0xf]
      %v2018 = vld [vmem:[%s1996 + $0x54] sm:$0xf]
      %v2019 = vld [vmem:[%s1996 + $0x58] sm:$0xf]
      %v2020 = vld [vmem:[%s1996 + $0x5c] sm:$0xf]
      %v2021 = vld [vmem:[%s1996 + $0x60] sm:$0xf]
      %v2022 = vld [vmem:[%s1996 + $0x64] sm:$0xf]
      %v2023 = vld [vmem:[%s1996 + $0x68] sm:$0xf]
      %v2024 = vld [vmem:[%s1996 + $0x6c] sm:$0xf]
      %v2025 = vld [vmem:[%s1996 + $0x70] sm:$0xf]
      %v2026 = vld [vmem:[%s1996 + $0x74] sm:$0xf]
      %v2027 = vld [vmem:[%s1996 + $0x78] sm:$0xf]
      %v2028 = vld [vmem:[%s1996 + $0x7c] sm:$0xf]
      %v2029 = vld [vmem:[%s1996 + $0x80] sm:$0xf]
      %v2030 = vld [vmem:[%s1996 + $0x84] sm:$0xf]
      %v2031 = vld [vmem:[%s1996 + $0x88] sm:$0xf]
      %v2032 = vld [vmem:[%s1996 + $0x8c] sm:$0xf]
      %v2033 = vld [vmem:[%s1996 + $0x90] sm:$0xf]
      %v2034 = vld [vmem:[%s1996 + $0x94] sm:$0xf]
      %v2035 = vld [vmem:[%s1996 + $0x98] sm:$0xf]
      %v2036 = vld [vmem:[%s1996 + $0x9c] sm:$0xf]
      %v2037 = vld [vmem:[%s1996 + $0xa0] sm:$0xf]
      %v2038 = vld [vmem:[%s1996 + $0xa4] sm:$0xf]
      %v2039 = vld [vmem:[%s1996 + $0xa8] sm:$0xf]
      %v2040 = vld [vmem:[%s1996 + $0xac] sm:$0xf]
      %v2041 = vld [vmem:[%s1996 + $0xb0] sm:$0xf]
      %v2042 = vld [vmem:[%s1996 + $0xb4] sm:$0xf]
      %v2043 = vld [vmem:[%s1996 + $0xb8] sm:$0xf]
      %v2044 = vld [vmem:[%s1996 + $0xbc] sm:$0xf]
      %v2093 = vunpack.c.l.b16 %v1997
      %v2094 = vunpack.c.l.b16 %v1998
      %v2095 = vunpack.c.l.b16 %v1999
      %v2096 = vunpack.c.l.b16 %v2000
      %v2097 = vunpack.c.l.b16 %v2001
      %v2098 = vunpack.c.l.b16 %v2002
      %v2099 = vunpack.c.l.b16 %v2003
      %v2100 = vunpack.c.l.b16 %v2004
      %v2101 = vunpack.c.l.b16 %v2005
      %v2102 = vunpack.c.l.b16 %v2006
      %v2103 = vunpack.c.l.b16 %v2007
      %v2104 = vunpack.c.l.b16 %v2008
      %v2105 = vunpack.c.l.b16 %v2009
      %v2106 = vunpack.c.l.b16 %v2010
      %v2107 = vunpack.c.l.b16 %v2011
      %v2108 = vunpack.c.l.b16 %v2012
      %v2109 = vunpack.c.l.b16 %v2013
      %v2110 = vunpack.c.l.b16 %v2014
      %v2111 = vunpack.c.l.b16 %v2015
      %v2112 = vunpack.c.l.b16 %v2016
      %v2113 = vunpack.c.l.b16 %v2017
      %v2114 = vunpack.c.l.b16 %v2018
      %v2115 = vunpack.c.l.b16 %v2019
      %v2116 = vunpack.c.l.b16 %v2020
      %v2117 = vunpack.c.l.b16 %v2021
      %v2118 = vunpack.c.l.b16 %v2022
      %v2119 = vunpack.c.l.b16 %v2023
      %v2120 = vunpack.c.l.b16 %v2024
      %v2121 = vunpack.c.l.b16 %v2025
      %v2122 = vunpack.c.l.b16 %v2026
      %v2123 = vunpack.c.l.b16 %v2027
      %v2124 = vunpack.c.l.b16 %v2028
      %v2125 = vunpack.c.l.b16 %v2029
      %v2126 = vunpack.c.l.b16 %v2030
      %v2127 = vunpack.c.l.b16 %v2031
      %v2128 = vunpack.c.l.b16 %v2032
      %v2129 = vunpack.c.l.b16 %v2033
      %v2130 = vunpack.c.l.b16 %v2034
      %v2131 = vunpack.c.l.b16 %v2035
      %v2132 = vunpack.c.l.b16 %v2036
      %v2133 = vunpack.c.l.b16 %v2037
      %v2134 = vunpack.c.l.b16 %v2038
      %v2135 = vunpack.c.l.b16 %v2039
      %v2136 = vunpack.c.l.b16 %v2040
      %v2137 = vunpack.c.l.b16 %v2041
      %v2138 = vunpack.c.l.b16 %v2042
      %v2139 = vunpack.c.l.b16 %v2043
      %v2140 = vunpack.c.l.b16 %v2044
      %v2141 = vpack.c.b16 %v2094, %v2093
      %v2142 = vpack.c.b16 %v2096, %v2095
      %v2143 = vpack.c.b16 %v2098, %v2097
      %v2144 = vpack.c.b16 %v2100, %v2099
      %v2145 = vpack.c.b16 %v2102, %v2101
      %v2146 = vpack.c.b16 %v2104, %v2103
      %v2147 = vpack.c.b16 %v2106, %v2105
      %v2148 = vpack.c.b16 %v2108, %v2107
      %v2149 = vpack.c.b16 %v2110, %v2109
      %v2150 = vpack.c.b16 %v2112, %v2111
      %v2151 = vpack.c.b16 %v2114, %v2113
      %v2152 = vpack.c.b16 %v2116, %v2115
      %v2153 = vpack.c.b16 %v2118, %v2117
      %v2154 = vpack.c.b16 %v2120, %v2119
      %v2155 = vpack.c.b16 %v2122, %v2121
      %v2156 = vpack.c.b16 %v2124, %v2123
      %v2157 = vpack.c.b16 %v2126, %v2125
      %v2158 = vpack.c.b16 %v2128, %v2127
      %v2159 = vpack.c.b16 %v2130, %v2129
      %v2160 = vpack.c.b16 %v2132, %v2131
      %v2161 = vpack.c.b16 %v2134, %v2133
      %v2162 = vpack.c.b16 %v2136, %v2135
      %v2163 = vpack.c.b16 %v2138, %v2137
      %v2164 = vpack.c.b16 %v2140, %v2139
      %2189 = vmatprep.subr.bf16.mxu0 0
      %2190 = vmatpush1.bf16.msra.mxu0 %v2141
      %2191 = vmatprep.subr.bf16.mxu0 0
      %2192 = vmatpush1.bf16.msra.mxu0 %v2142
      %2193 = vmatprep.subr.bf16.mxu0 0
      %2194 = vmatpush1.bf16.msra.mxu0 %v2143
      %2195 = vmatprep.subr.bf16.mxu0 0
      %2196 = vmatpush1.bf16.msra.mxu0 %v2144
      %2197 = vmatprep.subr.bf16.mxu0 0
      %2198 = vmatpush1.bf16.msra.mxu0 %v2145
      %2199 = vmatprep.subr.bf16.mxu0 0
      %2200 = vmatpush1.bf16.msra.mxu0 %v2146
      %2201 = vmatprep.subr.bf16.mxu0 0
      %2202 = vmatpush1.bf16.msra.mxu0 %v2147
      %2203 = vmatprep.subr.bf16.mxu0 0
      %2204 = vmatpush1.bf16.msra.mxu0 %v2148
      %2205 = vmatprep.subr.bf16.mxu0 0
      %2206 = vmatpush1.bf16.msra.mxu0 %v2149
      %2207 = vmatprep.subr.bf16.mxu0 0
      %2208 = vmatpush1.bf16.msra.mxu0 %v2150
      %2209 = vmatprep.subr.bf16.mxu0 0
      %2210 = vmatpush1.bf16.msra.mxu0 %v2151
      %2211 = vmatprep.subr.bf16.mxu0 0
      %2212 = vmatpush1.bf16.msra.mxu0 %v2152
      %2213 = vmatprep.subr.bf16.mxu0 0
      %2214 = vmatpush1.bf16.msra.mxu0 %v2153
      %2215 = vmatprep.subr.bf16.mxu0 0
      %2216 = vmatpush1.bf16.msra.mxu0 %v2154
      %2217 = vmatprep.subr.bf16.mxu0 0
      %2218 = vmatpush1.bf16.msra.mxu0 %v2155
      %2219 = vmatprep.subr.bf16.mxu0 0
      %2220 = vmatpush1.bf16.msra.mxu0 %v2156
      %2221 = vmatprep.mubr.bf16.mxu0 %v1673
      %2222 = vmatmul.mubr.bf16.gmra.mrb[0].mxu0 %v1838
      %v2223 = vpop.f32.mrb[0].mxu0
      %v2224 = vadd.f32 0.0, %v2223
      %v2225 = vpop.f32.mrb[0].mxu0
      %v2226 = vpop.f32.mrb[0].mxu0
      %v2227 = vadd.f32 0.0, %v2226
      %v2228 = vpop.f32.mrb[0].mxu0
      %2229 = vmatprep.mubr.bf16.mxu0 %v1674
      %2230 = vmatmul.mubr.bf16.gmra.mrb[0].mxu0 %v1839
      %v2231 = vpop.f32.mrb[0].mxu0
      %v2232 = vadd.f32 0.0, %v2231
      %v2233 = vpop.f32.mrb[0].mxu0
      %v2234 = vpop.f32.mrb[0].mxu0
      %v2235 = vadd.f32 0.0, %v2234
      %v2236 = vpop.f32.mrb[0].mxu0
      %2237 = vmatprep.mubr.bf16.mxu0 %v1675
      %2238 = vmatmul.mubr.bf16.gmra.mrb[0].mxu0 %v1840
      %v2239 = vpop.f32.mrb[0].mxu0
      %v2240 = vadd.f32 0.0, %v2239
      %v2241 = vpop.f32.mrb[0].mxu0
      %v2242 = vpop.f32.mrb[0].mxu0
      %v2243 = vadd.f32 0.0, %v2242
      %v2244 = vpop.f32.mrb[0].mxu0
      %2245 = vmatprep.mubr.bf16.mxu0 %v1676
      %2246 = vmatmul.mubr.bf16.gmra.mrb[0].mxu0 %v1841
      %v2247 = vpop.f32.mrb[0].mxu0
      %v2248 = vadd.f32 0.0, %v2247
      %v2249 = vpop.f32.mrb[0].mxu0
      %v2250 = vpop.f32.mrb[0].mxu0
      %v2251 = vadd.f32 0.0, %v2250
      %v2252 = vpop.f32.mrb[0].mxu0
      %2253 = vmatprep.mubr.bf16.mxu0 %v1677
      %2254 = vmatmul.mubr.bf16.gmra.mrb[0].mxu0 %v1842
      %v2255 = vpop.f32.mrb[0].mxu0
      %v2256 = vadd.f32 0.0, %v2255
      %v2257 = vpop.f32.mrb[0].mxu0
      %v2258 = vpop.f32.mrb[0].mxu0
      %v2259 = vadd.f32 0.0, %v2258
      %v2260 = vpop.f32.mrb[0].mxu0
      %2261 = vmatprep.mubr.bf16.mxu0 %v1678
      %2262 = vmatmul.mubr.bf16.gmra.mrb[0].mxu0 %v1843
      %v2263 = vpop.f32.mrb[0].mxu0
      %v2264 = vadd.f32 0.0, %v2263
      %v2265 = vpop.f32.mrb[0].mxu0
      %v2266 = vpop.f32.mrb[0].mxu0
      %v2267 = vadd.f32 0.0, %v2266
      %v2268 = vpop.f32.mrb[0].mxu0
      %2269 = vmatprep.mubr.bf16.mxu0 %v1679
      %2270 = vmatmul.mubr.bf16.gmra.mrb[0].mxu0 %v1844
      %v2271 = vpop.f32.mrb[0].mxu0
      %v2272 = vadd.f32 0.0, %v2271
      %v2273 = vpop.f32.mrb[0].mxu0
      %v2274 = vpop.f32.mrb[0].mxu0
      %v2275 = vadd.f32 0.0, %v2274
      %v2276 = vpop.f32.mrb[0].mxu0
      %2277 = vmatprep.mubr.bf16.mxu0 %v1680
      %2278 = vmatmul.mubr.bf16.gmra.mrb[0].mxu0 %v1845
      %v2279 = vpop.f32.mrb[0].mxu0
      %v2280 = vadd.f32 0.0, %v2279
      %v2281 = vpop.f32.mrb[0].mxu0
      %v2282 = vpop.f32.mrb[0].mxu0
      %v2283 = vadd.f32 0.0, %v2282
      %v2284 = vpop.f32.mrb[0].mxu0
      %2285 = vmatprep.mubr.bf16.mxu0 %v1681
      %2286 = vmatmul.mubr.bf16.gmra.mrb[0].mxu0 %v1846
      %v2287 = vpop.f32.mrb[0].mxu0
      %v2288 = vadd.f32 0.0, %v2287
      %v2289 = vpop.f32.mrb[0].mxu0
      %v2290 = vpop.f32.mrb[0].mxu0
      %v2291 = vadd.f32 0.0, %v2290
      %v2292 = vpop.f32.mrb[0].mxu0
      %2293 = vmatprep.mubr.bf16.mxu0 %v1682
      %2294 = vmatmul.mubr.bf16.gmra.mrb[0].mxu0 %v1847
      %v2295 = vpop.f32.mrb[0].mxu0
      %v2296 = vadd.f32 0.0, %v2295
      %v2297 = vpop.f32.mrb[0].mxu0
      %v2298 = vpop.f32.mrb[0].mxu0
      %v2299 = vadd.f32 0.0, %v2298
      %v2300 = vpop.f32.mrb[0].mxu0
      %2301 = vmatprep.mubr.bf16.mxu0 %v1683
      %2302 = vmatmul.mubr.bf16.gmra.mrb[0].mxu0 %v1848
      %v2303 = vpop.f32.mrb[0].mxu0
      %v2304 = vadd.f32 0.0, %v2303
      %v2305 = vpop.f32.mrb[0].mxu0
      %v2306 = vpop.f32.mrb[0].mxu0
      %v2307 = vadd.f32 0.0, %v2306
      %v2308 = vpop.f32.mrb[0].mxu0
      %2309 = vmatprep.mubr.bf16.mxu0 %v1684
      %2310 = vmatmul.mubr.bf16.gmra.mrb[0].mxu0 %v1849
      %v2311 = vpop.f32.mrb[0].mxu0
      %v2312 = vadd.f32 0.0, %v2311
      %v2313 = vpop.f32.mrb[0].mxu0
      %v2314 = vpop.f32.mrb[0].mxu0
      %v2315 = vadd.f32 0.0, %v2314
      %v2316 = vpop.f32.mrb[0].mxu0
      %2317 = vmatprep.mubr.bf16.mxu0 %v1685
      %2318 = vmatmul.mubr.bf16.gmra.mrb[0].mxu0 %v1850
      %v2319 = vpop.f32.mrb[0].mxu0
      %v2320 = vadd.f32 0.0, %v2319
      %v2321 = vpop.f32.mrb[0].mxu0
      %v2322 = vpop.f32.mrb[0].mxu0
      %v2323 = vadd.f32 0.0, %v2322
      %v2324 = vpop.f32.mrb[0].mxu0
      %2325 = vmatprep.mubr.bf16.mxu0 %v1686
      %2326 = vmatmul.mubr.bf16.gmra.mrb[0].mxu0 %v1851
      %v2327 = vpop.f32.mrb[0].mxu0
      %v2328 = vadd.f32 0.0, %v2327
      %v2329 = vpop.f32.mrb[0].mxu0
      %v2330 = vpop.f32.mrb[0].mxu0
      %v2331 = vadd.f32 0.0, %v2330
      %v2332 = vpop.f32.mrb[0].mxu0
      %2333 = vmatprep.mubr.bf16.mxu0 %v1687
      %2334 = vmatmul.mubr.bf16.gmra.mrb[0].mxu0 %v1852
      %v2335 = vpop.f32.mrb[0].mxu0
      %v2336 = vadd.f32 0.0, %v2335
      %v2337 = vpop.f32.mrb[0].mxu0
      %v2338 = vpop.f32.mrb[0].mxu0
      %v2339 = vadd.f32 0.0, %v2338
      %v2340 = vpop.f32.mrb[0].mxu0
      %2341 = vmatprep.mubr.bf16.mxu0 %v1688
      %2342 = vmatmul.mubr.bf16.gmra.mrb[0].mxu0 %v1853
      %v2343 = vpop.f32.mrb[0].mxu0
      %v2344 = vadd.f32 0.0, %v2343
      %v2345 = vpop.f32.mrb[0].mxu0
      %v2346 = vpop.f32.mrb[0].mxu0
      %v2347 = vadd.f32 0.0, %v2346
      %v2348 = vpop.f32.mrb[0].mxu0
      %2349 = vdwg.mxu0
      %2350 = vmatprep.subr.bf16.mxu0 0
      %2351 = vmatpush1.bf16.msra.mxu0 %v2157
      %2352 = vmatprep.subr.bf16.mxu0 0
      %2353 = vmatpush1.bf16.msra.mxu0 %v2158
      %2354 = vmatprep.subr.bf16.mxu0 0
      %2355 = vmatpush1.bf16.msra.mxu0 %v2159
      %2356 = vmatprep.subr.bf16.mxu0 0
      %2357 = vmatpush1.bf16.msra.mxu0 %v2160
      %2358 = vmatprep.subr.bf16.mxu0 0
      %2359 = vmatpush1.bf16.msra.mxu0 %v2161
      %2360 = vmatprep.subr.bf16.mxu0 0
      %2361 = vmatpush1.bf16.msra.mxu0 %v2162
      %2362 = vmatprep.subr.bf16.mxu0 0
      %2363 = vmatpush1.bf16.msra.mxu0 %v2163
      %2364 = vmatprep.subr.bf16.mxu0 0
      %2365 = vmatpush1.bf16.msra.mxu0 %v2164
      %2366 = vmatprep.subr.bf16.mxu0 0
      %2367 = vmatpush1.bf16.msra.mxu0 0
      %2368 = vmatprep.subr.bf16.mxu0 0
      %2369 = vmatpush1.bf16.msra.mxu0 0
      %2370 = vmatprep.subr.bf16.mxu0 0
      %2371 = vmatpush1.bf16.msra.mxu0 0
      %2372 = vmatprep.subr.bf16.mxu0 0
      %2373 = vmatpush1.bf16.msra.mxu0 0
      %2374 = vmatprep.subr.bf16.mxu0 0
      %2375 = vmatpush1.bf16.msra.mxu0 0
      %2376 = vmatprep.subr.bf16.mxu0 0
      %2377 = vmatpush1.bf16.msra.mxu0 0
      %2378 = vmatprep.subr.bf16.mxu0 0
      %2379 = vmatpush1.bf16.msra.mxu0 0
      %2380 = vmatprep.subr.bf16.mxu0 0
      %2381 = vmatpush1.bf16.msra.mxu0 0
      %2382 = vmatprep.mubr.bf16.mxu0 0
      %2383 = vmatmul.mubr.bf16.gmra.mrb[0].mxu0 %v1913
      %v2384 = vpop.f32.mrb[0].mxu0
      %v2385 = vadd.f32 %v2224, %v2384
      %v2386 = vpop.f32.mrb[0].mxu0
      %v2387 = vpop.f32.mrb[0].mxu0
      %v2388 = vadd.f32 %v2227, %v2387
      %v2389 = vpop.f32.mrb[0].mxu0
      %2390 = vmatprep.mubr.bf16.mxu0 0
      %2391 = vmatmul.mubr.bf16.gmra.mrb[0].mxu0 %v1914
      %v2392 = vpop.f32.mrb[0].mxu0
      %v2393 = vadd.f32 %v2232, %v2392
      %v2394 = vpop.f32.mrb[0].mxu0
      %v2395 = vpop.f32.mrb[0].mxu0
      %v2396 = vadd.f32 %v2235, %v2395
      %v2397 = vpop.f32.mrb[0].mxu0
      %2398 = vmatprep.mubr.bf16.mxu0 0
      %2399 = vmatmul.mubr.bf16.gmra.mrb[0].mxu0 %v1915
      %v2400 = vpop.f32.mrb[0].mxu0
      %v2401 = vadd.f32 %v2240, %v2400
      %v2402 = vpop.f32.mrb[0].mxu0
      %v2403 = vpop.f32.mrb[0].mxu0
      %v2404 = vadd.f32 %v2243, %v2403
      %v2405 = vpop.f32.mrb[0].mxu0
      %2406 = vmatprep.mubr.bf16.mxu0 0
      %2407 = vmatmul.mubr.bf16.gmra.mrb[0].mxu0 %v1916
      %v2408 = vpop.f32.mrb[0].mxu0
      %v2409 = vadd.f32 %v2248, %v2408
      %v2410 = vpop.f32.mrb[0].mxu0
      %v2411 = vpop.f32.mrb[0].mxu0
      %v2412 = vadd.f32 %v2251, %v2411
      %v2413 = vpop.f32.mrb[0].mxu0
      %2414 = vmatprep.mubr.bf16.mxu0 0
      %2415 = vmatmul.mubr.bf16.gmra.mrb[0].mxu0 %v1917
      %v2416 = vpop.f32.mrb[0].mxu0
      %v2417 = vadd.f32 %v2256, %v2416
      %v2418 = vpop.f32.mrb[0].mxu0
      %v2419 = vpop.f32.mrb[0].mxu0
      %v2420 = vadd.f32 %v2259, %v2419
      %v2421 = vpop.f32.mrb[0].mxu0
      %2422 = vmatprep.mubr.bf16.mxu0 0
      %2423 = vmatmul.mubr.bf16.gmra.mrb[0].mxu0 %v1918
      %v2424 = vpop.f32.mrb[0].mxu0
      %v2425 = vadd.f32 %v2264, %v2424
      %v2426 = vpop.f32.mrb[0].mxu0
      %v2427 = vpop.f32.mrb[0].mxu0
      %v2428 = vadd.f32 %v2267, %v2427
      %v2429 = vpop.f32.mrb[0].mxu0
      %2430 = vmatprep.mubr.bf16.mxu0 0
      %2431 = vmatmul.mubr.bf16.gmra.mrb[0].mxu0 %v1919
      %v2432 = vpop.f32.mrb[0].mxu0
      %v2433 = vadd.f32 %v2272, %v2432
      %v2434 = vpop.f32.mrb[0].mxu0
      %v2435 = vpop.f32.mrb[0].mxu0
      %v2436 = vadd.f32 %v2275, %v2435
      %v2437 = vpop.f32.mrb[0].mxu0
      %2438 = vmatprep.mubr.bf16.mxu0 0
      %2439 = vmatmul.mubr.bf16.gmra.mrb[0].mxu0 %v1920
      %v2440 = vpop.f32.mrb[0].mxu0
      %v2441 = vadd.f32 %v2280, %v2440
      %v2442 = vpop.f32.mrb[0].mxu0
      %v2443 = vpop.f32.mrb[0].mxu0
      %v2444 = vadd.f32 %v2283, %v2443
      %v2445 = vpop.f32.mrb[0].mxu0
      %2446 = vmatprep.mubr.bf16.mxu0 0
      %2447 = vmatmul.mubr.bf16.gmra.mrb[0].mxu0 %v1921
      %v2448 = vpop.f32.mrb[0].mxu0
      %v2449 = vadd.f32 %v2288, %v2448
      %v2450 = vpop.f32.mrb[0].mxu0
      %v2451 = vpop.f32.mrb[0].mxu0
      %v2452 = vadd.f32 %v2291, %v2451
      %v2453 = vpop.f32.mrb[0].mxu0
      %2454 = vmatprep.mubr.bf16.mxu0 0
      %2455 = vmatmul.mubr.bf16.gmra.mrb[0].mxu0 %v1922
      %v2456 = vpop.f32.mrb[0].mxu0
      %v2457 = vadd.f32 %v2296, %v2456
      %v2458 = vpop.f32.mrb[0].mxu0
      %v2459 = vpop.f32.mrb[0].mxu0
      %v2460 = vadd.f32 %v2299, %v2459
      %v2461 = vpop.f32.mrb[0].mxu0
      %2462 = vmatprep.mubr.bf16.mxu0 0
      %2463 = vmatmul.mubr.bf16.gmra.mrb[0].mxu0 %v1923
      %v2464 = vpop.f32.mrb[0].mxu0
      %v2465 = vadd.f32 %v2304, %v2464
      %v2466 = vpop.f32.mrb[0].mxu0
      %v2467 = vpop.f32.mrb[0].mxu0
      %v2468 = vadd.f32 %v2307, %v2467
      %v2469 = vpop.f32.mrb[0].mxu0
      %2470 = vmatprep.mubr.bf16.mxu0 0
      %2471 = vmatmul.mubr.bf16.gmra.mrb[0].mxu0 %v1924
      %v2472 = vpop.f32.mrb[0].mxu0
      %v2473 = vadd.f32 %v2312, %v2472
      %v2474 = vpop.f32.mrb[0].mxu0
      %v2475 = vpop.f32.mrb[0].mxu0
      %v2476 = vadd.f32 %v2315, %v2475
      %v2477 = vpop.f32.mrb[0].mxu0
      %2478 = vmatprep.mubr.bf16.mxu0 0
      %2479 = vmatmul.mubr.bf16.gmra.mrb[0].mxu0 %v1925
      %v2480 = vpop.f32.mrb[0].mxu0
      %v2481 = vadd.f32 %v2320, %v2480
      %v2482 = vpop.f32.mrb[0].mxu0
      %v2483 = vpop.f32.mrb[0].mxu0
      %v2484 = vadd.f32 %v2323, %v2483
      %v2485 = vpop.f32.mrb[0].mxu0
      %2486 = vmatprep.mubr.bf16.mxu0 0
      %2487 = vmatmul.mubr.bf16.gmra.mrb[0].mxu0 %v1926
      %v2488 = vpop.f32.mrb[0].mxu0
      %v2489 = vadd.f32 %v2328, %v2488
      %v2490 = vpop.f32.mrb[0].mxu0
      %v2491 = vpop.f32.mrb[0].mxu0
      %v2492 = vadd.f32 %v2331, %v2491
      %v2493 = vpop.f32.mrb[0].mxu0
      %2494 = vmatprep.mubr.bf16.mxu0 0
      %2495 = vmatmul.mubr.bf16.gmra.mrb[0].mxu0 %v1927
      %v2496 = vpop.f32.mrb[0].mxu0
      %v2497 = vadd.f32 %v2336, %v2496
      %v2498 = vpop.f32.mrb[0].mxu0
      %v2499 = vpop.f32.mrb[0].mxu0
      %v2500 = vadd.f32 %v2339, %v2499
      %v2501 = vpop.f32.mrb[0].mxu0
      %2502 = vmatprep.mubr.bf16.mxu0 0
      %2503 = vmatmul.mubr.bf16.gmra.mrb[0].mxu0 %v1928
      %v2504 = vpop.f32.mrb[0].mxu0
      %v2505 = vadd.f32 %v2344, %v2504
      %v2506 = vpop.f32.mrb[0].mxu0
      %v2507 = vpop.f32.mrb[0].mxu0
      %v2508 = vadd.f32 %v2347, %v2507
      %v2509 = vpop.f32.mrb[0].mxu0
      %2510 = vdwg.mxu0
      %v2559 = vunpack.c.l.b16 %v1948
      %v2560 = vunpack.c.l.b16 %v1949
      %v2561 = vunpack.c.l.b16 %v1950
      %v2562 = vunpack.c.l.b16 %v1951
      %v2563 = vunpack.c.l.b16 %v1952
      %v2564 = vunpack.c.l.b16 %v1953
      %v2565 = vunpack.c.l.b16 %v1954
      %v2566 = vunpack.c.l.b16 %v1955
      %v2567 = vunpack.c.l.b16 %v1956
      %v2568 = vunpack.c.l.b16 %v1957
      %v2569 = vunpack.c.l.b16 %v1958
      %v2570 = vunpack.c.l.b16 %v1959
      %v2571 = vunpack.c.l.b16 %v1960
      %v2572 = vunpack.c.l.b16 %v1961
      %v2573 = vunpack.c.l.b16 %v1962
      %v2574 = vunpack.c.l.b16 %v1963
      %v2575 = vunpack.c.l.b16 %v1964
      %v2576 = vunpack.c.l.b16 %v1965
      %v2577 = vunpack.c.l.b16 %v1966
      %v2578 = vunpack.c.l.b16 %v1967
      %v2579 = vunpack.c.l.b16 %v1968
      %v2580 = vunpack.c.l.b16 %v1969
      %v2581 = vunpack.c.l.b16 %v1970
      %v2582 = vunpack.c.l.b16 %v1971
      %v2583 = vunpack.c.l.b16 %v1972
      %v2584 = vunpack.c.l.b16 %v1973
      %v2585 = vunpack.c.l.b16 %v1974
      %v2586 = vunpack.c.l.b16 %v1975
      %v2587 = vunpack.c.l.b16 %v1976
      %v2588 = vunpack.c.l.b16 %v1977
      %v2589 = vunpack.c.l.b16 %v1978
      %v2590 = vunpack.c.l.b16 %v1979
      %v2591 = vunpack.c.l.b16 %v1980
      %v2592 = vunpack.c.l.b16 %v1981
      %v2593 = vunpack.c.l.b16 %v1982
      %v2594 = vunpack.c.l.b16 %v1983
      %v2595 = vunpack.c.l.b16 %v1984
      %v2596 = vunpack.c.l.b16 %v1985
      %v2597 = vunpack.c.l.b16 %v1986
      %v2598 = vunpack.c.l.b16 %v1987
      %v2599 = vunpack.c.l.b16 %v1988
      %v2600 = vunpack.c.l.b16 %v1989
      %v2601 = vunpack.c.l.b16 %v1990
      %v2602 = vunpack.c.l.b16 %v1991
      %v2603 = vunpack.c.l.b16 %v1992
      %v2604 = vunpack.c.l.b16 %v1993
      %v2605 = vunpack.c.l.b16 %v1994
      %v2606 = vunpack.c.l.b16 %v1995
      %v2607 = vpack.c.b16 %v2560, %v2559
      %v2608 = vpack.c.b16 %v2562, %v2561
      %v2609 = vpack.c.b16 %v2564, %v2563
      %v2610 = vpack.c.b16 %v2566, %v2565
      %v2611 = vpack.c.b16 %v2568, %v2567
      %v2612 = vpack.c.b16 %v2570, %v2569
      %v2613 = vpack.c.b16 %v2572, %v2571
      %v2614 = vpack.c.b16 %v2574, %v2573
      %v2615 = vpack.c.b16 %v2576, %v2575
      %v2616 = vpack.c.b16 %v2578, %v2577
      %v2617 = vpack.c.b16 %v2580, %v2579
      %v2618 = vpack.c.b16 %v2582, %v2581
      %v2619 = vpack.c.b16 %v2584, %v2583
      %v2620 = vpack.c.b16 %v2586, %v2585
      %v2621 = vpack.c.b16 %v2588, %v2587
      %v2622 = vpack.c.b16 %v2590, %v2589
      %v2623 = vpack.c.b16 %v2592, %v2591
      %v2624 = vpack.c.b16 %v2594, %v2593
      %v2625 = vpack.c.b16 %v2596, %v2595
      %v2626 = vpack.c.b16 %v2598, %v2597
      %v2627 = vpack.c.b16 %v2600, %v2599
      %v2628 = vpack.c.b16 %v2602, %v2601
      %v2629 = vpack.c.b16 %v2604, %v2603
      %v2630 = vpack.c.b16 %v2606, %v2605
      %2655 = vmatprep.subr.bf16.mxu0 0
      %2656 = vmatpush1.bf16.msra.mxu0 %v2607
      %2657 = vmatprep.subr.bf16.mxu0 0
      %2658 = vmatpush1.bf16.msra.mxu0 %v2608
      %2659 = vmatprep.subr.bf16.mxu0 0
      %2660 = vmatpush1.bf16.msra.mxu0 %v2609
      %2661 = vmatprep.subr.bf16.mxu0 0
      %2662 = vmatpush1.bf16.msra.mxu0 %v2610
      %2663 = vmatprep.subr.bf16.mxu0 0
      %2664 = vmatpush1.bf16.msra.mxu0 %v2611
      %2665 = vmatprep.subr.bf16.mxu0 0
      %2666 = vmatpush1.bf16.msra.mxu0 %v2612
      %2667 = vmatprep.subr.bf16.mxu0 0
      %2668 = vmatpush1.bf16.msra.mxu0 %v2613
      %2669 = vmatprep.subr.bf16.mxu0 0
      %2670 = vmatpush1.bf16.msra.mxu0 %v2614
      %2671 = vmatprep.subr.bf16.mxu0 0
      %2672 = vmatpush1.bf16.msra.mxu0 %v2615
      %2673 = vmatprep.subr.bf16.mxu0 0
      %2674 = vmatpush1.bf16.msra.mxu0 %v2616
      %2675 = vmatprep.subr.bf16.mxu0 0
      %2676 = vmatpush1.bf16.msra.mxu0 %v2617
      %2677 = vmatprep.subr.bf16.mxu0 0
      %2678 = vmatpush1.bf16.msra.mxu0 %v2618
      %2679 = vmatprep.subr.bf16.mxu0 0
      %2680 = vmatpush1.bf16.msra.mxu0 %v2619
      %2681 = vmatprep.subr.bf16.mxu0 0
      %2682 = vmatpush1.bf16.msra.mxu0 %v2620
      %2683 = vmatprep.subr.bf16.mxu0 0
      %2684 = vmatpush1.bf16.msra.mxu0 %v2621
      %2685 = vmatprep.subr.bf16.mxu0 0
      %2686 = vmatpush1.bf16.msra.mxu0 %v2622
      %2687 = vmatprep.mubr.bf16.mxu0 %v1672
      %2688 = vmatmul.mubr.bf16.gmra.mrb[0].mxu0 %v1837
      %v2689 = vpop.f32.mrb[0].mxu0
      %v2690 = vadd.f32 %v2385, %v2689
      %v2691 = vpop.f32.mrb[0].mxu0
      %v2692 = vpop.f32.mrb[0].mxu0
      %v2693 = vadd.f32 %v2388, %v2692
      %v2694 = vpop.f32.mrb[0].mxu0
      %2695 = vmatprep.mubr.bf16.mxu0 %v1673
      %2696 = vmatmul.mubr.bf16.gmra.mrb[0].mxu0 %v1838
      %v2697 = vpop.f32.mrb[0].mxu0
      %v2698 = vadd.f32 %v2393, %v2697
      %v2699 = vpop.f32.mrb[0].mxu0
      %v2700 = vpop.f32.mrb[0].mxu0
      %v2701 = vadd.f32 %v2396, %v2700
      %v2702 = vpop.f32.mrb[0].mxu0
      %2703 = vmatprep.mubr.bf16.mxu0 %v1674
      %2704 = vmatmul.mubr.bf16.gmra.mrb[0].mxu0 %v1839
      %v2705 = vpop.f32.mrb[0].mxu0
      %v2706 = vadd.f32 %v2401, %v2705
      %v2707 = vpop.f32.mrb[0].mxu0
      %v2708 = vpop.f32.mrb[0].mxu0
      %v2709 = vadd.f32 %v2404, %v2708
      %v2710 = vpop.f32.mrb[0].mxu0
      %2711 = vmatprep.mubr.bf16.mxu0 %v1675
      %2712 = vmatmul.mubr.bf16.gmra.mrb[0].mxu0 %v1840
      %v2713 = vpop.f32.mrb[0].mxu0
      %v2714 = vadd.f32 %v2409, %v2713
      %v2715 = vpop.f32.mrb[0].mxu0
      %v2716 = vpop.f32.mrb[0].mxu0
      %v2717 = vadd.f32 %v2412, %v2716
      %v2718 = vpop.f32.mrb[0].mxu0
      %2719 = vmatprep.mubr.bf16.mxu0 %v1676
      %2720 = vmatmul.mubr.bf16.gmra.mrb[0].mxu0 %v1841
      %v2721 = vpop.f32.mrb[0].mxu0
      %v2722 = vadd.f32 %v2417, %v2721
      %v2723 = vpop.f32.mrb[0].mxu0
      %v2724 = vpop.f32.mrb[0].mxu0
      %v2725 = vadd.f32 %v2420, %v2724
      %v2726 = vpop.f32.mrb[0].mxu0
      %2727 = vmatprep.mubr.bf16.mxu0 %v1677
      %2728 = vmatmul.mubr.bf16.gmra.mrb[0].mxu0 %v1842
      %v2729 = vpop.f32.mrb[0].mxu0
      %v2730 = vadd.f32 %v2425, %v2729
      %v2731 = vpop.f32.mrb[0].mxu0
      %v2732 = vpop.f32.mrb[0].mxu0
      %v2733 = vadd.f32 %v2428, %v2732
      %v2734 = vpop.f32.mrb[0].mxu0
      %2735 = vmatprep.mubr.bf16.mxu0 %v1678
      %2736 = vmatmul.mubr.bf16.gmra.mrb[0].mxu0 %v1843
      %v2737 = vpop.f32.mrb[0].mxu0
      %v2738 = vadd.f32 %v2433, %v2737
      %v2739 = vpop.f32.mrb[0].mxu0
      %v2740 = vpop.f32.mrb[0].mxu0
      %v2741 = vadd.f32 %v2436, %v2740
      %v2742 = vpop.f32.mrb[0].mxu0
      %2743 = vmatprep.mubr.bf16.mxu0 %v1679
      %2744 = vmatmul.mubr.bf16.gmra.mrb[0].mxu0 %v1844
      %v2745 = vpop.f32.mrb[0].mxu0
      %v2746 = vadd.f32 %v2441, %v2745
      %v2747 = vpop.f32.mrb[0].mxu0
      %v2748 = vpop.f32.mrb[0].mxu0
      %v2749 = vadd.f32 %v2444, %v2748
      %v2750 = vpop.f32.mrb[0].mxu0
      %2751 = vmatprep.mubr.bf16.mxu0 %v1680
      %2752 = vmatmul.mubr.bf16.gmra.mrb[0].mxu0 %v1845
      %v2753 = vpop.f32.mrb[0].mxu0
      %v2754 = vadd.f32 %v2449, %v2753
      %v2755 = vpop.f32.mrb[0].mxu0
      %v2756 = vpop.f32.mrb[0].mxu0
      %v2757 = vadd.f32 %v2452, %v2756
      %v2758 = vpop.f32.mrb[0].mxu0
      %2759 = vmatprep.mubr.bf16.mxu0 %v1681
      %2760 = vmatmul.mubr.bf16.gmra.mrb[0].mxu0 %v1846
      %v2761 = vpop.f32.mrb[0].mxu0
      %v2762 = vadd.f32 %v2457, %v2761
      %v2763 = vpop.f32.mrb[0].mxu0
      %v2764 = vpop.f32.mrb[0].mxu0
      %v2765 = vadd.f32 %v2460, %v2764
      %v2766 = vpop.f32.mrb[0].mxu0
      %2767 = vmatprep.mubr.bf16.mxu0 %v1682
      %2768 = vmatmul.mubr.bf16.gmra.mrb[0].mxu0 %v1847
      %v2769 = vpop.f32.mrb[0].mxu0
      %v2770 = vadd.f32 %v2465, %v2769
      %v2771 = vpop.f32.mrb[0].mxu0
      %v2772 = vpop.f32.mrb[0].mxu0
      %v2773 = vadd.f32 %v2468, %v2772
      %v2774 = vpop.f32.mrb[0].mxu0
      %2775 = vmatprep.mubr.bf16.mxu0 %v1683
      %2776 = vmatmul.mubr.bf16.gmra.mrb[0].mxu0 %v1848
      %v2777 = vpop.f32.mrb[0].mxu0
      %v2778 = vadd.f32 %v2473, %v2777
      %v2779 = vpop.f32.mrb[0].mxu0
      %v2780 = vpop.f32.mrb[0].mxu0
      %v2781 = vadd.f32 %v2476, %v2780
      %v2782 = vpop.f32.mrb[0].mxu0
      %2783 = vmatprep.mubr.bf16.mxu0 %v1684
      %2784 = vmatmul.mubr.bf16.gmra.mrb[0].mxu0 %v1849
      %v2785 = vpop.f32.mrb[0].mxu0
      %v2786 = vadd.f32 %v2481, %v2785
      %v2787 = vpop.f32.mrb[0].mxu0
      %v2788 = vpop.f32.mrb[0].mxu0
      %v2789 = vadd.f32 %v2484, %v2788
      %v2790 = vpop.f32.mrb[0].mxu0
      %2791 = vmatprep.mubr.bf16.mxu0 %v1685
      %2792 = vmatmul.mubr.bf16.gmra.mrb[0].mxu0 %v1850
      %v2793 = vpop.f32.mrb[0].mxu0
      %v2794 = vadd.f32 %v2489, %v2793
      %v2795 = vpop.f32.mrb[0].mxu0
      %v2796 = vpop.f32.mrb[0].mxu0
      %v2797 = vadd.f32 %v2492, %v2796
      %v2798 = vpop.f32.mrb[0].mxu0
      %2799 = vmatprep.mubr.bf16.mxu0 %v1686
      %2800 = vmatmul.mubr.bf16.gmra.mrb[0].mxu0 %v1851
      %v2801 = vpop.f32.mrb[0].mxu0
      %v2802 = vadd.f32 %v2497, %v2801
      %v2803 = vpop.f32.mrb[0].mxu0
      %v2804 = vpop.f32.mrb[0].mxu0
      %v2805 = vadd.f32 %v2500, %v2804
      %v2806 = vpop.f32.mrb[0].mxu0
      %2807 = vmatprep.mubr.bf16.mxu0 %v1687
      %2808 = vmatmul.mubr.bf16.gmra.mrb[0].mxu0 %v1852
      %v2809 = vpop.f32.mrb[0].mxu0
      %v2810 = vadd.f32 %v2505, %v2809
      %v2811 = vpop.f32.mrb[0].mxu0
      %v2812 = vpop.f32.mrb[0].mxu0
      %v2813 = vadd.f32 %v2508, %v2812
      %v2814 = vpop.f32.mrb[0].mxu0
      %2815 = vdwg.mxu0
      %2816 = vmatprep.subr.bf16.mxu0 0
      %2817 = vmatpush1.bf16.msra.mxu0 %v2623
      %2818 = vmatprep.subr.bf16.mxu0 0
      %2819 = vmatpush1.bf16.msra.mxu0 %v2624
      %2820 = vmatprep.subr.bf16.mxu0 0
      %2821 = vmatpush1.bf16.msra.mxu0 %v2625
      %2822 = vmatprep.subr.bf16.mxu0 0
      %2823 = vmatpush1.bf16.msra.mxu0 %v2626
      %2824 = vmatprep.subr.bf16.mxu0 0
      %2825 = vmatpush1.bf16.msra.mxu0 %v2627
      %2826 = vmatprep.subr.bf16.mxu0 0
      %2827 = vmatpush1.bf16.msra.mxu0 %v2628
      %2828 = vmatprep.subr.bf16.mxu0 0
      %2829 = vmatpush1.bf16.msra.mxu0 %v2629
      %2830 = vmatprep.subr.bf16.mxu0 0
      %2831 = vmatpush1.bf16.msra.mxu0 %v2630
      %2832 = vmatprep.subr.bf16.mxu0 0
      %2833 = vmatpush1.bf16.msra.mxu0 0
      %2834 = vmatprep.subr.bf16.mxu0 0
      %2835 = vmatpush1.bf16.msra.mxu0 0
      %2836 = vmatprep.subr.bf16.mxu0 0
      %2837 = vmatpush1.bf16.msra.mxu0 0
      %2838 = vmatprep.subr.bf16.mxu0 0
      %2839 = vmatpush1.bf16.msra.mxu0 0
      %2840 = vmatprep.subr.bf16.mxu0 0
      %2841 = vmatpush1.bf16.msra.mxu0 0
      %2842 = vmatprep.subr.bf16.mxu0 0
      %2843 = vmatpush1.bf16.msra.mxu0 0
      %2844 = vmatprep.subr.bf16.mxu0 0
      %2845 = vmatpush1.bf16.msra.mxu0 0
      %2846 = vmatprep.subr.bf16.mxu0 0
      %2847 = vmatpush1.bf16.msra.mxu0 0
      %2848 = vmatprep.mubr.bf16.mxu0 0
      %2849 = vmatmul.mubr.bf16.gmra.mrb[0].mxu0 %v1912
      %v2850 = vpop.f32.mrb[0].mxu0
      %v2851 = vadd.f32 %v2690, %v2850
      %v2852 = vpop.f32.mrb[0].mxu0
      %v2853 = vpop.f32.mrb[0].mxu0
      %v2854 = vadd.f32 %v2693, %v2853
      %v2855 = vpop.f32.mrb[0].mxu0
      %2856 = vmatprep.mubr.bf16.mxu0 0
      %2857 = vmatmul.mubr.bf16.gmra.mrb[0].mxu0 %v1913
      %v2858 = vpop.f32.mrb[0].mxu0
      %v2859 = vadd.f32 %v2698, %v2858
      %v2860 = vpop.f32.mrb[0].mxu0
      %v2861 = vpop.f32.mrb[0].mxu0
      %v2862 = vadd.f32 %v2701, %v2861
      %v2863 = vpop.f32.mrb[0].mxu0
      %2864 = vmatprep.mubr.bf16.mxu0 0
      %2865 = vmatmul.mubr.bf16.gmra.mrb[0].mxu0 %v1914
      %v2866 = vpop.f32.mrb[0].mxu0
      %v2867 = vadd.f32 %v2706, %v2866
      %v2868 = vpop.f32.mrb[0].mxu0
      %v2869 = vpop.f32.mrb[0].mxu0
      %v2870 = vadd.f32 %v2709, %v2869
      %v2871 = vpop.f32.mrb[0].mxu0
      %2872 = vmatprep.mubr.bf16.mxu0 0
      %2873 = vmatmul.mubr.bf16.gmra.mrb[0].mxu0 %v1915
      %v2874 = vpop.f32.mrb[0].mxu0
      %v2875 = vadd.f32 %v2714, %v2874
      %v2876 = vpop.f32.mrb[0].mxu0
      %v2877 = vpop.f32.mrb[0].mxu0
      %v2878 = vadd.f32 %v2717, %v2877
      %v2879 = vpop.f32.mrb[0].mxu0
      %2880 = vmatprep.mubr.bf16.mxu0 0
      %2881 = vmatmul.mubr.bf16.gmra.mrb[0].mxu0 %v1916
      %v2882 = vpop.f32.mrb[0].mxu0
      %v2883 = vadd.f32 %v2722, %v2882
      %v2884 = vpop.f32.mrb[0].mxu0
      %v2885 = vpop.f32.mrb[0].mxu0
      %v2886 = vadd.f32 %v2725, %v2885
      %v2887 = vpop.f32.mrb[0].mxu0
      %2888 = vmatprep.mubr.bf16.mxu0 0
      %2889 = vmatmul.mubr.bf16.gmra.mrb[0].mxu0 %v1917
      %v2890 = vpop.f32.mrb[0].mxu0
      %v2891 = vadd.f32 %v2730, %v2890
      %v2892 = vpop.f32.mrb[0].mxu0
      %v2893 = vpop.f32.mrb[0].mxu0
      %v2894 = vadd.f32 %v2733, %v2893
      %v2895 = vpop.f32.mrb[0].mxu0
      %2896 = vmatprep.mubr.bf16.mxu0 0
      %2897 = vmatmul.mubr.bf16.gmra.mrb[0].mxu0 %v1918
      %v2898 = vpop.f32.mrb[0].mxu0
      %v2899 = vadd.f32 %v2738, %v2898
      %v2900 = vpop.f32.mrb[0].mxu0
      %v2901 = vpop.f32.mrb[0].mxu0
      %v2902 = vadd.f32 %v2741, %v2901
      %v2903 = vpop.f32.mrb[0].mxu0
      %2904 = vmatprep.mubr.bf16.mxu0 0
      %2905 = vmatmul.mubr.bf16.gmra.mrb[0].mxu0 %v1919
      %v2906 = vpop.f32.mrb[0].mxu0
      %v2907 = vadd.f32 %v2746, %v2906
      %v2908 = vpop.f32.mrb[0].mxu0
      %v2909 = vpop.f32.mrb[0].mxu0
      %v2910 = vadd.f32 %v2749, %v2909
      %v2911 = vpop.f32.mrb[0].mxu0
      %2912 = vmatprep.mubr.bf16.mxu0 0
      %2913 = vmatmul.mubr.bf16.gmra.mrb[0].mxu0 %v1920
      %v2914 = vpop.f32.mrb[0].mxu0
      %v2915 = vadd.f32 %v2754, %v2914
      %v2916 = vpop.f32.mrb[0].mxu0
      %v2917 = vpop.f32.mrb[0].mxu0
      %v2918 = vadd.f32 %v2757, %v2917
      %v2919 = vpop.f32.mrb[0].mxu0
      %2920 = vmatprep.mubr.bf16.mxu0 0
      %2921 = vmatmul.mubr.bf16.gmra.mrb[0].mxu0 %v1921
      %v2922 = vpop.f32.mrb[0].mxu0
      %v2923 = vadd.f32 %v2762, %v2922
      %v2924 = vpop.f32.mrb[0].mxu0
      %v2925 = vpop.f32.mrb[0].mxu0
      %v2926 = vadd.f32 %v2765, %v2925
      %v2927 = vpop.f32.mrb[0].mxu0
      %2928 = vmatprep.mubr.bf16.mxu0 0
      %2929 = vmatmul.mubr.bf16.gmra.mrb[0].mxu0 %v1922
      %v2930 = vpop.f32.mrb[0].mxu0
      %v2931 = vadd.f32 %v2770, %v2930
      %v2932 = vpop.f32.mrb[0].mxu0
      %v2933 = vpop.f32.mrb[0].mxu0
      %v2934 = vadd.f32 %v2773, %v2933
      %v2935 = vpop.f32.mrb[0].mxu0
      %2936 = vmatprep.mubr.bf16.mxu0 0
      %2937 = vmatmul.mubr.bf16.gmra.mrb[0].mxu0 %v1923
      %v2938 = vpop.f32.mrb[0].mxu0
      %v2939 = vadd.f32 %v2778, %v2938
      %v2940 = vpop.f32.mrb[0].mxu0
      %v2941 = vpop.f32.mrb[0].mxu0
      %v2942 = vadd.f32 %v2781, %v2941
      %v2943 = vpop.f32.mrb[0].mxu0
      %2944 = vmatprep.mubr.bf16.mxu0 0
      %2945 = vmatmul.mubr.bf16.gmra.mrb[0].mxu0 %v1924
      %v2946 = vpop.f32.mrb[0].mxu0
      %v2947 = vadd.f32 %v2786, %v2946
      %v2948 = vpop.f32.mrb[0].mxu0
      %v2949 = vpop.f32.mrb[0].mxu0
      %v2950 = vadd.f32 %v2789, %v2949
      %v2951 = vpop.f32.mrb[0].mxu0
      %2952 = vmatprep.mubr.bf16.mxu0 0
      %2953 = vmatmul.mubr.bf16.gmra.mrb[0].mxu0 %v1925
      %v2954 = vpop.f32.mrb[0].mxu0
      %v2955 = vadd.f32 %v2794, %v2954
      %v2956 = vpop.f32.mrb[0].mxu0
      %v2957 = vpop.f32.mrb[0].mxu0
      %v2958 = vadd.f32 %v2797, %v2957
      %v2959 = vpop.f32.mrb[0].mxu0
      %2960 = vmatprep.mubr.bf16.mxu0 0
      %2961 = vmatmul.mubr.bf16.gmra.mrb[0].mxu0 %v1926
      %v2962 = vpop.f32.mrb[0].mxu0
      %v2963 = vadd.f32 %v2802, %v2962
      %v2964 = vpop.f32.mrb[0].mxu0
      %v2965 = vpop.f32.mrb[0].mxu0
      %v2966 = vadd.f32 %v2805, %v2965
      %v2967 = vpop.f32.mrb[0].mxu0
      %2968 = vmatprep.mubr.bf16.mxu0 0
      %2969 = vmatmul.mubr.bf16.gmra.mrb[0].mxu0 %v1927
      %v2970 = vpop.f32.mrb[0].mxu0
      %v2971 = vadd.f32 %v2810, %v2970
      %v2972 = vpop.f32.mrb[0].mxu0
      %v2973 = vpop.f32.mrb[0].mxu0
      %v2974 = vadd.f32 %v2813, %v2973
      %v2975 = vpop.f32.mrb[0].mxu0
      %2976 = vdwg.mxu0
      %s2977 = scalar_lea.vmem %s7, 384
      %v2978 = vld [vmem:[%s2977] sm:$0xf]
      %v2979 = vld [vmem:[%s2977 + $0x4] sm:$0xf]
      %v2980 = vld [vmem:[%s2977 + $0x8] sm:$0xf]
      %v2981 = vld [vmem:[%s2977 + $0xc] sm:$0xf]
      %v2982 = vld [vmem:[%s2977 + $0x10] sm:$0xf]
      %v2983 = vld [vmem:[%s2977 + $0x14] sm:$0xf]
      %v2984 = vld [vmem:[%s2977 + $0x18] sm:$0xf]
      %v2985 = vld [vmem:[%s2977 + $0x1c] sm:$0xf]
      %v2986 = vld [vmem:[%s2977 + $0x20] sm:$0xf]
      %v2987 = vld [vmem:[%s2977 + $0x24] sm:$0xf]
      %v2988 = vld [vmem:[%s2977 + $0x28] sm:$0xf]
      %v2989 = vld [vmem:[%s2977 + $0x2c] sm:$0xf]
      %v2990 = vld [vmem:[%s2977 + $0x30] sm:$0xf]
      %v2991 = vld [vmem:[%s2977 + $0x34] sm:$0xf]
      %v2992 = vld [vmem:[%s2977 + $0x38] sm:$0xf]
      %v2993 = vld [vmem:[%s2977 + $0x3c] sm:$0xf]
      %v2994 = vld [vmem:[%s2977 + $0x40] sm:$0xf]
      %v2995 = vld [vmem:[%s2977 + $0x44] sm:$0xf]
      %v2996 = vld [vmem:[%s2977 + $0x48] sm:$0xf]
      %v2997 = vld [vmem:[%s2977 + $0x4c] sm:$0xf]
      %v2998 = vld [vmem:[%s2977 + $0x50] sm:$0xf]
      %v2999 = vld [vmem:[%s2977 + $0x54] sm:$0xf]
      %v3000 = vld [vmem:[%s2977 + $0x58] sm:$0xf]
      %v3001 = vld [vmem:[%s2977 + $0x5c] sm:$0xf]
      %v3002 = vld [vmem:[%s2977 + $0x60] sm:$0xf]
      %v3003 = vld [vmem:[%s2977 + $0x64] sm:$0xf]
      %v3004 = vld [vmem:[%s2977 + $0x68] sm:$0xf]
      %v3005 = vld [vmem:[%s2977 + $0x6c] sm:$0xf]
      %v3006 = vld [vmem:[%s2977 + $0x70] sm:$0xf]
      %v3007 = vld [vmem:[%s2977 + $0x74] sm:$0xf]
      %v3008 = vld [vmem:[%s2977 + $0x78] sm:$0xf]
      %v3009 = vld [vmem:[%s2977 + $0x7c] sm:$0xf]
      %v3010 = vld [vmem:[%s2977 + $0x80] sm:$0xf]
      %v3011 = vld [vmem:[%s2977 + $0x84] sm:$0xf]
      %v3012 = vld [vmem:[%s2977 + $0x88] sm:$0xf]
      %v3013 = vld [vmem:[%s2977 + $0x8c] sm:$0xf]
      %v3014 = vld [vmem:[%s2977 + $0x90] sm:$0xf]
      %v3015 = vld [vmem:[%s2977 + $0x94] sm:$0xf]
      %v3016 = vld [vmem:[%s2977 + $0x98] sm:$0xf]
      %v3017 = vld [vmem:[%s2977 + $0x9c] sm:$0xf]
      %v3018 = vld [vmem:[%s2977 + $0xa0] sm:$0xf]
      %v3019 = vld [vmem:[%s2977 + $0xa4] sm:$0xf]
      %v3020 = vld [vmem:[%s2977 + $0xa8] sm:$0xf]
      %v3021 = vld [vmem:[%s2977 + $0xac] sm:$0xf]
      %v3022 = vld [vmem:[%s2977 + $0xb0] sm:$0xf]
      %v3023 = vld [vmem:[%s2977 + $0xb4] sm:$0xf]
      %v3024 = vld [vmem:[%s2977 + $0xb8] sm:$0xf]
      %v3025 = vld [vmem:[%s2977 + $0xbc] sm:$0xf]
      %v3074 = vunpack.c.l.b16 %v2978
      %v3075 = vunpack.c.l.b16 %v2979
      %v3076 = vunpack.c.l.b16 %v2980
      %v3077 = vunpack.c.l.b16 %v2981
      %v3078 = vunpack.c.l.b16 %v2982
      %v3079 = vunpack.c.l.b16 %v2983
      %v3080 = vunpack.c.l.b16 %v2984
      %v3081 = vunpack.c.l.b16 %v2985
      %v3082 = vunpack.c.l.b16 %v2986
      %v3083 = vunpack.c.l.b16 %v2987
      %v3084 = vunpack.c.l.b16 %v2988
      %v3085 = vunpack.c.l.b16 %v2989
      %v3086 = vunpack.c.l.b16 %v2990
      %v3087 = vunpack.c.l.b16 %v2991
      %v3088 = vunpack.c.l.b16 %v2992
      %v3089 = vunpack.c.l.b16 %v2993
      %v3090 = vunpack.c.l.b16 %v2994
      %v3091 = vunpack.c.l.b16 %v2995
      %v3092 = vunpack.c.l.b16 %v2996
      %v3093 = vunpack.c.l.b16 %v2997
      %v3094 = vunpack.c.l.b16 %v2998
      %v3095 = vunpack.c.l.b16 %v2999
      %v3096 = vunpack.c.l.b16 %v3000
      %v3097 = vunpack.c.l.b16 %v3001
      %v3098 = vunpack.c.l.b16 %v3002
      %v3099 = vunpack.c.l.b16 %v3003
      %v3100 = vunpack.c.l.b16 %v3004
      %v3101 = vunpack.c.l.b16 %v3005
      %v3102 = vunpack.c.l.b16 %v3006
      %v3103 = vunpack.c.l.b16 %v3007
      %v3104 = vunpack.c.l.b16 %v3008
      %v3105 = vunpack.c.l.b16 %v3009
      %v3106 = vunpack.c.l.b16 %v3010
      %v3107 = vunpack.c.l.b16 %v3011
      %v3108 = vunpack.c.l.b16 %v3012
      %v3109 = vunpack.c.l.b16 %v3013
      %v3110 = vunpack.c.l.b16 %v3014
      %v3111 = vunpack.c.l.b16 %v3015
      %v3112 = vunpack.c.l.b16 %v3016
      %v3113 = vunpack.c.l.b16 %v3017
      %v3114 = vunpack.c.l.b16 %v3018
      %v3115 = vunpack.c.l.b16 %v3019
      %v3116 = vunpack.c.l.b16 %v3020
      %v3117 = vunpack.c.l.b16 %v3021
      %v3118 = vunpack.c.l.b16 %v3022
      %v3119 = vunpack.c.l.b16 %v3023
      %v3120 = vunpack.c.l.b16 %v3024
      %v3121 = vunpack.c.l.b16 %v3025
      %v3122 = vpack.c.b16 %v3075, %v3074
      %v3123 = vpack.c.b16 %v3077, %v3076
      %v3124 = vpack.c.b16 %v3079, %v3078
      %v3125 = vpack.c.b16 %v3081, %v3080
      %v3126 = vpack.c.b16 %v3083, %v3082
      %v3127 = vpack.c.b16 %v3085, %v3084
      %v3128 = vpack.c.b16 %v3087, %v3086
      %v3129 = vpack.c.b16 %v3089, %v3088
      %v3130 = vpack.c.b16 %v3091, %v3090
      %v3131 = vpack.c.b16 %v3093, %v3092
      %v3132 = vpack.c.b16 %v3095, %v3094
      %v3133 = vpack.c.b16 %v3097, %v3096
      %v3134 = vpack.c.b16 %v3099, %v3098
      %v3135 = vpack.c.b16 %v3101, %v3100
      %v3136 = vpack.c.b16 %v3103, %v3102
      %v3137 = vpack.c.b16 %v3105, %v3104
      %v3138 = vpack.c.b16 %v3107, %v3106
      %v3139 = vpack.c.b16 %v3109, %v3108
      %v3140 = vpack.c.b16 %v3111, %v3110
      %v3141 = vpack.c.b16 %v3113, %v3112
      %v3142 = vpack.c.b16 %v3115, %v3114
      %v3143 = vpack.c.b16 %v3117, %v3116
      %v3144 = vpack.c.b16 %v3119, %v3118
      %v3145 = vpack.c.b16 %v3121, %v3120
      %3170 = vmatprep.subr.bf16.mxu0 0
      %3171 = vmatpush1.bf16.msra.mxu0 %v3122
      %3172 = vmatprep.subr.bf16.mxu0 0
      %3173 = vmatpush1.bf16.msra.mxu0 %v3123
      %3174 = vmatprep.subr.bf16.mxu0 0
      %3175 = vmatpush1.bf16.msra.mxu0 %v3124
      %3176 = vmatprep.subr.bf16.mxu0 0
      %3177 = vmatpush1.bf16.msra.mxu0 %v3125
      %3178 = vmatprep.subr.bf16.mxu0 0
      %3179 = vmatpush1.bf16.msra.mxu0 %v3126
      %3180 = vmatprep.subr.bf16.mxu0 0
      %3181 = vmatpush1.bf16.msra.mxu0 %v3127
      %3182 = vmatprep.subr.bf16.mxu0 0
      %3183 = vmatpush1.bf16.msra.mxu0 %v3128
      %3184 = vmatprep.subr.bf16.mxu0 0
      %3185 = vmatpush1.bf16.msra.mxu0 %v3129
      %3186 = vmatprep.subr.bf16.mxu0 0
      %3187 = vmatpush1.bf16.msra.mxu0 %v3130
      %3188 = vmatprep.subr.bf16.mxu0 0
      %3189 = vmatpush1.bf16.msra.mxu0 %v3131
      %3190 = vmatprep.subr.bf16.mxu0 0
      %3191 = vmatpush1.bf16.msra.mxu0 %v3132
      %3192 = vmatprep.subr.bf16.mxu0 0
      %3193 = vmatpush1.bf16.msra.mxu0 %v3133
      %3194 = vmatprep.subr.bf16.mxu0 0
      %3195 = vmatpush1.bf16.msra.mxu0 %v3134
      %3196 = vmatprep.subr.bf16.mxu0 0
      %3197 = vmatpush1.bf16.msra.mxu0 %v3135
      %3198 = vmatprep.subr.bf16.mxu0 0
      %3199 = vmatpush1.bf16.msra.mxu0 %v3136
      %3200 = vmatprep.subr.bf16.mxu0 0
      %3201 = vmatpush1.bf16.msra.mxu0 %v3137
      %3202 = vmatprep.mubr.bf16.mxu0 %v1674
      %3203 = vmatmul.mubr.bf16.gmra.mrb[0].mxu0 %v1839
      %v3204 = vpop.f32.mrb[0].mxu0
      %v3205 = vadd.f32 0.0, %v3204
      %v3206 = vpop.f32.mrb[0].mxu0
      %v3207 = vpop.f32.mrb[0].mxu0
      %v3208 = vadd.f32 0.0, %v3207
      %v3209 = vpop.f32.mrb[0].mxu0
      %3210 = vmatprep.mubr.bf16.mxu0 %v1675
      %3211 = vmatmul.mubr.bf16.gmra.mrb[0].mxu0 %v1840
      %v3212 = vpop.f32.mrb[0].mxu0
      %v3213 = vadd.f32 0.0, %v3212
      %v3214 = vpop.f32.mrb[0].mxu0
      %v3215 = vpop.f32.mrb[0].mxu0
      %v3216 = vadd.f32 0.0, %v3215
      %v3217 = vpop.f32.mrb[0].mxu0
      %3218 = vmatprep.mubr.bf16.mxu0 %v1676
      %3219 = vmatmul.mubr.bf16.gmra.mrb[0].mxu0 %v1841
      %v3220 = vpop.f32.mrb[0].mxu0
      %v3221 = vadd.f32 0.0, %v3220
      %v3222 = vpop.f32.mrb[0].mxu0
      %v3223 = vpop.f32.mrb[0].mxu0
      %v3224 = vadd.f32 0.0, %v3223
      %v3225 = vpop.f32.mrb[0].mxu0
      %3226 = vmatprep.mubr.bf16.mxu0 %v1677
      %3227 = vmatmul.mubr.bf16.gmra.mrb[0].mxu0 %v1842
      %v3228 = vpop.f32.mrb[0].mxu0
      %v3229 = vadd.f32 0.0, %v3228
      %v3230 = vpop.f32.mrb[0].mxu0
      %v3231 = vpop.f32.mrb[0].mxu0
      %v3232 = vadd.f32 0.0, %v3231
      %v3233 = vpop.f32.mrb[0].mxu0
      %3234 = vmatprep.mubr.bf16.mxu0 %v1678
      %3235 = vmatmul.mubr.bf16.gmra.mrb[0].mxu0 %v1843
      %v3236 = vpop.f32.mrb[0].mxu0
      %v3237 = vadd.f32 0.0, %v3236
      %v3238 = vpop.f32.mrb[0].mxu0
      %v3239 = vpop.f32.mrb[0].mxu0
      %v3240 = vadd.f32 0.0, %v3239
      %v3241 = vpop.f32.mrb[0].mxu0
      %3242 = vmatprep.mubr.bf16.mxu0 %v1679
      %3243 = vmatmul.mubr.bf16.gmra.mrb[0].mxu0 %v1844
      %v3244 = vpop.f32.mrb[0].mxu0
      %v3245 = vadd.f32 0.0, %v3244
      %v3246 = vpop.f32.mrb[0].mxu0
      %v3247 = vpop.f32.mrb[0].mxu0
      %v3248 = vadd.f32 0.0, %v3247
      %v3249 = vpop.f32.mrb[0].mxu0
      %3250 = vmatprep.mubr.bf16.mxu0 %v1680
      %3251 = vmatmul.mubr.bf16.gmra.mrb[0].mxu0 %v1845
      %v3252 = vpop.f32.mrb[0].mxu0
      %v3253 = vadd.f32 0.0, %v3252
      %v3254 = vpop.f32.mrb[0].mxu0
      %v3255 = vpop.f32.mrb[0].mxu0
      %v3256 = vadd.f32 0.0, %v3255
      %v3257 = vpop.f32.mrb[0].mxu0
      %3258 = vmatprep.mubr.bf16.mxu0 %v1681
      %3259 = vmatmul.mubr.bf16.gmra.mrb[0].mxu0 %v1846
      %v3260 = vpop.f32.mrb[0].mxu0
      %v3261 = vadd.f32 0.0, %v3260
      %v3262 = vpop.f32.mrb[0].mxu0
      %v3263 = vpop.f32.mrb[0].mxu0
      %v3264 = vadd.f32 0.0, %v3263
      %v3265 = vpop.f32.mrb[0].mxu0
      %3266 = vmatprep.mubr.bf16.mxu0 %v1682
      %3267 = vmatmul.mubr.bf16.gmra.mrb[0].mxu0 %v1847
      %v3268 = vpop.f32.mrb[0].mxu0
      %v3269 = vadd.f32 0.0, %v3268
      %v3270 = vpop.f32.mrb[0].mxu0
      %v3271 = vpop.f32.mrb[0].mxu0
      %v3272 = vadd.f32 0.0, %v3271
      %v3273 = vpop.f32.mrb[0].mxu0
      %3274 = vmatprep.mubr.bf16.mxu0 %v1683
      %3275 = vmatmul.mubr.bf16.gmra.mrb[0].mxu0 %v1848
      %v3276 = vpop.f32.mrb[0].mxu0
      %v3277 = vadd.f32 0.0, %v3276
      %v3278 = vpop.f32.mrb[0].mxu0
      %v3279 = vpop.f32.mrb[0].mxu0
      %v3280 = vadd.f32 0.0, %v3279
      %v3281 = vpop.f32.mrb[0].mxu0
      %3282 = vmatprep.mubr.bf16.mxu0 %v1684
      %3283 = vmatmul.mubr.bf16.gmra.mrb[0].mxu0 %v1849
      %v3284 = vpop.f32.mrb[0].mxu0
      %v3285 = vadd.f32 0.0, %v3284
      %v3286 = vpop.f32.mrb[0].mxu0
      %v3287 = vpop.f32.mrb[0].mxu0
      %v3288 = vadd.f32 0.0, %v3287
      %v3289 = vpop.f32.mrb[0].mxu0
      %3290 = vmatprep.mubr.bf16.mxu0 %v1685
      %3291 = vmatmul.mubr.bf16.gmra.mrb[0].mxu0 %v1850
      %v3292 = vpop.f32.mrb[0].mxu0
      %v3293 = vadd.f32 0.0, %v3292
      %v3294 = vpop.f32.mrb[0].mxu0
      %v3295 = vpop.f32.mrb[0].mxu0
      %v3296 = vadd.f32 0.0, %v3295
      %v3297 = vpop.f32.mrb[0].mxu0
      %3298 = vmatprep.mubr.bf16.mxu0 %v1686
      %3299 = vmatmul.mubr.bf16.gmra.mrb[0].mxu0 %v1851
      %v3300 = vpop.f32.mrb[0].mxu0
      %v3301 = vadd.f32 0.0, %v3300
      %v3302 = vpop.f32.mrb[0].mxu0
      %v3303 = vpop.f32.mrb[0].mxu0
      %v3304 = vadd.f32 0.0, %v3303
      %v3305 = vpop.f32.mrb[0].mxu0
      %3306 = vmatprep.mubr.bf16.mxu0 %v1687
      %3307 = vmatmul.mubr.bf16.gmra.mrb[0].mxu0 %v1852
      %v3308 = vpop.f32.mrb[0].mxu0
      %v3309 = vadd.f32 0.0, %v3308
      %v3310 = vpop.f32.mrb[0].mxu0
      %v3311 = vpop.f32.mrb[0].mxu0
      %v3312 = vadd.f32 0.0, %v3311
      %v3313 = vpop.f32.mrb[0].mxu0
      %3314 = vmatprep.mubr.bf16.mxu0 %v1688
      %3315 = vmatmul.mubr.bf16.gmra.mrb[0].mxu0 %v1853
      %v3316 = vpop.f32.mrb[0].mxu0
      %v3317 = vadd.f32 0.0, %v3316
      %v3318 = vpop.f32.mrb[0].mxu0
      %v3319 = vpop.f32.mrb[0].mxu0
      %v3320 = vadd.f32 0.0, %v3319
      %v3321 = vpop.f32.mrb[0].mxu0
      %3322 = vmatprep.mubr.bf16.mxu0 %v1689
      %3323 = vmatmul.mubr.bf16.gmra.mrb[0].mxu0 %v1854
      %v3324 = vpop.f32.mrb[0].mxu0
      %v3325 = vadd.f32 0.0, %v3324
      %v3326 = vpop.f32.mrb[0].mxu0
      %v3327 = vpop.f32.mrb[0].mxu0
      %v3328 = vadd.f32 0.0, %v3327
      %v3329 = vpop.f32.mrb[0].mxu0
      %3330 = vdwg.mxu0
      %3331 = vmatprep.subr.bf16.mxu0 0
      %3332 = vmatpush1.bf16.msra.mxu0 %v3138
      %3333 = vmatprep.subr.bf16.mxu0 0
      %3334 = vmatpush1.bf16.msra.mxu0 %v3139
      %3335 = vmatprep.subr.bf16.mxu0 0
      %3336 = vmatpush1.bf16.msra.mxu0 %v3140
      %3337 = vmatprep.subr.bf16.mxu0 0
      %3338 = vmatpush1.bf16.msra.mxu0 %v3141
      %3339 = vmatprep.subr.bf16.mxu0 0
      %3340 = vmatpush1.bf16.msra.mxu0 %v3142
      %3341 = vmatprep.subr.bf16.mxu0 0
      %3342 = vmatpush1.bf16.msra.mxu0 %v3143
      %3343 = vmatprep.subr.bf16.mxu0 0
      %3344 = vmatpush1.bf16.msra.mxu0 %v3144
      %3345 = vmatprep.subr.bf16.mxu0 0
      %3346 = vmatpush1.bf16.msra.mxu0 %v3145
      %3347 = vmatprep.subr.bf16.mxu0 0
      %3348 = vmatpush1.bf16.msra.mxu0 0
      %3349 = vmatprep.subr.bf16.mxu0 0
      %3350 = vmatpush1.bf16.msra.mxu0 0
      %3351 = vmatprep.subr.bf16.mxu0 0
      %3352 = vmatpush1.bf16.msra.mxu0 0
      %3353 = vmatprep.subr.bf16.mxu0 0
      %3354 = vmatpush1.bf16.msra.mxu0 0
      %3355 = vmatprep.subr.bf16.mxu0 0
      %3356 = vmatpush1.bf16.msra.mxu0 0
      %3357 = vmatprep.subr.bf16.mxu0 0
      %3358 = vmatpush1.bf16.msra.mxu0 0
      %3359 = vmatprep.subr.bf16.mxu0 0
      %3360 = vmatpush1.bf16.msra.mxu0 0
      %3361 = vmatprep.subr.bf16.mxu0 0
      %3362 = vmatpush1.bf16.msra.mxu0 0
      %3363 = vmatprep.mubr.bf16.mxu0 0
      %3364 = vmatmul.mubr.bf16.gmra.mrb[0].mxu0 %v1914
      %v3365 = vpop.f32.mrb[0].mxu0
      %v3366 = vadd.f32 %v3205, %v3365
      %v3367 = vpop.f32.mrb[0].mxu0
      %v3368 = vpop.f32.mrb[0].mxu0
      %v3369 = vadd.f32 %v3208, %v3368
      %v3370 = vpop.f32.mrb[0].mxu0
      %3371 = vmatprep.mubr.bf16.mxu0 0
      %3372 = vmatmul.mubr.bf16.gmra.mrb[0].mxu0 %v1915
      %v3373 = vpop.f32.mrb[0].mxu0
      %v3374 = vadd.f32 %v3213, %v3373
      %v3375 = vpop.f32.mrb[0].mxu0
      %v3376 = vpop.f32.mrb[0].mxu0
      %v3377 = vadd.f32 %v3216, %v3376
      %v3378 = vpop.f32.mrb[0].mxu0
      %3379 = vmatprep.mubr.bf16.mxu0 0
      %3380 = vmatmul.mubr.bf16.gmra.mrb[0].mxu0 %v1916
      %v3381 = vpop.f32.mrb[0].mxu0
      %v3382 = vadd.f32 %v3221, %v3381
      %v3383 = vpop.f32.mrb[0].mxu0
      %v3384 = vpop.f32.mrb[0].mxu0
      %v3385 = vadd.f32 %v3224, %v3384
      %v3386 = vpop.f32.mrb[0].mxu0
      %3387 = vmatprep.mubr.bf16.mxu0 0
      %3388 = vmatmul.mubr.bf16.gmra.mrb[0].mxu0 %v1917
      %v3389 = vpop.f32.mrb[0].mxu0
      %v3390 = vadd.f32 %v3229, %v3389
      %v3391 = vpop.f32.mrb[0].mxu0
      %v3392 = vpop.f32.mrb[0].mxu0
      %v3393 = vadd.f32 %v3232, %v3392
      %v3394 = vpop.f32.mrb[0].mxu0
      %3395 = vmatprep.mubr.bf16.mxu0 0
      %3396 = vmatmul.mubr.bf16.gmra.mrb[0].mxu0 %v1918
      %v3397 = vpop.f32.mrb[0].mxu0
      %v3398 = vadd.f32 %v3237, %v3397
      %v3399 = vpop.f32.mrb[0].mxu0
      %v3400 = vpop.f32.mrb[0].mxu0
      %v3401 = vadd.f32 %v3240, %v3400
      %v3402 = vpop.f32.mrb[0].mxu0
      %3403 = vmatprep.mubr.bf16.mxu0 0
      %3404 = vmatmul.mubr.bf16.gmra.mrb[0].mxu0 %v1919
      %v3405 = vpop.f32.mrb[0].mxu0
      %v3406 = vadd.f32 %v3245, %v3405
      %v3407 = vpop.f32.mrb[0].mxu0
      %v3408 = vpop.f32.mrb[0].mxu0
      %v3409 = vadd.f32 %v3248, %v3408
      %v3410 = vpop.f32.mrb[0].mxu0
      %3411 = vmatprep.mubr.bf16.mxu0 0
      %3412 = vmatmul.mubr.bf16.gmra.mrb[0].mxu0 %v1920
      %v3413 = vpop.f32.mrb[0].mxu0
      %v3414 = vadd.f32 %v3253, %v3413
      %v3415 = vpop.f32.mrb[0].mxu0
      %v3416 = vpop.f32.mrb[0].mxu0
      %v3417 = vadd.f32 %v3256, %v3416
      %v3418 = vpop.f32.mrb[0].mxu0
      %3419 = vmatprep.mubr.bf16.mxu0 0
      %3420 = vmatmul.mubr.bf16.gmra.mrb[0].mxu0 %v1921
      %v3421 = vpop.f32.mrb[0].mxu0
      %v3422 = vadd.f32 %v3261, %v3421
      %v3423 = vpop.f32.mrb[0].mxu0
      %v3424 = vpop.f32.mrb[0].mxu0
      %v3425 = vadd.f32 %v3264, %v3424
      %v3426 = vpop.f32.mrb[0].mxu0
      %3427 = vmatprep.mubr.bf16.mxu0 0
      %3428 = vmatmul.mubr.bf16.gmra.mrb[0].mxu0 %v1922
      %v3429 = vpop.f32.mrb[0].mxu0
      %v3430 = vadd.f32 %v3269, %v3429
      %v3431 = vpop.f32.mrb[0].mxu0
      %v3432 = vpop.f32.mrb[0].mxu0
      %v3433 = vadd.f32 %v3272, %v3432
      %v3434 = vpop.f32.mrb[0].mxu0
      %3435 = vmatprep.mubr.bf16.mxu0 0
      %3436 = vmatmul.mubr.bf16.gmra.mrb[0].mxu0 %v1923
      %v3437 = vpop.f32.mrb[0].mxu0
      %v3438 = vadd.f32 %v3277, %v3437
      %v3439 = vpop.f32.mrb[0].mxu0
      %v3440 = vpop.f32.mrb[0].mxu0
      %v3441 = vadd.f32 %v3280, %v3440
      %v3442 = vpop.f32.mrb[0].mxu0
      %3443 = vmatprep.mubr.bf16.mxu0 0
      %3444 = vmatmul.mubr.bf16.gmra.mrb[0].mxu0 %v1924
      %v3445 = vpop.f32.mrb[0].mxu0
      %v3446 = vadd.f32 %v3285, %v3445
      %v3447 = vpop.f32.mrb[0].mxu0
      %v3448 = vpop.f32.mrb[0].mxu0
      %v3449 = vadd.f32 %v3288, %v3448
      %v3450 = vpop.f32.mrb[0].mxu0
      %3451 = vmatprep.mubr.bf16.mxu0 0
      %3452 = vmatmul.mubr.bf16.gmra.mrb[0].mxu0 %v1925
      %v3453 = vpop.f32.mrb[0].mxu0
      %v3454 = vadd.f32 %v3293, %v3453
      %v3455 = vpop.f32.mrb[0].mxu0
      %v3456 = vpop.f32.mrb[0].mxu0
      %v3457 = vadd.f32 %v3296, %v3456
      %v3458 = vpop.f32.mrb[0].mxu0
      %3459 = vmatprep.mubr.bf16.mxu0 0
      %3460 = vmatmul.mubr.bf16.gmra.mrb[0].mxu0 %v1926
      %v3461 = vpop.f32.mrb[0].mxu0
      %v3462 = vadd.f32 %v3301, %v3461
      %v3463 = vpop.f32.mrb[0].mxu0
      %v3464 = vpop.f32.mrb[0].mxu0
      %v3465 = vadd.f32 %v3304, %v3464
      %v3466 = vpop.f32.mrb[0].mxu0
      %3467 = vmatprep.mubr.bf16.mxu0 0
      %3468 = vmatmul.mubr.bf16.gmra.mrb[0].mxu0 %v1927
      %v3469 = vpop.f32.mrb[0].mxu0
      %v3470 = vadd.f32 %v3309, %v3469
      %v3471 = vpop.f32.mrb[0].mxu0
      %v3472 = vpop.f32.mrb[0].mxu0
      %v3473 = vadd.f32 %v3312, %v3472
      %v3474 = vpop.f32.mrb[0].mxu0
      %3475 = vmatprep.mubr.bf16.mxu0 0
      %3476 = vmatmul.mubr.bf16.gmra.mrb[0].mxu0 %v1928
      %v3477 = vpop.f32.mrb[0].mxu0
      %v3478 = vadd.f32 %v3317, %v3477
      %v3479 = vpop.f32.mrb[0].mxu0
      %v3480 = vpop.f32.mrb[0].mxu0
      %v3481 = vadd.f32 %v3320, %v3480
      %v3482 = vpop.f32.mrb[0].mxu0
      %3483 = vmatprep.mubr.bf16.mxu0 0
      %3484 = vmatmul.mubr.bf16.gmra.mrb[0].mxu0 %v1929
      %v3485 = vpop.f32.mrb[0].mxu0
      %v3486 = vadd.f32 %v3325, %v3485
      %v3487 = vpop.f32.mrb[0].mxu0
      %v3488 = vpop.f32.mrb[0].mxu0
      %v3489 = vadd.f32 %v3328, %v3488
      %v3490 = vpop.f32.mrb[0].mxu0
      %3491 = vdwg.mxu0
      %v3492 = vadd.f32 %v2851, %v3366
      %v3493 = vadd.f32 %v2854, %v3369
      %v3494 = vadd.f32 %v2859, %v3374
      %v3495 = vadd.f32 %v2862, %v3377
      %v3496 = vadd.f32 %v2867, %v3382
      %v3497 = vadd.f32 %v2870, %v3385
      %v3498 = vadd.f32 %v2875, %v3390
      %v3499 = vadd.f32 %v2878, %v3393
      %v3500 = vadd.f32 %v2883, %v3398
      %v3501 = vadd.f32 %v2886, %v3401
      %v3502 = vadd.f32 %v2891, %v3406
      %v3503 = vadd.f32 %v2894, %v3409
      %v3504 = vadd.f32 %v2899, %v3414
      %v3505 = vadd.f32 %v2902, %v3417
      %v3506 = vadd.f32 %v2907, %v3422
      %v3507 = vadd.f32 %v2910, %v3425
      %v3508 = vadd.f32 %v2915, %v3430
      %v3509 = vadd.f32 %v2918, %v3433
      %v3510 = vadd.f32 %v2923, %v3438
      %v3511 = vadd.f32 %v2926, %v3441
      %v3512 = vadd.f32 %v2931, %v3446
      %v3513 = vadd.f32 %v2934, %v3449
      %v3514 = vadd.f32 %v2939, %v3454
      %v3515 = vadd.f32 %v2942, %v3457
      %v3516 = vadd.f32 %v2947, %v3462
      %v3517 = vadd.f32 %v2950, %v3465
      %v3518 = vadd.f32 %v2955, %v3470
      %v3519 = vadd.f32 %v2958, %v3473
      %v3520 = vadd.f32 %v2963, %v3478
      %v3521 = vadd.f32 %v2966, %v3481
      %v3522 = vadd.f32 %v2971, %v3486
      %v3523 = vadd.f32 %v2974, %v3489
      %v3524 = vld [vmem:[%s8] sm:$0x1]
      %v3526 = vlaneseq
      %v3527 = vshrl.u32 %v3526, 7
      %v3528 = vsub.s32 0, %v3527
      %v3529 = vrot.slane %v3524, %v3528
      %v3531 = vadd.f32 %v3492, %v3529
      %v3532 = vadd.f32 %v3493, %v3529
      %v3533 = vadd.f32 %v3494, %v3529
      %v3534 = vadd.f32 %v3495, %v3529
      %v3535 = vadd.f32 %v3496, %v3529
      %v3536 = vadd.f32 %v3497, %v3529
      %v3537 = vadd.f32 %v3498, %v3529
      %v3538 = vadd.f32 %v3499, %v3529
      %v3539 = vadd.f32 %v3500, %v3529
      %v3540 = vadd.f32 %v3501, %v3529
      %v3541 = vadd.f32 %v3502, %v3529
      %v3542 = vadd.f32 %v3503, %v3529
      %v3543 = vadd.f32 %v3504, %v3529
      %v3544 = vadd.f32 %v3505, %v3529
      %v3545 = vadd.f32 %v3506, %v3529
      %v3546 = vadd.f32 %v3507, %v3529
      %v3547 = vadd.f32 %v3508, %v3529
      %v3548 = vadd.f32 %v3509, %v3529
      %v3549 = vadd.f32 %v3510, %v3529
      %v3550 = vadd.f32 %v3511, %v3529
      %v3551 = vadd.f32 %v3512, %v3529
      %v3552 = vadd.f32 %v3513, %v3529
      %v3553 = vadd.f32 %v3514, %v3529
      %v3554 = vadd.f32 %v3515, %v3529
      %v3555 = vadd.f32 %v3516, %v3529
      %v3556 = vadd.f32 %v3517, %v3529
      %v3557 = vadd.f32 %v3518, %v3529
      %v3558 = vadd.f32 %v3519, %v3529
      %v3559 = vadd.f32 %v3520, %v3529
      %v3560 = vadd.f32 %v3521, %v3529
      %v3561 = vadd.f32 %v3522, %v3529
      %v3562 = vadd.f32 %v3523, %v3529
      %v3563 = vld [vmem:[%s594] sm:$0xf]
      %v3564 = vld [vmem:[%s594 + $0x4] sm:$0xf]
      %v3565 = vld [vmem:[%s594 + $0x8] sm:$0xf]
      %v3566 = vld [vmem:[%s594 + $0xc] sm:$0xf]
      %v3567 = vld [vmem:[%s594 + $0x10] sm:$0xf]
      %v3568 = vld [vmem:[%s594 + $0x14] sm:$0xf]
      %v3569 = vld [vmem:[%s594 + $0x18] sm:$0xf]
      %v3570 = vld [vmem:[%s594 + $0x1c] sm:$0xf]
      %v3571 = vld [vmem:[%s594 + $0x20] sm:$0xf]
      %v3572 = vld [vmem:[%s594 + $0x24] sm:$0xf]
      %v3573 = vld [vmem:[%s594 + $0x28] sm:$0xf]
      %v3574 = vld [vmem:[%s594 + $0x2c] sm:$0xf]
      %v3575 = vld [vmem:[%s594 + $0x30] sm:$0xf]
      %v3576 = vld [vmem:[%s594 + $0x34] sm:$0xf]
      %v3577 = vld [vmem:[%s594 + $0x38] sm:$0xf]
      %v3578 = vld [vmem:[%s594 + $0x3c] sm:$0xf]
      %v3579 = vld [vmem:[%s594 + $0x40] sm:$0xf]
      %v3580 = vld [vmem:[%s594 + $0x44] sm:$0xf]
      %v3581 = vld [vmem:[%s594 + $0x48] sm:$0xf]
      %v3582 = vld [vmem:[%s594 + $0x4c] sm:$0xf]
      %v3583 = vld [vmem:[%s594 + $0x50] sm:$0xf]
      %v3584 = vld [vmem:[%s594 + $0x54] sm:$0xf]
      %v3585 = vld [vmem:[%s594 + $0x58] sm:$0xf]
      %v3586 = vld [vmem:[%s594 + $0x5c] sm:$0xf]
      %v3587 = vld [vmem:[%s594 + $0x60] sm:$0xf]
      %v3588 = vld [vmem:[%s594 + $0x64] sm:$0xf]
      %v3589 = vld [vmem:[%s594 + $0x68] sm:$0xf]
      %v3590 = vld [vmem:[%s594 + $0x6c] sm:$0xf]
      %v3591 = vld [vmem:[%s594 + $0x70] sm:$0xf]
      %v3592 = vld [vmem:[%s594 + $0x74] sm:$0xf]
      %v3593 = vld [vmem:[%s594 + $0x78] sm:$0xf]
      %v3594 = vld [vmem:[%s594 + $0x7c] sm:$0xf]
      %v3595 = vunpack.c.l.bf16 %v3563
      %v3596 = vunpack.c.l.bf16 %v3564
      %v3597 = vunpack.c.l.bf16 %v3565
      %v3598 = vunpack.c.l.bf16 %v3566
      %v3599 = vunpack.c.l.bf16 %v3567
      %v3600 = vunpack.c.l.bf16 %v3568
      %v3601 = vunpack.c.l.bf16 %v3569
      %v3602 = vunpack.c.l.bf16 %v3570
      %v3603 = vunpack.c.l.bf16 %v3571
      %v3604 = vunpack.c.l.bf16 %v3572
      %v3605 = vunpack.c.l.bf16 %v3573
      %v3606 = vunpack.c.l.bf16 %v3574
      %v3607 = vunpack.c.l.bf16 %v3575
      %v3608 = vunpack.c.l.bf16 %v3576
      %v3609 = vunpack.c.l.bf16 %v3577
      %v3610 = vunpack.c.l.bf16 %v3578
      %v3611 = vunpack.c.l.bf16 %v3579
      %v3612 = vunpack.c.l.bf16 %v3580
      %v3613 = vunpack.c.l.bf16 %v3581
      %v3614 = vunpack.c.l.bf16 %v3582
      %v3615 = vunpack.c.l.bf16 %v3583
      %v3616 = vunpack.c.l.bf16 %v3584
      %v3617 = vunpack.c.l.bf16 %v3585
      %v3618 = vunpack.c.l.bf16 %v3586
      %v3619 = vunpack.c.l.bf16 %v3587
      %v3620 = vunpack.c.l.bf16 %v3588
      %v3621 = vunpack.c.l.bf16 %v3589
      %v3622 = vunpack.c.l.bf16 %v3590
      %v3623 = vunpack.c.l.bf16 %v3591
      %v3624 = vunpack.c.l.bf16 %v3592
      %v3625 = vunpack.c.l.bf16 %v3593
      %v3626 = vunpack.c.l.bf16 %v3594
      %v3627 = vadd.f32 %v3531, %v3595
      %v3628 = vadd.f32 %v3532, %v3596
      %v3629 = vadd.f32 %v3533, %v3597
      %v3630 = vadd.f32 %v3534, %v3598
      %v3631 = vadd.f32 %v3535, %v3599
      %v3632 = vadd.f32 %v3536, %v3600
      %v3633 = vadd.f32 %v3537, %v3601
      %v3634 = vadd.f32 %v3538, %v3602
      %v3635 = vadd.f32 %v3539, %v3603
      %v3636 = vadd.f32 %v3540, %v3604
      %v3637 = vadd.f32 %v3541, %v3605
      %v3638 = vadd.f32 %v3542, %v3606
      %v3639 = vadd.f32 %v3543, %v3607
      %v3640 = vadd.f32 %v3544, %v3608
      %v3641 = vadd.f32 %v3545, %v3609
      %v3642 = vadd.f32 %v3546, %v3610
      %v3643 = vadd.f32 %v3547, %v3611
      %v3644 = vadd.f32 %v3548, %v3612
      %v3645 = vadd.f32 %v3549, %v3613
      %v3646 = vadd.f32 %v3550, %v3614
      %v3647 = vadd.f32 %v3551, %v3615
      %v3648 = vadd.f32 %v3552, %v3616
      %v3649 = vadd.f32 %v3553, %v3617
      %v3650 = vadd.f32 %v3554, %v3618
      %v3651 = vadd.f32 %v3555, %v3619
      %v3652 = vadd.f32 %v3556, %v3620
      %v3653 = vadd.f32 %v3557, %v3621
      %v3654 = vadd.f32 %v3558, %v3622
      %v3655 = vadd.f32 %v3559, %v3623
      %v3656 = vadd.f32 %v3560, %v3624
      %v3657 = vadd.f32 %v3561, %v3625
      %v3658 = vadd.f32 %v3562, %v3626
      %v3659 = vmax.f32 %v3627, 0.0
      %v3660 = vmax.f32 %v3628, 0.0
      %v3661 = vmax.f32 %v3629, 0.0
      %v3662 = vmax.f32 %v3630, 0.0
      %v3663 = vmax.f32 %v3631, 0.0
      %v3664 = vmax.f32 %v3632, 0.0
      %v3665 = vmax.f32 %v3633, 0.0
      %v3666 = vmax.f32 %v3634, 0.0
      %v3667 = vmax.f32 %v3635, 0.0
      %v3668 = vmax.f32 %v3636, 0.0
      %v3669 = vmax.f32 %v3637, 0.0
      %v3670 = vmax.f32 %v3638, 0.0
      %v3671 = vmax.f32 %v3639, 0.0
      %v3672 = vmax.f32 %v3640, 0.0
      %v3673 = vmax.f32 %v3641, 0.0
      %v3674 = vmax.f32 %v3642, 0.0
      %v3675 = vmax.f32 %v3643, 0.0
      %v3676 = vmax.f32 %v3644, 0.0
      %v3677 = vmax.f32 %v3645, 0.0
      %v3678 = vmax.f32 %v3646, 0.0
      %v3679 = vmax.f32 %v3647, 0.0
      %v3680 = vmax.f32 %v3648, 0.0
      %v3681 = vmax.f32 %v3649, 0.0
      %v3682 = vmax.f32 %v3650, 0.0
      %v3683 = vmax.f32 %v3651, 0.0
      %v3684 = vmax.f32 %v3652, 0.0
      %v3685 = vmax.f32 %v3653, 0.0
      %v3686 = vmax.f32 %v3654, 0.0
      %v3687 = vmax.f32 %v3655, 0.0
      %v3688 = vmax.f32 %v3656, 0.0
      %v3689 = vmax.f32 %v3657, 0.0
      %v3690 = vmax.f32 %v3658, 0.0
      %3691 = vst [vmem:[%s605] sm:$0xff] %v3659
      %3692 = vst [vmem:[%s605 + $0x8] sm:$0xff] %v3660
      %3693 = vst [vmem:[%s605 + $0x10] sm:$0xff] %v3661
      %3694 = vst [vmem:[%s605 + $0x18] sm:$0xff] %v3662
      %3695 = vst [vmem:[%s605 + $0x20] sm:$0xff] %v3663
      %3696 = vst [vmem:[%s605 + $0x28] sm:$0xff] %v3664
      %3697 = vst [vmem:[%s605 + $0x30] sm:$0xff] %v3665
      %3698 = vst [vmem:[%s605 + $0x38] sm:$0xff] %v3666
      %3699 = vst [vmem:[%s605 + $0x40] sm:$0xff] %v3667
      %3700 = vst [vmem:[%s605 + $0x48] sm:$0xff] %v3668
      %3701 = vst [vmem:[%s605 + $0x50] sm:$0xff] %v3669
      %3702 = vst [vmem:[%s605 + $0x58] sm:$0xff] %v3670
      %3703 = vst [vmem:[%s605 + $0x60] sm:$0xff] %v3671
      %3704 = vst [vmem:[%s605 + $0x68] sm:$0xff] %v3672
      %3705 = vst [vmem:[%s605 + $0x70] sm:$0xff] %v3673
      %3706 = vst [vmem:[%s605 + $0x78] sm:$0xff] %v3674
      %3707 = vst [vmem:[%s605 + $0x80] sm:$0xff] %v3675
      %3708 = vst [vmem:[%s605 + $0x88] sm:$0xff] %v3676
      %3709 = vst [vmem:[%s605 + $0x90] sm:$0xff] %v3677
      %3710 = vst [vmem:[%s605 + $0x98] sm:$0xff] %v3678
      %3711 = vst [vmem:[%s605 + $0xa0] sm:$0xff] %v3679
      %3712 = vst [vmem:[%s605 + $0xa8] sm:$0xff] %v3680
      %3713 = vst [vmem:[%s605 + $0xb0] sm:$0xff] %v3681
      %3714 = vst [vmem:[%s605 + $0xb8] sm:$0xff] %v3682
      %3715 = vst [vmem:[%s605 + $0xc0] sm:$0xff] %v3683
      %3716 = vst [vmem:[%s605 + $0xc8] sm:$0xff] %v3684
      %3717 = vst [vmem:[%s605 + $0xd0] sm:$0xff] %v3685
      %3718 = vst [vmem:[%s605 + $0xd8] sm:$0xff] %v3686
      %3719 = vst [vmem:[%s605 + $0xe0] sm:$0xff] %v3687
      %3720 = vst [vmem:[%s605 + $0xe8] sm:$0xff] %v3688
      %3721 = vst [vmem:[%s605 + $0xf0] sm:$0xff] %v3689
      %3722 = vst [vmem:[%s605 + $0xf8] sm:$0xff] %v3690
      %s3723 = smul.u32 16, %s26
      %p3724 = scmp.lt.s32.totalorder %s25, 1
      %s3725 = scalar_select %p3724, %s25, 1
      %p3726 = scmp.lt.s32.totalorder %s3723, 15
      %s3727 = scalar_select %p3726, %s3723, 15
      %s3728 = smul.addr %s3727, 2
      %s3729 = smul.addr %s3725, 32
      %s3730 = sadd.s32 %s3728, %s3729
      %s3731 = smul.addr %s3730, 8
      %s3732 = scalar_lea.vmem %s10, %s3731
      // Predicated region
      $region61: #{basic_block_forward.3} parent=59 // pred_check
        %p3733 = pneg %p317
      $region62: #{basic_block_forward.3} parent=59 // pred_check_branch
        %3735 = sbr.rel (%p3733) target = $region64
      $region63: #{basic_block_forward.3} parent=59 // pred_region
        %s3736 = smul.u32 16, %s26
      $region64: #{basic_block_forward.3} parent=59 // pred_fallthru
        _
    $region60: #{basic_block_forward.3} parent=5 // pred_fallthru
      _
    %p3737 = scmp.le.s32.totalorder 2, %s16
    // Predicated region
    $region65: #{basic_block_forward.3} parent=5 // pred_check
      %p3738 = pneg %p3737
    $region66: #{basic_block_forward.3} parent=5 // pred_check_branch
      %3740 = sbr.rel (%p3738) target = $region68
    $region67: #{basic_block_forward.3} parent=5 // pred_region
      %s3741 = ssub.s32 %s16, 2
      // Predicated region
      $region69: #{basic_block_forward.3} parent=67 // pred_check
        %p3742 = pneg %p323
      $region70: #{basic_block_forward.3} parent=67 // pred_check_branch
        %3744 = sbr.rel (%p3742) target = $region72
      $region71: #{basic_block_forward.3} parent=67 // pred_region
        %s3745 = smul.u32 16, %s28
        %p3746 = scmp.lt.s32.totalorder %s27, 1
        %s3747 = scalar_select %p3746, %s27, 1
        %p3748 = scmp.lt.s32.totalorder %s3745, 15
        %s3749 = scalar_select %p3748, %s3745, 15
        %s3750 = smul.addr %s3749, 2
        %s3751 = smul.addr %s3747, 32
        %s3752 = sadd.s32 %s3750, %s3751
        %s3753 = smul.addr %s3752, 8
        %s3754 = scalar_lea.vmem %s10, %s3753
      $region72: #{basic_block_forward.3} parent=67 // pred_fallthru
        _
    $region68: #{basic_block_forward.3} parent=5 // pred_fallthru
      _
  $region6: #{basic_block_forward.3} parent=0 // loop_footer
    %s20 = sadd.s32 1, %s16
  $region7: #{basic_block_forward.3} parent=0 // loop_footer_branch
    %15 = sbr.rel target = $region3
  $region8: #{basic_block_forward.3} parent=0 // loop_exit
    _

</llo_original>
